<compile_context>
chip_gen: v5e
topology: v5e:2x2
jax: 0.10.0
libtpu: 0.0.40
codegen_flags: <defaults>
</compile_context>

<pallas_src>
import functools
import math

import jax
import jax.numpy as jnp
from jax.experimental import pallas as pl
from jax.experimental.pallas import tpu as pltpu


def mlp_kernel(x_ref, w1_ref, b1_ref, w2_ref, b2_ref, o_ref, acc_ref):
    """Grid: (k,) — K-reduction axis ("arbitrary").

    x_ref  : (Bp, TK)      bf16 slice of flattened (batch-padded) input
    w1_ref : (TK, H)       bf16 slice of first-layer weight
    b1_ref : (1, H)        f32 first-layer bias (resident)
    w2_ref : (H, Cpad)     bf16 second-layer weight (resident, lane-padded)
    b2_ref : (1, Cpad)     f32 second-layer bias (resident, lane-padded)
    o_ref  : (Bp, Cpad)    f32 logits (lane-padded)
    acc_ref: (Bp, H) f32   hidden-layer accumulator scratch
    """
    k = pl.program_id(0)

    @pl.when(k == 0)
    def _():
        acc_ref[...] = jnp.zeros_like(acc_ref)

    # Partial first-layer matmul on the MXU (bf16 in, f32 accumulate).
    acc_ref[...] += jnp.dot(x_ref[...], w1_ref[...],
                            preferred_element_type=jnp.float32)

    @pl.when(k == pl.num_programs(0) - 1)
    def _():
        # bias + ReLU, second layer, second bias — full epilogue in-kernel.
        h = jnp.maximum(acc_ref[...] + b1_ref[...], 0.0)
        logits = jnp.dot(h.astype(w2_ref.dtype), w2_ref[...],
                         preferred_element_type=jnp.float32)
        o_ref[...] = (logits + b2_ref[...]).astype(o_ref.dtype)


def _pick_tk(K, H, max_block_bytes=8 * 1024 * 1024):
    """Largest 128-multiple divisor of K whose W1 block (tk x H bf16) fits the budget."""
    tk_max = max(128, min(K, max_block_bytes // (H * 2)))
    best = None
    for tk in range(128, tk_max + 1, 128):
        if K % tk == 0:
            best = tk
    return best if best is not None else K


def prepare_params(w1, b1, w2, b2):
    """One-time weight prep: bf16 casts + lane padding (hoisted out of the hot path)."""
    H = w1.shape[1]
    C = w2.shape[1]
    Cpad = ((C + 127) // 128) * 128
    w1_b = w1.astype(jnp.bfloat16)
    b1_2d = b1.reshape(1, H).astype(jnp.float32)
    w2_pad = jnp.zeros((H, Cpad), jnp.bfloat16).at[:, :C].set(w2.astype(jnp.bfloat16))
    b2_pad = jnp.zeros((1, Cpad), jnp.float32).at[0, :C].set(b2.astype(jnp.float32))
    return w1_b, b1_2d, w2_pad, b2_pad


@functools.partial(jax.jit, static_argnames=("nclasses", "tk"))
def network_forward(x, w1_b, b1_2d, w2_pad, b2_pad, *, nclasses, tk=None):
    """x: (B, C, 32, 32) float32. Returns logits (B, nclasses) float32."""
    B = x.shape[0]
    x_flat = x.reshape(B, -1).astype(jnp.bfloat16)   # row-major flatten, same as torch.view
    K = x_flat.shape[1]
    H = w1_b.shape[1]
    Cpad = w2_pad.shape[1]

    # Pad batch to a full sublane group (8) so stores are unmasked; sliced back below.
    Bp = ((B + 7) // 8) * 8
    if Bp != B:
        x_flat = jnp.zeros((Bp, K), jnp.bfloat16).at[:B].set(x_flat)

    if tk is None:
        tk = _pick_tk(K, H)
    assert K % tk == 0, "K must be divisible by the chosen tk"
    nk = K // tk

    out_pad = pl.pallas_call(
        mlp_kernel,
        out_shape=jax.ShapeDtypeStruct((Bp, Cpad), jnp.float32),
        grid_spec=pltpu.PrefetchScalarGridSpec(
            num_scalar_prefetch=0,
            grid=(nk,),
            in_specs=[
                pl.BlockSpec((Bp, tk), lambda k: (0, k)),     # x slice along K
                pl.BlockSpec((tk, H), lambda k: (k, 0)),      # W1 slice along K
                pl.BlockSpec((1, H), lambda k: (0, 0)),       # b1 (resident)
                pl.BlockSpec((H, Cpad), lambda k: (0, 0)),    # W2 (resident)
                pl.BlockSpec((1, Cpad), lambda k: (0, 0)),    # b2 (resident)
            ],
            out_specs=pl.BlockSpec((Bp, Cpad), lambda k: (0, 0)),
            scratch_shapes=[pltpu.VMEM((Bp, H), jnp.float32)],
        ),
        compiler_params=pltpu.CompilerParams(
            dimension_semantics=("arbitrary",),
            # 6 MiB W1 block double-buffered (~13 MiB total) would brush v5e's
            # 16 MiB default scoped-VMEM limit; raise it explicitly.
            vmem_limit_bytes=32 * 1024 * 1024,
        ),
    )(x_flat, w1_b, b1_2d, w2_pad, b2_pad)

    # Drop batch / lane padding.
    return out_pad[:B, :nclasses]


def init_params(key, nchannels, nclasses, hidden=1024):
    """Deterministic init mimicking PyTorch nn.Linear default (uniform +/- 1/sqrt(fan_in))."""
    in_dim = nchannels * 32 * 32
    k1, k2, k3, k4 = jax.random.split(key, 4)
    bound1 = 1.0 / math.sqrt(in_dim)
    bound2 = 1.0 / math.sqrt(hidden)
    # Stored as (in, out) so the kernel does x @ W (equivalent to torch's x @ W.T).
    w1 = jax.random.uniform(k1, (in_dim, hidden), jnp.float32, -bound1, bound1)
    b1 = jax.random.uniform(k2, (hidden,), jnp.float32, -bound1, bound1)
    w2 = jax.random.uniform(k3, (hidden, nclasses), jnp.float32, -bound2, bound2)
    b2 = jax.random.uniform(k4, (nclasses,), jnp.float32, -bound2, bound2)
    return w1, b1, w2, b2


if __name__ == "__main__":
    nchannels, nclasses, batch = 3, 10, 2

    key = jax.random.PRNGKey(0)
    pkey, xkey = jax.random.split(key)
    w1, b1, w2, b2 = init_params(pkey, nchannels, nclasses)

    # One-time weight prep (bf16 cast + lane padding) outside the hot path.
    w1_b, b1_2d, w2_pad, b2_pad = prepare_params(w1, b1, w2, b2)
    w1_b, b1_2d, w2_pad, b2_pad = jax.block_until_ready(
        (w1_b, b1_2d, w2_pad, b2_pad))

    # Input matches the PyTorch module's implied shape: (B, C, 32, 32) NCHW.
    x = jax.random.normal(xkey, (batch, nchannels, 32, 32), jnp.float32)

    out = network_forward(x, w1_b, b1_2d, w2_pad, b2_pad, nclasses=nclasses)
    out = jax.block_until_ready(out)
    assert out.shape == (batch, nclasses)

    # Reference 1: same bf16 casts as the kernel (tight tolerance).
    x_flat = x.reshape(batch, -1)
    xb, w1r, w2r = (a.astype(jnp.bfloat16) for a in (x_flat, w1, w2))
    h_ref = jnp.maximum(jnp.dot(xb, w1r, preferred_element_type=jnp.float32) + b1, 0.0)
    ref_bf16 = jnp.dot(h_ref.astype(jnp.bfloat16), w2r,
                       preferred_element_type=jnp.float32) + b2
    assert jnp.allclose(out, ref_bf16, atol=2e-3, rtol=2e-3)

    # Reference 2: pure f32 math (loose tolerance, guards overall semantics).
    ref_f32 = jnp.maximum(x_flat @ w1 + b1, 0.0) @ w2 + b2
    assert jnp.allclose(out, ref_f32, atol=5e-2, rtol=5e-2)

    print("KERNEL_OK")
</pallas_src>

<mosaic_0001>
module attributes {stable_mosaic.version = 11 : i64} {
  func.func @mlp_kernel(%arg0: i32, %arg1: memref<8x3072xbf16, #tpu.memory_space<vmem>>, %arg2: memref<3072x1024xbf16, #tpu.memory_space<vmem>>, %arg3: memref<1x1024xf32, #tpu.memory_space<vmem>>, %arg4: memref<1024x128xbf16, #tpu.memory_space<vmem>>, %arg5: memref<1x128xf32, #tpu.memory_space<vmem>>, %arg6: memref<8x128xf32, #tpu.memory_space<vmem>>, %arg7: memref<8x1024xf32, #tpu.memory_space<vmem>>) attributes {dimension_semantics = [#tpu.dimension_semantics<arbitrary>], iteration_bounds = array<i64: 1>, scalar_prefetch = 0 : i64, scratch_operands = 1 : i64, tpu.core_type = #tpu.core_type<tc>, window_params = [{transform_indices = @transform_0, window_bounds = array<i64: 8, 3072>}, {transform_indices = @transform_1, window_bounds = array<i64: 3072, 1024>}, {pipeline_mode = #tpu.pipeline_mode<synchronous>, transform_indices = @transform_2, window_bounds = array<i64: 1, 1024>}, {pipeline_mode = #tpu.pipeline_mode<synchronous>, transform_indices = @transform_3, window_bounds = array<i64: 1024, 128>}, {pipeline_mode = #tpu.pipeline_mode<synchronous>, transform_indices = @transform_4, window_bounds = array<i64: 1, 128>}, {pipeline_mode = #tpu.pipeline_mode<synchronous>, transform_indices = @transform_5, window_bounds = array<i64: 8, 128>}]} {
    %c0_i32 = arith.constant 0 : i32
    %0 = arith.cmpi eq, %arg0, %c0_i32 : i32
    %1 = arith.extui %0 : i1 to i32
    %c0_i32_0 = arith.constant 0 : i32
    %2 = arith.cmpi ne, %1, %c0_i32_0 : i32
    scf.if %2 {
      %cst_10 = arith.constant 0.000000e+00 : f32
      %12 = vector.broadcast %cst_10 : f32 to vector<8x1024xf32>
      %c0_11 = arith.constant 0 : index
      %c0_12 = arith.constant 0 : index
      %13 = vector.load %arg7[%c0_11, %c0_12] : memref<8x1024xf32, #tpu.memory_space<vmem>>, vector<8x1024xf32>
      tpu.vector_store %arg7[%c0_11, %c0_12], %12 {strides = array<i32>} : memref<8x1024xf32, #tpu.memory_space<vmem>>, vector<8x1024xf32>,
    } else {
    }
    %c0 = arith.constant 0 : index
    %c0_1 = arith.constant 0 : index
    %3 = vector.load %arg7[%c0, %c0_1] : memref<8x1024xf32, #tpu.memory_space<vmem>>, vector<8x1024xf32>
    %c0_2 = arith.constant 0 : index
    %c0_3 = arith.constant 0 : index
    %4 = vector.load %arg1[%c0_2, %c0_3] : memref<8x3072xbf16, #tpu.memory_space<vmem>>, vector<8x3072xbf16>
    %c0_4 = arith.constant 0 : index
    %c0_5 = arith.constant 0 : index
    %5 = vector.load %arg2[%c0_4, %c0_5] : memref<3072x1024xbf16, #tpu.memory_space<vmem>>, vector<3072x1024xbf16>
    %cst = arith.constant dense<0.000000e+00> : vector<8x1024xf32>
    %6 = tpu.matmul %4, %5, %cst {dimension_numbers = #tpu.dot_dimension_numbers<[1], [0], [0], [1], [0, 0, 1, 1], [], []>} : vector<8x3072xbf16>, vector<3072x1024xbf16>, vector<8x1024xf32> -> vector<8x1024xf32>
    %7 = arith.addf %3, %6 : vector<8x1024xf32>
    %c0_6 = arith.constant 0 : index
    %c0_7 = arith.constant 0 : index
    %8 = vector.load %arg7[%c0_6, %c0_7] : memref<8x1024xf32, #tpu.memory_space<vmem>>, vector<8x1024xf32>
    tpu.vector_store %arg7[%c0_6, %c0_7], %7 {strides = array<i32>} : memref<8x1024xf32, #tpu.memory_space<vmem>>, vector<8x1024xf32>,
    %c0_i32_8 = arith.constant 0 : i32
    %9 = arith.cmpi eq, %arg0, %c0_i32_8 : i32
    %10 = arith.extui %9 : i1 to i32
    %c0_i32_9 = arith.constant 0 : i32
    %11 = arith.cmpi ne, %10, %c0_i32_9 : i32
    scf.if %11 {
      %c0_10 = arith.constant 0 : index
      %c0_11 = arith.constant 0 : index
      %12 = vector.load %arg7[%c0_10, %c0_11] : memref<8x1024xf32, #tpu.memory_space<vmem>>, vector<8x1024xf32>
      %c0_12 = arith.constant 0 : index
      %c0_13 = arith.constant 0 : index
      %13 = vector.load %arg3[%c0_12, %c0_13] : memref<1x1024xf32, #tpu.memory_space<vmem>>, vector<1x1024xf32>
      %14 = vector.broadcast %13 : vector<1x1024xf32> to vector<8x1024xf32>
      %15 = arith.addf %12, %14 : vector<8x1024xf32>
      %cst_14 = arith.constant 0.000000e+00 : f32
      %16 = vector.broadcast %cst_14 : f32 to vector<8x1024xf32>
      %17 = arith.maximumf %15, %16 : vector<8x1024xf32>
      %18 = arith.truncf %17 : vector<8x1024xf32> to vector<8x1024xbf16>
      %c0_15 = arith.constant 0 : index
      %c0_16 = arith.constant 0 : index
      %19 = vector.load %arg4[%c0_15, %c0_16] : memref<1024x128xbf16, #tpu.memory_space<vmem>>, vector<1024x128xbf16>
      %cst_17 = arith.constant dense<0.000000e+00> : vector<8x128xf32>
      %20 = tpu.matmul %18, %19, %cst_17 {dimension_numbers = #tpu.dot_dimension_numbers<[1], [0], [0], [1], [0, 0, 1, 1], [], []>} : vector<8x1024xbf16>, vector<1024x128xbf16>, vector<8x128xf32> -> vector<8x128xf32>
      %c0_18 = arith.constant 0 : index
      %c0_19 = arith.constant 0 : index
      %21 = vector.load %arg5[%c0_18, %c0_19] : memref<1x128xf32, #tpu.memory_space<vmem>>, vector<1x128xf32>
      %22 = vector.broadcast %21 : vector<1x128xf32> to vector<8x128xf32>
      %23 = arith.addf %20, %22 : vector<8x128xf32>
      %c0_20 = arith.constant 0 : index
      %c0_21 = arith.constant 0 : index
      %24 = vector.load %arg6[%c0_20, %c0_21] : memref<8x128xf32, #tpu.memory_space<vmem>>, vector<8x128xf32>
      tpu.vector_store %arg6[%c0_20, %c0_21], %23 {strides = array<i32>} : memref<8x128xf32, #tpu.memory_space<vmem>>, vector<8x128xf32>,
    } else {
    }
    return
  }
  func.func @transform_0(%arg0: i32) -> (i32, i32) {
    %c0_i32 = arith.constant 0 : i32
    %c0_i32_0 = arith.constant 0 : i32
    return %c0_i32, %arg0 : i32, i32
  }
  func.func @transform_1(%arg0: i32) -> (i32, i32) {
    %c0_i32 = arith.constant 0 : i32
    %c0_i32_0 = arith.constant 0 : i32
    return %arg0, %c0_i32 : i32, i32
  }
  func.func @transform_2(%arg0: i32) -> (i32, i32) {
    %c0_i32 = arith.constant 0 : i32
    %c0_i32_0 = arith.constant 0 : i32
    %c0_i32_1 = arith.constant 0 : i32
    return %c0_i32, %c0_i32_0 : i32, i32
  }
  func.func @transform_3(%arg0: i32) -> (i32, i32) {
    %c0_i32 = arith.constant 0 : i32
    %c0_i32_0 = arith.constant 0 : i32
    %c0_i32_1 = arith.constant 0 : i32
    return %c0_i32, %c0_i32_0 : i32, i32
  }
  func.func @transform_4(%arg0: i32) -> (i32, i32) {
    %c0_i32 = arith.constant 0 : i32
    %c0_i32_0 = arith.constant 0 : i32
    %c0_i32_1 = arith.constant 0 : i32
    return %c0_i32, %c0_i32_0 : i32, i32
  }
  func.func @transform_5(%arg0: i32) -> (i32, i32) {
    %c0_i32 = arith.constant 0 : i32
    %c0_i32_0 = arith.constant 0 : i32
    %c0_i32_1 = arith.constant 0 : i32
    return %c0_i32, %c0_i32_0 : i32, i32
  }
}

</mosaic_0001>

<llo_original>
// kernel: network_forward.1
$region0: #{network_forward.1}
  #allocation0 [shape = 'u32[]', space=smem, size = 0x4, offset = 0x4, fixed_abs, tag = 'smem constant byte address 0x4 - core index']
  #allocation1 [shape = 'u32[72,128]{1,0:T(1,128)}', space=vmem, size = 0x9000, scoped, tag = 'internal scratch']
  #allocation2 [shape = 'f32[8,1024]{1,0:T(8,128)}', space=vmem, size = 0x8000, scoped, tag = 'scratch operand']
  %s0 = inlined_call_operand.vmem [shape: bf16[8,3072], index: 0, kind: input, shape index: {}]
  %s1 = inlined_call_operand.hbm [shape: bf16[3072,1024], index: 1, kind: input, shape index: {}]
  %s2 = inlined_call_operand.hbm [shape: f32[1,1024], index: 2, kind: input, shape index: {}]
  %s3 = inlined_call_operand.hbm [shape: bf16[1024,128], index: 3, kind: input, shape index: {}]
  %s4 = inlined_call_operand.hbm [shape: f32[1,128], index: 4, kind: input, shape index: {}]
  %s5 = inlined_call_operand.vmem [shape: f32[8,128], index: 5, kind: output, shape index: {}]
  %s6 = sld [smem:[#allocation0]]
  $region54: #{network_forward.1} parent=0
    _
  %s8 = ssub.s32 1, %s6
  %s9 = scalar_select 0, %s8, %s6
  $region1: #{network_forward.1} parent=0
    #allocation3 [shape = 'u8[6291456]{0}', space=vmem, size = 0x600000, scoped, tag = 'input window, operand 1, single buffered']
    #allocation4 [shape = 's32[1]{0}', space=sflag, size = 0x4, scoped, tag = 'scoped memory for network_forward.1']
    #allocation5 [shape = 'u8[4096]{0}', space=vmem, size = 0x1000, scoped, tag = 'input window, operand 2, single buffered']
    #allocation6 [shape = 's32[1]{0}', space=sflag, size = 0x4, scoped, tag = 'scoped memory for network_forward.1']
    #allocation7 [shape = 'u8[262144]{0}', space=vmem, size = 0x40000, scoped, tag = 'input window, operand 3, single buffered']
    #allocation8 [shape = 'u8[512]{0}', space=vmem, size = 0x400, scoped, tag = 'input window, operand 4, single buffered']
    #allocation9 [shape = 's32[1]{0}', space=sflag, size = 0x4, scoped, tag = 'scoped memory for network_forward.1']
    %10 = vsyncpa [#allocation4], 0
    %11 = vsyncpa [#allocation6], 0
    %12 = vsyncpa [#allocation9], 0
    // Predicated region
    $region2: #{network_forward.1} parent=1 // pred_check
      _
    $region3: #{network_forward.1} parent=1 // pred_check_branch
      %14 = sbr.rel (0) target = $region5
    $region4: #{network_forward.1} parent=1 // pred_region
      _
    $region5: #{network_forward.1} parent=1 // pred_fallthru
      _
    // Predicated region
    $region6: #{network_forward.1} parent=1 // pred_check
      _
    $region7: #{network_forward.1} parent=1 // pred_check_branch
      %16 = sbr.rel (0) target = $region9
    $region8: #{network_forward.1} parent=1 // pred_region
      %18 = vsyncadd [#allocation4], 0
      %s19 = sshll.u32 %s1, 4
      %s20 = int_to_ptr.hbm [resolvable:$true] %s19
      %s21 = sshll.u32 [#allocation3], 4
      %s22 = int_to_ptr.vmem [resolvable:$true] %s21
      %27 = dma.hbm_to_vmem [thread:$0]  %s20, 196608, %s22, [#allocation4], 512, 512, 32
    $region9: #{network_forward.1} parent=1 // pred_fallthru
      _
    // Predicated region
    $region10: #{network_forward.1} parent=1 // pred_check
      _
    $region11: #{network_forward.1} parent=1 // pred_check_branch
      %29 = sbr.rel (0) target = $region13
    $region12: #{network_forward.1} parent=1 // pred_region
      %31 = vsyncadd [#allocation6], 0
      %s33 = sshll.u32 %s2, 4
      %s34 = int_to_ptr.hbm [resolvable:$true] %s33
      %s35 = sshll.u32 [#allocation5], 4
      %s36 = int_to_ptr.vmem [resolvable:$true] %s35
      %38 = dma.hbm_to_vmem [thread:$0]  %s34, 128, %s36, [#allocation6]
    $region13: #{network_forward.1} parent=1 // pred_fallthru
      _
    // Predicated region
    $region14: #{network_forward.1} parent=1 // pred_check
      _
    $region15: #{network_forward.1} parent=1 // pred_check_branch
      %40 = sbr.rel (0) target = $region17
    $region16: #{network_forward.1} parent=1 // pred_region
      %42 = vsyncadd [#allocation6], 0
      %s43 = sshll.u32 %s3, 4
      %s44 = int_to_ptr.hbm [resolvable:$true] %s43
      %s45 = sshll.u32 [#allocation7], 4
      %s46 = int_to_ptr.vmem [resolvable:$true] %s45
      %51 = dma.hbm_to_vmem [thread:$0]  %s44, 8192, %s46, [#allocation6], 64, 64, 4
    $region17: #{network_forward.1} parent=1 // pred_fallthru
      _
    // Predicated region
    $region18: #{network_forward.1} parent=1 // pred_check
      _
    $region19: #{network_forward.1} parent=1 // pred_check_branch
      %53 = sbr.rel (0) target = $region21
    $region20: #{network_forward.1} parent=1 // pred_region
      %55 = vsyncadd [#allocation9], 0
      %s57 = sshll.u32 %s4, 4
      %s58 = int_to_ptr.hbm [resolvable:$true] %s57
      %s59 = sshll.u32 [#allocation8], 4
      %s60 = int_to_ptr.vmem [resolvable:$true] %s59
      %62 = dma.hbm_to_vmem [thread:$0]  %s58, 16, %s60, [#allocation9]
    $region21: #{network_forward.1} parent=1 // pred_fallthru
      _
    // Predicated region
    $region22: #{network_forward.1} parent=1 // pred_check
      _
    $region23: #{network_forward.1} parent=1 // pred_check_branch
      %64 = sbr.rel (0) target = $region25
    $region24: #{network_forward.1} parent=1 // pred_region
      %66 = dma.done [#allocation4], 196608
    $region25: #{network_forward.1} parent=1 // pred_fallthru
      _
    // Predicated region
    $region26: #{network_forward.1} parent=1 // pred_check
      _
    $region27: #{network_forward.1} parent=1 // pred_check_branch
      %68 = sbr.rel (0) target = $region29
    $region28: #{network_forward.1} parent=1 // pred_region
      %70 = dma.done [#allocation6], 128
    $region29: #{network_forward.1} parent=1 // pred_fallthru
      _
    // Predicated region
    $region30: #{network_forward.1} parent=1 // pred_check
      _
    $region31: #{network_forward.1} parent=1 // pred_check_branch
      %72 = sbr.rel (0) target = $region33
    $region32: #{network_forward.1} parent=1 // pred_region
      %74 = dma.done [#allocation6], 8192
    $region33: #{network_forward.1} parent=1 // pred_fallthru
      _
    // Predicated region
    $region34: #{network_forward.1} parent=1 // pred_check
      _
    $region35: #{network_forward.1} parent=1 // pred_check_branch
      %76 = sbr.rel (0) target = $region37
    $region36: #{network_forward.1} parent=1 // pred_region
      %78 = dma.done [#allocation9], 16
    $region37: #{network_forward.1} parent=1 // pred_fallthru
      _
    %p79 = scmp.eq.s32.totalorder 0, 0
    // Predicated region
    $region38: #{network_forward.1} parent=1 // pred_check
      %p80 = pneg %p79
    $region39: #{network_forward.1} parent=1 // pred_check_branch
      %82 = sbr.rel (%p80) target = $region41
    $region40: #{network_forward.1} parent=1 // pred_region
      %83 = vst [vmem:[#allocation2] sm:$0xff] 0.0
      %84 = vst [vmem:[#allocation2 + $0x8] sm:$0xff] 0.0
      %85 = vst [vmem:[#allocation2 + $0x10] sm:$0xff] 0.0
      %86 = vst [vmem:[#allocation2 + $0x18] sm:$0xff] 0.0
      %87 = vst [vmem:[#allocation2 + $0x20] sm:$0xff] 0.0
      %88 = vst [vmem:[#allocation2 + $0x28] sm:$0xff] 0.0
      %89 = vst [vmem:[#allocation2 + $0x30] sm:$0xff] 0.0
      %90 = vst [vmem:[#allocation2 + $0x38] sm:$0xff] 0.0
    $region41: #{network_forward.1} parent=1 // pred_fallthru
      _
    %v91 = vld [vmem:[#allocation2] sm:$0xff]
    %v92 = vld [vmem:[#allocation2 + $0x8] sm:$0xff]
    %v93 = vld [vmem:[#allocation2 + $0x10] sm:$0xff]
    %v94 = vld [vmem:[#allocation2 + $0x18] sm:$0xff]
    %v95 = vld [vmem:[#allocation2 + $0x20] sm:$0xff]
    %v96 = vld [vmem:[#allocation2 + $0x28] sm:$0xff]
    %v97 = vld [vmem:[#allocation2 + $0x30] sm:$0xff]
    %v98 = vld [vmem:[#allocation2 + $0x38] sm:$0xff]
    %v99 = vld [vmem:[%s0] sm:$0xff]
    %v100 = vld [vmem:[%s0 + $0x8] sm:$0xff]
    %v101 = vld [vmem:[%s0 + $0x10] sm:$0xff]
    %v102 = vld [vmem:[%s0 + $0x18] sm:$0xff]
    %v103 = vld [vmem:[%s0 + $0x20] sm:$0xff]
    %v104 = vld [vmem:[%s0 + $0x28] sm:$0xff]
    %v105 = vld [vmem:[%s0 + $0x30] sm:$0xff]
    %v106 = vld [vmem:[%s0 + $0x38] sm:$0xff]
    %v107 = vld [vmem:[%s0 + $0x40] sm:$0xff]
    %v108 = vld [vmem:[%s0 + $0x48] sm:$0xff]
    %v109 = vld [vmem:[%s0 + $0x50] sm:$0xff]
    %v110 = vld [vmem:[%s0 + $0x58] sm:$0xff]
    %v111 = vld [vmem:[#allocation3] sm:$0xff]
    %v112 = vld [vmem:[#allocation3 + $0x8] sm:$0xff]
    %v113 = vld [vmem:[#allocation3 + $0x10] sm:$0xff]
    %v114 = vld [vmem:[#allocation3 + $0x18] sm:$0xff]
    %v115 = vld [vmem:[#allocation3 + $0x20] sm:$0xff]
    %v116 = vld [vmem:[#allocation3 + $0x28] sm:$0xff]
    %v117 = vld [vmem:[#allocation3 + $0x30] sm:$0xff]
    %v118 = vld [vmem:[#allocation3 + $0x38] sm:$0xff]
    %v119 = vld [vmem:[#allocation3 + $0x40] sm:$0xff]
    %v120 = vld [vmem:[#allocation3 + $0x48] sm:$0xff]
    %v121 = vld [vmem:[#allocation3 + $0x50] sm:$0xff]
    %v122 = vld [vmem:[#allocation3 + $0x58] sm:$0xff]
    %v123 = vld [vmem:[#allocation3 + $0x60] sm:$0xff]
    %v124 = vld [vmem:[#allocation3 + $0x68] sm:$0xff]
    %v125 = vld [vmem:[#allocation3 + $0x70] sm:$0xff]
    %v126 = vld [vmem:[#allocation3 + $0x78] sm:$0xff]
    %v127 = vld [vmem:[#allocation3 + $0x80] sm:$0xff]
    %v128 = vld [vmem:[#allocation3 + $0x88] sm:$0xff]
    %v129 = vld [vmem:[#allocation3 + $0x90] sm:$0xff]
    %v130 = vld [vmem:[#allocation3 + $0x98] sm:$0xff]
    %v131 = vld [vmem:[#allocation3 + $0xa0] sm:$0xff]
    %v132 = vld [vmem:[#allocation3 + $0xa8] sm:$0xff]
    %v133 = vld [vmem:[#allocation3 + $0xb0] sm:$0xff]
    %v134 = vld [vmem:[#allocation3 + $0xb8] sm:$0xff]
    %v135 = vld [vmem:[#allocation3 + $0xc0] sm:$0xff]
    %v136 = vld [vmem:[#allocation3 + $0xc8] sm:$0xff]
    %v137 = vld [vmem:[#allocation3 + $0xd0] sm:$0xff]
    %v138 = vld [vmem:[#allocation3 + $0xd8] sm:$0xff]
    %v139 = vld [vmem:[#allocation3 + $0xe0] sm:$0xff]
    %v140 = vld [vmem:[#allocation3 + $0xe8] sm:$0xff]
    %v141 = vld [vmem:[#allocation3 + $0xf0] sm:$0xff]
    %v142 = vld [vmem:[#allocation3 + $0xf8] sm:$0xff]
    %v143 = vld [vmem:[#allocation3 + $0x100] sm:$0xff]
    %v144 = vld [vmem:[#allocation3 + $0x108] sm:$0xff]
    %v145 = vld [vmem:[#allocation3 + $0x110] sm:$0xff]
    %v146 = vld [vmem:[#allocation3 + $0x118] sm:$0xff]
    %v147 = vld [vmem:[#allocation3 + $0x120] sm:$0xff]
    %v148 = vld [vmem:[#allocation3 + $0x128] sm:$0xff]
    %v149 = vld [vmem:[#allocation3 + $0x130] sm:$0xff]
    %v150 = vld [vmem:[#allocation3 + $0x138] sm:$0xff]
    %v151 = vld [vmem:[#allocation3 + $0x140] sm:$0xff]
    %v152 = vld [vmem:[#allocation3 + $0x148] sm:$0xff]
    %v153 = vld [vmem:[#allocation3 + $0x150] sm:$0xff]
    %v154 = vld [vmem:[#allocation3 + $0x158] sm:$0xff]
    %v155 = vld [vmem:[#allocation3 + $0x160] sm:$0xff]
    %v156 = vld [vmem:[#allocation3 + $0x168] sm:$0xff]
    %v157 = vld [vmem:[#allocation3 + $0x170] sm:$0xff]
    %v158 = vld [vmem:[#allocation3 + $0x178] sm:$0xff]
    %v159 = vld [vmem:[#allocation3 + $0x180] sm:$0xff]
    %v160 = vld [vmem:[#allocation3 + $0x188] sm:$0xff]
    %v161 = vld [vmem:[#allocation3 + $0x190] sm:$0xff]
    %v162 = vld [vmem:[#allocation3 + $0x198] sm:$0xff]
    %v163 = vld [vmem:[#allocation3 + $0x1a0] sm:$0xff]
    %v164 = vld [vmem:[#allocation3 + $0x1a8] sm:$0xff]
    %v165 = vld [vmem:[#allocation3 + $0x1b0] sm:$0xff]
    %v166 = vld [vmem:[#allocation3 + $0x1b8] sm:$0xff]
    %v167 = vld [vmem:[#allocation3 + $0x1c0] sm:$0xff]
    %v168 = vld [vmem:[#allocation3 + $0x1c8] sm:$0xff]
    %v169 = vld [vmem:[#allocation3 + $0x1d0] sm:$0xff]
    %v170 = vld [vmem:[#allocation3 + $0x1d8] sm:$0xff]
    %v171 = vld [vmem:[#allocation3 + $0x1e0] sm:$0xff]
    %v172 = vld [vmem:[#allocation3 + $0x1e8] sm:$0xff]
    %v173 = vld [vmem:[#allocation3 + $0x1f0] sm:$0xff]
    %v174 = vld [vmem:[#allocation3 + $0x1f8] sm:$0xff]
    %v175 = vld [vmem:[#allocation3 + $0x200] sm:$0xff]
    %v176 = vld [vmem:[#allocation3 + $0x208] sm:$0xff]
    %v177 = vld [vmem:[#allocation3 + $0x210] sm:$0xff]
    %v178 = vld [vmem:[#allocation3 + $0x218] sm:$0xff]
    %v179 = vld [vmem:[#allocation3 + $0x220] sm:$0xff]
    %v180 = vld [vmem:[#allocation3 + $0x228] sm:$0xff]
    %v181 = vld [vmem:[#allocation3 + $0x230] sm:$0xff]
    %v182 = vld [vmem:[#allocation3 + $0x238] sm:$0xff]
    %v183 = vld [vmem:[#allocation3 + $0x240] sm:$0xff]
    %v184 = vld [vmem:[#allocation3 + $0x248] sm:$0xff]
    %v185 = vld [vmem:[#allocation3 + $0x250] sm:$0xff]
    %v186 = vld [vmem:[#allocation3 + $0x258] sm:$0xff]
    %v187 = vld [vmem:[#allocation3 + $0x260] sm:$0xff]
    %v188 = vld [vmem:[#allocation3 + $0x268] sm:$0xff]
    %v189 = vld [vmem:[#allocation3 + $0x270] sm:$0xff]
    %v190 = vld [vmem:[#allocation3 + $0x278] sm:$0xff]
    %v191 = vld [vmem:[#allocation3 + $0x280] sm:$0xff]
    %v192 = vld [vmem:[#allocation3 + $0x288] sm:$0xff]
    %v193 = vld [vmem:[#allocation3 + $0x290] sm:$0xff]
    %v194 = vld [vmem:[#allocation3 + $0x298] sm:$0xff]
    %v195 = vld [vmem:[#allocation3 + $0x2a0] sm:$0xff]
    %v196 = vld [vmem:[#allocation3 + $0x2a8] sm:$0xff]
    %v197 = vld [vmem:[#allocation3 + $0x2b0] sm:$0xff]
    %v198 = vld [vmem:[#allocation3 + $0x2b8] sm:$0xff]
    %v199 = vld [vmem:[#allocation3 + $0x2c0] sm:$0xff]
    %v200 = vld [vmem:[#allocation3 + $0x2c8] sm:$0xff]
    %v201 = vld [vmem:[#allocation3 + $0x2d0] sm:$0xff]
    %v202 = vld [vmem:[#allocation3 + $0x2d8] sm:$0xff]
    %v203 = vld [vmem:[#allocation3 + $0x2e0] sm:$0xff]
    %v204 = vld [vmem:[#allocation3 + $0x2e8] sm:$0xff]
    %v205 = vld [vmem:[#allocation3 + $0x2f0] sm:$0xff]
    %v206 = vld [vmem:[#allocation3 + $0x2f8] sm:$0xff]
    %v207 = vld [vmem:[#allocation3 + $0x300] sm:$0xff]
    %v208 = vld [vmem:[#allocation3 + $0x308] sm:$0xff]
    %v209 = vld [vmem:[#allocation3 + $0x310] sm:$0xff]
    %v210 = vld [vmem:[#allocation3 + $0x318] sm:$0xff]
    %v211 = vld [vmem:[#allocation3 + $0x320] sm:$0xff]
    %v212 = vld [vmem:[#allocation3 + $0x328] sm:$0xff]
    %v213 = vld [vmem:[#allocation3 + $0x330] sm:$0xff]
    %v214 = vld [vmem:[#allocation3 + $0x338] sm:$0xff]
    %v215 = vld [vmem:[#allocation3 + $0x340] sm:$0xff]
    %v216 = vld [vmem:[#allocation3 + $0x348] sm:$0xff]
    %v217 = vld [vmem:[#allocation3 + $0x350] sm:$0xff]
    %v218 = vld [vmem:[#allocation3 + $0x358] sm:$0xff]
    %v219 = vld [vmem:[#allocation3 + $0x360] sm:$0xff]
    %v220 = vld [vmem:[#allocation3 + $0x368] sm:$0xff]
    %v221 = vld [vmem:[#allocation3 + $0x370] sm:$0xff]
    %v222 = vld [vmem:[#allocation3 + $0x378] sm:$0xff]
    %v223 = vld [vmem:[#allocation3 + $0x380] sm:$0xff]
    %v224 = vld [vmem:[#allocation3 + $0x388] sm:$0xff]
    %v225 = vld [vmem:[#allocation3 + $0x390] sm:$0xff]
    %v226 = vld [vmem:[#allocation3 + $0x398] sm:$0xff]
    %v227 = vld [vmem:[#allocation3 + $0x3a0] sm:$0xff]
    %v228 = vld [vmem:[#allocation3 + $0x3a8] sm:$0xff]
    %v229 = vld [vmem:[#allocation3 + $0x3b0] sm:$0xff]
    %v230 = vld [vmem:[#allocation3 + $0x3b8] sm:$0xff]
    %v231 = vld [vmem:[#allocation3 + $0x3c0] sm:$0xff]
    %v232 = vld [vmem:[#allocation3 + $0x3c8] sm:$0xff]
    %v233 = vld [vmem:[#allocation3 + $0x3d0] sm:$0xff]
    %v234 = vld [vmem:[#allocation3 + $0x3d8] sm:$0xff]
    %v235 = vld [vmem:[#allocation3 + $0x3e0] sm:$0xff]
    %v236 = vld [vmem:[#allocation3 + $0x3e8] sm:$0xff]
    %v237 = vld [vmem:[#allocation3 + $0x3f0] sm:$0xff]
    %v238 = vld [vmem:[#allocation3 + $0x3f8] sm:$0xff]
    %v239 = vld [vmem:[#allocation3 + $0x400] sm:$0xff]
    %v240 = vld [vmem:[#allocation3 + $0x408] sm:$0xff]
    %v241 = vld [vmem:[#allocation3 + $0x410] sm:$0xff]
    %v242 = vld [vmem:[#allocation3 + $0x418] sm:$0xff]
    %v243 = vld [vmem:[#allocation3 + $0x420] sm:$0xff]
    %v244 = vld [vmem:[#allocation3 + $0x428] sm:$0xff]
    %v245 = vld [vmem:[#allocation3 + $0x430] sm:$0xff]
    %v246 = vld [vmem:[#allocation3 + $0x438] sm:$0xff]
    %v247 = vld [vmem:[#allocation3 + $0x440] sm:$0xff]
    %v248 = vld [vmem:[#allocation3 + $0x448] sm:$0xff]
    %v249 = vld [vmem:[#allocation3 + $0x450] sm:$0xff]
    %v250 = vld [vmem:[#allocation3 + $0x458] sm:$0xff]
    %v251 = vld [vmem:[#allocation3 + $0x460] sm:$0xff]
    %v252 = vld [vmem:[#allocation3 + $0x468] sm:$0xff]
    %v253 = vld [vmem:[#allocation3 + $0x470] sm:$0xff]
    %v254 = vld [vmem:[#allocation3 + $0x478] sm:$0xff]
    %v255 = vld [vmem:[#allocation3 + $0x480] sm:$0xff]
    %v256 = vld [vmem:[#allocation3 + $0x488] sm:$0xff]
    %v257 = vld [vmem:[#allocation3 + $0x490] sm:$0xff]
    %v258 = vld [vmem:[#allocation3 + $0x498] sm:$0xff]
    %v259 = vld [vmem:[#allocation3 + $0x4a0] sm:$0xff]
    %v260 = vld [vmem:[#allocation3 + $0x4a8] sm:$0xff]
    %v261 = vld [vmem:[#allocation3 + $0x4b0] sm:$0xff]
    %v262 = vld [vmem:[#allocation3 + $0x4b8] sm:$0xff]
    %v263 = vld [vmem:[#allocation3 + $0x4c0] sm:$0xff]
    %v264 = vld [vmem:[#allocation3 + $0x4c8] sm:$0xff]
    %v265 = vld [vmem:[#allocation3 + $0x4d0] sm:$0xff]
    %v266 = vld [vmem:[#allocation3 + $0x4d8] sm:$0xff]
    %v267 = vld [vmem:[#allocation3 + $0x4e0] sm:$0xff]
    %v268 = vld [vmem:[#allocation3 + $0x4e8] sm:$0xff]
    %v269 = vld [vmem:[#allocation3 + $0x4f0] sm:$0xff]
    %v270 = vld [vmem:[#allocation3 + $0x4f8] sm:$0xff]
    %v271 = vld [vmem:[#allocation3 + $0x500] sm:$0xff]
    %v272 = vld [vmem:[#allocation3 + $0x508] sm:$0xff]
    %v273 = vld [vmem:[#allocation3 + $0x510] sm:$0xff]
    %v274 = vld [vmem:[#allocation3 + $0x518] sm:$0xff]
    %v275 = vld [vmem:[#allocation3 + $0x520] sm:$0xff]
    %v276 = vld [vmem:[#allocation3 + $0x528] sm:$0xff]
    %v277 = vld [vmem:[#allocation3 + $0x530] sm:$0xff]
    %v278 = vld [vmem:[#allocation3 + $0x538] sm:$0xff]
    %v279 = vld [vmem:[#allocation3 + $0x540] sm:$0xff]
    %v280 = vld [vmem:[#allocation3 + $0x548] sm:$0xff]
    %v281 = vld [vmem:[#allocation3 + $0x550] sm:$0xff]
    %v282 = vld [vmem:[#allocation3 + $0x558] sm:$0xff]
    %v283 = vld [vmem:[#allocation3 + $0x560] sm:$0xff]
    %v284 = vld [vmem:[#allocation3 + $0x568] sm:$0xff]
    %v285 = vld [vmem:[#allocation3 + $0x570] sm:$0xff]
    %v286 = vld [vmem:[#allocation3 + $0x578] sm:$0xff]
    %v287 = vld [vmem:[#allocation3 + $0x580] sm:$0xff]
    %v288 = vld [vmem:[#allocation3 + $0x588] sm:$0xff]
    %v289 = vld [vmem:[#allocation3 + $0x590] sm:$0xff]
    %v290 = vld [vmem:[#allocation3 + $0x598] sm:$0xff]
    %v291 = vld [vmem:[#allocation3 + $0x5a0] sm:$0xff]
    %v292 = vld [vmem:[#allocation3 + $0x5a8] sm:$0xff]
    %v293 = vld [vmem:[#allocation3 + $0x5b0] sm:$0xff]
    %v294 = vld [vmem:[#allocation3 + $0x5b8] sm:$0xff]
    %v295 = vld [vmem:[#allocation3 + $0x5c0] sm:$0xff]
    %v296 = vld [vmem:[#allocation3 + $0x5c8] sm:$0xff]
    %v297 = vld [vmem:[#allocation3 + $0x5d0] sm:$0xff]
    %v298 = vld [vmem:[#allocation3 + $0x5d8] sm:$0xff]
    %v299 = vld [vmem:[#allocation3 + $0x5e0] sm:$0xff]
    %v300 = vld [vmem:[#allocation3 + $0x5e8] sm:$0xff]
    %v301 = vld [vmem:[#allocation3 + $0x5f0] sm:$0xff]
    %v302 = vld [vmem:[#allocation3 + $0x5f8] sm:$0xff]
    %v303 = vld [vmem:[#allocation3 + $0x600] sm:$0xff]
    %v304 = vld [vmem:[#allocation3 + $0x608] sm:$0xff]
    %v305 = vld [vmem:[#allocation3 + $0x610] sm:$0xff]
    %v306 = vld [vmem:[#allocation3 + $0x618] sm:$0xff]
    %v307 = vld [vmem:[#allocation3 + $0x620] sm:$0xff]
    %v308 = vld [vmem:[#allocation3 + $0x628] sm:$0xff]
    %v309 = vld [vmem:[#allocation3 + $0x630] sm:$0xff]
    %v310 = vld [vmem:[#allocation3 + $0x638] sm:$0xff]
    %v311 = vld [vmem:[#allocation3 + $0x640] sm:$0xff]
    %v312 = vld [vmem:[#allocation3 + $0x648] sm:$0xff]
    %v313 = vld [vmem:[#allocation3 + $0x650] sm:$0xff]
    %v314 = vld [vmem:[#allocation3 + $0x658] sm:$0xff]
    %v315 = vld [vmem:[#allocation3 + $0x660] sm:$0xff]
    %v316 = vld [vmem:[#allocation3 + $0x668] sm:$0xff]
    %v317 = vld [vmem:[#allocation3 + $0x670] sm:$0xff]
    %v318 = vld [vmem:[#allocation3 + $0x678] sm:$0xff]
    %v319 = vld [vmem:[#allocation3 + $0x680] sm:$0xff]
    %v320 = vld [vmem:[#allocation3 + $0x688] sm:$0xff]
    %v321 = vld [vmem:[#allocation3 + $0x690] sm:$0xff]
    %v322 = vld [vmem:[#allocation3 + $0x698] sm:$0xff]
    %v323 = vld [vmem:[#allocation3 + $0x6a0] sm:$0xff]
    %v324 = vld [vmem:[#allocation3 + $0x6a8] sm:$0xff]
    %v325 = vld [vmem:[#allocation3 + $0x6b0] sm:$0xff]
    %v326 = vld [vmem:[#allocation3 + $0x6b8] sm:$0xff]
    %v327 = vld [vmem:[#allocation3 + $0x6c0] sm:$0xff]
    %v328 = vld [vmem:[#allocation3 + $0x6c8] sm:$0xff]
    %v329 = vld [vmem:[#allocation3 + $0x6d0] sm:$0xff]
    %v330 = vld [vmem:[#allocation3 + $0x6d8] sm:$0xff]
    %v331 = vld [vmem:[#allocation3 + $0x6e0] sm:$0xff]
    %v332 = vld [vmem:[#allocation3 + $0x6e8] sm:$0xff]
    %v333 = vld [vmem:[#allocation3 + $0x6f0] sm:$0xff]
    %v334 = vld [vmem:[#allocation3 + $0x6f8] sm:$0xff]
    %v335 = vld [vmem:[#allocation3 + $0x700] sm:$0xff]
    %v336 = vld [vmem:[#allocation3 + $0x708] sm:$0xff]
    %v337 = vld [vmem:[#allocation3 + $0x710] sm:$0xff]
    %v338 = vld [vmem:[#allocation3 + $0x718] sm:$0xff]
    %v339 = vld [vmem:[#allocation3 + $0x720] sm:$0xff]
    %v340 = vld [vmem:[#allocation3 + $0x728] sm:$0xff]
    %v341 = vld [vmem:[#allocation3 + $0x730] sm:$0xff]
    %v342 = vld [vmem:[#allocation3 + $0x738] sm:$0xff]
    %v343 = vld [vmem:[#allocation3 + $0x740] sm:$0xff]
    %v344 = vld [vmem:[#allocation3 + $0x748] sm:$0xff]
    %v345 = vld [vmem:[#allocation3 + $0x750] sm:$0xff]
    %v346 = vld [vmem:[#allocation3 + $0x758] sm:$0xff]
    %v347 = vld [vmem:[#allocation3 + $0x760] sm:$0xff]
    %v348 = vld [vmem:[#allocation3 + $0x768] sm:$0xff]
    %v349 = vld [vmem:[#allocation3 + $0x770] sm:$0xff]
    %v350 = vld [vmem:[#allocation3 + $0x778] sm:$0xff]
    %v351 = vld [vmem:[#allocation3 + $0x780] sm:$0xff]
    %v352 = vld [vmem:[#allocation3 + $0x788] sm:$0xff]
    %v353 = vld [vmem:[#allocation3 + $0x790] sm:$0xff]
    %v354 = vld [vmem:[#allocation3 + $0x798] sm:$0xff]
    %v355 = vld [vmem:[#allocation3 + $0x7a0] sm:$0xff]
    %v356 = vld [vmem:[#allocation3 + $0x7a8] sm:$0xff]
    %v357 = vld [vmem:[#allocation3 + $0x7b0] sm:$0xff]
    %v358 = vld [vmem:[#allocation3 + $0x7b8] sm:$0xff]
    %v359 = vld [vmem:[#allocation3 + $0x7c0] sm:$0xff]
    %v360 = vld [vmem:[#allocation3 + $0x7c8] sm:$0xff]
    %v361 = vld [vmem:[#allocation3 + $0x7d0] sm:$0xff]
    %v362 = vld [vmem:[#allocation3 + $0x7d8] sm:$0xff]
    %v363 = vld [vmem:[#allocation3 + $0x7e0] sm:$0xff]
    %v364 = vld [vmem:[#allocation3 + $0x7e8] sm:$0xff]
    %v365 = vld [vmem:[#allocation3 + $0x7f0] sm:$0xff]
    %v366 = vld [vmem:[#allocation3 + $0x7f8] sm:$0xff]
    %v367 = vld [vmem:[#allocation3 + $0x800] sm:$0xff]
    %v368 = vld [vmem:[#allocation3 + $0x808] sm:$0xff]
    %v369 = vld [vmem:[#allocation3 + $0x810] sm:$0xff]
    %v370 = vld [vmem:[#allocation3 + $0x818] sm:$0xff]
    %v371 = vld [vmem:[#allocation3 + $0x820] sm:$0xff]
    %v372 = vld [vmem:[#allocation3 + $0x828] sm:$0xff]
    %v373 = vld [vmem:[#allocation3 + $0x830] sm:$0xff]
    %v374 = vld [vmem:[#allocation3 + $0x838] sm:$0xff]
    %v375 = vld [vmem:[#allocation3 + $0x840] sm:$0xff]
    %v376 = vld [vmem:[#allocation3 + $0x848] sm:$0xff]
    %v377 = vld [vmem:[#allocation3 + $0x850] sm:$0xff]
    %v378 = vld [vmem:[#allocation3 + $0x858] sm:$0xff]
    %v379 = vld [vmem:[#allocation3 + $0x860] sm:$0xff]
    %v380 = vld [vmem:[#allocation3 + $0x868] sm:$0xff]
    %v381 = vld [vmem:[#allocation3 + $0x870] sm:$0xff]
    %v382 = vld [vmem:[#allocation3 + $0x878] sm:$0xff]
    %v383 = vld [vmem:[#allocation3 + $0x880] sm:$0xff]
    %v384 = vld [vmem:[#allocation3 + $0x888] sm:$0xff]
    %v385 = vld [vmem:[#allocation3 + $0x890] sm:$0xff]
    %v386 = vld [vmem:[#allocation3 + $0x898] sm:$0xff]
    %v387 = vld [vmem:[#allocation3 + $0x8a0] sm:$0xff]
    %v388 = vld [vmem:[#allocation3 + $0x8a8] sm:$0xff]
    %v389 = vld [vmem:[#allocation3 + $0x8b0] sm:$0xff]
    %v390 = vld [vmem:[#allocation3 + $0x8b8] sm:$0xff]
    %v391 = vld [vmem:[#allocation3 + $0x8c0] sm:$0xff]
    %v392 = vld [vmem:[#allocation3 + $0x8c8] sm:$0xff]
    %v393 = vld [vmem:[#allocation3 + $0x8d0] sm:$0xff]
    %v394 = vld [vmem:[#allocation3 + $0x8d8] sm:$0xff]
    %v395 = vld [vmem:[#allocation3 + $0x8e0] sm:$0xff]
    %v396 = vld [vmem:[#allocation3 + $0x8e8] sm:$0xff]
    %v397 = vld [vmem:[#allocation3 + $0x8f0] sm:$0xff]
    %v398 = vld [vmem:[#allocation3 + $0x8f8] sm:$0xff]
    %v399 = vld [vmem:[#allocation3 + $0x900] sm:$0xff]
    %v400 = vld [vmem:[#allocation3 + $0x908] sm:$0xff]
    %v401 = vld [vmem:[#allocation3 + $0x910] sm:$0xff]
    %v402 = vld [vmem:[#allocation3 + $0x918] sm:$0xff]
    %v403 = vld [vmem:[#allocation3 + $0x920] sm:$0xff]
    %v404 = vld [vmem:[#allocation3 + $0x928] sm:$0xff]
    %v405 = vld [vmem:[#allocation3 + $0x930] sm:$0xff]
    %v406 = vld [vmem:[#allocation3 + $0x938] sm:$0xff]
    %v407 = vld [vmem:[#allocation3 + $0x940] sm:$0xff]
    %v408 = vld [vmem:[#allocation3 + $0x948] sm:$0xff]
    %v409 = vld [vmem:[#allocation3 + $0x950] sm:$0xff]
    %v410 = vld [vmem:[#allocation3 + $0x958] sm:$0xff]
    %v411 = vld [vmem:[#allocation3 + $0x960] sm:$0xff]
    %v412 = vld [vmem:[#allocation3 + $0x968] sm:$0xff]
    %v413 = vld [vmem:[#allocation3 + $0x970] sm:$0xff]
    %v414 = vld [vmem:[#allocation3 + $0x978] sm:$0xff]
    %v415 = vld [vmem:[#allocation3 + $0x980] sm:$0xff]
    %v416 = vld [vmem:[#allocation3 + $0x988] sm:$0xff]
    %v417 = vld [vmem:[#allocation3 + $0x990] sm:$0xff]
    %v418 = vld [vmem:[#allocation3 + $0x998] sm:$0xff]
    %v419 = vld [vmem:[#allocation3 + $0x9a0] sm:$0xff]
    %v420 = vld [vmem:[#allocation3 + $0x9a8] sm:$0xff]
    %v421 = vld [vmem:[#allocation3 + $0x9b0] sm:$0xff]
    %v422 = vld [vmem:[#allocation3 + $0x9b8] sm:$0xff]
    %v423 = vld [vmem:[#allocation3 + $0x9c0] sm:$0xff]
    %v424 = vld [vmem:[#allocation3 + $0x9c8] sm:$0xff]
    %v425 = vld [vmem:[#allocation3 + $0x9d0] sm:$0xff]
    %v426 = vld [vmem:[#allocation3 + $0x9d8] sm:$0xff]
    %v427 = vld [vmem:[#allocation3 + $0x9e0] sm:$0xff]
    %v428 = vld [vmem:[#allocation3 + $0x9e8] sm:$0xff]
    %v429 = vld [vmem:[#allocation3 + $0x9f0] sm:$0xff]
    %v430 = vld [vmem:[#allocation3 + $0x9f8] sm:$0xff]
    %v431 = vld [vmem:[#allocation3 + $0xa00] sm:$0xff]
    %v432 = vld [vmem:[#allocation3 + $0xa08] sm:$0xff]
    %v433 = vld [vmem:[#allocation3 + $0xa10] sm:$0xff]
    %v434 = vld [vmem:[#allocation3 + $0xa18] sm:$0xff]
    %v435 = vld [vmem:[#allocation3 + $0xa20] sm:$0xff]
    %v436 = vld [vmem:[#allocation3 + $0xa28] sm:$0xff]
    %v437 = vld [vmem:[#allocation3 + $0xa30] sm:$0xff]
    %v438 = vld [vmem:[#allocation3 + $0xa38] sm:$0xff]
    %v439 = vld [vmem:[#allocation3 + $0xa40] sm:$0xff]
    %v440 = vld [vmem:[#allocation3 + $0xa48] sm:$0xff]
    %v441 = vld [vmem:[#allocation3 + $0xa50] sm:$0xff]
    %v442 = vld [vmem:[#allocation3 + $0xa58] sm:$0xff]
    %v443 = vld [vmem:[#allocation3 + $0xa60] sm:$0xff]
    %v444 = vld [vmem:[#allocation3 + $0xa68] sm:$0xff]
    %v445 = vld [vmem:[#allocation3 + $0xa70] sm:$0xff]
    %v446 = vld [vmem:[#allocation3 + $0xa78] sm:$0xff]
    %v447 = vld [vmem:[#allocation3 + $0xa80] sm:$0xff]
    %v448 = vld [vmem:[#allocation3 + $0xa88] sm:$0xff]
    %v449 = vld [vmem:[#allocation3 + $0xa90] sm:$0xff]
    %v450 = vld [vmem:[#allocation3 + $0xa98] sm:$0xff]
    %v451 = vld [vmem:[#allocation3 + $0xaa0] sm:$0xff]
    %v452 = vld [vmem:[#allocation3 + $0xaa8] sm:$0xff]
    %v453 = vld [vmem:[#allocation3 + $0xab0] sm:$0xff]
    %v454 = vld [vmem:[#allocation3 + $0xab8] sm:$0xff]
    %v455 = vld [vmem:[#allocation3 + $0xac0] sm:$0xff]
    %v456 = vld [vmem:[#allocation3 + $0xac8] sm:$0xff]
    %v457 = vld [vmem:[#allocation3 + $0xad0] sm:$0xff]
    %v458 = vld [vmem:[#allocation3 + $0xad8] sm:$0xff]
    %v459 = vld [vmem:[#allocation3 + $0xae0] sm:$0xff]
    %v460 = vld [vmem:[#allocation3 + $0xae8] sm:$0xff]
    %v461 = vld [vmem:[#allocation3 + $0xaf0] sm:$0xff]
    %v462 = vld [vmem:[#allocation3 + $0xaf8] sm:$0xff]
    %v463 = vld [vmem:[#allocation3 + $0xb00] sm:$0xff]
    %v464 = vld [vmem:[#allocation3 + $0xb08] sm:$0xff]
    %v465 = vld [vmem:[#allocation3 + $0xb10] sm:$0xff]
    %v466 = vld [vmem:[#allocation3 + $0xb18] sm:$0xff]
    %v467 = vld [vmem:[#allocation3 + $0xb20] sm:$0xff]
    %v468 = vld [vmem:[#allocation3 + $0xb28] sm:$0xff]
    %v469 = vld [vmem:[#allocation3 + $0xb30] sm:$0xff]
    %v470 = vld [vmem:[#allocation3 + $0xb38] sm:$0xff]
    %v471 = vld [vmem:[#allocation3 + $0xb40] sm:$0xff]
    %v472 = vld [vmem:[#allocation3 + $0xb48] sm:$0xff]
    %v473 = vld [vmem:[#allocation3 + $0xb50] sm:$0xff]
    %v474 = vld [vmem:[#allocation3 + $0xb58] sm:$0xff]
    %v475 = vld [vmem:[#allocation3 + $0xb60] sm:$0xff]
    %v476 = vld [vmem:[#allocation3 + $0xb68] sm:$0xff]
    %v477 = vld [vmem:[#allocation3 + $0xb70] sm:$0xff]
    %v478 = vld [vmem:[#allocation3 + $0xb78] sm:$0xff]
    %v479 = vld [vmem:[#allocation3 + $0xb80] sm:$0xff]
    %v480 = vld [vmem:[#allocation3 + $0xb88] sm:$0xff]
    %v481 = vld [vmem:[#allocation3 + $0xb90] sm:$0xff]
    %v482 = vld [vmem:[#allocation3 + $0xb98] sm:$0xff]
    %v483 = vld [vmem:[#allocation3 + $0xba0] sm:$0xff]
    %v484 = vld [vmem:[#allocation3 + $0xba8] sm:$0xff]
    %v485 = vld [vmem:[#allocation3 + $0xbb0] sm:$0xff]
    %v486 = vld [vmem:[#allocation3 + $0xbb8] sm:$0xff]
    %v487 = vld [vmem:[#allocation3 + $0xbc0] sm:$0xff]
    %v488 = vld [vmem:[#allocation3 + $0xbc8] sm:$0xff]
    %v489 = vld [vmem:[#allocation3 + $0xbd0] sm:$0xff]
    %v490 = vld [vmem:[#allocation3 + $0xbd8] sm:$0xff]
    %v491 = vld [vmem:[#allocation3 + $0xbe0] sm:$0xff]
    %v492 = vld [vmem:[#allocation3 + $0xbe8] sm:$0xff]
    %v493 = vld [vmem:[#allocation3 + $0xbf0] sm:$0xff]
    %v494 = vld [vmem:[#allocation3 + $0xbf8] sm:$0xff]
    %v495 = vld [vmem:[#allocation3 + $0xc00] sm:$0xff]
    %v496 = vld [vmem:[#allocation3 + $0xc08] sm:$0xff]
    %v497 = vld [vmem:[#allocation3 + $0xc10] sm:$0xff]
    %v498 = vld [vmem:[#allocation3 + $0xc18] sm:$0xff]
    %v499 = vld [vmem:[#allocation3 + $0xc20] sm:$0xff]
    %v500 = vld [vmem:[#allocation3 + $0xc28] sm:$0xff]
    %v501 = vld [vmem:[#allocation3 + $0xc30] sm:$0xff]
    %v502 = vld [vmem:[#allocation3 + $0xc38] sm:$0xff]
    %v503 = vld [vmem:[#allocation3 + $0xc40] sm:$0xff]
    %v504 = vld [vmem:[#allocation3 + $0xc48] sm:$0xff]
    %v505 = vld [vmem:[#allocation3 + $0xc50] sm:$0xff]
    %v506 = vld [vmem:[#allocation3 + $0xc58] sm:$0xff]
    %v507 = vld [vmem:[#allocation3 + $0xc60] sm:$0xff]
    %v508 = vld [vmem:[#allocation3 + $0xc68] sm:$0xff]
    %v509 = vld [vmem:[#allocation3 + $0xc70] sm:$0xff]
    %v510 = vld [vmem:[#allocation3 + $0xc78] sm:$0xff]
    %v511 = vld [vmem:[#allocation3 + $0xc80] sm:$0xff]
    %v512 = vld [vmem:[#allocation3 + $0xc88] sm:$0xff]
    %v513 = vld [vmem:[#allocation3 + $0xc90] sm:$0xff]
    %v514 = vld [vmem:[#allocation3 + $0xc98] sm:$0xff]
    %v515 = vld [vmem:[#allocation3 + $0xca0] sm:$0xff]
    %v516 = vld [vmem:[#allocation3 + $0xca8] sm:$0xff]
    %v517 = vld [vmem:[#allocation3 + $0xcb0] sm:$0xff]
    %v518 = vld [vmem:[#allocation3 + $0xcb8] sm:$0xff]
    %v519 = vld [vmem:[#allocation3 + $0xcc0] sm:$0xff]
    %v520 = vld [vmem:[#allocation3 + $0xcc8] sm:$0xff]
    %v521 = vld [vmem:[#allocation3 + $0xcd0] sm:$0xff]
    %v522 = vld [vmem:[#allocation3 + $0xcd8] sm:$0xff]
    %v523 = vld [vmem:[#allocation3 + $0xce0] sm:$0xff]
    %v524 = vld [vmem:[#allocation3 + $0xce8] sm:$0xff]
    %v525 = vld [vmem:[#allocation3 + $0xcf0] sm:$0xff]
    %v526 = vld [vmem:[#allocation3 + $0xcf8] sm:$0xff]
    %v527 = vld [vmem:[#allocation3 + $0xd00] sm:$0xff]
    %v528 = vld [vmem:[#allocation3 + $0xd08] sm:$0xff]
    %v529 = vld [vmem:[#allocation3 + $0xd10] sm:$0xff]
    %v530 = vld [vmem:[#allocation3 + $0xd18] sm:$0xff]
    %v531 = vld [vmem:[#allocation3 + $0xd20] sm:$0xff]
    %v532 = vld [vmem:[#allocation3 + $0xd28] sm:$0xff]
    %v533 = vld [vmem:[#allocation3 + $0xd30] sm:$0xff]
    %v534 = vld [vmem:[#allocation3 + $0xd38] sm:$0xff]
    %v535 = vld [vmem:[#allocation3 + $0xd40] sm:$0xff]
    %v536 = vld [vmem:[#allocation3 + $0xd48] sm:$0xff]
    %v537 = vld [vmem:[#allocation3 + $0xd50] sm:$0xff]
    %v538 = vld [vmem:[#allocation3 + $0xd58] sm:$0xff]
    %v539 = vld [vmem:[#allocation3 + $0xd60] sm:$0xff]
    %v540 = vld [vmem:[#allocation3 + $0xd68] sm:$0xff]
    %v541 = vld [vmem:[#allocation3 + $0xd70] sm:$0xff]
    %v542 = vld [vmem:[#allocation3 + $0xd78] sm:$0xff]
    %v543 = vld [vmem:[#allocation3 + $0xd80] sm:$0xff]
    %v544 = vld [vmem:[#allocation3 + $0xd88] sm:$0xff]
    %v545 = vld [vmem:[#allocation3 + $0xd90] sm:$0xff]
    %v546 = vld [vmem:[#allocation3 + $0xd98] sm:$0xff]
    %v547 = vld [vmem:[#allocation3 + $0xda0] sm:$0xff]
    %v548 = vld [vmem:[#allocation3 + $0xda8] sm:$0xff]
    %v549 = vld [vmem:[#allocation3 + $0xdb0] sm:$0xff]
    %v550 = vld [vmem:[#allocation3 + $0xdb8] sm:$0xff]
    %v551 = vld [vmem:[#allocation3 + $0xdc0] sm:$0xff]
    %v552 = vld [vmem:[#allocation3 + $0xdc8] sm:$0xff]
    %v553 = vld [vmem:[#allocation3 + $0xdd0] sm:$0xff]
    %v554 = vld [vmem:[#allocation3 + $0xdd8] sm:$0xff]
    %v555 = vld [vmem:[#allocation3 + $0xde0] sm:$0xff]
    %v556 = vld [vmem:[#allocation3 + $0xde8] sm:$0xff]
    %v557 = vld [vmem:[#allocation3 + $0xdf0] sm:$0xff]
    %v558 = vld [vmem:[#allocation3 + $0xdf8] sm:$0xff]
    %v559 = vld [vmem:[#allocation3 + $0xe00] sm:$0xff]
    %v560 = vld [vmem:[#allocation3 + $0xe08] sm:$0xff]
    %v561 = vld [vmem:[#allocation3 + $0xe10] sm:$0xff]
    %v562 = vld [vmem:[#allocation3 + $0xe18] sm:$0xff]
    %v563 = vld [vmem:[#allocation3 + $0xe20] sm:$0xff]
    %v564 = vld [vmem:[#allocation3 + $0xe28] sm:$0xff]
    %v565 = vld [vmem:[#allocation3 + $0xe30] sm:$0xff]
    %v566 = vld [vmem:[#allocation3 + $0xe38] sm:$0xff]
    %v567 = vld [vmem:[#allocation3 + $0xe40] sm:$0xff]
    %v568 = vld [vmem:[#allocation3 + $0xe48] sm:$0xff]
    %v569 = vld [vmem:[#allocation3 + $0xe50] sm:$0xff]
    %v570 = vld [vmem:[#allocation3 + $0xe58] sm:$0xff]
    %v571 = vld [vmem:[#allocation3 + $0xe60] sm:$0xff]
    %v572 = vld [vmem:[#allocation3 + $0xe68] sm:$0xff]
    %v573 = vld [vmem:[#allocation3 + $0xe70] sm:$0xff]
    %v574 = vld [vmem:[#allocation3 + $0xe78] sm:$0xff]
    %v575 = vld [vmem:[#allocation3 + $0xe80] sm:$0xff]
    %v576 = vld [vmem:[#allocation3 + $0xe88] sm:$0xff]
    %v577 = vld [vmem:[#allocation3 + $0xe90] sm:$0xff]
    %v578 = vld [vmem:[#allocation3 + $0xe98] sm:$0xff]
    %v579 = vld [vmem:[#allocation3 + $0xea0] sm:$0xff]
    %v580 = vld [vmem:[#allocation3 + $0xea8] sm:$0xff]
    %v581 = vld [vmem:[#allocation3 + $0xeb0] sm:$0xff]
    %v582 = vld [vmem:[#allocation3 + $0xeb8] sm:$0xff]
    %v583 = vld [vmem:[#allocation3 + $0xec0] sm:$0xff]
    %v584 = vld [vmem:[#allocation3 + $0xec8] sm:$0xff]
    %v585 = vld [vmem:[#allocation3 + $0xed0] sm:$0xff]
    %v586 = vld [vmem:[#allocation3 + $0xed8] sm:$0xff]
    %v587 = vld [vmem:[#allocation3 + $0xee0] sm:$0xff]
    %v588 = vld [vmem:[#allocation3 + $0xee8] sm:$0xff]
    %v589 = vld [vmem:[#allocation3 + $0xef0] sm:$0xff]
    %v590 = vld [vmem:[#allocation3 + $0xef8] sm:$0xff]
    %v591 = vld [vmem:[#allocation3 + $0xf00] sm:$0xff]
    %v592 = vld [vmem:[#allocation3 + $0xf08] sm:$0xff]
    %v593 = vld [vmem:[#allocation3 + $0xf10] sm:$0xff]
    %v594 = vld [vmem:[#allocation3 + $0xf18] sm:$0xff]
    %v595 = vld [vmem:[#allocation3 + $0xf20] sm:$0xff]
    %v596 = vld [vmem:[#allocation3 + $0xf28] sm:$0xff]
    %v597 = vld [vmem:[#allocation3 + $0xf30] sm:$0xff]
    %v598 = vld [vmem:[#allocation3 + $0xf38] sm:$0xff]
    %v599 = vld [vmem:[#allocation3 + $0xf40] sm:$0xff]
    %v600 = vld [vmem:[#allocation3 + $0xf48] sm:$0xff]
    %v601 = vld [vmem:[#allocation3 + $0xf50] sm:$0xff]
    %v602 = vld [vmem:[#allocation3 + $0xf58] sm:$0xff]
    %v603 = vld [vmem:[#allocation3 + $0xf60] sm:$0xff]
    %v604 = vld [vmem:[#allocation3 + $0xf68] sm:$0xff]
    %v605 = vld [vmem:[#allocation3 + $0xf70] sm:$0xff]
    %v606 = vld [vmem:[#allocation3 + $0xf78] sm:$0xff]
    %v607 = vld [vmem:[#allocation3 + $0xf80] sm:$0xff]
    %v608 = vld [vmem:[#allocation3 + $0xf88] sm:$0xff]
    %v609 = vld [vmem:[#allocation3 + $0xf90] sm:$0xff]
    %v610 = vld [vmem:[#allocation3 + $0xf98] sm:$0xff]
    %v611 = vld [vmem:[#allocation3 + $0xfa0] sm:$0xff]
    %v612 = vld [vmem:[#allocation3 + $0xfa8] sm:$0xff]
    %v613 = vld [vmem:[#allocation3 + $0xfb0] sm:$0xff]
    %v614 = vld [vmem:[#allocation3 + $0xfb8] sm:$0xff]
    %v615 = vld [vmem:[#allocation3 + $0xfc0] sm:$0xff]
    %v616 = vld [vmem:[#allocation3 + $0xfc8] sm:$0xff]
    %v617 = vld [vmem:[#allocation3 + $0xfd0] sm:$0xff]
    %v618 = vld [vmem:[#allocation3 + $0xfd8] sm:$0xff]
    %v619 = vld [vmem:[#allocation3 + $0xfe0] sm:$0xff]
    %v620 = vld [vmem:[#allocation3 + $0xfe8] sm:$0xff]
    %v621 = vld [vmem:[#allocation3 + $0xff0] sm:$0xff]
    %v622 = vld [vmem:[#allocation3 + $0xff8] sm:$0xff]
    %v623 = vld [vmem:[#allocation3 + $0x1000] sm:$0xff]
    %v624 = vld [vmem:[#allocation3 + $0x1008] sm:$0xff]
    %v625 = vld [vmem:[#allocation3 + $0x1010] sm:$0xff]
    %v626 = vld [vmem:[#allocation3 + $0x1018] sm:$0xff]
    %v627 = vld [vmem:[#allocation3 + $0x1020] sm:$0xff]
    %v628 = vld [vmem:[#allocation3 + $0x1028] sm:$0xff]
    %v629 = vld [vmem:[#allocation3 + $0x1030] sm:$0xff]
    %v630 = vld [vmem:[#allocation3 + $0x1038] sm:$0xff]
    %v631 = vld [vmem:[#allocation3 + $0x1040] sm:$0xff]
    %v632 = vld [vmem:[#allocation3 + $0x1048] sm:$0xff]
    %v633 = vld [vmem:[#allocation3 + $0x1050] sm:$0xff]
    %v634 = vld [vmem:[#allocation3 + $0x1058] sm:$0xff]
    %v635 = vld [vmem:[#allocation3 + $0x1060] sm:$0xff]
    %v636 = vld [vmem:[#allocation3 + $0x1068] sm:$0xff]
    %v637 = vld [vmem:[#allocation3 + $0x1070] sm:$0xff]
    %v638 = vld [vmem:[#allocation3 + $0x1078] sm:$0xff]
    %v639 = vld [vmem:[#allocation3 + $0x1080] sm:$0xff]
    %v640 = vld [vmem:[#allocation3 + $0x1088] sm:$0xff]
    %v641 = vld [vmem:[#allocation3 + $0x1090] sm:$0xff]
    %v642 = vld [vmem:[#allocation3 + $0x1098] sm:$0xff]
    %v643 = vld [vmem:[#allocation3 + $0x10a0] sm:$0xff]
    %v644 = vld [vmem:[#allocation3 + $0x10a8] sm:$0xff]
    %v645 = vld [vmem:[#allocation3 + $0x10b0] sm:$0xff]
    %v646 = vld [vmem:[#allocation3 + $0x10b8] sm:$0xff]
    %v647 = vld [vmem:[#allocation3 + $0x10c0] sm:$0xff]
    %v648 = vld [vmem:[#allocation3 + $0x10c8] sm:$0xff]
    %v649 = vld [vmem:[#allocation3 + $0x10d0] sm:$0xff]
    %v650 = vld [vmem:[#allocation3 + $0x10d8] sm:$0xff]
    %v651 = vld [vmem:[#allocation3 + $0x10e0] sm:$0xff]
    %v652 = vld [vmem:[#allocation3 + $0x10e8] sm:$0xff]
    %v653 = vld [vmem:[#allocation3 + $0x10f0] sm:$0xff]
    %v654 = vld [vmem:[#allocation3 + $0x10f8] sm:$0xff]
    %v655 = vld [vmem:[#allocation3 + $0x1100] sm:$0xff]
    %v656 = vld [vmem:[#allocation3 + $0x1108] sm:$0xff]
    %v657 = vld [vmem:[#allocation3 + $0x1110] sm:$0xff]
    %v658 = vld [vmem:[#allocation3 + $0x1118] sm:$0xff]
    %v659 = vld [vmem:[#allocation3 + $0x1120] sm:$0xff]
    %v660 = vld [vmem:[#allocation3 + $0x1128] sm:$0xff]
    %v661 = vld [vmem:[#allocation3 + $0x1130] sm:$0xff]
    %v662 = vld [vmem:[#allocation3 + $0x1138] sm:$0xff]
    %v663 = vld [vmem:[#allocation3 + $0x1140] sm:$0xff]
    %v664 = vld [vmem:[#allocation3 + $0x1148] sm:$0xff]
    %v665 = vld [vmem:[#allocation3 + $0x1150] sm:$0xff]
    %v666 = vld [vmem:[#allocation3 + $0x1158] sm:$0xff]
    %v667 = vld [vmem:[#allocation3 + $0x1160] sm:$0xff]
    %v668 = vld [vmem:[#allocation3 + $0x1168] sm:$0xff]
    %v669 = vld [vmem:[#allocation3 + $0x1170] sm:$0xff]
    %v670 = vld [vmem:[#allocation3 + $0x1178] sm:$0xff]
    %v671 = vld [vmem:[#allocation3 + $0x1180] sm:$0xff]
    %v672 = vld [vmem:[#allocation3 + $0x1188] sm:$0xff]
    %v673 = vld [vmem:[#allocation3 + $0x1190] sm:$0xff]
    %v674 = vld [vmem:[#allocation3 + $0x1198] sm:$0xff]
    %v675 = vld [vmem:[#allocation3 + $0x11a0] sm:$0xff]
    %v676 = vld [vmem:[#allocation3 + $0x11a8] sm:$0xff]
    %v677 = vld [vmem:[#allocation3 + $0x11b0] sm:$0xff]
    %v678 = vld [vmem:[#allocation3 + $0x11b8] sm:$0xff]
    %v679 = vld [vmem:[#allocation3 + $0x11c0] sm:$0xff]
    %v680 = vld [vmem:[#allocation3 + $0x11c8] sm:$0xff]
    %v681 = vld [vmem:[#allocation3 + $0x11d0] sm:$0xff]
    %v682 = vld [vmem:[#allocation3 + $0x11d8] sm:$0xff]
    %v683 = vld [vmem:[#allocation3 + $0x11e0] sm:$0xff]
    %v684 = vld [vmem:[#allocation3 + $0x11e8] sm:$0xff]
    %v685 = vld [vmem:[#allocation3 + $0x11f0] sm:$0xff]
    %v686 = vld [vmem:[#allocation3 + $0x11f8] sm:$0xff]
    %v687 = vld [vmem:[#allocation3 + $0x1200] sm:$0xff]
    %v688 = vld [vmem:[#allocation3 + $0x1208] sm:$0xff]
    %v689 = vld [vmem:[#allocation3 + $0x1210] sm:$0xff]
    %v690 = vld [vmem:[#allocation3 + $0x1218] sm:$0xff]
    %v691 = vld [vmem:[#allocation3 + $0x1220] sm:$0xff]
    %v692 = vld [vmem:[#allocation3 + $0x1228] sm:$0xff]
    %v693 = vld [vmem:[#allocation3 + $0x1230] sm:$0xff]
    %v694 = vld [vmem:[#allocation3 + $0x1238] sm:$0xff]
    %v695 = vld [vmem:[#allocation3 + $0x1240] sm:$0xff]
    %v696 = vld [vmem:[#allocation3 + $0x1248] sm:$0xff]
    %v697 = vld [vmem:[#allocation3 + $0x1250] sm:$0xff]
    %v698 = vld [vmem:[#allocation3 + $0x1258] sm:$0xff]
    %v699 = vld [vmem:[#allocation3 + $0x1260] sm:$0xff]
    %v700 = vld [vmem:[#allocation3 + $0x1268] sm:$0xff]
    %v701 = vld [vmem:[#allocation3 + $0x1270] sm:$0xff]
    %v702 = vld [vmem:[#allocation3 + $0x1278] sm:$0xff]
    %v703 = vld [vmem:[#allocation3 + $0x1280] sm:$0xff]
    %v704 = vld [vmem:[#allocation3 + $0x1288] sm:$0xff]
    %v705 = vld [vmem:[#allocation3 + $0x1290] sm:$0xff]
    %v706 = vld [vmem:[#allocation3 + $0x1298] sm:$0xff]
    %v707 = vld [vmem:[#allocation3 + $0x12a0] sm:$0xff]
    %v708 = vld [vmem:[#allocation3 + $0x12a8] sm:$0xff]
    %v709 = vld [vmem:[#allocation3 + $0x12b0] sm:$0xff]
    %v710 = vld [vmem:[#allocation3 + $0x12b8] sm:$0xff]
    %v711 = vld [vmem:[#allocation3 + $0x12c0] sm:$0xff]
    %v712 = vld [vmem:[#allocation3 + $0x12c8] sm:$0xff]
    %v713 = vld [vmem:[#allocation3 + $0x12d0] sm:$0xff]
    %v714 = vld [vmem:[#allocation3 + $0x12d8] sm:$0xff]
    %v715 = vld [vmem:[#allocation3 + $0x12e0] sm:$0xff]
    %v716 = vld [vmem:[#allocation3 + $0x12e8] sm:$0xff]
    %v717 = vld [vmem:[#allocation3 + $0x12f0] sm:$0xff]
    %v718 = vld [vmem:[#allocation3 + $0x12f8] sm:$0xff]
    %v719 = vld [vmem:[#allocation3 + $0x1300] sm:$0xff]
    %v720 = vld [vmem:[#allocation3 + $0x1308] sm:$0xff]
    %v721 = vld [vmem:[#allocation3 + $0x1310] sm:$0xff]
    %v722 = vld [vmem:[#allocation3 + $0x1318] sm:$0xff]
    %v723 = vld [vmem:[#allocation3 + $0x1320] sm:$0xff]
    %v724 = vld [vmem:[#allocation3 + $0x1328] sm:$0xff]
    %v725 = vld [vmem:[#allocation3 + $0x1330] sm:$0xff]
    %v726 = vld [vmem:[#allocation3 + $0x1338] sm:$0xff]
    %v727 = vld [vmem:[#allocation3 + $0x1340] sm:$0xff]
    %v728 = vld [vmem:[#allocation3 + $0x1348] sm:$0xff]
    %v729 = vld [vmem:[#allocation3 + $0x1350] sm:$0xff]
    %v730 = vld [vmem:[#allocation3 + $0x1358] sm:$0xff]
    %v731 = vld [vmem:[#allocation3 + $0x1360] sm:$0xff]
    %v732 = vld [vmem:[#allocation3 + $0x1368] sm:$0xff]
    %v733 = vld [vmem:[#allocation3 + $0x1370] sm:$0xff]
    %v734 = vld [vmem:[#allocation3 + $0x1378] sm:$0xff]
    %v735 = vld [vmem:[#allocation3 + $0x1380] sm:$0xff]
    %v736 = vld [vmem:[#allocation3 + $0x1388] sm:$0xff]
    %v737 = vld [vmem:[#allocation3 + $0x1390] sm:$0xff]
    %v738 = vld [vmem:[#allocation3 + $0x1398] sm:$0xff]
    %v739 = vld [vmem:[#allocation3 + $0x13a0] sm:$0xff]
    %v740 = vld [vmem:[#allocation3 + $0x13a8] sm:$0xff]
    %v741 = vld [vmem:[#allocation3 + $0x13b0] sm:$0xff]
    %v742 = vld [vmem:[#allocation3 + $0x13b8] sm:$0xff]
    %v743 = vld [vmem:[#allocation3 + $0x13c0] sm:$0xff]
    %v744 = vld [vmem:[#allocation3 + $0x13c8] sm:$0xff]
    %v745 = vld [vmem:[#allocation3 + $0x13d0] sm:$0xff]
    %v746 = vld [vmem:[#allocation3 + $0x13d8] sm:$0xff]
    %v747 = vld [vmem:[#allocation3 + $0x13e0] sm:$0xff]
    %v748 = vld [vmem:[#allocation3 + $0x13e8] sm:$0xff]
    %v749 = vld [vmem:[#allocation3 + $0x13f0] sm:$0xff]
    %v750 = vld [vmem:[#allocation3 + $0x13f8] sm:$0xff]
    %v751 = vld [vmem:[#allocation3 + $0x1400] sm:$0xff]
    %v752 = vld [vmem:[#allocation3 + $0x1408] sm:$0xff]
    %v753 = vld [vmem:[#allocation3 + $0x1410] sm:$0xff]
    %v754 = vld [vmem:[#allocation3 + $0x1418] sm:$0xff]
    %v755 = vld [vmem:[#allocation3 + $0x1420] sm:$0xff]
    %v756 = vld [vmem:[#allocation3 + $0x1428] sm:$0xff]
    %v757 = vld [vmem:[#allocation3 + $0x1430] sm:$0xff]
    %v758 = vld [vmem:[#allocation3 + $0x1438] sm:$0xff]
    %v759 = vld [vmem:[#allocation3 + $0x1440] sm:$0xff]
    %v760 = vld [vmem:[#allocation3 + $0x1448] sm:$0xff]
    %v761 = vld [vmem:[#allocation3 + $0x1450] sm:$0xff]
    %v762 = vld [vmem:[#allocation3 + $0x1458] sm:$0xff]
    %v763 = vld [vmem:[#allocation3 + $0x1460] sm:$0xff]
    %v764 = vld [vmem:[#allocation3 + $0x1468] sm:$0xff]
    %v765 = vld [vmem:[#allocation3 + $0x1470] sm:$0xff]
    %v766 = vld [vmem:[#allocation3 + $0x1478] sm:$0xff]
    %v767 = vld [vmem:[#allocation3 + $0x1480] sm:$0xff]
    %v768 = vld [vmem:[#allocation3 + $0x1488] sm:$0xff]
    %v769 = vld [vmem:[#allocation3 + $0x1490] sm:$0xff]
    %v770 = vld [vmem:[#allocation3 + $0x1498] sm:$0xff]
    %v771 = vld [vmem:[#allocation3 + $0x14a0] sm:$0xff]
    %v772 = vld [vmem:[#allocation3 + $0x14a8] sm:$0xff]
    %v773 = vld [vmem:[#allocation3 + $0x14b0] sm:$0xff]
    %v774 = vld [vmem:[#allocation3 + $0x14b8] sm:$0xff]
    %v775 = vld [vmem:[#allocation3 + $0x14c0] sm:$0xff]
    %v776 = vld [vmem:[#allocation3 + $0x14c8] sm:$0xff]
    %v777 = vld [vmem:[#allocation3 + $0x14d0] sm:$0xff]
    %v778 = vld [vmem:[#allocation3 + $0x14d8] sm:$0xff]
    %v779 = vld [vmem:[#allocation3 + $0x14e0] sm:$0xff]
    %v780 = vld [vmem:[#allocation3 + $0x14e8] sm:$0xff]
    %v781 = vld [vmem:[#allocation3 + $0x14f0] sm:$0xff]
    %v782 = vld [vmem:[#allocation3 + $0x14f8] sm:$0xff]
    %v783 = vld [vmem:[#allocation3 + $0x1500] sm:$0xff]
    %v784 = vld [vmem:[#allocation3 + $0x1508] sm:$0xff]
    %v785 = vld [vmem:[#allocation3 + $0x1510] sm:$0xff]
    %v786 = vld [vmem:[#allocation3 + $0x1518] sm:$0xff]
    %v787 = vld [vmem:[#allocation3 + $0x1520] sm:$0xff]
    %v788 = vld [vmem:[#allocation3 + $0x1528] sm:$0xff]
    %v789 = vld [vmem:[#allocation3 + $0x1530] sm:$0xff]
    %v790 = vld [vmem:[#allocation3 + $0x1538] sm:$0xff]
    %v791 = vld [vmem:[#allocation3 + $0x1540] sm:$0xff]
    %v792 = vld [vmem:[#allocation3 + $0x1548] sm:$0xff]
    %v793 = vld [vmem:[#allocation3 + $0x1550] sm:$0xff]
    %v794 = vld [vmem:[#allocation3 + $0x1558] sm:$0xff]
    %v795 = vld [vmem:[#allocation3 + $0x1560] sm:$0xff]
    %v796 = vld [vmem:[#allocation3 + $0x1568] sm:$0xff]
    %v797 = vld [vmem:[#allocation3 + $0x1570] sm:$0xff]
    %v798 = vld [vmem:[#allocation3 + $0x1578] sm:$0xff]
    %v799 = vld [vmem:[#allocation3 + $0x1580] sm:$0xff]
    %v800 = vld [vmem:[#allocation3 + $0x1588] sm:$0xff]
    %v801 = vld [vmem:[#allocation3 + $0x1590] sm:$0xff]
    %v802 = vld [vmem:[#allocation3 + $0x1598] sm:$0xff]
    %v803 = vld [vmem:[#allocation3 + $0x15a0] sm:$0xff]
    %v804 = vld [vmem:[#allocation3 + $0x15a8] sm:$0xff]
    %v805 = vld [vmem:[#allocation3 + $0x15b0] sm:$0xff]
    %v806 = vld [vmem:[#allocation3 + $0x15b8] sm:$0xff]
    %v807 = vld [vmem:[#allocation3 + $0x15c0] sm:$0xff]
    %v808 = vld [vmem:[#allocation3 + $0x15c8] sm:$0xff]
    %v809 = vld [vmem:[#allocation3 + $0x15d0] sm:$0xff]
    %v810 = vld [vmem:[#allocation3 + $0x15d8] sm:$0xff]
    %v811 = vld [vmem:[#allocation3 + $0x15e0] sm:$0xff]
    %v812 = vld [vmem:[#allocation3 + $0x15e8] sm:$0xff]
    %v813 = vld [vmem:[#allocation3 + $0x15f0] sm:$0xff]
    %v814 = vld [vmem:[#allocation3 + $0x15f8] sm:$0xff]
    %v815 = vld [vmem:[#allocation3 + $0x1600] sm:$0xff]
    %v816 = vld [vmem:[#allocation3 + $0x1608] sm:$0xff]
    %v817 = vld [vmem:[#allocation3 + $0x1610] sm:$0xff]
    %v818 = vld [vmem:[#allocation3 + $0x1618] sm:$0xff]
    %v819 = vld [vmem:[#allocation3 + $0x1620] sm:$0xff]
    %v820 = vld [vmem:[#allocation3 + $0x1628] sm:$0xff]
    %v821 = vld [vmem:[#allocation3 + $0x1630] sm:$0xff]
    %v822 = vld [vmem:[#allocation3 + $0x1638] sm:$0xff]
    %v823 = vld [vmem:[#allocation3 + $0x1640] sm:$0xff]
    %v824 = vld [vmem:[#allocation3 + $0x1648] sm:$0xff]
    %v825 = vld [vmem:[#allocation3 + $0x1650] sm:$0xff]
    %v826 = vld [vmem:[#allocation3 + $0x1658] sm:$0xff]
    %v827 = vld [vmem:[#allocation3 + $0x1660] sm:$0xff]
    %v828 = vld [vmem:[#allocation3 + $0x1668] sm:$0xff]
    %v829 = vld [vmem:[#allocation3 + $0x1670] sm:$0xff]
    %v830 = vld [vmem:[#allocation3 + $0x1678] sm:$0xff]
    %v831 = vld [vmem:[#allocation3 + $0x1680] sm:$0xff]
    %v832 = vld [vmem:[#allocation3 + $0x1688] sm:$0xff]
    %v833 = vld [vmem:[#allocation3 + $0x1690] sm:$0xff]
    %v834 = vld [vmem:[#allocation3 + $0x1698] sm:$0xff]
    %v835 = vld [vmem:[#allocation3 + $0x16a0] sm:$0xff]
    %v836 = vld [vmem:[#allocation3 + $0x16a8] sm:$0xff]
    %v837 = vld [vmem:[#allocation3 + $0x16b0] sm:$0xff]
    %v838 = vld [vmem:[#allocation3 + $0x16b8] sm:$0xff]
    %v839 = vld [vmem:[#allocation3 + $0x16c0] sm:$0xff]
    %v840 = vld [vmem:[#allocation3 + $0x16c8] sm:$0xff]
    %v841 = vld [vmem:[#allocation3 + $0x16d0] sm:$0xff]
    %v842 = vld [vmem:[#allocation3 + $0x16d8] sm:$0xff]
    %v843 = vld [vmem:[#allocation3 + $0x16e0] sm:$0xff]
    %v844 = vld [vmem:[#allocation3 + $0x16e8] sm:$0xff]
    %v845 = vld [vmem:[#allocation3 + $0x16f0] sm:$0xff]
    %v846 = vld [vmem:[#allocation3 + $0x16f8] sm:$0xff]
    %v847 = vld [vmem:[#allocation3 + $0x1700] sm:$0xff]
    %v848 = vld [vmem:[#allocation3 + $0x1708] sm:$0xff]
    %v849 = vld [vmem:[#allocation3 + $0x1710] sm:$0xff]
    %v850 = vld [vmem:[#allocation3 + $0x1718] sm:$0xff]
    %v851 = vld [vmem:[#allocation3 + $0x1720] sm:$0xff]
    %v852 = vld [vmem:[#allocation3 + $0x1728] sm:$0xff]
    %v853 = vld [vmem:[#allocation3 + $0x1730] sm:$0xff]
    %v854 = vld [vmem:[#allocation3 + $0x1738] sm:$0xff]
    %v855 = vld [vmem:[#allocation3 + $0x1740] sm:$0xff]
    %v856 = vld [vmem:[#allocation3 + $0x1748] sm:$0xff]
    %v857 = vld [vmem:[#allocation3 + $0x1750] sm:$0xff]
    %v858 = vld [vmem:[#allocation3 + $0x1758] sm:$0xff]
    %v859 = vld [vmem:[#allocation3 + $0x1760] sm:$0xff]
    %v860 = vld [vmem:[#allocation3 + $0x1768] sm:$0xff]
    %v861 = vld [vmem:[#allocation3 + $0x1770] sm:$0xff]
    %v862 = vld [vmem:[#allocation3 + $0x1778] sm:$0xff]
    %v863 = vld [vmem:[#allocation3 + $0x1780] sm:$0xff]
    %v864 = vld [vmem:[#allocation3 + $0x1788] sm:$0xff]
    %v865 = vld [vmem:[#allocation3 + $0x1790] sm:$0xff]
    %v866 = vld [vmem:[#allocation3 + $0x1798] sm:$0xff]
    %v867 = vld [vmem:[#allocation3 + $0x17a0] sm:$0xff]
    %v868 = vld [vmem:[#allocation3 + $0x17a8] sm:$0xff]
    %v869 = vld [vmem:[#allocation3 + $0x17b0] sm:$0xff]
    %v870 = vld [vmem:[#allocation3 + $0x17b8] sm:$0xff]
    %v871 = vld [vmem:[#allocation3 + $0x17c0] sm:$0xff]
    %v872 = vld [vmem:[#allocation3 + $0x17c8] sm:$0xff]
    %v873 = vld [vmem:[#allocation3 + $0x17d0] sm:$0xff]
    %v874 = vld [vmem:[#allocation3 + $0x17d8] sm:$0xff]
    %v875 = vld [vmem:[#allocation3 + $0x17e0] sm:$0xff]
    %v876 = vld [vmem:[#allocation3 + $0x17e8] sm:$0xff]
    %v877 = vld [vmem:[#allocation3 + $0x17f0] sm:$0xff]
    %v878 = vld [vmem:[#allocation3 + $0x17f8] sm:$0xff]
    %v879 = vld [vmem:[#allocation3 + $0x1800] sm:$0xff]
    %v880 = vld [vmem:[#allocation3 + $0x1808] sm:$0xff]
    %v881 = vld [vmem:[#allocation3 + $0x1810] sm:$0xff]
    %v882 = vld [vmem:[#allocation3 + $0x1818] sm:$0xff]
    %v883 = vld [vmem:[#allocation3 + $0x1820] sm:$0xff]
    %v884 = vld [vmem:[#allocation3 + $0x1828] sm:$0xff]
    %v885 = vld [vmem:[#allocation3 + $0x1830] sm:$0xff]
    %v886 = vld [vmem:[#allocation3 + $0x1838] sm:$0xff]
    %v887 = vld [vmem:[#allocation3 + $0x1840] sm:$0xff]
    %v888 = vld [vmem:[#allocation3 + $0x1848] sm:$0xff]
    %v889 = vld [vmem:[#allocation3 + $0x1850] sm:$0xff]
    %v890 = vld [vmem:[#allocation3 + $0x1858] sm:$0xff]
    %v891 = vld [vmem:[#allocation3 + $0x1860] sm:$0xff]
    %v892 = vld [vmem:[#allocation3 + $0x1868] sm:$0xff]
    %v893 = vld [vmem:[#allocation3 + $0x1870] sm:$0xff]
    %v894 = vld [vmem:[#allocation3 + $0x1878] sm:$0xff]
    %v895 = vld [vmem:[#allocation3 + $0x1880] sm:$0xff]
    %v896 = vld [vmem:[#allocation3 + $0x1888] sm:$0xff]
    %v897 = vld [vmem:[#allocation3 + $0x1890] sm:$0xff]
    %v898 = vld [vmem:[#allocation3 + $0x1898] sm:$0xff]
    %v899 = vld [vmem:[#allocation3 + $0x18a0] sm:$0xff]
    %v900 = vld [vmem:[#allocation3 + $0x18a8] sm:$0xff]
    %v901 = vld [vmem:[#allocation3 + $0x18b0] sm:$0xff]
    %v902 = vld [vmem:[#allocation3 + $0x18b8] sm:$0xff]
    %v903 = vld [vmem:[#allocation3 + $0x18c0] sm:$0xff]
    %v904 = vld [vmem:[#allocation3 + $0x18c8] sm:$0xff]
    %v905 = vld [vmem:[#allocation3 + $0x18d0] sm:$0xff]
    %v906 = vld [vmem:[#allocation3 + $0x18d8] sm:$0xff]
    %v907 = vld [vmem:[#allocation3 + $0x18e0] sm:$0xff]
    %v908 = vld [vmem:[#allocation3 + $0x18e8] sm:$0xff]
    %v909 = vld [vmem:[#allocation3 + $0x18f0] sm:$0xff]
    %v910 = vld [vmem:[#allocation3 + $0x18f8] sm:$0xff]
    %v911 = vld [vmem:[#allocation3 + $0x1900] sm:$0xff]
    %v912 = vld [vmem:[#allocation3 + $0x1908] sm:$0xff]
    %v913 = vld [vmem:[#allocation3 + $0x1910] sm:$0xff]
    %v914 = vld [vmem:[#allocation3 + $0x1918] sm:$0xff]
    %v915 = vld [vmem:[#allocation3 + $0x1920] sm:$0xff]
    %v916 = vld [vmem:[#allocation3 + $0x1928] sm:$0xff]
    %v917 = vld [vmem:[#allocation3 + $0x1930] sm:$0xff]
    %v918 = vld [vmem:[#allocation3 + $0x1938] sm:$0xff]
    %v919 = vld [vmem:[#allocation3 + $0x1940] sm:$0xff]
    %v920 = vld [vmem:[#allocation3 + $0x1948] sm:$0xff]
    %v921 = vld [vmem:[#allocation3 + $0x1950] sm:$0xff]
    %v922 = vld [vmem:[#allocation3 + $0x1958] sm:$0xff]
    %v923 = vld [vmem:[#allocation3 + $0x1960] sm:$0xff]
    %v924 = vld [vmem:[#allocation3 + $0x1968] sm:$0xff]
    %v925 = vld [vmem:[#allocation3 + $0x1970] sm:$0xff]
    %v926 = vld [vmem:[#allocation3 + $0x1978] sm:$0xff]
    %v927 = vld [vmem:[#allocation3 + $0x1980] sm:$0xff]
    %v928 = vld [vmem:[#allocation3 + $0x1988] sm:$0xff]
    %v929 = vld [vmem:[#allocation3 + $0x1990] sm:$0xff]
    %v930 = vld [vmem:[#allocation3 + $0x1998] sm:$0xff]
    %v931 = vld [vmem:[#allocation3 + $0x19a0] sm:$0xff]
    %v932 = vld [vmem:[#allocation3 + $0x19a8] sm:$0xff]
    %v933 = vld [vmem:[#allocation3 + $0x19b0] sm:$0xff]
    %v934 = vld [vmem:[#allocation3 + $0x19b8] sm:$0xff]
    %v935 = vld [vmem:[#allocation3 + $0x19c0] sm:$0xff]
    %v936 = vld [vmem:[#allocation3 + $0x19c8] sm:$0xff]
    %v937 = vld [vmem:[#allocation3 + $0x19d0] sm:$0xff]
    %v938 = vld [vmem:[#allocation3 + $0x19d8] sm:$0xff]
    %v939 = vld [vmem:[#allocation3 + $0x19e0] sm:$0xff]
    %v940 = vld [vmem:[#allocation3 + $0x19e8] sm:$0xff]
    %v941 = vld [vmem:[#allocation3 + $0x19f0] sm:$0xff]
    %v942 = vld [vmem:[#allocation3 + $0x19f8] sm:$0xff]
    %v943 = vld [vmem:[#allocation3 + $0x1a00] sm:$0xff]
    %v944 = vld [vmem:[#allocation3 + $0x1a08] sm:$0xff]
    %v945 = vld [vmem:[#allocation3 + $0x1a10] sm:$0xff]
    %v946 = vld [vmem:[#allocation3 + $0x1a18] sm:$0xff]
    %v947 = vld [vmem:[#allocation3 + $0x1a20] sm:$0xff]
    %v948 = vld [vmem:[#allocation3 + $0x1a28] sm:$0xff]
    %v949 = vld [vmem:[#allocation3 + $0x1a30] sm:$0xff]
    %v950 = vld [vmem:[#allocation3 + $0x1a38] sm:$0xff]
    %v951 = vld [vmem:[#allocation3 + $0x1a40] sm:$0xff]
    %v952 = vld [vmem:[#allocation3 + $0x1a48] sm:$0xff]
    %v953 = vld [vmem:[#allocation3 + $0x1a50] sm:$0xff]
    %v954 = vld [vmem:[#allocation3 + $0x1a58] sm:$0xff]
    %v955 = vld [vmem:[#allocation3 + $0x1a60] sm:$0xff]
    %v956 = vld [vmem:[#allocation3 + $0x1a68] sm:$0xff]
    %v957 = vld [vmem:[#allocation3 + $0x1a70] sm:$0xff]
    %v958 = vld [vmem:[#allocation3 + $0x1a78] sm:$0xff]
    %v959 = vld [vmem:[#allocation3 + $0x1a80] sm:$0xff]
    %v960 = vld [vmem:[#allocation3 + $0x1a88] sm:$0xff]
    %v961 = vld [vmem:[#allocation3 + $0x1a90] sm:$0xff]
    %v962 = vld [vmem:[#allocation3 + $0x1a98] sm:$0xff]
    %v963 = vld [vmem:[#allocation3 + $0x1aa0] sm:$0xff]
    %v964 = vld [vmem:[#allocation3 + $0x1aa8] sm:$0xff]
    %v965 = vld [vmem:[#allocation3 + $0x1ab0] sm:$0xff]
    %v966 = vld [vmem:[#allocation3 + $0x1ab8] sm:$0xff]
    %v967 = vld [vmem:[#allocation3 + $0x1ac0] sm:$0xff]
    %v968 = vld [vmem:[#allocation3 + $0x1ac8] sm:$0xff]
    %v969 = vld [vmem:[#allocation3 + $0x1ad0] sm:$0xff]
    %v970 = vld [vmem:[#allocation3 + $0x1ad8] sm:$0xff]
    %v971 = vld [vmem:[#allocation3 + $0x1ae0] sm:$0xff]
    %v972 = vld [vmem:[#allocation3 + $0x1ae8] sm:$0xff]
    %v973 = vld [vmem:[#allocation3 + $0x1af0] sm:$0xff]
    %v974 = vld [vmem:[#allocation3 + $0x1af8] sm:$0xff]
    %v975 = vld [vmem:[#allocation3 + $0x1b00] sm:$0xff]
    %v976 = vld [vmem:[#allocation3 + $0x1b08] sm:$0xff]
    %v977 = vld [vmem:[#allocation3 + $0x1b10] sm:$0xff]
    %v978 = vld [vmem:[#allocation3 + $0x1b18] sm:$0xff]
    %v979 = vld [vmem:[#allocation3 + $0x1b20] sm:$0xff]
    %v980 = vld [vmem:[#allocation3 + $0x1b28] sm:$0xff]
    %v981 = vld [vmem:[#allocation3 + $0x1b30] sm:$0xff]
    %v982 = vld [vmem:[#allocation3 + $0x1b38] sm:$0xff]
    %v983 = vld [vmem:[#allocation3 + $0x1b40] sm:$0xff]
    %v984 = vld [vmem:[#allocation3 + $0x1b48] sm:$0xff]
    %v985 = vld [vmem:[#allocation3 + $0x1b50] sm:$0xff]
    %v986 = vld [vmem:[#allocation3 + $0x1b58] sm:$0xff]
    %v987 = vld [vmem:[#allocation3 + $0x1b60] sm:$0xff]
    %v988 = vld [vmem:[#allocation3 + $0x1b68] sm:$0xff]
    %v989 = vld [vmem:[#allocation3 + $0x1b70] sm:$0xff]
    %v990 = vld [vmem:[#allocation3 + $0x1b78] sm:$0xff]
    %v991 = vld [vmem:[#allocation3 + $0x1b80] sm:$0xff]
    %v992 = vld [vmem:[#allocation3 + $0x1b88] sm:$0xff]
    %v993 = vld [vmem:[#allocation3 + $0x1b90] sm:$0xff]
    %v994 = vld [vmem:[#allocation3 + $0x1b98] sm:$0xff]
    %v995 = vld [vmem:[#allocation3 + $0x1ba0] sm:$0xff]
    %v996 = vld [vmem:[#allocation3 + $0x1ba8] sm:$0xff]
    %v997 = vld [vmem:[#allocation3 + $0x1bb0] sm:$0xff]
    %v998 = vld [vmem:[#allocation3 + $0x1bb8] sm:$0xff]
    %v999 = vld [vmem:[#allocation3 + $0x1bc0] sm:$0xff]
    %v1000 = vld [vmem:[#allocation3 + $0x1bc8] sm:$0xff]
    %v1001 = vld [vmem:[#allocation3 + $0x1bd0] sm:$0xff]
    %v1002 = vld [vmem:[#allocation3 + $0x1bd8] sm:$0xff]
    %v1003 = vld [vmem:[#allocation3 + $0x1be0] sm:$0xff]
    %v1004 = vld [vmem:[#allocation3 + $0x1be8] sm:$0xff]
    %v1005 = vld [vmem:[#allocation3 + $0x1bf0] sm:$0xff]
    %v1006 = vld [vmem:[#allocation3 + $0x1bf8] sm:$0xff]
    %v1007 = vld [vmem:[#allocation3 + $0x1c00] sm:$0xff]
    %v1008 = vld [vmem:[#allocation3 + $0x1c08] sm:$0xff]
    %v1009 = vld [vmem:[#allocation3 + $0x1c10] sm:$0xff]
    %v1010 = vld [vmem:[#allocation3 + $0x1c18] sm:$0xff]
    %v1011 = vld [vmem:[#allocation3 + $0x1c20] sm:$0xff]
    %v1012 = vld [vmem:[#allocation3 + $0x1c28] sm:$0xff]
    %v1013 = vld [vmem:[#allocation3 + $0x1c30] sm:$0xff]
    %v1014 = vld [vmem:[#allocation3 + $0x1c38] sm:$0xff]
    %v1015 = vld [vmem:[#allocation3 + $0x1c40] sm:$0xff]
    %v1016 = vld [vmem:[#allocation3 + $0x1c48] sm:$0xff]
    %v1017 = vld [vmem:[#allocation3 + $0x1c50] sm:$0xff]
    %v1018 = vld [vmem:[#allocation3 + $0x1c58] sm:$0xff]
    %v1019 = vld [vmem:[#allocation3 + $0x1c60] sm:$0xff]
    %v1020 = vld [vmem:[#allocation3 + $0x1c68] sm:$0xff]
    %v1021 = vld [vmem:[#allocation3 + $0x1c70] sm:$0xff]
    %v1022 = vld [vmem:[#allocation3 + $0x1c78] sm:$0xff]
    %v1023 = vld [vmem:[#allocation3 + $0x1c80] sm:$0xff]
    %v1024 = vld [vmem:[#allocation3 + $0x1c88] sm:$0xff]
    %v1025 = vld [vmem:[#allocation3 + $0x1c90] sm:$0xff]
    %v1026 = vld [vmem:[#allocation3 + $0x1c98] sm:$0xff]
    %v1027 = vld [vmem:[#allocation3 + $0x1ca0] sm:$0xff]
    %v1028 = vld [vmem:[#allocation3 + $0x1ca8] sm:$0xff]
    %v1029 = vld [vmem:[#allocation3 + $0x1cb0] sm:$0xff]
    %v1030 = vld [vmem:[#allocation3 + $0x1cb8] sm:$0xff]
    %v1031 = vld [vmem:[#allocation3 + $0x1cc0] sm:$0xff]
    %v1032 = vld [vmem:[#allocation3 + $0x1cc8] sm:$0xff]
    %v1033 = vld [vmem:[#allocation3 + $0x1cd0] sm:$0xff]
    %v1034 = vld [vmem:[#allocation3 + $0x1cd8] sm:$0xff]
    %v1035 = vld [vmem:[#allocation3 + $0x1ce0] sm:$0xff]
    %v1036 = vld [vmem:[#allocation3 + $0x1ce8] sm:$0xff]
    %v1037 = vld [vmem:[#allocation3 + $0x1cf0] sm:$0xff]
    %v1038 = vld [vmem:[#allocation3 + $0x1cf8] sm:$0xff]
    %v1039 = vld [vmem:[#allocation3 + $0x1d00] sm:$0xff]
    %v1040 = vld [vmem:[#allocation3 + $0x1d08] sm:$0xff]
    %v1041 = vld [vmem:[#allocation3 + $0x1d10] sm:$0xff]
    %v1042 = vld [vmem:[#allocation3 + $0x1d18] sm:$0xff]
    %v1043 = vld [vmem:[#allocation3 + $0x1d20] sm:$0xff]
    %v1044 = vld [vmem:[#allocation3 + $0x1d28] sm:$0xff]
    %v1045 = vld [vmem:[#allocation3 + $0x1d30] sm:$0xff]
    %v1046 = vld [vmem:[#allocation3 + $0x1d38] sm:$0xff]
    %v1047 = vld [vmem:[#allocation3 + $0x1d40] sm:$0xff]
    %v1048 = vld [vmem:[#allocation3 + $0x1d48] sm:$0xff]
    %v1049 = vld [vmem:[#allocation3 + $0x1d50] sm:$0xff]
    %v1050 = vld [vmem:[#allocation3 + $0x1d58] sm:$0xff]
    %v1051 = vld [vmem:[#allocation3 + $0x1d60] sm:$0xff]
    %v1052 = vld [vmem:[#allocation3 + $0x1d68] sm:$0xff]
    %v1053 = vld [vmem:[#allocation3 + $0x1d70] sm:$0xff]
    %v1054 = vld [vmem:[#allocation3 + $0x1d78] sm:$0xff]
    %v1055 = vld [vmem:[#allocation3 + $0x1d80] sm:$0xff]
    %v1056 = vld [vmem:[#allocation3 + $0x1d88] sm:$0xff]
    %v1057 = vld [vmem:[#allocation3 + $0x1d90] sm:$0xff]
    %v1058 = vld [vmem:[#allocation3 + $0x1d98] sm:$0xff]
    %v1059 = vld [vmem:[#allocation3 + $0x1da0] sm:$0xff]
    %v1060 = vld [vmem:[#allocation3 + $0x1da8] sm:$0xff]
    %v1061 = vld [vmem:[#allocation3 + $0x1db0] sm:$0xff]
    %v1062 = vld [vmem:[#allocation3 + $0x1db8] sm:$0xff]
    %v1063 = vld [vmem:[#allocation3 + $0x1dc0] sm:$0xff]
    %v1064 = vld [vmem:[#allocation3 + $0x1dc8] sm:$0xff]
    %v1065 = vld [vmem:[#allocation3 + $0x1dd0] sm:$0xff]
    %v1066 = vld [vmem:[#allocation3 + $0x1dd8] sm:$0xff]
    %v1067 = vld [vmem:[#allocation3 + $0x1de0] sm:$0xff]
    %v1068 = vld [vmem:[#allocation3 + $0x1de8] sm:$0xff]
    %v1069 = vld [vmem:[#allocation3 + $0x1df0] sm:$0xff]
    %v1070 = vld [vmem:[#allocation3 + $0x1df8] sm:$0xff]
    %v1071 = vld [vmem:[#allocation3 + $0x1e00] sm:$0xff]
    %v1072 = vld [vmem:[#allocation3 + $0x1e08] sm:$0xff]
    %v1073 = vld [vmem:[#allocation3 + $0x1e10] sm:$0xff]
    %v1074 = vld [vmem:[#allocation3 + $0x1e18] sm:$0xff]
    %v1075 = vld [vmem:[#allocation3 + $0x1e20] sm:$0xff]
    %v1076 = vld [vmem:[#allocation3 + $0x1e28] sm:$0xff]
    %v1077 = vld [vmem:[#allocation3 + $0x1e30] sm:$0xff]
    %v1078 = vld [vmem:[#allocation3 + $0x1e38] sm:$0xff]
    %v1079 = vld [vmem:[#allocation3 + $0x1e40] sm:$0xff]
    %v1080 = vld [vmem:[#allocation3 + $0x1e48] sm:$0xff]
    %v1081 = vld [vmem:[#allocation3 + $0x1e50] sm:$0xff]
    %v1082 = vld [vmem:[#allocation3 + $0x1e58] sm:$0xff]
    %v1083 = vld [vmem:[#allocation3 + $0x1e60] sm:$0xff]
    %v1084 = vld [vmem:[#allocation3 + $0x1e68] sm:$0xff]
    %v1085 = vld [vmem:[#allocation3 + $0x1e70] sm:$0xff]
    %v1086 = vld [vmem:[#allocation3 + $0x1e78] sm:$0xff]
    %v1087 = vld [vmem:[#allocation3 + $0x1e80] sm:$0xff]
    %v1088 = vld [vmem:[#allocation3 + $0x1e88] sm:$0xff]
    %v1089 = vld [vmem:[#allocation3 + $0x1e90] sm:$0xff]
    %v1090 = vld [vmem:[#allocation3 + $0x1e98] sm:$0xff]
    %v1091 = vld [vmem:[#allocation3 + $0x1ea0] sm:$0xff]
    %v1092 = vld [vmem:[#allocation3 + $0x1ea8] sm:$0xff]
    %v1093 = vld [vmem:[#allocation3 + $0x1eb0] sm:$0xff]
    %v1094 = vld [vmem:[#allocation3 + $0x1eb8] sm:$0xff]
    %v1095 = vld [vmem:[#allocation3 + $0x1ec0] sm:$0xff]
    %v1096 = vld [vmem:[#allocation3 + $0x1ec8] sm:$0xff]
    %v1097 = vld [vmem:[#allocation3 + $0x1ed0] sm:$0xff]
    %v1098 = vld [vmem:[#allocation3 + $0x1ed8] sm:$0xff]
    %v1099 = vld [vmem:[#allocation3 + $0x1ee0] sm:$0xff]
    %v1100 = vld [vmem:[#allocation3 + $0x1ee8] sm:$0xff]
    %v1101 = vld [vmem:[#allocation3 + $0x1ef0] sm:$0xff]
    %v1102 = vld [vmem:[#allocation3 + $0x1ef8] sm:$0xff]
    %v1103 = vld [vmem:[#allocation3 + $0x1f00] sm:$0xff]
    %v1104 = vld [vmem:[#allocation3 + $0x1f08] sm:$0xff]
    %v1105 = vld [vmem:[#allocation3 + $0x1f10] sm:$0xff]
    %v1106 = vld [vmem:[#allocation3 + $0x1f18] sm:$0xff]
    %v1107 = vld [vmem:[#allocation3 + $0x1f20] sm:$0xff]
    %v1108 = vld [vmem:[#allocation3 + $0x1f28] sm:$0xff]
    %v1109 = vld [vmem:[#allocation3 + $0x1f30] sm:$0xff]
    %v1110 = vld [vmem:[#allocation3 + $0x1f38] sm:$0xff]
    %v1111 = vld [vmem:[#allocation3 + $0x1f40] sm:$0xff]
    %v1112 = vld [vmem:[#allocation3 + $0x1f48] sm:$0xff]
    %v1113 = vld [vmem:[#allocation3 + $0x1f50] sm:$0xff]
    %v1114 = vld [vmem:[#allocation3 + $0x1f58] sm:$0xff]
    %v1115 = vld [vmem:[#allocation3 + $0x1f60] sm:$0xff]
    %v1116 = vld [vmem:[#allocation3 + $0x1f68] sm:$0xff]
    %v1117 = vld [vmem:[#allocation3 + $0x1f70] sm:$0xff]
    %v1118 = vld [vmem:[#allocation3 + $0x1f78] sm:$0xff]
    %v1119 = vld [vmem:[#allocation3 + $0x1f80] sm:$0xff]
    %v1120 = vld [vmem:[#allocation3 + $0x1f88] sm:$0xff]
    %v1121 = vld [vmem:[#allocation3 + $0x1f90] sm:$0xff]
    %v1122 = vld [vmem:[#allocation3 + $0x1f98] sm:$0xff]
    %v1123 = vld [vmem:[#allocation3 + $0x1fa0] sm:$0xff]
    %v1124 = vld [vmem:[#allocation3 + $0x1fa8] sm:$0xff]
    %v1125 = vld [vmem:[#allocation3 + $0x1fb0] sm:$0xff]
    %v1126 = vld [vmem:[#allocation3 + $0x1fb8] sm:$0xff]
    %v1127 = vld [vmem:[#allocation3 + $0x1fc0] sm:$0xff]
    %v1128 = vld [vmem:[#allocation3 + $0x1fc8] sm:$0xff]
    %v1129 = vld [vmem:[#allocation3 + $0x1fd0] sm:$0xff]
    %v1130 = vld [vmem:[#allocation3 + $0x1fd8] sm:$0xff]
    %v1131 = vld [vmem:[#allocation3 + $0x1fe0] sm:$0xff]
    %v1132 = vld [vmem:[#allocation3 + $0x1fe8] sm:$0xff]
    %v1133 = vld [vmem:[#allocation3 + $0x1ff0] sm:$0xff]
    %v1134 = vld [vmem:[#allocation3 + $0x1ff8] sm:$0xff]
    %v1135 = vld [vmem:[#allocation3 + $0x2000] sm:$0xff]
    %v1136 = vld [vmem:[#allocation3 + $0x2008] sm:$0xff]
    %v1137 = vld [vmem:[#allocation3 + $0x2010] sm:$0xff]
    %v1138 = vld [vmem:[#allocation3 + $0x2018] sm:$0xff]
    %v1139 = vld [vmem:[#allocation3 + $0x2020] sm:$0xff]
    %v1140 = vld [vmem:[#allocation3 + $0x2028] sm:$0xff]
    %v1141 = vld [vmem:[#allocation3 + $0x2030] sm:$0xff]
    %v1142 = vld [vmem:[#allocation3 + $0x2038] sm:$0xff]
    %v1143 = vld [vmem:[#allocation3 + $0x2040] sm:$0xff]
    %v1144 = vld [vmem:[#allocation3 + $0x2048] sm:$0xff]
    %v1145 = vld [vmem:[#allocation3 + $0x2050] sm:$0xff]
    %v1146 = vld [vmem:[#allocation3 + $0x2058] sm:$0xff]
    %v1147 = vld [vmem:[#allocation3 + $0x2060] sm:$0xff]
    %v1148 = vld [vmem:[#allocation3 + $0x2068] sm:$0xff]
    %v1149 = vld [vmem:[#allocation3 + $0x2070] sm:$0xff]
    %v1150 = vld [vmem:[#allocation3 + $0x2078] sm:$0xff]
    %v1151 = vld [vmem:[#allocation3 + $0x2080] sm:$0xff]
    %v1152 = vld [vmem:[#allocation3 + $0x2088] sm:$0xff]
    %v1153 = vld [vmem:[#allocation3 + $0x2090] sm:$0xff]
    %v1154 = vld [vmem:[#allocation3 + $0x2098] sm:$0xff]
    %v1155 = vld [vmem:[#allocation3 + $0x20a0] sm:$0xff]
    %v1156 = vld [vmem:[#allocation3 + $0x20a8] sm:$0xff]
    %v1157 = vld [vmem:[#allocation3 + $0x20b0] sm:$0xff]
    %v1158 = vld [vmem:[#allocation3 + $0x20b8] sm:$0xff]
    %v1159 = vld [vmem:[#allocation3 + $0x20c0] sm:$0xff]
    %v1160 = vld [vmem:[#allocation3 + $0x20c8] sm:$0xff]
    %v1161 = vld [vmem:[#allocation3 + $0x20d0] sm:$0xff]
    %v1162 = vld [vmem:[#allocation3 + $0x20d8] sm:$0xff]
    %v1163 = vld [vmem:[#allocation3 + $0x20e0] sm:$0xff]
    %v1164 = vld [vmem:[#allocation3 + $0x20e8] sm:$0xff]
    %v1165 = vld [vmem:[#allocation3 + $0x20f0] sm:$0xff]
    %v1166 = vld [vmem:[#allocation3 + $0x20f8] sm:$0xff]
    %v1167 = vld [vmem:[#allocation3 + $0x2100] sm:$0xff]
    %v1168 = vld [vmem:[#allocation3 + $0x2108] sm:$0xff]
    %v1169 = vld [vmem:[#allocation3 + $0x2110] sm:$0xff]
    %v1170 = vld [vmem:[#allocation3 + $0x2118] sm:$0xff]
    %v1171 = vld [vmem:[#allocation3 + $0x2120] sm:$0xff]
    %v1172 = vld [vmem:[#allocation3 + $0x2128] sm:$0xff]
    %v1173 = vld [vmem:[#allocation3 + $0x2130] sm:$0xff]
    %v1174 = vld [vmem:[#allocation3 + $0x2138] sm:$0xff]
    %v1175 = vld [vmem:[#allocation3 + $0x2140] sm:$0xff]
    %v1176 = vld [vmem:[#allocation3 + $0x2148] sm:$0xff]
    %v1177 = vld [vmem:[#allocation3 + $0x2150] sm:$0xff]
    %v1178 = vld [vmem:[#allocation3 + $0x2158] sm:$0xff]
    %v1179 = vld [vmem:[#allocation3 + $0x2160] sm:$0xff]
    %v1180 = vld [vmem:[#allocation3 + $0x2168] sm:$0xff]
    %v1181 = vld [vmem:[#allocation3 + $0x2170] sm:$0xff]
    %v1182 = vld [vmem:[#allocation3 + $0x2178] sm:$0xff]
    %v1183 = vld [vmem:[#allocation3 + $0x2180] sm:$0xff]
    %v1184 = vld [vmem:[#allocation3 + $0x2188] sm:$0xff]
    %v1185 = vld [vmem:[#allocation3 + $0x2190] sm:$0xff]
    %v1186 = vld [vmem:[#allocation3 + $0x2198] sm:$0xff]
    %v1187 = vld [vmem:[#allocation3 + $0x21a0] sm:$0xff]
    %v1188 = vld [vmem:[#allocation3 + $0x21a8] sm:$0xff]
    %v1189 = vld [vmem:[#allocation3 + $0x21b0] sm:$0xff]
    %v1190 = vld [vmem:[#allocation3 + $0x21b8] sm:$0xff]
    %v1191 = vld [vmem:[#allocation3 + $0x21c0] sm:$0xff]
    %v1192 = vld [vmem:[#allocation3 + $0x21c8] sm:$0xff]
    %v1193 = vld [vmem:[#allocation3 + $0x21d0] sm:$0xff]
    %v1194 = vld [vmem:[#allocation3 + $0x21d8] sm:$0xff]
    %v1195 = vld [vmem:[#allocation3 + $0x21e0] sm:$0xff]
    %v1196 = vld [vmem:[#allocation3 + $0x21e8] sm:$0xff]
    %v1197 = vld [vmem:[#allocation3 + $0x21f0] sm:$0xff]
    %v1198 = vld [vmem:[#allocation3 + $0x21f8] sm:$0xff]
    %v1199 = vld [vmem:[#allocation3 + $0x2200] sm:$0xff]
    %v1200 = vld [vmem:[#allocation3 + $0x2208] sm:$0xff]
    %v1201 = vld [vmem:[#allocation3 + $0x2210] sm:$0xff]
    %v1202 = vld [vmem:[#allocation3 + $0x2218] sm:$0xff]
    %v1203 = vld [vmem:[#allocation3 + $0x2220] sm:$0xff]
    %v1204 = vld [vmem:[#allocation3 + $0x2228] sm:$0xff]
    %v1205 = vld [vmem:[#allocation3 + $0x2230] sm:$0xff]
    %v1206 = vld [vmem:[#allocation3 + $0x2238] sm:$0xff]
    %v1207 = vld [vmem:[#allocation3 + $0x2240] sm:$0xff]
    %v1208 = vld [vmem:[#allocation3 + $0x2248] sm:$0xff]
    %v1209 = vld [vmem:[#allocation3 + $0x2250] sm:$0xff]
    %v1210 = vld [vmem:[#allocation3 + $0x2258] sm:$0xff]
    %v1211 = vld [vmem:[#allocation3 + $0x2260] sm:$0xff]
    %v1212 = vld [vmem:[#allocation3 + $0x2268] sm:$0xff]
    %v1213 = vld [vmem:[#allocation3 + $0x2270] sm:$0xff]
    %v1214 = vld [vmem:[#allocation3 + $0x2278] sm:$0xff]
    %v1215 = vld [vmem:[#allocation3 + $0x2280] sm:$0xff]
    %v1216 = vld [vmem:[#allocation3 + $0x2288] sm:$0xff]
    %v1217 = vld [vmem:[#allocation3 + $0x2290] sm:$0xff]
    %v1218 = vld [vmem:[#allocation3 + $0x2298] sm:$0xff]
    %v1219 = vld [vmem:[#allocation3 + $0x22a0] sm:$0xff]
    %v1220 = vld [vmem:[#allocation3 + $0x22a8] sm:$0xff]
    %v1221 = vld [vmem:[#allocation3 + $0x22b0] sm:$0xff]
    %v1222 = vld [vmem:[#allocation3 + $0x22b8] sm:$0xff]
    %v1223 = vld [vmem:[#allocation3 + $0x22c0] sm:$0xff]
    %v1224 = vld [vmem:[#allocation3 + $0x22c8] sm:$0xff]
    %v1225 = vld [vmem:[#allocation3 + $0x22d0] sm:$0xff]
    %v1226 = vld [vmem:[#allocation3 + $0x22d8] sm:$0xff]
    %v1227 = vld [vmem:[#allocation3 + $0x22e0] sm:$0xff]
    %v1228 = vld [vmem:[#allocation3 + $0x22e8] sm:$0xff]
    %v1229 = vld [vmem:[#allocation3 + $0x22f0] sm:$0xff]
    %v1230 = vld [vmem:[#allocation3 + $0x22f8] sm:$0xff]
    %v1231 = vld [vmem:[#allocation3 + $0x2300] sm:$0xff]
    %v1232 = vld [vmem:[#allocation3 + $0x2308] sm:$0xff]
    %v1233 = vld [vmem:[#allocation3 + $0x2310] sm:$0xff]
    %v1234 = vld [vmem:[#allocation3 + $0x2318] sm:$0xff]
    %v1235 = vld [vmem:[#allocation3 + $0x2320] sm:$0xff]
    %v1236 = vld [vmem:[#allocation3 + $0x2328] sm:$0xff]
    %v1237 = vld [vmem:[#allocation3 + $0x2330] sm:$0xff]
    %v1238 = vld [vmem:[#allocation3 + $0x2338] sm:$0xff]
    %v1239 = vld [vmem:[#allocation3 + $0x2340] sm:$0xff]
    %v1240 = vld [vmem:[#allocation3 + $0x2348] sm:$0xff]
    %v1241 = vld [vmem:[#allocation3 + $0x2350] sm:$0xff]
    %v1242 = vld [vmem:[#allocation3 + $0x2358] sm:$0xff]
    %v1243 = vld [vmem:[#allocation3 + $0x2360] sm:$0xff]
    %v1244 = vld [vmem:[#allocation3 + $0x2368] sm:$0xff]
    %v1245 = vld [vmem:[#allocation3 + $0x2370] sm:$0xff]
    %v1246 = vld [vmem:[#allocation3 + $0x2378] sm:$0xff]
    %v1247 = vld [vmem:[#allocation3 + $0x2380] sm:$0xff]
    %v1248 = vld [vmem:[#allocation3 + $0x2388] sm:$0xff]
    %v1249 = vld [vmem:[#allocation3 + $0x2390] sm:$0xff]
    %v1250 = vld [vmem:[#allocation3 + $0x2398] sm:$0xff]
    %v1251 = vld [vmem:[#allocation3 + $0x23a0] sm:$0xff]
    %v1252 = vld [vmem:[#allocation3 + $0x23a8] sm:$0xff]
    %v1253 = vld [vmem:[#allocation3 + $0x23b0] sm:$0xff]
    %v1254 = vld [vmem:[#allocation3 + $0x23b8] sm:$0xff]
    %v1255 = vld [vmem:[#allocation3 + $0x23c0] sm:$0xff]
    %v1256 = vld [vmem:[#allocation3 + $0x23c8] sm:$0xff]
    %v1257 = vld [vmem:[#allocation3 + $0x23d0] sm:$0xff]
    %v1258 = vld [vmem:[#allocation3 + $0x23d8] sm:$0xff]
    %v1259 = vld [vmem:[#allocation3 + $0x23e0] sm:$0xff]
    %v1260 = vld [vmem:[#allocation3 + $0x23e8] sm:$0xff]
    %v1261 = vld [vmem:[#allocation3 + $0x23f0] sm:$0xff]
    %v1262 = vld [vmem:[#allocation3 + $0x23f8] sm:$0xff]
    %v1263 = vld [vmem:[#allocation3 + $0x2400] sm:$0xff]
    %v1264 = vld [vmem:[#allocation3 + $0x2408] sm:$0xff]
    %v1265 = vld [vmem:[#allocation3 + $0x2410] sm:$0xff]
    %v1266 = vld [vmem:[#allocation3 + $0x2418] sm:$0xff]
    %v1267 = vld [vmem:[#allocation3 + $0x2420] sm:$0xff]
    %v1268 = vld [vmem:[#allocation3 + $0x2428] sm:$0xff]
    %v1269 = vld [vmem:[#allocation3 + $0x2430] sm:$0xff]
    %v1270 = vld [vmem:[#allocation3 + $0x2438] sm:$0xff]
    %v1271 = vld [vmem:[#allocation3 + $0x2440] sm:$0xff]
    %v1272 = vld [vmem:[#allocation3 + $0x2448] sm:$0xff]
    %v1273 = vld [vmem:[#allocation3 + $0x2450] sm:$0xff]
    %v1274 = vld [vmem:[#allocation3 + $0x2458] sm:$0xff]
    %v1275 = vld [vmem:[#allocation3 + $0x2460] sm:$0xff]
    %v1276 = vld [vmem:[#allocation3 + $0x2468] sm:$0xff]
    %v1277 = vld [vmem:[#allocation3 + $0x2470] sm:$0xff]
    %v1278 = vld [vmem:[#allocation3 + $0x2478] sm:$0xff]
    %v1279 = vld [vmem:[#allocation3 + $0x2480] sm:$0xff]
    %v1280 = vld [vmem:[#allocation3 + $0x2488] sm:$0xff]
    %v1281 = vld [vmem:[#allocation3 + $0x2490] sm:$0xff]
    %v1282 = vld [vmem:[#allocation3 + $0x2498] sm:$0xff]
    %v1283 = vld [vmem:[#allocation3 + $0x24a0] sm:$0xff]
    %v1284 = vld [vmem:[#allocation3 + $0x24a8] sm:$0xff]
    %v1285 = vld [vmem:[#allocation3 + $0x24b0] sm:$0xff]
    %v1286 = vld [vmem:[#allocation3 + $0x24b8] sm:$0xff]
    %v1287 = vld [vmem:[#allocation3 + $0x24c0] sm:$0xff]
    %v1288 = vld [vmem:[#allocation3 + $0x24c8] sm:$0xff]
    %v1289 = vld [vmem:[#allocation3 + $0x24d0] sm:$0xff]
    %v1290 = vld [vmem:[#allocation3 + $0x24d8] sm:$0xff]
    %v1291 = vld [vmem:[#allocation3 + $0x24e0] sm:$0xff]
    %v1292 = vld [vmem:[#allocation3 + $0x24e8] sm:$0xff]
    %v1293 = vld [vmem:[#allocation3 + $0x24f0] sm:$0xff]
    %v1294 = vld [vmem:[#allocation3 + $0x24f8] sm:$0xff]
    %v1295 = vld [vmem:[#allocation3 + $0x2500] sm:$0xff]
    %v1296 = vld [vmem:[#allocation3 + $0x2508] sm:$0xff]
    %v1297 = vld [vmem:[#allocation3 + $0x2510] sm:$0xff]
    %v1298 = vld [vmem:[#allocation3 + $0x2518] sm:$0xff]
    %v1299 = vld [vmem:[#allocation3 + $0x2520] sm:$0xff]
    %v1300 = vld [vmem:[#allocation3 + $0x2528] sm:$0xff]
    %v1301 = vld [vmem:[#allocation3 + $0x2530] sm:$0xff]
    %v1302 = vld [vmem:[#allocation3 + $0x2538] sm:$0xff]
    %v1303 = vld [vmem:[#allocation3 + $0x2540] sm:$0xff]
    %v1304 = vld [vmem:[#allocation3 + $0x2548] sm:$0xff]
    %v1305 = vld [vmem:[#allocation3 + $0x2550] sm:$0xff]
    %v1306 = vld [vmem:[#allocation3 + $0x2558] sm:$0xff]
    %v1307 = vld [vmem:[#allocation3 + $0x2560] sm:$0xff]
    %v1308 = vld [vmem:[#allocation3 + $0x2568] sm:$0xff]
    %v1309 = vld [vmem:[#allocation3 + $0x2570] sm:$0xff]
    %v1310 = vld [vmem:[#allocation3 + $0x2578] sm:$0xff]
    %v1311 = vld [vmem:[#allocation3 + $0x2580] sm:$0xff]
    %v1312 = vld [vmem:[#allocation3 + $0x2588] sm:$0xff]
    %v1313 = vld [vmem:[#allocation3 + $0x2590] sm:$0xff]
    %v1314 = vld [vmem:[#allocation3 + $0x2598] sm:$0xff]
    %v1315 = vld [vmem:[#allocation3 + $0x25a0] sm:$0xff]
    %v1316 = vld [vmem:[#allocation3 + $0x25a8] sm:$0xff]
    %v1317 = vld [vmem:[#allocation3 + $0x25b0] sm:$0xff]
    %v1318 = vld [vmem:[#allocation3 + $0x25b8] sm:$0xff]
    %v1319 = vld [vmem:[#allocation3 + $0x25c0] sm:$0xff]
    %v1320 = vld [vmem:[#allocation3 + $0x25c8] sm:$0xff]
    %v1321 = vld [vmem:[#allocation3 + $0x25d0] sm:$0xff]
    %v1322 = vld [vmem:[#allocation3 + $0x25d8] sm:$0xff]
    %v1323 = vld [vmem:[#allocation3 + $0x25e0] sm:$0xff]
    %v1324 = vld [vmem:[#allocation3 + $0x25e8] sm:$0xff]
    %v1325 = vld [vmem:[#allocation3 + $0x25f0] sm:$0xff]
    %v1326 = vld [vmem:[#allocation3 + $0x25f8] sm:$0xff]
    %v1327 = vld [vmem:[#allocation3 + $0x2600] sm:$0xff]
    %v1328 = vld [vmem:[#allocation3 + $0x2608] sm:$0xff]
    %v1329 = vld [vmem:[#allocation3 + $0x2610] sm:$0xff]
    %v1330 = vld [vmem:[#allocation3 + $0x2618] sm:$0xff]
    %v1331 = vld [vmem:[#allocation3 + $0x2620] sm:$0xff]
    %v1332 = vld [vmem:[#allocation3 + $0x2628] sm:$0xff]
    %v1333 = vld [vmem:[#allocation3 + $0x2630] sm:$0xff]
    %v1334 = vld [vmem:[#allocation3 + $0x2638] sm:$0xff]
    %v1335 = vld [vmem:[#allocation3 + $0x2640] sm:$0xff]
    %v1336 = vld [vmem:[#allocation3 + $0x2648] sm:$0xff]
    %v1337 = vld [vmem:[#allocation3 + $0x2650] sm:$0xff]
    %v1338 = vld [vmem:[#allocation3 + $0x2658] sm:$0xff]
    %v1339 = vld [vmem:[#allocation3 + $0x2660] sm:$0xff]
    %v1340 = vld [vmem:[#allocation3 + $0x2668] sm:$0xff]
    %v1341 = vld [vmem:[#allocation3 + $0x2670] sm:$0xff]
    %v1342 = vld [vmem:[#allocation3 + $0x2678] sm:$0xff]
    %v1343 = vld [vmem:[#allocation3 + $0x2680] sm:$0xff]
    %v1344 = vld [vmem:[#allocation3 + $0x2688] sm:$0xff]
    %v1345 = vld [vmem:[#allocation3 + $0x2690] sm:$0xff]
    %v1346 = vld [vmem:[#allocation3 + $0x2698] sm:$0xff]
    %v1347 = vld [vmem:[#allocation3 + $0x26a0] sm:$0xff]
    %v1348 = vld [vmem:[#allocation3 + $0x26a8] sm:$0xff]
    %v1349 = vld [vmem:[#allocation3 + $0x26b0] sm:$0xff]
    %v1350 = vld [vmem:[#allocation3 + $0x26b8] sm:$0xff]
    %v1351 = vld [vmem:[#allocation3 + $0x26c0] sm:$0xff]
    %v1352 = vld [vmem:[#allocation3 + $0x26c8] sm:$0xff]
    %v1353 = vld [vmem:[#allocation3 + $0x26d0] sm:$0xff]
    %v1354 = vld [vmem:[#allocation3 + $0x26d8] sm:$0xff]
    %v1355 = vld [vmem:[#allocation3 + $0x26e0] sm:$0xff]
    %v1356 = vld [vmem:[#allocation3 + $0x26e8] sm:$0xff]
    %v1357 = vld [vmem:[#allocation3 + $0x26f0] sm:$0xff]
    %v1358 = vld [vmem:[#allocation3 + $0x26f8] sm:$0xff]
    %v1359 = vld [vmem:[#allocation3 + $0x2700] sm:$0xff]
    %v1360 = vld [vmem:[#allocation3 + $0x2708] sm:$0xff]
    %v1361 = vld [vmem:[#allocation3 + $0x2710] sm:$0xff]
    %v1362 = vld [vmem:[#allocation3 + $0x2718] sm:$0xff]
    %v1363 = vld [vmem:[#allocation3 + $0x2720] sm:$0xff]
    %v1364 = vld [vmem:[#allocation3 + $0x2728] sm:$0xff]
    %v1365 = vld [vmem:[#allocation3 + $0x2730] sm:$0xff]
    %v1366 = vld [vmem:[#allocation3 + $0x2738] sm:$0xff]
    %v1367 = vld [vmem:[#allocation3 + $0x2740] sm:$0xff]
    %v1368 = vld [vmem:[#allocation3 + $0x2748] sm:$0xff]
    %v1369 = vld [vmem:[#allocation3 + $0x2750] sm:$0xff]
    %v1370 = vld [vmem:[#allocation3 + $0x2758] sm:$0xff]
    %v1371 = vld [vmem:[#allocation3 + $0x2760] sm:$0xff]
    %v1372 = vld [vmem:[#allocation3 + $0x2768] sm:$0xff]
    %v1373 = vld [vmem:[#allocation3 + $0x2770] sm:$0xff]
    %v1374 = vld [vmem:[#allocation3 + $0x2778] sm:$0xff]
    %v1375 = vld [vmem:[#allocation3 + $0x2780] sm:$0xff]
    %v1376 = vld [vmem:[#allocation3 + $0x2788] sm:$0xff]
    %v1377 = vld [vmem:[#allocation3 + $0x2790] sm:$0xff]
    %v1378 = vld [vmem:[#allocation3 + $0x2798] sm:$0xff]
    %v1379 = vld [vmem:[#allocation3 + $0x27a0] sm:$0xff]
    %v1380 = vld [vmem:[#allocation3 + $0x27a8] sm:$0xff]
    %v1381 = vld [vmem:[#allocation3 + $0x27b0] sm:$0xff]
    %v1382 = vld [vmem:[#allocation3 + $0x27b8] sm:$0xff]
    %v1383 = vld [vmem:[#allocation3 + $0x27c0] sm:$0xff]
    %v1384 = vld [vmem:[#allocation3 + $0x27c8] sm:$0xff]
    %v1385 = vld [vmem:[#allocation3 + $0x27d0] sm:$0xff]
    %v1386 = vld [vmem:[#allocation3 + $0x27d8] sm:$0xff]
    %v1387 = vld [vmem:[#allocation3 + $0x27e0] sm:$0xff]
    %v1388 = vld [vmem:[#allocation3 + $0x27e8] sm:$0xff]
    %v1389 = vld [vmem:[#allocation3 + $0x27f0] sm:$0xff]
    %v1390 = vld [vmem:[#allocation3 + $0x27f8] sm:$0xff]
    %v1391 = vld [vmem:[#allocation3 + $0x2800] sm:$0xff]
    %v1392 = vld [vmem:[#allocation3 + $0x2808] sm:$0xff]
    %v1393 = vld [vmem:[#allocation3 + $0x2810] sm:$0xff]
    %v1394 = vld [vmem:[#allocation3 + $0x2818] sm:$0xff]
    %v1395 = vld [vmem:[#allocation3 + $0x2820] sm:$0xff]
    %v1396 = vld [vmem:[#allocation3 + $0x2828] sm:$0xff]
    %v1397 = vld [vmem:[#allocation3 + $0x2830] sm:$0xff]
    %v1398 = vld [vmem:[#allocation3 + $0x2838] sm:$0xff]
    %v1399 = vld [vmem:[#allocation3 + $0x2840] sm:$0xff]
    %v1400 = vld [vmem:[#allocation3 + $0x2848] sm:$0xff]
    %v1401 = vld [vmem:[#allocation3 + $0x2850] sm:$0xff]
    %v1402 = vld [vmem:[#allocation3 + $0x2858] sm:$0xff]
    %v1403 = vld [vmem:[#allocation3 + $0x2860] sm:$0xff]
    %v1404 = vld [vmem:[#allocation3 + $0x2868] sm:$0xff]
    %v1405 = vld [vmem:[#allocation3 + $0x2870] sm:$0xff]
    %v1406 = vld [vmem:[#allocation3 + $0x2878] sm:$0xff]
    %v1407 = vld [vmem:[#allocation3 + $0x2880] sm:$0xff]
    %v1408 = vld [vmem:[#allocation3 + $0x2888] sm:$0xff]
    %v1409 = vld [vmem:[#allocation3 + $0x2890] sm:$0xff]
    %v1410 = vld [vmem:[#allocation3 + $0x2898] sm:$0xff]
    %v1411 = vld [vmem:[#allocation3 + $0x28a0] sm:$0xff]
    %v1412 = vld [vmem:[#allocation3 + $0x28a8] sm:$0xff]
    %v1413 = vld [vmem:[#allocation3 + $0x28b0] sm:$0xff]
    %v1414 = vld [vmem:[#allocation3 + $0x28b8] sm:$0xff]
    %v1415 = vld [vmem:[#allocation3 + $0x28c0] sm:$0xff]
    %v1416 = vld [vmem:[#allocation3 + $0x28c8] sm:$0xff]
    %v1417 = vld [vmem:[#allocation3 + $0x28d0] sm:$0xff]
    %v1418 = vld [vmem:[#allocation3 + $0x28d8] sm:$0xff]
    %v1419 = vld [vmem:[#allocation3 + $0x28e0] sm:$0xff]
    %v1420 = vld [vmem:[#allocation3 + $0x28e8] sm:$0xff]
    %v1421 = vld [vmem:[#allocation3 + $0x28f0] sm:$0xff]
    %v1422 = vld [vmem:[#allocation3 + $0x28f8] sm:$0xff]
    %v1423 = vld [vmem:[#allocation3 + $0x2900] sm:$0xff]
    %v1424 = vld [vmem:[#allocation3 + $0x2908] sm:$0xff]
    %v1425 = vld [vmem:[#allocation3 + $0x2910] sm:$0xff]
    %v1426 = vld [vmem:[#allocation3 + $0x2918] sm:$0xff]
    %v1427 = vld [vmem:[#allocation3 + $0x2920] sm:$0xff]
    %v1428 = vld [vmem:[#allocation3 + $0x2928] sm:$0xff]
    %v1429 = vld [vmem:[#allocation3 + $0x2930] sm:$0xff]
    %v1430 = vld [vmem:[#allocation3 + $0x2938] sm:$0xff]
    %v1431 = vld [vmem:[#allocation3 + $0x2940] sm:$0xff]
    %v1432 = vld [vmem:[#allocation3 + $0x2948] sm:$0xff]
    %v1433 = vld [vmem:[#allocation3 + $0x2950] sm:$0xff]
    %v1434 = vld [vmem:[#allocation3 + $0x2958] sm:$0xff]
    %v1435 = vld [vmem:[#allocation3 + $0x2960] sm:$0xff]
    %v1436 = vld [vmem:[#allocation3 + $0x2968] sm:$0xff]
    %v1437 = vld [vmem:[#allocation3 + $0x2970] sm:$0xff]
    %v1438 = vld [vmem:[#allocation3 + $0x2978] sm:$0xff]
    %v1439 = vld [vmem:[#allocation3 + $0x2980] sm:$0xff]
    %v1440 = vld [vmem:[#allocation3 + $0x2988] sm:$0xff]
    %v1441 = vld [vmem:[#allocation3 + $0x2990] sm:$0xff]
    %v1442 = vld [vmem:[#allocation3 + $0x2998] sm:$0xff]
    %v1443 = vld [vmem:[#allocation3 + $0x29a0] sm:$0xff]
    %v1444 = vld [vmem:[#allocation3 + $0x29a8] sm:$0xff]
    %v1445 = vld [vmem:[#allocation3 + $0x29b0] sm:$0xff]
    %v1446 = vld [vmem:[#allocation3 + $0x29b8] sm:$0xff]
    %v1447 = vld [vmem:[#allocation3 + $0x29c0] sm:$0xff]
    %v1448 = vld [vmem:[#allocation3 + $0x29c8] sm:$0xff]
    %v1449 = vld [vmem:[#allocation3 + $0x29d0] sm:$0xff]
    %v1450 = vld [vmem:[#allocation3 + $0x29d8] sm:$0xff]
    %v1451 = vld [vmem:[#allocation3 + $0x29e0] sm:$0xff]
    %v1452 = vld [vmem:[#allocation3 + $0x29e8] sm:$0xff]
    %v1453 = vld [vmem:[#allocation3 + $0x29f0] sm:$0xff]
    %v1454 = vld [vmem:[#allocation3 + $0x29f8] sm:$0xff]
    %v1455 = vld [vmem:[#allocation3 + $0x2a00] sm:$0xff]
    %v1456 = vld [vmem:[#allocation3 + $0x2a08] sm:$0xff]
    %v1457 = vld [vmem:[#allocation3 + $0x2a10] sm:$0xff]
    %v1458 = vld [vmem:[#allocation3 + $0x2a18] sm:$0xff]
    %v1459 = vld [vmem:[#allocation3 + $0x2a20] sm:$0xff]
    %v1460 = vld [vmem:[#allocation3 + $0x2a28] sm:$0xff]
    %v1461 = vld [vmem:[#allocation3 + $0x2a30] sm:$0xff]
    %v1462 = vld [vmem:[#allocation3 + $0x2a38] sm:$0xff]
    %v1463 = vld [vmem:[#allocation3 + $0x2a40] sm:$0xff]
    %v1464 = vld [vmem:[#allocation3 + $0x2a48] sm:$0xff]
    %v1465 = vld [vmem:[#allocation3 + $0x2a50] sm:$0xff]
    %v1466 = vld [vmem:[#allocation3 + $0x2a58] sm:$0xff]
    %v1467 = vld [vmem:[#allocation3 + $0x2a60] sm:$0xff]
    %v1468 = vld [vmem:[#allocation3 + $0x2a68] sm:$0xff]
    %v1469 = vld [vmem:[#allocation3 + $0x2a70] sm:$0xff]
    %v1470 = vld [vmem:[#allocation3 + $0x2a78] sm:$0xff]
    %v1471 = vld [vmem:[#allocation3 + $0x2a80] sm:$0xff]
    %v1472 = vld [vmem:[#allocation3 + $0x2a88] sm:$0xff]
    %v1473 = vld [vmem:[#allocation3 + $0x2a90] sm:$0xff]
    %v1474 = vld [vmem:[#allocation3 + $0x2a98] sm:$0xff]
    %v1475 = vld [vmem:[#allocation3 + $0x2aa0] sm:$0xff]
    %v1476 = vld [vmem:[#allocation3 + $0x2aa8] sm:$0xff]
    %v1477 = vld [vmem:[#allocation3 + $0x2ab0] sm:$0xff]
    %v1478 = vld [vmem:[#allocation3 + $0x2ab8] sm:$0xff]
    %v1479 = vld [vmem:[#allocation3 + $0x2ac0] sm:$0xff]
    %v1480 = vld [vmem:[#allocation3 + $0x2ac8] sm:$0xff]
    %v1481 = vld [vmem:[#allocation3 + $0x2ad0] sm:$0xff]
    %v1482 = vld [vmem:[#allocation3 + $0x2ad8] sm:$0xff]
    %v1483 = vld [vmem:[#allocation3 + $0x2ae0] sm:$0xff]
    %v1484 = vld [vmem:[#allocation3 + $0x2ae8] sm:$0xff]
    %v1485 = vld [vmem:[#allocation3 + $0x2af0] sm:$0xff]
    %v1486 = vld [vmem:[#allocation3 + $0x2af8] sm:$0xff]
    %v1487 = vld [vmem:[#allocation3 + $0x2b00] sm:$0xff]
    %v1488 = vld [vmem:[#allocation3 + $0x2b08] sm:$0xff]
    %v1489 = vld [vmem:[#allocation3 + $0x2b10] sm:$0xff]
    %v1490 = vld [vmem:[#allocation3 + $0x2b18] sm:$0xff]
    %v1491 = vld [vmem:[#allocation3 + $0x2b20] sm:$0xff]
    %v1492 = vld [vmem:[#allocation3 + $0x2b28] sm:$0xff]
    %v1493 = vld [vmem:[#allocation3 + $0x2b30] sm:$0xff]
    %v1494 = vld [vmem:[#allocation3 + $0x2b38] sm:$0xff]
    %v1495 = vld [vmem:[#allocation3 + $0x2b40] sm:$0xff]
    %v1496 = vld [vmem:[#allocation3 + $0x2b48] sm:$0xff]
    %v1497 = vld [vmem:[#allocation3 + $0x2b50] sm:$0xff]
    %v1498 = vld [vmem:[#allocation3 + $0x2b58] sm:$0xff]
    %v1499 = vld [vmem:[#allocation3 + $0x2b60] sm:$0xff]
    %v1500 = vld [vmem:[#allocation3 + $0x2b68] sm:$0xff]
    %v1501 = vld [vmem:[#allocation3 + $0x2b70] sm:$0xff]
    %v1502 = vld [vmem:[#allocation3 + $0x2b78] sm:$0xff]
    %v1503 = vld [vmem:[#allocation3 + $0x2b80] sm:$0xff]
    %v1504 = vld [vmem:[#allocation3 + $0x2b88] sm:$0xff]
    %v1505 = vld [vmem:[#allocation3 + $0x2b90] sm:$0xff]
    %v1506 = vld [vmem:[#allocation3 + $0x2b98] sm:$0xff]
    %v1507 = vld [vmem:[#allocation3 + $0x2ba0] sm:$0xff]
    %v1508 = vld [vmem:[#allocation3 + $0x2ba8] sm:$0xff]
    %v1509 = vld [vmem:[#allocation3 + $0x2bb0] sm:$0xff]
    %v1510 = vld [vmem:[#allocation3 + $0x2bb8] sm:$0xff]
    %v1511 = vld [vmem:[#allocation3 + $0x2bc0] sm:$0xff]
    %v1512 = vld [vmem:[#allocation3 + $0x2bc8] sm:$0xff]
    %v1513 = vld [vmem:[#allocation3 + $0x2bd0] sm:$0xff]
    %v1514 = vld [vmem:[#allocation3 + $0x2bd8] sm:$0xff]
    %v1515 = vld [vmem:[#allocation3 + $0x2be0] sm:$0xff]
    %v1516 = vld [vmem:[#allocation3 + $0x2be8] sm:$0xff]
    %v1517 = vld [vmem:[#allocation3 + $0x2bf0] sm:$0xff]
    %v1518 = vld [vmem:[#allocation3 + $0x2bf8] sm:$0xff]
    %v1519 = vld [vmem:[#allocation3 + $0x2c00] sm:$0xff]
    %v1520 = vld [vmem:[#allocation3 + $0x2c08] sm:$0xff]
    %v1521 = vld [vmem:[#allocation3 + $0x2c10] sm:$0xff]
    %v1522 = vld [vmem:[#allocation3 + $0x2c18] sm:$0xff]
    %v1523 = vld [vmem:[#allocation3 + $0x2c20] sm:$0xff]
    %v1524 = vld [vmem:[#allocation3 + $0x2c28] sm:$0xff]
    %v1525 = vld [vmem:[#allocation3 + $0x2c30] sm:$0xff]
    %v1526 = vld [vmem:[#allocation3 + $0x2c38] sm:$0xff]
    %v1527 = vld [vmem:[#allocation3 + $0x2c40] sm:$0xff]
    %v1528 = vld [vmem:[#allocation3 + $0x2c48] sm:$0xff]
    %v1529 = vld [vmem:[#allocation3 + $0x2c50] sm:$0xff]
    %v1530 = vld [vmem:[#allocation3 + $0x2c58] sm:$0xff]
    %v1531 = vld [vmem:[#allocation3 + $0x2c60] sm:$0xff]
    %v1532 = vld [vmem:[#allocation3 + $0x2c68] sm:$0xff]
    %v1533 = vld [vmem:[#allocation3 + $0x2c70] sm:$0xff]
    %v1534 = vld [vmem:[#allocation3 + $0x2c78] sm:$0xff]
    %v1535 = vld [vmem:[#allocation3 + $0x2c80] sm:$0xff]
    %v1536 = vld [vmem:[#allocation3 + $0x2c88] sm:$0xff]
    %v1537 = vld [vmem:[#allocation3 + $0x2c90] sm:$0xff]
    %v1538 = vld [vmem:[#allocation3 + $0x2c98] sm:$0xff]
    %v1539 = vld [vmem:[#allocation3 + $0x2ca0] sm:$0xff]
    %v1540 = vld [vmem:[#allocation3 + $0x2ca8] sm:$0xff]
    %v1541 = vld [vmem:[#allocation3 + $0x2cb0] sm:$0xff]
    %v1542 = vld [vmem:[#allocation3 + $0x2cb8] sm:$0xff]
    %v1543 = vld [vmem:[#allocation3 + $0x2cc0] sm:$0xff]
    %v1544 = vld [vmem:[#allocation3 + $0x2cc8] sm:$0xff]
    %v1545 = vld [vmem:[#allocation3 + $0x2cd0] sm:$0xff]
    %v1546 = vld [vmem:[#allocation3 + $0x2cd8] sm:$0xff]
    %v1547 = vld [vmem:[#allocation3 + $0x2ce0] sm:$0xff]
    %v1548 = vld [vmem:[#allocation3 + $0x2ce8] sm:$0xff]
    %v1549 = vld [vmem:[#allocation3 + $0x2cf0] sm:$0xff]
    %v1550 = vld [vmem:[#allocation3 + $0x2cf8] sm:$0xff]
    %v1551 = vld [vmem:[#allocation3 + $0x2d00] sm:$0xff]
    %v1552 = vld [vmem:[#allocation3 + $0x2d08] sm:$0xff]
    %v1553 = vld [vmem:[#allocation3 + $0x2d10] sm:$0xff]
    %v1554 = vld [vmem:[#allocation3 + $0x2d18] sm:$0xff]
    %v1555 = vld [vmem:[#allocation3 + $0x2d20] sm:$0xff]
    %v1556 = vld [vmem:[#allocation3 + $0x2d28] sm:$0xff]
    %v1557 = vld [vmem:[#allocation3 + $0x2d30] sm:$0xff]
    %v1558 = vld [vmem:[#allocation3 + $0x2d38] sm:$0xff]
    %v1559 = vld [vmem:[#allocation3 + $0x2d40] sm:$0xff]
    %v1560 = vld [vmem:[#allocation3 + $0x2d48] sm:$0xff]
    %v1561 = vld [vmem:[#allocation3 + $0x2d50] sm:$0xff]
    %v1562 = vld [vmem:[#allocation3 + $0x2d58] sm:$0xff]
    %v1563 = vld [vmem:[#allocation3 + $0x2d60] sm:$0xff]
    %v1564 = vld [vmem:[#allocation3 + $0x2d68] sm:$0xff]
    %v1565 = vld [vmem:[#allocation3 + $0x2d70] sm:$0xff]
    %v1566 = vld [vmem:[#allocation3 + $0x2d78] sm:$0xff]
    %v1567 = vld [vmem:[#allocation3 + $0x2d80] sm:$0xff]
    %v1568 = vld [vmem:[#allocation3 + $0x2d88] sm:$0xff]
    %v1569 = vld [vmem:[#allocation3 + $0x2d90] sm:$0xff]
    %v1570 = vld [vmem:[#allocation3 + $0x2d98] sm:$0xff]
    %v1571 = vld [vmem:[#allocation3 + $0x2da0] sm:$0xff]
    %v1572 = vld [vmem:[#allocation3 + $0x2da8] sm:$0xff]
    %v1573 = vld [vmem:[#allocation3 + $0x2db0] sm:$0xff]
    %v1574 = vld [vmem:[#allocation3 + $0x2db8] sm:$0xff]
    %v1575 = vld [vmem:[#allocation3 + $0x2dc0] sm:$0xff]
    %v1576 = vld [vmem:[#allocation3 + $0x2dc8] sm:$0xff]
    %v1577 = vld [vmem:[#allocation3 + $0x2dd0] sm:$0xff]
    %v1578 = vld [vmem:[#allocation3 + $0x2dd8] sm:$0xff]
    %v1579 = vld [vmem:[#allocation3 + $0x2de0] sm:$0xff]
    %v1580 = vld [vmem:[#allocation3 + $0x2de8] sm:$0xff]
    %v1581 = vld [vmem:[#allocation3 + $0x2df0] sm:$0xff]
    %v1582 = vld [vmem:[#allocation3 + $0x2df8] sm:$0xff]
    %v1583 = vld [vmem:[#allocation3 + $0x2e00] sm:$0xff]
    %v1584 = vld [vmem:[#allocation3 + $0x2e08] sm:$0xff]
    %v1585 = vld [vmem:[#allocation3 + $0x2e10] sm:$0xff]
    %v1586 = vld [vmem:[#allocation3 + $0x2e18] sm:$0xff]
    %v1587 = vld [vmem:[#allocation3 + $0x2e20] sm:$0xff]
    %v1588 = vld [vmem:[#allocation3 + $0x2e28] sm:$0xff]
    %v1589 = vld [vmem:[#allocation3 + $0x2e30] sm:$0xff]
    %v1590 = vld [vmem:[#allocation3 + $0x2e38] sm:$0xff]
    %v1591 = vld [vmem:[#allocation3 + $0x2e40] sm:$0xff]
    %v1592 = vld [vmem:[#allocation3 + $0x2e48] sm:$0xff]
    %v1593 = vld [vmem:[#allocation3 + $0x2e50] sm:$0xff]
    %v1594 = vld [vmem:[#allocation3 + $0x2e58] sm:$0xff]
    %v1595 = vld [vmem:[#allocation3 + $0x2e60] sm:$0xff]
    %v1596 = vld [vmem:[#allocation3 + $0x2e68] sm:$0xff]
    %v1597 = vld [vmem:[#allocation3 + $0x2e70] sm:$0xff]
    %v1598 = vld [vmem:[#allocation3 + $0x2e78] sm:$0xff]
    %v1599 = vld [vmem:[#allocation3 + $0x2e80] sm:$0xff]
    %v1600 = vld [vmem:[#allocation3 + $0x2e88] sm:$0xff]
    %v1601 = vld [vmem:[#allocation3 + $0x2e90] sm:$0xff]
    %v1602 = vld [vmem:[#allocation3 + $0x2e98] sm:$0xff]
    %v1603 = vld [vmem:[#allocation3 + $0x2ea0] sm:$0xff]
    %v1604 = vld [vmem:[#allocation3 + $0x2ea8] sm:$0xff]
    %v1605 = vld [vmem:[#allocation3 + $0x2eb0] sm:$0xff]
    %v1606 = vld [vmem:[#allocation3 + $0x2eb8] sm:$0xff]
    %v1607 = vld [vmem:[#allocation3 + $0x2ec0] sm:$0xff]
    %v1608 = vld [vmem:[#allocation3 + $0x2ec8] sm:$0xff]
    %v1609 = vld [vmem:[#allocation3 + $0x2ed0] sm:$0xff]
    %v1610 = vld [vmem:[#allocation3 + $0x2ed8] sm:$0xff]
    %v1611 = vld [vmem:[#allocation3 + $0x2ee0] sm:$0xff]
    %v1612 = vld [vmem:[#allocation3 + $0x2ee8] sm:$0xff]
    %v1613 = vld [vmem:[#allocation3 + $0x2ef0] sm:$0xff]
    %v1614 = vld [vmem:[#allocation3 + $0x2ef8] sm:$0xff]
    %v1615 = vld [vmem:[#allocation3 + $0x2f00] sm:$0xff]
    %v1616 = vld [vmem:[#allocation3 + $0x2f08] sm:$0xff]
    %v1617 = vld [vmem:[#allocation3 + $0x2f10] sm:$0xff]
    %v1618 = vld [vmem:[#allocation3 + $0x2f18] sm:$0xff]
    %v1619 = vld [vmem:[#allocation3 + $0x2f20] sm:$0xff]
    %v1620 = vld [vmem:[#allocation3 + $0x2f28] sm:$0xff]
    %v1621 = vld [vmem:[#allocation3 + $0x2f30] sm:$0xff]
    %v1622 = vld [vmem:[#allocation3 + $0x2f38] sm:$0xff]
    %v1623 = vld [vmem:[#allocation3 + $0x2f40] sm:$0xff]
    %v1624 = vld [vmem:[#allocation3 + $0x2f48] sm:$0xff]
    %v1625 = vld [vmem:[#allocation3 + $0x2f50] sm:$0xff]
    %v1626 = vld [vmem:[#allocation3 + $0x2f58] sm:$0xff]
    %v1627 = vld [vmem:[#allocation3 + $0x2f60] sm:$0xff]
    %v1628 = vld [vmem:[#allocation3 + $0x2f68] sm:$0xff]
    %v1629 = vld [vmem:[#allocation3 + $0x2f70] sm:$0xff]
    %v1630 = vld [vmem:[#allocation3 + $0x2f78] sm:$0xff]
    %v1631 = vld [vmem:[#allocation3 + $0x2f80] sm:$0xff]
    %v1632 = vld [vmem:[#allocation3 + $0x2f88] sm:$0xff]
    %v1633 = vld [vmem:[#allocation3 + $0x2f90] sm:$0xff]
    %v1634 = vld [vmem:[#allocation3 + $0x2f98] sm:$0xff]
    %v1635 = vld [vmem:[#allocation3 + $0x2fa0] sm:$0xff]
    %v1636 = vld [vmem:[#allocation3 + $0x2fa8] sm:$0xff]
    %v1637 = vld [vmem:[#allocation3 + $0x2fb0] sm:$0xff]
    %v1638 = vld [vmem:[#allocation3 + $0x2fb8] sm:$0xff]
    %v1639 = vld [vmem:[#allocation3 + $0x2fc0] sm:$0xff]
    %v1640 = vld [vmem:[#allocation3 + $0x2fc8] sm:$0xff]
    %v1641 = vld [vmem:[#allocation3 + $0x2fd0] sm:$0xff]
    %v1642 = vld [vmem:[#allocation3 + $0x2fd8] sm:$0xff]
    %v1643 = vld [vmem:[#allocation3 + $0x2fe0] sm:$0xff]
    %v1644 = vld [vmem:[#allocation3 + $0x2fe8] sm:$0xff]
    %v1645 = vld [vmem:[#allocation3 + $0x2ff0] sm:$0xff]
    %v1646 = vld [vmem:[#allocation3 + $0x2ff8] sm:$0xff]
    %v1659 = vunpack.c.l.b16 %v99
    %v1660 = vunpack.c.h.b16 %v99
    %v1661 = vunpack.c.l.b16 %v100
    %v1662 = vunpack.c.h.b16 %v100
    %v1663 = vunpack.c.l.b16 %v101
    %v1664 = vunpack.c.h.b16 %v101
    %v1665 = vunpack.c.l.b16 %v102
    %v1666 = vunpack.c.h.b16 %v102
    %v1667 = vunpack.c.l.b16 %v103
    %v1668 = vunpack.c.h.b16 %v103
    %v1669 = vunpack.c.l.b16 %v104
    %v1670 = vunpack.c.h.b16 %v104
    %v1671 = vunpack.c.l.b16 %v105
    %v1672 = vunpack.c.h.b16 %v105
    %v1673 = vunpack.c.l.b16 %v106
    %v1674 = vunpack.c.h.b16 %v106
    %v1675 = vunpack.c.l.b16 %v107
    %v1676 = vunpack.c.h.b16 %v107
    %v1677 = vunpack.c.l.b16 %v108
    %v1678 = vunpack.c.h.b16 %v108
    %v1679 = vunpack.c.l.b16 %v109
    %v1680 = vunpack.c.h.b16 %v109
    %v1681 = vunpack.c.l.b16 %v110
    %v1682 = vunpack.c.h.b16 %v110
    %v1683 = vpack.c.b16 %v1659, %v1659
    %v1684 = vpack.c.b16 %v1660, %v1660
    %v1685 = vpack.c.b16 %v1661, %v1661
    %v1686 = vpack.c.b16 %v1662, %v1662
    %v1687 = vpack.c.b16 %v1663, %v1663
    %v1688 = vpack.c.b16 %v1664, %v1664
    %v1689 = vpack.c.b16 %v1665, %v1665
    %v1690 = vpack.c.b16 %v1666, %v1666
    %v1691 = vpack.c.b16 %v1667, %v1667
    %v1692 = vpack.c.b16 %v1668, %v1668
    %v1693 = vpack.c.b16 %v1669, %v1669
    %v1694 = vpack.c.b16 %v1670, %v1670
    %v1695 = vpack.c.b16 %v1671, %v1671
    %v1696 = vpack.c.b16 %v1672, %v1672
    %v1697 = vpack.c.b16 %v1673, %v1673
    %v1698 = vpack.c.b16 %v1674, %v1674
    %v1699 = vpack.c.b16 %v1675, %v1675
    %v1700 = vpack.c.b16 %v1676, %v1676
    %v1701 = vpack.c.b16 %v1677, %v1677
    %v1702 = vpack.c.b16 %v1678, %v1678
    %v1703 = vpack.c.b16 %v1679, %v1679
    %v1704 = vpack.c.b16 %v1680, %v1680
    %v1705 = vpack.c.b16 %v1681, %v1681
    %v1706 = vpack.c.b16 %v1682, %v1682
    %v3267 = vunpack.c.l.b16 %v111
    %v3268 = vunpack.c.h.b16 %v111
    %v3269 = vunpack.c.l.b16 %v112
    %v3270 = vunpack.c.h.b16 %v112
    %v3271 = vunpack.c.l.b16 %v113
    %v3272 = vunpack.c.h.b16 %v113
    %v3273 = vunpack.c.l.b16 %v114
    %v3274 = vunpack.c.h.b16 %v114
    %v3275 = vunpack.c.l.b16 %v115
    %v3276 = vunpack.c.h.b16 %v115
    %v3277 = vunpack.c.l.b16 %v116
    %v3278 = vunpack.c.h.b16 %v116
    %v3279 = vunpack.c.l.b16 %v117
    %v3280 = vunpack.c.h.b16 %v117
    %v3281 = vunpack.c.l.b16 %v118
    %v3282 = vunpack.c.h.b16 %v118
    %v3283 = vunpack.c.l.b16 %v119
    %v3284 = vunpack.c.h.b16 %v119
    %v3285 = vunpack.c.l.b16 %v120
    %v3286 = vunpack.c.h.b16 %v120
    %v3287 = vunpack.c.l.b16 %v121
    %v3288 = vunpack.c.h.b16 %v121
    %v3289 = vunpack.c.l.b16 %v122
    %v3290 = vunpack.c.h.b16 %v122
    %v3291 = vunpack.c.l.b16 %v123
    %v3292 = vunpack.c.h.b16 %v123
    %v3293 = vunpack.c.l.b16 %v124
    %v3294 = vunpack.c.h.b16 %v124
    %v3295 = vunpack.c.l.b16 %v125
    %v3296 = vunpack.c.h.b16 %v125
    %v3297 = vunpack.c.l.b16 %v126
    %v3298 = vunpack.c.h.b16 %v126
    %v3299 = vunpack.c.l.b16 %v127
    %v3300 = vunpack.c.h.b16 %v127
    %v3301 = vunpack.c.l.b16 %v128
    %v3302 = vunpack.c.h.b16 %v128
    %v3303 = vunpack.c.l.b16 %v129
    %v3304 = vunpack.c.h.b16 %v129
    %v3305 = vunpack.c.l.b16 %v130
    %v3306 = vunpack.c.h.b16 %v130
    %v3307 = vunpack.c.l.b16 %v131
    %v3308 = vunpack.c.h.b16 %v131
    %v3309 = vunpack.c.l.b16 %v132
    %v3310 = vunpack.c.h.b16 %v132
    %v3311 = vunpack.c.l.b16 %v133
    %v3312 = vunpack.c.h.b16 %v133
    %v3313 = vunpack.c.l.b16 %v134
    %v3314 = vunpack.c.h.b16 %v134
    %v3315 = vunpack.c.l.b16 %v135
    %v3316 = vunpack.c.h.b16 %v135
    %v3317 = vunpack.c.l.b16 %v136
    %v3318 = vunpack.c.h.b16 %v136
    %v3319 = vunpack.c.l.b16 %v137
    %v3320 = vunpack.c.h.b16 %v137
    %v3321 = vunpack.c.l.b16 %v138
    %v3322 = vunpack.c.h.b16 %v138
    %v3323 = vunpack.c.l.b16 %v139
    %v3324 = vunpack.c.h.b16 %v139
    %v3325 = vunpack.c.l.b16 %v140
    %v3326 = vunpack.c.h.b16 %v140
    %v3327 = vunpack.c.l.b16 %v141
    %v3328 = vunpack.c.h.b16 %v141
    %v3329 = vunpack.c.l.b16 %v142
    %v3330 = vunpack.c.h.b16 %v142
    %v3331 = vunpack.c.l.b16 %v143
    %v3332 = vunpack.c.h.b16 %v143
    %v3333 = vunpack.c.l.b16 %v144
    %v3334 = vunpack.c.h.b16 %v144
    %v3335 = vunpack.c.l.b16 %v145
    %v3336 = vunpack.c.h.b16 %v145
    %v3337 = vunpack.c.l.b16 %v146
    %v3338 = vunpack.c.h.b16 %v146
    %v3339 = vunpack.c.l.b16 %v147
    %v3340 = vunpack.c.h.b16 %v147
    %v3341 = vunpack.c.l.b16 %v148
    %v3342 = vunpack.c.h.b16 %v148
    %v3343 = vunpack.c.l.b16 %v149
    %v3344 = vunpack.c.h.b16 %v149
    %v3345 = vunpack.c.l.b16 %v150
    %v3346 = vunpack.c.h.b16 %v150
    %v3347 = vunpack.c.l.b16 %v151
    %v3348 = vunpack.c.h.b16 %v151
    %v3349 = vunpack.c.l.b16 %v152
    %v3350 = vunpack.c.h.b16 %v152
    %v3351 = vunpack.c.l.b16 %v153
    %v3352 = vunpack.c.h.b16 %v153
    %v3353 = vunpack.c.l.b16 %v154
    %v3354 = vunpack.c.h.b16 %v154
    %v3355 = vunpack.c.l.b16 %v155
    %v3356 = vunpack.c.h.b16 %v155
    %v3357 = vunpack.c.l.b16 %v156
    %v3358 = vunpack.c.h.b16 %v156
    %v3359 = vunpack.c.l.b16 %v157
    %v3360 = vunpack.c.h.b16 %v157
    %v3361 = vunpack.c.l.b16 %v158
    %v3362 = vunpack.c.h.b16 %v158
    %v3363 = vunpack.c.l.b16 %v159
    %v3364 = vunpack.c.h.b16 %v159
    %v3365 = vunpack.c.l.b16 %v160
    %v3366 = vunpack.c.h.b16 %v160
    %v3367 = vunpack.c.l.b16 %v161
    %v3368 = vunpack.c.h.b16 %v161
    %v3369 = vunpack.c.l.b16 %v162
    %v3370 = vunpack.c.h.b16 %v162
    %v3371 = vunpack.c.l.b16 %v163
    %v3372 = vunpack.c.h.b16 %v163
    %v3373 = vunpack.c.l.b16 %v164
    %v3374 = vunpack.c.h.b16 %v164
    %v3375 = vunpack.c.l.b16 %v165
    %v3376 = vunpack.c.h.b16 %v165
    %v3377 = vunpack.c.l.b16 %v166
    %v3378 = vunpack.c.h.b16 %v166
    %v3379 = vunpack.c.l.b16 %v167
    %v3380 = vunpack.c.h.b16 %v167
    %v3381 = vunpack.c.l.b16 %v168
    %v3382 = vunpack.c.h.b16 %v168
    %v3383 = vunpack.c.l.b16 %v169
    %v3384 = vunpack.c.h.b16 %v169
    %v3385 = vunpack.c.l.b16 %v170
    %v3386 = vunpack.c.h.b16 %v170
    %v3387 = vunpack.c.l.b16 %v171
    %v3388 = vunpack.c.h.b16 %v171
    %v3389 = vunpack.c.l.b16 %v172
    %v3390 = vunpack.c.h.b16 %v172
    %v3391 = vunpack.c.l.b16 %v173
    %v3392 = vunpack.c.h.b16 %v173
    %v3393 = vunpack.c.l.b16 %v174
    %v3394 = vunpack.c.h.b16 %v174
    %v3395 = vunpack.c.l.b16 %v175
    %v3396 = vunpack.c.h.b16 %v175
    %v3397 = vunpack.c.l.b16 %v176
    %v3398 = vunpack.c.h.b16 %v176
    %v3399 = vunpack.c.l.b16 %v177
    %v3400 = vunpack.c.h.b16 %v177
    %v3401 = vunpack.c.l.b16 %v178
    %v3402 = vunpack.c.h.b16 %v178
    %v3403 = vunpack.c.l.b16 %v179
    %v3404 = vunpack.c.h.b16 %v179
    %v3405 = vunpack.c.l.b16 %v180
    %v3406 = vunpack.c.h.b16 %v180
    %v3407 = vunpack.c.l.b16 %v181
    %v3408 = vunpack.c.h.b16 %v181
    %v3409 = vunpack.c.l.b16 %v182
    %v3410 = vunpack.c.h.b16 %v182
    %v3411 = vunpack.c.l.b16 %v183
    %v3412 = vunpack.c.h.b16 %v183
    %v3413 = vunpack.c.l.b16 %v184
    %v3414 = vunpack.c.h.b16 %v184
    %v3415 = vunpack.c.l.b16 %v185
    %v3416 = vunpack.c.h.b16 %v185
    %v3417 = vunpack.c.l.b16 %v186
    %v3418 = vunpack.c.h.b16 %v186
    %v3419 = vunpack.c.l.b16 %v187
    %v3420 = vunpack.c.h.b16 %v187
    %v3421 = vunpack.c.l.b16 %v188
    %v3422 = vunpack.c.h.b16 %v188
    %v3423 = vunpack.c.l.b16 %v189
    %v3424 = vunpack.c.h.b16 %v189
    %v3425 = vunpack.c.l.b16 %v190
    %v3426 = vunpack.c.h.b16 %v190
    %v3427 = vunpack.c.l.b16 %v191
    %v3428 = vunpack.c.h.b16 %v191
    %v3429 = vunpack.c.l.b16 %v192
    %v3430 = vunpack.c.h.b16 %v192
    %v3431 = vunpack.c.l.b16 %v193
    %v3432 = vunpack.c.h.b16 %v193
    %v3433 = vunpack.c.l.b16 %v194
    %v3434 = vunpack.c.h.b16 %v194
    %v3435 = vunpack.c.l.b16 %v195
    %v3436 = vunpack.c.h.b16 %v195
    %v3437 = vunpack.c.l.b16 %v196
    %v3438 = vunpack.c.h.b16 %v196
    %v3439 = vunpack.c.l.b16 %v197
    %v3440 = vunpack.c.h.b16 %v197
    %v3441 = vunpack.c.l.b16 %v198
    %v3442 = vunpack.c.h.b16 %v198
    %v3443 = vunpack.c.l.b16 %v199
    %v3444 = vunpack.c.h.b16 %v199
    %v3445 = vunpack.c.l.b16 %v200
    %v3446 = vunpack.c.h.b16 %v200
    %v3447 = vunpack.c.l.b16 %v201
    %v3448 = vunpack.c.h.b16 %v201
    %v3449 = vunpack.c.l.b16 %v202
    %v3450 = vunpack.c.h.b16 %v202
    %v3451 = vunpack.c.l.b16 %v203
    %v3452 = vunpack.c.h.b16 %v203
    %v3453 = vunpack.c.l.b16 %v204
    %v3454 = vunpack.c.h.b16 %v204
    %v3455 = vunpack.c.l.b16 %v205
    %v3456 = vunpack.c.h.b16 %v205
    %v3457 = vunpack.c.l.b16 %v206
    %v3458 = vunpack.c.h.b16 %v206
    %v3459 = vunpack.c.l.b16 %v207
    %v3460 = vunpack.c.h.b16 %v207
    %v3461 = vunpack.c.l.b16 %v208
    %v3462 = vunpack.c.h.b16 %v208
    %v3463 = vunpack.c.l.b16 %v209
    %v3464 = vunpack.c.h.b16 %v209
    %v3465 = vunpack.c.l.b16 %v210
    %v3466 = vunpack.c.h.b16 %v210
    %v3467 = vunpack.c.l.b16 %v211
    %v3468 = vunpack.c.h.b16 %v211
    %v3469 = vunpack.c.l.b16 %v212
    %v3470 = vunpack.c.h.b16 %v212
    %v3471 = vunpack.c.l.b16 %v213
    %v3472 = vunpack.c.h.b16 %v213
    %v3473 = vunpack.c.l.b16 %v214
    %v3474 = vunpack.c.h.b16 %v214
    %v3475 = vunpack.c.l.b16 %v215
    %v3476 = vunpack.c.h.b16 %v215
    %v3477 = vunpack.c.l.b16 %v216
    %v3478 = vunpack.c.h.b16 %v216
    %v3479 = vunpack.c.l.b16 %v217
    %v3480 = vunpack.c.h.b16 %v217
    %v3481 = vunpack.c.l.b16 %v218
    %v3482 = vunpack.c.h.b16 %v218
    %v3483 = vunpack.c.l.b16 %v219
    %v3484 = vunpack.c.h.b16 %v219
    %v3485 = vunpack.c.l.b16 %v220
    %v3486 = vunpack.c.h.b16 %v220
    %v3487 = vunpack.c.l.b16 %v221
    %v3488 = vunpack.c.h.b16 %v221
    %v3489 = vunpack.c.l.b16 %v222
    %v3490 = vunpack.c.h.b16 %v222
    %v3491 = vunpack.c.l.b16 %v223
    %v3492 = vunpack.c.h.b16 %v223
    %v3493 = vunpack.c.l.b16 %v224
    %v3494 = vunpack.c.h.b16 %v224
    %v3495 = vunpack.c.l.b16 %v225
    %v3496 = vunpack.c.h.b16 %v225
    %v3497 = vunpack.c.l.b16 %v226
    %v3498 = vunpack.c.h.b16 %v226
    %v3499 = vunpack.c.l.b16 %v227
    %v3500 = vunpack.c.h.b16 %v227
    %v3501 = vunpack.c.l.b16 %v228
    %v3502 = vunpack.c.h.b16 %v228
    %v3503 = vunpack.c.l.b16 %v229
    %v3504 = vunpack.c.h.b16 %v229
    %v3505 = vunpack.c.l.b16 %v230
    %v3506 = vunpack.c.h.b16 %v230
    %v3507 = vunpack.c.l.b16 %v231
    %v3508 = vunpack.c.h.b16 %v231
    %v3509 = vunpack.c.l.b16 %v232
    %v3510 = vunpack.c.h.b16 %v232
    %v3511 = vunpack.c.l.b16 %v233
    %v3512 = vunpack.c.h.b16 %v233
    %v3513 = vunpack.c.l.b16 %v234
    %v3514 = vunpack.c.h.b16 %v234
    %v3515 = vunpack.c.l.b16 %v235
    %v3516 = vunpack.c.h.b16 %v235
    %v3517 = vunpack.c.l.b16 %v236
    %v3518 = vunpack.c.h.b16 %v236
    %v3519 = vunpack.c.l.b16 %v237
    %v3520 = vunpack.c.h.b16 %v237
    %v3521 = vunpack.c.l.b16 %v238
    %v3522 = vunpack.c.h.b16 %v238
    %v3523 = vunpack.c.l.b16 %v239
    %v3524 = vunpack.c.h.b16 %v239
    %v3525 = vunpack.c.l.b16 %v240
    %v3526 = vunpack.c.h.b16 %v240
    %v3527 = vunpack.c.l.b16 %v241
    %v3528 = vunpack.c.h.b16 %v241
    %v3529 = vunpack.c.l.b16 %v242
    %v3530 = vunpack.c.h.b16 %v242
    %v3531 = vunpack.c.l.b16 %v243
    %v3532 = vunpack.c.h.b16 %v243
    %v3533 = vunpack.c.l.b16 %v244
    %v3534 = vunpack.c.h.b16 %v244
    %v3535 = vunpack.c.l.b16 %v245
    %v3536 = vunpack.c.h.b16 %v245
    %v3537 = vunpack.c.l.b16 %v246
    %v3538 = vunpack.c.h.b16 %v246
    %v3539 = vunpack.c.l.b16 %v247
    %v3540 = vunpack.c.h.b16 %v247
    %v3541 = vunpack.c.l.b16 %v248
    %v3542 = vunpack.c.h.b16 %v248
    %v3543 = vunpack.c.l.b16 %v249
    %v3544 = vunpack.c.h.b16 %v249
    %v3545 = vunpack.c.l.b16 %v250
    %v3546 = vunpack.c.h.b16 %v250
    %v3547 = vunpack.c.l.b16 %v251
    %v3548 = vunpack.c.h.b16 %v251
    %v3549 = vunpack.c.l.b16 %v252
    %v3550 = vunpack.c.h.b16 %v252
    %v3551 = vunpack.c.l.b16 %v253
    %v3552 = vunpack.c.h.b16 %v253
    %v3553 = vunpack.c.l.b16 %v254
    %v3554 = vunpack.c.h.b16 %v254
    %v3555 = vunpack.c.l.b16 %v255
    %v3556 = vunpack.c.h.b16 %v255
    %v3557 = vunpack.c.l.b16 %v256
    %v3558 = vunpack.c.h.b16 %v256
    %v3559 = vunpack.c.l.b16 %v257
    %v3560 = vunpack.c.h.b16 %v257
    %v3561 = vunpack.c.l.b16 %v258
    %v3562 = vunpack.c.h.b16 %v258
    %v3563 = vunpack.c.l.b16 %v259
    %v3564 = vunpack.c.h.b16 %v259
    %v3565 = vunpack.c.l.b16 %v260
    %v3566 = vunpack.c.h.b16 %v260
    %v3567 = vunpack.c.l.b16 %v261
    %v3568 = vunpack.c.h.b16 %v261
    %v3569 = vunpack.c.l.b16 %v262
    %v3570 = vunpack.c.h.b16 %v262
    %v3571 = vunpack.c.l.b16 %v263
    %v3572 = vunpack.c.h.b16 %v263
    %v3573 = vunpack.c.l.b16 %v264
    %v3574 = vunpack.c.h.b16 %v264
    %v3575 = vunpack.c.l.b16 %v265
    %v3576 = vunpack.c.h.b16 %v265
    %v3577 = vunpack.c.l.b16 %v266
    %v3578 = vunpack.c.h.b16 %v266
    %v3579 = vunpack.c.l.b16 %v267
    %v3580 = vunpack.c.h.b16 %v267
    %v3581 = vunpack.c.l.b16 %v268
    %v3582 = vunpack.c.h.b16 %v268
    %v3583 = vunpack.c.l.b16 %v269
    %v3584 = vunpack.c.h.b16 %v269
    %v3585 = vunpack.c.l.b16 %v270
    %v3586 = vunpack.c.h.b16 %v270
    %v3587 = vunpack.c.l.b16 %v271
    %v3588 = vunpack.c.h.b16 %v271
    %v3589 = vunpack.c.l.b16 %v272
    %v3590 = vunpack.c.h.b16 %v272
    %v3591 = vunpack.c.l.b16 %v273
    %v3592 = vunpack.c.h.b16 %v273
    %v3593 = vunpack.c.l.b16 %v274
    %v3594 = vunpack.c.h.b16 %v274
    %v3595 = vunpack.c.l.b16 %v275
    %v3596 = vunpack.c.h.b16 %v275
    %v3597 = vunpack.c.l.b16 %v276
    %v3598 = vunpack.c.h.b16 %v276
    %v3599 = vunpack.c.l.b16 %v277
    %v3600 = vunpack.c.h.b16 %v277
    %v3601 = vunpack.c.l.b16 %v278
    %v3602 = vunpack.c.h.b16 %v278
    %v3603 = vunpack.c.l.b16 %v279
    %v3604 = vunpack.c.h.b16 %v279
    %v3605 = vunpack.c.l.b16 %v280
    %v3606 = vunpack.c.h.b16 %v280
    %v3607 = vunpack.c.l.b16 %v281
    %v3608 = vunpack.c.h.b16 %v281
    %v3609 = vunpack.c.l.b16 %v282
    %v3610 = vunpack.c.h.b16 %v282
    %v3611 = vunpack.c.l.b16 %v283
    %v3612 = vunpack.c.h.b16 %v283
    %v3613 = vunpack.c.l.b16 %v284
    %v3614 = vunpack.c.h.b16 %v284
    %v3615 = vunpack.c.l.b16 %v285
    %v3616 = vunpack.c.h.b16 %v285
    %v3617 = vunpack.c.l.b16 %v286
    %v3618 = vunpack.c.h.b16 %v286
    %v3619 = vunpack.c.l.b16 %v287
    %v3620 = vunpack.c.h.b16 %v287
    %v3621 = vunpack.c.l.b16 %v288
    %v3622 = vunpack.c.h.b16 %v288
    %v3623 = vunpack.c.l.b16 %v289
    %v3624 = vunpack.c.h.b16 %v289
    %v3625 = vunpack.c.l.b16 %v290
    %v3626 = vunpack.c.h.b16 %v290
    %v3627 = vunpack.c.l.b16 %v291
    %v3628 = vunpack.c.h.b16 %v291
    %v3629 = vunpack.c.l.b16 %v292
    %v3630 = vunpack.c.h.b16 %v292
    %v3631 = vunpack.c.l.b16 %v293
    %v3632 = vunpack.c.h.b16 %v293
    %v3633 = vunpack.c.l.b16 %v294
    %v3634 = vunpack.c.h.b16 %v294
    %v3635 = vunpack.c.l.b16 %v295
    %v3636 = vunpack.c.h.b16 %v295
    %v3637 = vunpack.c.l.b16 %v296
    %v3638 = vunpack.c.h.b16 %v296
    %v3639 = vunpack.c.l.b16 %v297
    %v3640 = vunpack.c.h.b16 %v297
    %v3641 = vunpack.c.l.b16 %v298
    %v3642 = vunpack.c.h.b16 %v298
    %v3643 = vunpack.c.l.b16 %v299
    %v3644 = vunpack.c.h.b16 %v299
    %v3645 = vunpack.c.l.b16 %v300
    %v3646 = vunpack.c.h.b16 %v300
    %v3647 = vunpack.c.l.b16 %v301
    %v3648 = vunpack.c.h.b16 %v301
    %v3649 = vunpack.c.l.b16 %v302
    %v3650 = vunpack.c.h.b16 %v302
    %v3651 = vunpack.c.l.b16 %v303
    %v3652 = vunpack.c.h.b16 %v303
    %v3653 = vunpack.c.l.b16 %v304
    %v3654 = vunpack.c.h.b16 %v304
    %v3655 = vunpack.c.l.b16 %v305
    %v3656 = vunpack.c.h.b16 %v305
    %v3657 = vunpack.c.l.b16 %v306
    %v3658 = vunpack.c.h.b16 %v306
    %v3659 = vunpack.c.l.b16 %v307
    %v3660 = vunpack.c.h.b16 %v307
    %v3661 = vunpack.c.l.b16 %v308
    %v3662 = vunpack.c.h.b16 %v308
    %v3663 = vunpack.c.l.b16 %v309
    %v3664 = vunpack.c.h.b16 %v309
    %v3665 = vunpack.c.l.b16 %v310
    %v3666 = vunpack.c.h.b16 %v310
    %v3667 = vunpack.c.l.b16 %v311
    %v3668 = vunpack.c.h.b16 %v311
    %v3669 = vunpack.c.l.b16 %v312
    %v3670 = vunpack.c.h.b16 %v312
    %v3671 = vunpack.c.l.b16 %v313
    %v3672 = vunpack.c.h.b16 %v313
    %v3673 = vunpack.c.l.b16 %v314
    %v3674 = vunpack.c.h.b16 %v314
    %v3675 = vunpack.c.l.b16 %v315
    %v3676 = vunpack.c.h.b16 %v315
    %v3677 = vunpack.c.l.b16 %v316
    %v3678 = vunpack.c.h.b16 %v316
    %v3679 = vunpack.c.l.b16 %v317
    %v3680 = vunpack.c.h.b16 %v317
    %v3681 = vunpack.c.l.b16 %v318
    %v3682 = vunpack.c.h.b16 %v318
    %v3683 = vunpack.c.l.b16 %v319
    %v3684 = vunpack.c.h.b16 %v319
    %v3685 = vunpack.c.l.b16 %v320
    %v3686 = vunpack.c.h.b16 %v320
    %v3687 = vunpack.c.l.b16 %v321
    %v3688 = vunpack.c.h.b16 %v321
    %v3689 = vunpack.c.l.b16 %v322
    %v3690 = vunpack.c.h.b16 %v322
    %v3691 = vunpack.c.l.b16 %v323
    %v3692 = vunpack.c.h.b16 %v323
    %v3693 = vunpack.c.l.b16 %v324
    %v3694 = vunpack.c.h.b16 %v324
    %v3695 = vunpack.c.l.b16 %v325
    %v3696 = vunpack.c.h.b16 %v325
    %v3697 = vunpack.c.l.b16 %v326
    %v3698 = vunpack.c.h.b16 %v326
    %v3699 = vunpack.c.l.b16 %v327
    %v3700 = vunpack.c.h.b16 %v327
    %v3701 = vunpack.c.l.b16 %v328
    %v3702 = vunpack.c.h.b16 %v328
    %v3703 = vunpack.c.l.b16 %v329
    %v3704 = vunpack.c.h.b16 %v329
    %v3705 = vunpack.c.l.b16 %v330
    %v3706 = vunpack.c.h.b16 %v330
    %v3707 = vunpack.c.l.b16 %v331
    %v3708 = vunpack.c.h.b16 %v331
    %v3709 = vunpack.c.l.b16 %v332
    %v3710 = vunpack.c.h.b16 %v332
    %v3711 = vunpack.c.l.b16 %v333
    %v3712 = vunpack.c.h.b16 %v333
    %v3713 = vunpack.c.l.b16 %v334
    %v3714 = vunpack.c.h.b16 %v334
    %v3715 = vunpack.c.l.b16 %v335
    %v3716 = vunpack.c.h.b16 %v335
    %v3717 = vunpack.c.l.b16 %v336
    %v3718 = vunpack.c.h.b16 %v336
    %v3719 = vunpack.c.l.b16 %v337
    %v3720 = vunpack.c.h.b16 %v337
    %v3721 = vunpack.c.l.b16 %v338
    %v3722 = vunpack.c.h.b16 %v338
    %v3723 = vunpack.c.l.b16 %v339
    %v3724 = vunpack.c.h.b16 %v339
    %v3725 = vunpack.c.l.b16 %v340
    %v3726 = vunpack.c.h.b16 %v340
    %v3727 = vunpack.c.l.b16 %v341
    %v3728 = vunpack.c.h.b16 %v341
    %v3729 = vunpack.c.l.b16 %v342
    %v3730 = vunpack.c.h.b16 %v342
    %v3731 = vunpack.c.l.b16 %v343
    %v3732 = vunpack.c.h.b16 %v343
    %v3733 = vunpack.c.l.b16 %v344
    %v3734 = vunpack.c.h.b16 %v344
    %v3735 = vunpack.c.l.b16 %v345
    %v3736 = vunpack.c.h.b16 %v345
    %v3737 = vunpack.c.l.b16 %v346
    %v3738 = vunpack.c.h.b16 %v346
    %v3739 = vunpack.c.l.b16 %v347
    %v3740 = vunpack.c.h.b16 %v347
    %v3741 = vunpack.c.l.b16 %v348
    %v3742 = vunpack.c.h.b16 %v348
    %v3743 = vunpack.c.l.b16 %v349
    %v3744 = vunpack.c.h.b16 %v349
    %v3745 = vunpack.c.l.b16 %v350
    %v3746 = vunpack.c.h.b16 %v350
    %v3747 = vunpack.c.l.b16 %v351
    %v3748 = vunpack.c.h.b16 %v351
    %v3749 = vunpack.c.l.b16 %v352
    %v3750 = vunpack.c.h.b16 %v352
    %v3751 = vunpack.c.l.b16 %v353
    %v3752 = vunpack.c.h.b16 %v353
    %v3753 = vunpack.c.l.b16 %v354
    %v3754 = vunpack.c.h.b16 %v354
    %v3755 = vunpack.c.l.b16 %v355
    %v3756 = vunpack.c.h.b16 %v355
    %v3757 = vunpack.c.l.b16 %v356
    %v3758 = vunpack.c.h.b16 %v356
    %v3759 = vunpack.c.l.b16 %v357
    %v3760 = vunpack.c.h.b16 %v357
    %v3761 = vunpack.c.l.b16 %v358
    %v3762 = vunpack.c.h.b16 %v358
    %v3763 = vunpack.c.l.b16 %v359
    %v3764 = vunpack.c.h.b16 %v359
    %v3765 = vunpack.c.l.b16 %v360
    %v3766 = vunpack.c.h.b16 %v360
    %v3767 = vunpack.c.l.b16 %v361
    %v3768 = vunpack.c.h.b16 %v361
    %v3769 = vunpack.c.l.b16 %v362
    %v3770 = vunpack.c.h.b16 %v362
    %v3771 = vunpack.c.l.b16 %v363
    %v3772 = vunpack.c.h.b16 %v363
    %v3773 = vunpack.c.l.b16 %v364
    %v3774 = vunpack.c.h.b16 %v364
    %v3775 = vunpack.c.l.b16 %v365
    %v3776 = vunpack.c.h.b16 %v365
    %v3777 = vunpack.c.l.b16 %v366
    %v3778 = vunpack.c.h.b16 %v366
    %v3779 = vunpack.c.l.b16 %v367
    %v3780 = vunpack.c.h.b16 %v367
    %v3781 = vunpack.c.l.b16 %v368
    %v3782 = vunpack.c.h.b16 %v368
    %v3783 = vunpack.c.l.b16 %v369
    %v3784 = vunpack.c.h.b16 %v369
    %v3785 = vunpack.c.l.b16 %v370
    %v3786 = vunpack.c.h.b16 %v370
    %v3787 = vunpack.c.l.b16 %v371
    %v3788 = vunpack.c.h.b16 %v371
    %v3789 = vunpack.c.l.b16 %v372
    %v3790 = vunpack.c.h.b16 %v372
    %v3791 = vunpack.c.l.b16 %v373
    %v3792 = vunpack.c.h.b16 %v373
    %v3793 = vunpack.c.l.b16 %v374
    %v3794 = vunpack.c.h.b16 %v374
    %v3795 = vunpack.c.l.b16 %v375
    %v3796 = vunpack.c.h.b16 %v375
    %v3797 = vunpack.c.l.b16 %v376
    %v3798 = vunpack.c.h.b16 %v376
    %v3799 = vunpack.c.l.b16 %v377
    %v3800 = vunpack.c.h.b16 %v377
    %v3801 = vunpack.c.l.b16 %v378
    %v3802 = vunpack.c.h.b16 %v378
    %v3803 = vunpack.c.l.b16 %v379
    %v3804 = vunpack.c.h.b16 %v379
    %v3805 = vunpack.c.l.b16 %v380
    %v3806 = vunpack.c.h.b16 %v380
    %v3807 = vunpack.c.l.b16 %v381
    %v3808 = vunpack.c.h.b16 %v381
    %v3809 = vunpack.c.l.b16 %v382
    %v3810 = vunpack.c.h.b16 %v382
    %v3811 = vunpack.c.l.b16 %v383
    %v3812 = vunpack.c.h.b16 %v383
    %v3813 = vunpack.c.l.b16 %v384
    %v3814 = vunpack.c.h.b16 %v384
    %v3815 = vunpack.c.l.b16 %v385
    %v3816 = vunpack.c.h.b16 %v385
    %v3817 = vunpack.c.l.b16 %v386
    %v3818 = vunpack.c.h.b16 %v386
    %v3819 = vunpack.c.l.b16 %v387
    %v3820 = vunpack.c.h.b16 %v387
    %v3821 = vunpack.c.l.b16 %v388
    %v3822 = vunpack.c.h.b16 %v388
    %v3823 = vunpack.c.l.b16 %v389
    %v3824 = vunpack.c.h.b16 %v389
    %v3825 = vunpack.c.l.b16 %v390
    %v3826 = vunpack.c.h.b16 %v390
    %v3827 = vunpack.c.l.b16 %v391
    %v3828 = vunpack.c.h.b16 %v391
    %v3829 = vunpack.c.l.b16 %v392
    %v3830 = vunpack.c.h.b16 %v392
    %v3831 = vunpack.c.l.b16 %v393
    %v3832 = vunpack.c.h.b16 %v393
    %v3833 = vunpack.c.l.b16 %v394
    %v3834 = vunpack.c.h.b16 %v394
    %v3835 = vunpack.c.l.b16 %v395
    %v3836 = vunpack.c.h.b16 %v395
    %v3837 = vunpack.c.l.b16 %v396
    %v3838 = vunpack.c.h.b16 %v396
    %v3839 = vunpack.c.l.b16 %v397
    %v3840 = vunpack.c.h.b16 %v397
    %v3841 = vunpack.c.l.b16 %v398
    %v3842 = vunpack.c.h.b16 %v398
    %v3843 = vunpack.c.l.b16 %v399
    %v3844 = vunpack.c.h.b16 %v399
    %v3845 = vunpack.c.l.b16 %v400
    %v3846 = vunpack.c.h.b16 %v400
    %v3847 = vunpack.c.l.b16 %v401
    %v3848 = vunpack.c.h.b16 %v401
    %v3849 = vunpack.c.l.b16 %v402
    %v3850 = vunpack.c.h.b16 %v402
    %v3851 = vunpack.c.l.b16 %v403
    %v3852 = vunpack.c.h.b16 %v403
    %v3853 = vunpack.c.l.b16 %v404
    %v3854 = vunpack.c.h.b16 %v404
    %v3855 = vunpack.c.l.b16 %v405
    %v3856 = vunpack.c.h.b16 %v405
    %v3857 = vunpack.c.l.b16 %v406
    %v3858 = vunpack.c.h.b16 %v406
    %v3859 = vunpack.c.l.b16 %v407
    %v3860 = vunpack.c.h.b16 %v407
    %v3861 = vunpack.c.l.b16 %v408
    %v3862 = vunpack.c.h.b16 %v408
    %v3863 = vunpack.c.l.b16 %v409
    %v3864 = vunpack.c.h.b16 %v409
    %v3865 = vunpack.c.l.b16 %v410
    %v3866 = vunpack.c.h.b16 %v410
    %v3867 = vunpack.c.l.b16 %v411
    %v3868 = vunpack.c.h.b16 %v411
    %v3869 = vunpack.c.l.b16 %v412
    %v3870 = vunpack.c.h.b16 %v412
    %v3871 = vunpack.c.l.b16 %v413
    %v3872 = vunpack.c.h.b16 %v413
    %v3873 = vunpack.c.l.b16 %v414
    %v3874 = vunpack.c.h.b16 %v414
    %v3875 = vunpack.c.l.b16 %v415
    %v3876 = vunpack.c.h.b16 %v415
    %v3877 = vunpack.c.l.b16 %v416
    %v3878 = vunpack.c.h.b16 %v416
    %v3879 = vunpack.c.l.b16 %v417
    %v3880 = vunpack.c.h.b16 %v417
    %v3881 = vunpack.c.l.b16 %v418
    %v3882 = vunpack.c.h.b16 %v418
    %v3883 = vunpack.c.l.b16 %v419
    %v3884 = vunpack.c.h.b16 %v419
    %v3885 = vunpack.c.l.b16 %v420
    %v3886 = vunpack.c.h.b16 %v420
    %v3887 = vunpack.c.l.b16 %v421
    %v3888 = vunpack.c.h.b16 %v421
    %v3889 = vunpack.c.l.b16 %v422
    %v3890 = vunpack.c.h.b16 %v422
    %v3891 = vunpack.c.l.b16 %v423
    %v3892 = vunpack.c.h.b16 %v423
    %v3893 = vunpack.c.l.b16 %v424
    %v3894 = vunpack.c.h.b16 %v424
    %v3895 = vunpack.c.l.b16 %v425
    %v3896 = vunpack.c.h.b16 %v425
    %v3897 = vunpack.c.l.b16 %v426
    %v3898 = vunpack.c.h.b16 %v426
    %v3899 = vunpack.c.l.b16 %v427
    %v3900 = vunpack.c.h.b16 %v427
    %v3901 = vunpack.c.l.b16 %v428
    %v3902 = vunpack.c.h.b16 %v428
    %v3903 = vunpack.c.l.b16 %v429
    %v3904 = vunpack.c.h.b16 %v429
    %v3905 = vunpack.c.l.b16 %v430
    %v3906 = vunpack.c.h.b16 %v430
    %v3907 = vunpack.c.l.b16 %v431
    %v3908 = vunpack.c.h.b16 %v431
    %v3909 = vunpack.c.l.b16 %v432
    %v3910 = vunpack.c.h.b16 %v432
    %v3911 = vunpack.c.l.b16 %v433
    %v3912 = vunpack.c.h.b16 %v433
    %v3913 = vunpack.c.l.b16 %v434
    %v3914 = vunpack.c.h.b16 %v434
    %v3915 = vunpack.c.l.b16 %v435
    %v3916 = vunpack.c.h.b16 %v435
    %v3917 = vunpack.c.l.b16 %v436
    %v3918 = vunpack.c.h.b16 %v436
    %v3919 = vunpack.c.l.b16 %v437
    %v3920 = vunpack.c.h.b16 %v437
    %v3921 = vunpack.c.l.b16 %v438
    %v3922 = vunpack.c.h.b16 %v438
    %v3923 = vunpack.c.l.b16 %v439
    %v3924 = vunpack.c.h.b16 %v439
    %v3925 = vunpack.c.l.b16 %v440
    %v3926 = vunpack.c.h.b16 %v440
    %v3927 = vunpack.c.l.b16 %v441
    %v3928 = vunpack.c.h.b16 %v441
    %v3929 = vunpack.c.l.b16 %v442
    %v3930 = vunpack.c.h.b16 %v442
    %v3931 = vunpack.c.l.b16 %v443
    %v3932 = vunpack.c.h.b16 %v443
    %v3933 = vunpack.c.l.b16 %v444
    %v3934 = vunpack.c.h.b16 %v444
    %v3935 = vunpack.c.l.b16 %v445
    %v3936 = vunpack.c.h.b16 %v445
    %v3937 = vunpack.c.l.b16 %v446
    %v3938 = vunpack.c.h.b16 %v446
    %v3939 = vunpack.c.l.b16 %v447
    %v3940 = vunpack.c.h.b16 %v447
    %v3941 = vunpack.c.l.b16 %v448
    %v3942 = vunpack.c.h.b16 %v448
    %v3943 = vunpack.c.l.b16 %v449
    %v3944 = vunpack.c.h.b16 %v449
    %v3945 = vunpack.c.l.b16 %v450
    %v3946 = vunpack.c.h.b16 %v450
    %v3947 = vunpack.c.l.b16 %v451
    %v3948 = vunpack.c.h.b16 %v451
    %v3949 = vunpack.c.l.b16 %v452
    %v3950 = vunpack.c.h.b16 %v452
    %v3951 = vunpack.c.l.b16 %v453
    %v3952 = vunpack.c.h.b16 %v453
    %v3953 = vunpack.c.l.b16 %v454
    %v3954 = vunpack.c.h.b16 %v454
    %v3955 = vunpack.c.l.b16 %v455
    %v3956 = vunpack.c.h.b16 %v455
    %v3957 = vunpack.c.l.b16 %v456
    %v3958 = vunpack.c.h.b16 %v456
    %v3959 = vunpack.c.l.b16 %v457
    %v3960 = vunpack.c.h.b16 %v457
    %v3961 = vunpack.c.l.b16 %v458
    %v3962 = vunpack.c.h.b16 %v458
    %v3963 = vunpack.c.l.b16 %v459
    %v3964 = vunpack.c.h.b16 %v459
    %v3965 = vunpack.c.l.b16 %v460
    %v3966 = vunpack.c.h.b16 %v460
    %v3967 = vunpack.c.l.b16 %v461
    %v3968 = vunpack.c.h.b16 %v461
    %v3969 = vunpack.c.l.b16 %v462
    %v3970 = vunpack.c.h.b16 %v462
    %v3971 = vunpack.c.l.b16 %v463
    %v3972 = vunpack.c.h.b16 %v463
    %v3973 = vunpack.c.l.b16 %v464
    %v3974 = vunpack.c.h.b16 %v464
    %v3975 = vunpack.c.l.b16 %v465
    %v3976 = vunpack.c.h.b16 %v465
    %v3977 = vunpack.c.l.b16 %v466
    %v3978 = vunpack.c.h.b16 %v466
    %v3979 = vunpack.c.l.b16 %v467
    %v3980 = vunpack.c.h.b16 %v467
    %v3981 = vunpack.c.l.b16 %v468
    %v3982 = vunpack.c.h.b16 %v468
    %v3983 = vunpack.c.l.b16 %v469
    %v3984 = vunpack.c.h.b16 %v469
    %v3985 = vunpack.c.l.b16 %v470
    %v3986 = vunpack.c.h.b16 %v470
    %v3987 = vunpack.c.l.b16 %v471
    %v3988 = vunpack.c.h.b16 %v471
    %v3989 = vunpack.c.l.b16 %v472
    %v3990 = vunpack.c.h.b16 %v472
    %v3991 = vunpack.c.l.b16 %v473
    %v3992 = vunpack.c.h.b16 %v473
    %v3993 = vunpack.c.l.b16 %v474
    %v3994 = vunpack.c.h.b16 %v474
    %v3995 = vunpack.c.l.b16 %v475
    %v3996 = vunpack.c.h.b16 %v475
    %v3997 = vunpack.c.l.b16 %v476
    %v3998 = vunpack.c.h.b16 %v476
    %v3999 = vunpack.c.l.b16 %v477
    %v4000 = vunpack.c.h.b16 %v477
    %v4001 = vunpack.c.l.b16 %v478
    %v4002 = vunpack.c.h.b16 %v478
    %v4003 = vunpack.c.l.b16 %v479
    %v4004 = vunpack.c.h.b16 %v479
    %v4005 = vunpack.c.l.b16 %v480
    %v4006 = vunpack.c.h.b16 %v480
    %v4007 = vunpack.c.l.b16 %v481
    %v4008 = vunpack.c.h.b16 %v481
    %v4009 = vunpack.c.l.b16 %v482
    %v4010 = vunpack.c.h.b16 %v482
    %v4011 = vunpack.c.l.b16 %v483
    %v4012 = vunpack.c.h.b16 %v483
    %v4013 = vunpack.c.l.b16 %v484
    %v4014 = vunpack.c.h.b16 %v484
    %v4015 = vunpack.c.l.b16 %v485
    %v4016 = vunpack.c.h.b16 %v485
    %v4017 = vunpack.c.l.b16 %v486
    %v4018 = vunpack.c.h.b16 %v486
    %v4019 = vunpack.c.l.b16 %v487
    %v4020 = vunpack.c.h.b16 %v487
    %v4021 = vunpack.c.l.b16 %v488
    %v4022 = vunpack.c.h.b16 %v488
    %v4023 = vunpack.c.l.b16 %v489
    %v4024 = vunpack.c.h.b16 %v489
    %v4025 = vunpack.c.l.b16 %v490
    %v4026 = vunpack.c.h.b16 %v490
    %v4027 = vunpack.c.l.b16 %v491
    %v4028 = vunpack.c.h.b16 %v491
    %v4029 = vunpack.c.l.b16 %v492
    %v4030 = vunpack.c.h.b16 %v492
    %v4031 = vunpack.c.l.b16 %v493
    %v4032 = vunpack.c.h.b16 %v493
    %v4033 = vunpack.c.l.b16 %v494
    %v4034 = vunpack.c.h.b16 %v494
    %v4035 = vunpack.c.l.b16 %v495
    %v4036 = vunpack.c.h.b16 %v495
    %v4037 = vunpack.c.l.b16 %v496
    %v4038 = vunpack.c.h.b16 %v496
    %v4039 = vunpack.c.l.b16 %v497
    %v4040 = vunpack.c.h.b16 %v497
    %v4041 = vunpack.c.l.b16 %v498
    %v4042 = vunpack.c.h.b16 %v498
    %v4043 = vunpack.c.l.b16 %v499
    %v4044 = vunpack.c.h.b16 %v499
    %v4045 = vunpack.c.l.b16 %v500
    %v4046 = vunpack.c.h.b16 %v500
    %v4047 = vunpack.c.l.b16 %v501
    %v4048 = vunpack.c.h.b16 %v501
    %v4049 = vunpack.c.l.b16 %v502
    %v4050 = vunpack.c.h.b16 %v502
    %v4051 = vunpack.c.l.b16 %v503
    %v4052 = vunpack.c.h.b16 %v503
    %v4053 = vunpack.c.l.b16 %v504
    %v4054 = vunpack.c.h.b16 %v504
    %v4055 = vunpack.c.l.b16 %v505
    %v4056 = vunpack.c.h.b16 %v505
    %v4057 = vunpack.c.l.b16 %v506
    %v4058 = vunpack.c.h.b16 %v506
    %v4059 = vunpack.c.l.b16 %v507
    %v4060 = vunpack.c.h.b16 %v507
    %v4061 = vunpack.c.l.b16 %v508
    %v4062 = vunpack.c.h.b16 %v508
    %v4063 = vunpack.c.l.b16 %v509
    %v4064 = vunpack.c.h.b16 %v509
    %v4065 = vunpack.c.l.b16 %v510
    %v4066 = vunpack.c.h.b16 %v510
    %v4067 = vunpack.c.l.b16 %v511
    %v4068 = vunpack.c.h.b16 %v511
    %v4069 = vunpack.c.l.b16 %v512
    %v4070 = vunpack.c.h.b16 %v512
    %v4071 = vunpack.c.l.b16 %v513
    %v4072 = vunpack.c.h.b16 %v513
    %v4073 = vunpack.c.l.b16 %v514
    %v4074 = vunpack.c.h.b16 %v514
    %v4075 = vunpack.c.l.b16 %v515
    %v4076 = vunpack.c.h.b16 %v515
    %v4077 = vunpack.c.l.b16 %v516
    %v4078 = vunpack.c.h.b16 %v516
    %v4079 = vunpack.c.l.b16 %v517
    %v4080 = vunpack.c.h.b16 %v517
    %v4081 = vunpack.c.l.b16 %v518
    %v4082 = vunpack.c.h.b16 %v518
    %v4083 = vunpack.c.l.b16 %v519
    %v4084 = vunpack.c.h.b16 %v519
    %v4085 = vunpack.c.l.b16 %v520
    %v4086 = vunpack.c.h.b16 %v520
    %v4087 = vunpack.c.l.b16 %v521
    %v4088 = vunpack.c.h.b16 %v521
    %v4089 = vunpack.c.l.b16 %v522
    %v4090 = vunpack.c.h.b16 %v522
    %v4091 = vunpack.c.l.b16 %v523
    %v4092 = vunpack.c.h.b16 %v523
    %v4093 = vunpack.c.l.b16 %v524
    %v4094 = vunpack.c.h.b16 %v524
    %v4095 = vunpack.c.l.b16 %v525
    %v4096 = vunpack.c.h.b16 %v525
    %v4097 = vunpack.c.l.b16 %v526
    %v4098 = vunpack.c.h.b16 %v526
    %v4099 = vunpack.c.l.b16 %v527
    %v4100 = vunpack.c.h.b16 %v527
    %v4101 = vunpack.c.l.b16 %v528
    %v4102 = vunpack.c.h.b16 %v528
    %v4103 = vunpack.c.l.b16 %v529
    %v4104 = vunpack.c.h.b16 %v529
    %v4105 = vunpack.c.l.b16 %v530
    %v4106 = vunpack.c.h.b16 %v530
    %v4107 = vunpack.c.l.b16 %v531
    %v4108 = vunpack.c.h.b16 %v531
    %v4109 = vunpack.c.l.b16 %v532
    %v4110 = vunpack.c.h.b16 %v532
    %v4111 = vunpack.c.l.b16 %v533
    %v4112 = vunpack.c.h.b16 %v533
    %v4113 = vunpack.c.l.b16 %v534
    %v4114 = vunpack.c.h.b16 %v534
    %v4115 = vunpack.c.l.b16 %v535
    %v4116 = vunpack.c.h.b16 %v535
    %v4117 = vunpack.c.l.b16 %v536
    %v4118 = vunpack.c.h.b16 %v536
    %v4119 = vunpack.c.l.b16 %v537
    %v4120 = vunpack.c.h.b16 %v537
    %v4121 = vunpack.c.l.b16 %v538
    %v4122 = vunpack.c.h.b16 %v538
    %v4123 = vunpack.c.l.b16 %v539
    %v4124 = vunpack.c.h.b16 %v539
    %v4125 = vunpack.c.l.b16 %v540
    %v4126 = vunpack.c.h.b16 %v540
    %v4127 = vunpack.c.l.b16 %v541
    %v4128 = vunpack.c.h.b16 %v541
    %v4129 = vunpack.c.l.b16 %v542
    %v4130 = vunpack.c.h.b16 %v542
    %v4131 = vunpack.c.l.b16 %v543
    %v4132 = vunpack.c.h.b16 %v543
    %v4133 = vunpack.c.l.b16 %v544
    %v4134 = vunpack.c.h.b16 %v544
    %v4135 = vunpack.c.l.b16 %v545
    %v4136 = vunpack.c.h.b16 %v545
    %v4137 = vunpack.c.l.b16 %v546
    %v4138 = vunpack.c.h.b16 %v546
    %v4139 = vunpack.c.l.b16 %v547
    %v4140 = vunpack.c.h.b16 %v547
    %v4141 = vunpack.c.l.b16 %v548
    %v4142 = vunpack.c.h.b16 %v548
    %v4143 = vunpack.c.l.b16 %v549
    %v4144 = vunpack.c.h.b16 %v549
    %v4145 = vunpack.c.l.b16 %v550
    %v4146 = vunpack.c.h.b16 %v550
    %v4147 = vunpack.c.l.b16 %v551
    %v4148 = vunpack.c.h.b16 %v551
    %v4149 = vunpack.c.l.b16 %v552
    %v4150 = vunpack.c.h.b16 %v552
    %v4151 = vunpack.c.l.b16 %v553
    %v4152 = vunpack.c.h.b16 %v553
    %v4153 = vunpack.c.l.b16 %v554
    %v4154 = vunpack.c.h.b16 %v554
    %v4155 = vunpack.c.l.b16 %v555
    %v4156 = vunpack.c.h.b16 %v555
    %v4157 = vunpack.c.l.b16 %v556
    %v4158 = vunpack.c.h.b16 %v556
    %v4159 = vunpack.c.l.b16 %v557
    %v4160 = vunpack.c.h.b16 %v557
    %v4161 = vunpack.c.l.b16 %v558
    %v4162 = vunpack.c.h.b16 %v558
    %v4163 = vunpack.c.l.b16 %v559
    %v4164 = vunpack.c.h.b16 %v559
    %v4165 = vunpack.c.l.b16 %v560
    %v4166 = vunpack.c.h.b16 %v560
    %v4167 = vunpack.c.l.b16 %v561
    %v4168 = vunpack.c.h.b16 %v561
    %v4169 = vunpack.c.l.b16 %v562
    %v4170 = vunpack.c.h.b16 %v562
    %v4171 = vunpack.c.l.b16 %v563
    %v4172 = vunpack.c.h.b16 %v563
    %v4173 = vunpack.c.l.b16 %v564
    %v4174 = vunpack.c.h.b16 %v564
    %v4175 = vunpack.c.l.b16 %v565
    %v4176 = vunpack.c.h.b16 %v565
    %v4177 = vunpack.c.l.b16 %v566
    %v4178 = vunpack.c.h.b16 %v566
    %v4179 = vunpack.c.l.b16 %v567
    %v4180 = vunpack.c.h.b16 %v567
    %v4181 = vunpack.c.l.b16 %v568
    %v4182 = vunpack.c.h.b16 %v568
    %v4183 = vunpack.c.l.b16 %v569
    %v4184 = vunpack.c.h.b16 %v569
    %v4185 = vunpack.c.l.b16 %v570
    %v4186 = vunpack.c.h.b16 %v570
    %v4187 = vunpack.c.l.b16 %v571
    %v4188 = vunpack.c.h.b16 %v571
    %v4189 = vunpack.c.l.b16 %v572
    %v4190 = vunpack.c.h.b16 %v572
    %v4191 = vunpack.c.l.b16 %v573
    %v4192 = vunpack.c.h.b16 %v573
    %v4193 = vunpack.c.l.b16 %v574
    %v4194 = vunpack.c.h.b16 %v574
    %v4195 = vunpack.c.l.b16 %v575
    %v4196 = vunpack.c.h.b16 %v575
    %v4197 = vunpack.c.l.b16 %v576
    %v4198 = vunpack.c.h.b16 %v576
    %v4199 = vunpack.c.l.b16 %v577
    %v4200 = vunpack.c.h.b16 %v577
    %v4201 = vunpack.c.l.b16 %v578
    %v4202 = vunpack.c.h.b16 %v578
    %v4203 = vunpack.c.l.b16 %v579
    %v4204 = vunpack.c.h.b16 %v579
    %v4205 = vunpack.c.l.b16 %v580
    %v4206 = vunpack.c.h.b16 %v580
    %v4207 = vunpack.c.l.b16 %v581
    %v4208 = vunpack.c.h.b16 %v581
    %v4209 = vunpack.c.l.b16 %v582
    %v4210 = vunpack.c.h.b16 %v582
    %v4211 = vunpack.c.l.b16 %v583
    %v4212 = vunpack.c.h.b16 %v583
    %v4213 = vunpack.c.l.b16 %v584
    %v4214 = vunpack.c.h.b16 %v584
    %v4215 = vunpack.c.l.b16 %v585
    %v4216 = vunpack.c.h.b16 %v585
    %v4217 = vunpack.c.l.b16 %v586
    %v4218 = vunpack.c.h.b16 %v586
    %v4219 = vunpack.c.l.b16 %v587
    %v4220 = vunpack.c.h.b16 %v587
    %v4221 = vunpack.c.l.b16 %v588
    %v4222 = vunpack.c.h.b16 %v588
    %v4223 = vunpack.c.l.b16 %v589
    %v4224 = vunpack.c.h.b16 %v589
    %v4225 = vunpack.c.l.b16 %v590
    %v4226 = vunpack.c.h.b16 %v590
    %v4227 = vunpack.c.l.b16 %v591
    %v4228 = vunpack.c.h.b16 %v591
    %v4229 = vunpack.c.l.b16 %v592
    %v4230 = vunpack.c.h.b16 %v592
    %v4231 = vunpack.c.l.b16 %v593
    %v4232 = vunpack.c.h.b16 %v593
    %v4233 = vunpack.c.l.b16 %v594
    %v4234 = vunpack.c.h.b16 %v594
    %v4235 = vunpack.c.l.b16 %v595
    %v4236 = vunpack.c.h.b16 %v595
    %v4237 = vunpack.c.l.b16 %v596
    %v4238 = vunpack.c.h.b16 %v596
    %v4239 = vunpack.c.l.b16 %v597
    %v4240 = vunpack.c.h.b16 %v597
    %v4241 = vunpack.c.l.b16 %v598
    %v4242 = vunpack.c.h.b16 %v598
    %v4243 = vunpack.c.l.b16 %v599
    %v4244 = vunpack.c.h.b16 %v599
    %v4245 = vunpack.c.l.b16 %v600
    %v4246 = vunpack.c.h.b16 %v600
    %v4247 = vunpack.c.l.b16 %v601
    %v4248 = vunpack.c.h.b16 %v601
    %v4249 = vunpack.c.l.b16 %v602
    %v4250 = vunpack.c.h.b16 %v602
    %v4251 = vunpack.c.l.b16 %v603
    %v4252 = vunpack.c.h.b16 %v603
    %v4253 = vunpack.c.l.b16 %v604
    %v4254 = vunpack.c.h.b16 %v604
    %v4255 = vunpack.c.l.b16 %v605
    %v4256 = vunpack.c.h.b16 %v605
    %v4257 = vunpack.c.l.b16 %v606
    %v4258 = vunpack.c.h.b16 %v606
    %v4259 = vunpack.c.l.b16 %v607
    %v4260 = vunpack.c.h.b16 %v607
    %v4261 = vunpack.c.l.b16 %v608
    %v4262 = vunpack.c.h.b16 %v608
    %v4263 = vunpack.c.l.b16 %v609
    %v4264 = vunpack.c.h.b16 %v609
    %v4265 = vunpack.c.l.b16 %v610
    %v4266 = vunpack.c.h.b16 %v610
    %v4267 = vunpack.c.l.b16 %v611
    %v4268 = vunpack.c.h.b16 %v611
    %v4269 = vunpack.c.l.b16 %v612
    %v4270 = vunpack.c.h.b16 %v612
    %v4271 = vunpack.c.l.b16 %v613
    %v4272 = vunpack.c.h.b16 %v613
    %v4273 = vunpack.c.l.b16 %v614
    %v4274 = vunpack.c.h.b16 %v614
    %v4275 = vunpack.c.l.b16 %v615
    %v4276 = vunpack.c.h.b16 %v615
    %v4277 = vunpack.c.l.b16 %v616
    %v4278 = vunpack.c.h.b16 %v616
    %v4279 = vunpack.c.l.b16 %v617
    %v4280 = vunpack.c.h.b16 %v617
    %v4281 = vunpack.c.l.b16 %v618
    %v4282 = vunpack.c.h.b16 %v618
    %v4283 = vunpack.c.l.b16 %v619
    %v4284 = vunpack.c.h.b16 %v619
    %v4285 = vunpack.c.l.b16 %v620
    %v4286 = vunpack.c.h.b16 %v620
    %v4287 = vunpack.c.l.b16 %v621
    %v4288 = vunpack.c.h.b16 %v621
    %v4289 = vunpack.c.l.b16 %v622
    %v4290 = vunpack.c.h.b16 %v622
    %v4291 = vunpack.c.l.b16 %v623
    %v4292 = vunpack.c.h.b16 %v623
    %v4293 = vunpack.c.l.b16 %v624
    %v4294 = vunpack.c.h.b16 %v624
    %v4295 = vunpack.c.l.b16 %v625
    %v4296 = vunpack.c.h.b16 %v625
    %v4297 = vunpack.c.l.b16 %v626
    %v4298 = vunpack.c.h.b16 %v626
    %v4299 = vunpack.c.l.b16 %v627
    %v4300 = vunpack.c.h.b16 %v627
    %v4301 = vunpack.c.l.b16 %v628
    %v4302 = vunpack.c.h.b16 %v628
    %v4303 = vunpack.c.l.b16 %v629
    %v4304 = vunpack.c.h.b16 %v629
    %v4305 = vunpack.c.l.b16 %v630
    %v4306 = vunpack.c.h.b16 %v630
    %v4307 = vunpack.c.l.b16 %v631
    %v4308 = vunpack.c.h.b16 %v631
    %v4309 = vunpack.c.l.b16 %v632
    %v4310 = vunpack.c.h.b16 %v632
    %v4311 = vunpack.c.l.b16 %v633
    %v4312 = vunpack.c.h.b16 %v633
    %v4313 = vunpack.c.l.b16 %v634
    %v4314 = vunpack.c.h.b16 %v634
    %v4315 = vunpack.c.l.b16 %v635
    %v4316 = vunpack.c.h.b16 %v635
    %v4317 = vunpack.c.l.b16 %v636
    %v4318 = vunpack.c.h.b16 %v636
    %v4319 = vunpack.c.l.b16 %v637
    %v4320 = vunpack.c.h.b16 %v637
    %v4321 = vunpack.c.l.b16 %v638
    %v4322 = vunpack.c.h.b16 %v638
    %v4323 = vunpack.c.l.b16 %v639
    %v4324 = vunpack.c.h.b16 %v639
    %v4325 = vunpack.c.l.b16 %v640
    %v4326 = vunpack.c.h.b16 %v640
    %v4327 = vunpack.c.l.b16 %v641
    %v4328 = vunpack.c.h.b16 %v641
    %v4329 = vunpack.c.l.b16 %v642
    %v4330 = vunpack.c.h.b16 %v642
    %v4331 = vunpack.c.l.b16 %v643
    %v4332 = vunpack.c.h.b16 %v643
    %v4333 = vunpack.c.l.b16 %v644
    %v4334 = vunpack.c.h.b16 %v644
    %v4335 = vunpack.c.l.b16 %v645
    %v4336 = vunpack.c.h.b16 %v645
    %v4337 = vunpack.c.l.b16 %v646
    %v4338 = vunpack.c.h.b16 %v646
    %v4339 = vunpack.c.l.b16 %v647
    %v4340 = vunpack.c.h.b16 %v647
    %v4341 = vunpack.c.l.b16 %v648
    %v4342 = vunpack.c.h.b16 %v648
    %v4343 = vunpack.c.l.b16 %v649
    %v4344 = vunpack.c.h.b16 %v649
    %v4345 = vunpack.c.l.b16 %v650
    %v4346 = vunpack.c.h.b16 %v650
    %v4347 = vunpack.c.l.b16 %v651
    %v4348 = vunpack.c.h.b16 %v651
    %v4349 = vunpack.c.l.b16 %v652
    %v4350 = vunpack.c.h.b16 %v652
    %v4351 = vunpack.c.l.b16 %v653
    %v4352 = vunpack.c.h.b16 %v653
    %v4353 = vunpack.c.l.b16 %v654
    %v4354 = vunpack.c.h.b16 %v654
    %v4355 = vunpack.c.l.b16 %v655
    %v4356 = vunpack.c.h.b16 %v655
    %v4357 = vunpack.c.l.b16 %v656
    %v4358 = vunpack.c.h.b16 %v656
    %v4359 = vunpack.c.l.b16 %v657
    %v4360 = vunpack.c.h.b16 %v657
    %v4361 = vunpack.c.l.b16 %v658
    %v4362 = vunpack.c.h.b16 %v658
    %v4363 = vunpack.c.l.b16 %v659
    %v4364 = vunpack.c.h.b16 %v659
    %v4365 = vunpack.c.l.b16 %v660
    %v4366 = vunpack.c.h.b16 %v660
    %v4367 = vunpack.c.l.b16 %v661
    %v4368 = vunpack.c.h.b16 %v661
    %v4369 = vunpack.c.l.b16 %v662
    %v4370 = vunpack.c.h.b16 %v662
    %v4371 = vunpack.c.l.b16 %v663
    %v4372 = vunpack.c.h.b16 %v663
    %v4373 = vunpack.c.l.b16 %v664
    %v4374 = vunpack.c.h.b16 %v664
    %v4375 = vunpack.c.l.b16 %v665
    %v4376 = vunpack.c.h.b16 %v665
    %v4377 = vunpack.c.l.b16 %v666
    %v4378 = vunpack.c.h.b16 %v666
    %v4379 = vunpack.c.l.b16 %v667
    %v4380 = vunpack.c.h.b16 %v667
    %v4381 = vunpack.c.l.b16 %v668
    %v4382 = vunpack.c.h.b16 %v668
    %v4383 = vunpack.c.l.b16 %v669
    %v4384 = vunpack.c.h.b16 %v669
    %v4385 = vunpack.c.l.b16 %v670
    %v4386 = vunpack.c.h.b16 %v670
    %v4387 = vunpack.c.l.b16 %v671
    %v4388 = vunpack.c.h.b16 %v671
    %v4389 = vunpack.c.l.b16 %v672
    %v4390 = vunpack.c.h.b16 %v672
    %v4391 = vunpack.c.l.b16 %v673
    %v4392 = vunpack.c.h.b16 %v673
    %v4393 = vunpack.c.l.b16 %v674
    %v4394 = vunpack.c.h.b16 %v674
    %v4395 = vunpack.c.l.b16 %v675
    %v4396 = vunpack.c.h.b16 %v675
    %v4397 = vunpack.c.l.b16 %v676
    %v4398 = vunpack.c.h.b16 %v676
    %v4399 = vunpack.c.l.b16 %v677
    %v4400 = vunpack.c.h.b16 %v677
    %v4401 = vunpack.c.l.b16 %v678
    %v4402 = vunpack.c.h.b16 %v678
    %v4403 = vunpack.c.l.b16 %v679
    %v4404 = vunpack.c.h.b16 %v679
    %v4405 = vunpack.c.l.b16 %v680
    %v4406 = vunpack.c.h.b16 %v680
    %v4407 = vunpack.c.l.b16 %v681
    %v4408 = vunpack.c.h.b16 %v681
    %v4409 = vunpack.c.l.b16 %v682
    %v4410 = vunpack.c.h.b16 %v682
    %v4411 = vunpack.c.l.b16 %v683
    %v4412 = vunpack.c.h.b16 %v683
    %v4413 = vunpack.c.l.b16 %v684
    %v4414 = vunpack.c.h.b16 %v684
    %v4415 = vunpack.c.l.b16 %v685
    %v4416 = vunpack.c.h.b16 %v685
    %v4417 = vunpack.c.l.b16 %v686
    %v4418 = vunpack.c.h.b16 %v686
    %v4419 = vunpack.c.l.b16 %v687
    %v4420 = vunpack.c.h.b16 %v687
    %v4421 = vunpack.c.l.b16 %v688
    %v4422 = vunpack.c.h.b16 %v688
    %v4423 = vunpack.c.l.b16 %v689
    %v4424 = vunpack.c.h.b16 %v689
    %v4425 = vunpack.c.l.b16 %v690
    %v4426 = vunpack.c.h.b16 %v690
    %v4427 = vunpack.c.l.b16 %v691
    %v4428 = vunpack.c.h.b16 %v691
    %v4429 = vunpack.c.l.b16 %v692
    %v4430 = vunpack.c.h.b16 %v692
    %v4431 = vunpack.c.l.b16 %v693
    %v4432 = vunpack.c.h.b16 %v693
    %v4433 = vunpack.c.l.b16 %v694
    %v4434 = vunpack.c.h.b16 %v694
    %v4435 = vunpack.c.l.b16 %v695
    %v4436 = vunpack.c.h.b16 %v695
    %v4437 = vunpack.c.l.b16 %v696
    %v4438 = vunpack.c.h.b16 %v696
    %v4439 = vunpack.c.l.b16 %v697
    %v4440 = vunpack.c.h.b16 %v697
    %v4441 = vunpack.c.l.b16 %v698
    %v4442 = vunpack.c.h.b16 %v698
    %v4443 = vunpack.c.l.b16 %v699
    %v4444 = vunpack.c.h.b16 %v699
    %v4445 = vunpack.c.l.b16 %v700
    %v4446 = vunpack.c.h.b16 %v700
    %v4447 = vunpack.c.l.b16 %v701
    %v4448 = vunpack.c.h.b16 %v701
    %v4449 = vunpack.c.l.b16 %v702
    %v4450 = vunpack.c.h.b16 %v702
    %v4451 = vunpack.c.l.b16 %v703
    %v4452 = vunpack.c.h.b16 %v703
    %v4453 = vunpack.c.l.b16 %v704
    %v4454 = vunpack.c.h.b16 %v704
    %v4455 = vunpack.c.l.b16 %v705
    %v4456 = vunpack.c.h.b16 %v705
    %v4457 = vunpack.c.l.b16 %v706
    %v4458 = vunpack.c.h.b16 %v706
    %v4459 = vunpack.c.l.b16 %v707
    %v4460 = vunpack.c.h.b16 %v707
    %v4461 = vunpack.c.l.b16 %v708
    %v4462 = vunpack.c.h.b16 %v708
    %v4463 = vunpack.c.l.b16 %v709
    %v4464 = vunpack.c.h.b16 %v709
    %v4465 = vunpack.c.l.b16 %v710
    %v4466 = vunpack.c.h.b16 %v710
    %v4467 = vunpack.c.l.b16 %v711
    %v4468 = vunpack.c.h.b16 %v711
    %v4469 = vunpack.c.l.b16 %v712
    %v4470 = vunpack.c.h.b16 %v712
    %v4471 = vunpack.c.l.b16 %v713
    %v4472 = vunpack.c.h.b16 %v713
    %v4473 = vunpack.c.l.b16 %v714
    %v4474 = vunpack.c.h.b16 %v714
    %v4475 = vunpack.c.l.b16 %v715
    %v4476 = vunpack.c.h.b16 %v715
    %v4477 = vunpack.c.l.b16 %v716
    %v4478 = vunpack.c.h.b16 %v716
    %v4479 = vunpack.c.l.b16 %v717
    %v4480 = vunpack.c.h.b16 %v717
    %v4481 = vunpack.c.l.b16 %v718
    %v4482 = vunpack.c.h.b16 %v718
    %v4483 = vunpack.c.l.b16 %v719
    %v4484 = vunpack.c.h.b16 %v719
    %v4485 = vunpack.c.l.b16 %v720
    %v4486 = vunpack.c.h.b16 %v720
    %v4487 = vunpack.c.l.b16 %v721
    %v4488 = vunpack.c.h.b16 %v721
    %v4489 = vunpack.c.l.b16 %v722
    %v4490 = vunpack.c.h.b16 %v722
    %v4491 = vunpack.c.l.b16 %v723
    %v4492 = vunpack.c.h.b16 %v723
    %v4493 = vunpack.c.l.b16 %v724
    %v4494 = vunpack.c.h.b16 %v724
    %v4495 = vunpack.c.l.b16 %v725
    %v4496 = vunpack.c.h.b16 %v725
    %v4497 = vunpack.c.l.b16 %v726
    %v4498 = vunpack.c.h.b16 %v726
    %v4499 = vunpack.c.l.b16 %v727
    %v4500 = vunpack.c.h.b16 %v727
    %v4501 = vunpack.c.l.b16 %v728
    %v4502 = vunpack.c.h.b16 %v728
    %v4503 = vunpack.c.l.b16 %v729
    %v4504 = vunpack.c.h.b16 %v729
    %v4505 = vunpack.c.l.b16 %v730
    %v4506 = vunpack.c.h.b16 %v730
    %v4507 = vunpack.c.l.b16 %v731
    %v4508 = vunpack.c.h.b16 %v731
    %v4509 = vunpack.c.l.b16 %v732
    %v4510 = vunpack.c.h.b16 %v732
    %v4511 = vunpack.c.l.b16 %v733
    %v4512 = vunpack.c.h.b16 %v733
    %v4513 = vunpack.c.l.b16 %v734
    %v4514 = vunpack.c.h.b16 %v734
    %v4515 = vunpack.c.l.b16 %v735
    %v4516 = vunpack.c.h.b16 %v735
    %v4517 = vunpack.c.l.b16 %v736
    %v4518 = vunpack.c.h.b16 %v736
    %v4519 = vunpack.c.l.b16 %v737
    %v4520 = vunpack.c.h.b16 %v737
    %v4521 = vunpack.c.l.b16 %v738
    %v4522 = vunpack.c.h.b16 %v738
    %v4523 = vunpack.c.l.b16 %v739
    %v4524 = vunpack.c.h.b16 %v739
    %v4525 = vunpack.c.l.b16 %v740
    %v4526 = vunpack.c.h.b16 %v740
    %v4527 = vunpack.c.l.b16 %v741
    %v4528 = vunpack.c.h.b16 %v741
    %v4529 = vunpack.c.l.b16 %v742
    %v4530 = vunpack.c.h.b16 %v742
    %v4531 = vunpack.c.l.b16 %v743
    %v4532 = vunpack.c.h.b16 %v743
    %v4533 = vunpack.c.l.b16 %v744
    %v4534 = vunpack.c.h.b16 %v744
    %v4535 = vunpack.c.l.b16 %v745
    %v4536 = vunpack.c.h.b16 %v745
    %v4537 = vunpack.c.l.b16 %v746
    %v4538 = vunpack.c.h.b16 %v746
    %v4539 = vunpack.c.l.b16 %v747
    %v4540 = vunpack.c.h.b16 %v747
    %v4541 = vunpack.c.l.b16 %v748
    %v4542 = vunpack.c.h.b16 %v748
    %v4543 = vunpack.c.l.b16 %v749
    %v4544 = vunpack.c.h.b16 %v749
    %v4545 = vunpack.c.l.b16 %v750
    %v4546 = vunpack.c.h.b16 %v750
    %v4547 = vunpack.c.l.b16 %v751
    %v4548 = vunpack.c.h.b16 %v751
    %v4549 = vunpack.c.l.b16 %v752
    %v4550 = vunpack.c.h.b16 %v752
    %v4551 = vunpack.c.l.b16 %v753
    %v4552 = vunpack.c.h.b16 %v753
    %v4553 = vunpack.c.l.b16 %v754
    %v4554 = vunpack.c.h.b16 %v754
    %v4555 = vunpack.c.l.b16 %v755
    %v4556 = vunpack.c.h.b16 %v755
    %v4557 = vunpack.c.l.b16 %v756
    %v4558 = vunpack.c.h.b16 %v756
    %v4559 = vunpack.c.l.b16 %v757
    %v4560 = vunpack.c.h.b16 %v757
    %v4561 = vunpack.c.l.b16 %v758
    %v4562 = vunpack.c.h.b16 %v758
    %v4563 = vunpack.c.l.b16 %v759
    %v4564 = vunpack.c.h.b16 %v759
    %v4565 = vunpack.c.l.b16 %v760
    %v4566 = vunpack.c.h.b16 %v760
    %v4567 = vunpack.c.l.b16 %v761
    %v4568 = vunpack.c.h.b16 %v761
    %v4569 = vunpack.c.l.b16 %v762
    %v4570 = vunpack.c.h.b16 %v762
    %v4571 = vunpack.c.l.b16 %v763
    %v4572 = vunpack.c.h.b16 %v763
    %v4573 = vunpack.c.l.b16 %v764
    %v4574 = vunpack.c.h.b16 %v764
    %v4575 = vunpack.c.l.b16 %v765
    %v4576 = vunpack.c.h.b16 %v765
    %v4577 = vunpack.c.l.b16 %v766
    %v4578 = vunpack.c.h.b16 %v766
    %v4579 = vunpack.c.l.b16 %v767
    %v4580 = vunpack.c.h.b16 %v767
    %v4581 = vunpack.c.l.b16 %v768
    %v4582 = vunpack.c.h.b16 %v768
    %v4583 = vunpack.c.l.b16 %v769
    %v4584 = vunpack.c.h.b16 %v769
    %v4585 = vunpack.c.l.b16 %v770
    %v4586 = vunpack.c.h.b16 %v770
    %v4587 = vunpack.c.l.b16 %v771
    %v4588 = vunpack.c.h.b16 %v771
    %v4589 = vunpack.c.l.b16 %v772
    %v4590 = vunpack.c.h.b16 %v772
    %v4591 = vunpack.c.l.b16 %v773
    %v4592 = vunpack.c.h.b16 %v773
    %v4593 = vunpack.c.l.b16 %v774
    %v4594 = vunpack.c.h.b16 %v774
    %v4595 = vunpack.c.l.b16 %v775
    %v4596 = vunpack.c.h.b16 %v775
    %v4597 = vunpack.c.l.b16 %v776
    %v4598 = vunpack.c.h.b16 %v776
    %v4599 = vunpack.c.l.b16 %v777
    %v4600 = vunpack.c.h.b16 %v777
    %v4601 = vunpack.c.l.b16 %v778
    %v4602 = vunpack.c.h.b16 %v778
    %v4603 = vunpack.c.l.b16 %v779
    %v4604 = vunpack.c.h.b16 %v779
    %v4605 = vunpack.c.l.b16 %v780
    %v4606 = vunpack.c.h.b16 %v780
    %v4607 = vunpack.c.l.b16 %v781
    %v4608 = vunpack.c.h.b16 %v781
    %v4609 = vunpack.c.l.b16 %v782
    %v4610 = vunpack.c.h.b16 %v782
    %v4611 = vunpack.c.l.b16 %v783
    %v4612 = vunpack.c.h.b16 %v783
    %v4613 = vunpack.c.l.b16 %v784
    %v4614 = vunpack.c.h.b16 %v784
    %v4615 = vunpack.c.l.b16 %v785
    %v4616 = vunpack.c.h.b16 %v785
    %v4617 = vunpack.c.l.b16 %v786
    %v4618 = vunpack.c.h.b16 %v786
    %v4619 = vunpack.c.l.b16 %v787
    %v4620 = vunpack.c.h.b16 %v787
    %v4621 = vunpack.c.l.b16 %v788
    %v4622 = vunpack.c.h.b16 %v788
    %v4623 = vunpack.c.l.b16 %v789
    %v4624 = vunpack.c.h.b16 %v789
    %v4625 = vunpack.c.l.b16 %v790
    %v4626 = vunpack.c.h.b16 %v790
    %v4627 = vunpack.c.l.b16 %v791
    %v4628 = vunpack.c.h.b16 %v791
    %v4629 = vunpack.c.l.b16 %v792
    %v4630 = vunpack.c.h.b16 %v792
    %v4631 = vunpack.c.l.b16 %v793
    %v4632 = vunpack.c.h.b16 %v793
    %v4633 = vunpack.c.l.b16 %v794
    %v4634 = vunpack.c.h.b16 %v794
    %v4635 = vunpack.c.l.b16 %v795
    %v4636 = vunpack.c.h.b16 %v795
    %v4637 = vunpack.c.l.b16 %v796
    %v4638 = vunpack.c.h.b16 %v796
    %v4639 = vunpack.c.l.b16 %v797
    %v4640 = vunpack.c.h.b16 %v797
    %v4641 = vunpack.c.l.b16 %v798
    %v4642 = vunpack.c.h.b16 %v798
    %v4643 = vunpack.c.l.b16 %v799
    %v4644 = vunpack.c.h.b16 %v799
    %v4645 = vunpack.c.l.b16 %v800
    %v4646 = vunpack.c.h.b16 %v800
    %v4647 = vunpack.c.l.b16 %v801
    %v4648 = vunpack.c.h.b16 %v801
    %v4649 = vunpack.c.l.b16 %v802
    %v4650 = vunpack.c.h.b16 %v802
    %v4651 = vunpack.c.l.b16 %v803
    %v4652 = vunpack.c.h.b16 %v803
    %v4653 = vunpack.c.l.b16 %v804
    %v4654 = vunpack.c.h.b16 %v804
    %v4655 = vunpack.c.l.b16 %v805
    %v4656 = vunpack.c.h.b16 %v805
    %v4657 = vunpack.c.l.b16 %v806
    %v4658 = vunpack.c.h.b16 %v806
    %v4659 = vunpack.c.l.b16 %v807
    %v4660 = vunpack.c.h.b16 %v807
    %v4661 = vunpack.c.l.b16 %v808
    %v4662 = vunpack.c.h.b16 %v808
    %v4663 = vunpack.c.l.b16 %v809
    %v4664 = vunpack.c.h.b16 %v809
    %v4665 = vunpack.c.l.b16 %v810
    %v4666 = vunpack.c.h.b16 %v810
    %v4667 = vunpack.c.l.b16 %v811
    %v4668 = vunpack.c.h.b16 %v811
    %v4669 = vunpack.c.l.b16 %v812
    %v4670 = vunpack.c.h.b16 %v812
    %v4671 = vunpack.c.l.b16 %v813
    %v4672 = vunpack.c.h.b16 %v813
    %v4673 = vunpack.c.l.b16 %v814
    %v4674 = vunpack.c.h.b16 %v814
    %v4675 = vunpack.c.l.b16 %v815
    %v4676 = vunpack.c.h.b16 %v815
    %v4677 = vunpack.c.l.b16 %v816
    %v4678 = vunpack.c.h.b16 %v816
    %v4679 = vunpack.c.l.b16 %v817
    %v4680 = vunpack.c.h.b16 %v817
    %v4681 = vunpack.c.l.b16 %v818
    %v4682 = vunpack.c.h.b16 %v818
    %v4683 = vunpack.c.l.b16 %v819
    %v4684 = vunpack.c.h.b16 %v819
    %v4685 = vunpack.c.l.b16 %v820
    %v4686 = vunpack.c.h.b16 %v820
    %v4687 = vunpack.c.l.b16 %v821
    %v4688 = vunpack.c.h.b16 %v821
    %v4689 = vunpack.c.l.b16 %v822
    %v4690 = vunpack.c.h.b16 %v822
    %v4691 = vunpack.c.l.b16 %v823
    %v4692 = vunpack.c.h.b16 %v823
    %v4693 = vunpack.c.l.b16 %v824
    %v4694 = vunpack.c.h.b16 %v824
    %v4695 = vunpack.c.l.b16 %v825
    %v4696 = vunpack.c.h.b16 %v825
    %v4697 = vunpack.c.l.b16 %v826
    %v4698 = vunpack.c.h.b16 %v826
    %v4699 = vunpack.c.l.b16 %v827
    %v4700 = vunpack.c.h.b16 %v827
    %v4701 = vunpack.c.l.b16 %v828
    %v4702 = vunpack.c.h.b16 %v828
    %v4703 = vunpack.c.l.b16 %v829
    %v4704 = vunpack.c.h.b16 %v829
    %v4705 = vunpack.c.l.b16 %v830
    %v4706 = vunpack.c.h.b16 %v830
    %v4707 = vunpack.c.l.b16 %v831
    %v4708 = vunpack.c.h.b16 %v831
    %v4709 = vunpack.c.l.b16 %v832
    %v4710 = vunpack.c.h.b16 %v832
    %v4711 = vunpack.c.l.b16 %v833
    %v4712 = vunpack.c.h.b16 %v833
    %v4713 = vunpack.c.l.b16 %v834
    %v4714 = vunpack.c.h.b16 %v834
    %v4715 = vunpack.c.l.b16 %v835
    %v4716 = vunpack.c.h.b16 %v835
    %v4717 = vunpack.c.l.b16 %v836
    %v4718 = vunpack.c.h.b16 %v836
    %v4719 = vunpack.c.l.b16 %v837
    %v4720 = vunpack.c.h.b16 %v837
    %v4721 = vunpack.c.l.b16 %v838
    %v4722 = vunpack.c.h.b16 %v838
    %v4723 = vunpack.c.l.b16 %v839
    %v4724 = vunpack.c.h.b16 %v839
    %v4725 = vunpack.c.l.b16 %v840
    %v4726 = vunpack.c.h.b16 %v840
    %v4727 = vunpack.c.l.b16 %v841
    %v4728 = vunpack.c.h.b16 %v841
    %v4729 = vunpack.c.l.b16 %v842
    %v4730 = vunpack.c.h.b16 %v842
    %v4731 = vunpack.c.l.b16 %v843
    %v4732 = vunpack.c.h.b16 %v843
    %v4733 = vunpack.c.l.b16 %v844
    %v4734 = vunpack.c.h.b16 %v844
    %v4735 = vunpack.c.l.b16 %v845
    %v4736 = vunpack.c.h.b16 %v845
    %v4737 = vunpack.c.l.b16 %v846
    %v4738 = vunpack.c.h.b16 %v846
    %v4739 = vunpack.c.l.b16 %v847
    %v4740 = vunpack.c.h.b16 %v847
    %v4741 = vunpack.c.l.b16 %v848
    %v4742 = vunpack.c.h.b16 %v848
    %v4743 = vunpack.c.l.b16 %v849
    %v4744 = vunpack.c.h.b16 %v849
    %v4745 = vunpack.c.l.b16 %v850
    %v4746 = vunpack.c.h.b16 %v850
    %v4747 = vunpack.c.l.b16 %v851
    %v4748 = vunpack.c.h.b16 %v851
    %v4749 = vunpack.c.l.b16 %v852
    %v4750 = vunpack.c.h.b16 %v852
    %v4751 = vunpack.c.l.b16 %v853
    %v4752 = vunpack.c.h.b16 %v853
    %v4753 = vunpack.c.l.b16 %v854
    %v4754 = vunpack.c.h.b16 %v854
    %v4755 = vunpack.c.l.b16 %v855
    %v4756 = vunpack.c.h.b16 %v855
    %v4757 = vunpack.c.l.b16 %v856
    %v4758 = vunpack.c.h.b16 %v856
    %v4759 = vunpack.c.l.b16 %v857
    %v4760 = vunpack.c.h.b16 %v857
    %v4761 = vunpack.c.l.b16 %v858
    %v4762 = vunpack.c.h.b16 %v858
    %v4763 = vunpack.c.l.b16 %v859
    %v4764 = vunpack.c.h.b16 %v859
    %v4765 = vunpack.c.l.b16 %v860
    %v4766 = vunpack.c.h.b16 %v860
    %v4767 = vunpack.c.l.b16 %v861
    %v4768 = vunpack.c.h.b16 %v861
    %v4769 = vunpack.c.l.b16 %v862
    %v4770 = vunpack.c.h.b16 %v862
    %v4771 = vunpack.c.l.b16 %v863
    %v4772 = vunpack.c.h.b16 %v863
    %v4773 = vunpack.c.l.b16 %v864
    %v4774 = vunpack.c.h.b16 %v864
    %v4775 = vunpack.c.l.b16 %v865
    %v4776 = vunpack.c.h.b16 %v865
    %v4777 = vunpack.c.l.b16 %v866
    %v4778 = vunpack.c.h.b16 %v866
    %v4779 = vunpack.c.l.b16 %v867
    %v4780 = vunpack.c.h.b16 %v867
    %v4781 = vunpack.c.l.b16 %v868
    %v4782 = vunpack.c.h.b16 %v868
    %v4783 = vunpack.c.l.b16 %v869
    %v4784 = vunpack.c.h.b16 %v869
    %v4785 = vunpack.c.l.b16 %v870
    %v4786 = vunpack.c.h.b16 %v870
    %v4787 = vunpack.c.l.b16 %v871
    %v4788 = vunpack.c.h.b16 %v871
    %v4789 = vunpack.c.l.b16 %v872
    %v4790 = vunpack.c.h.b16 %v872
    %v4791 = vunpack.c.l.b16 %v873
    %v4792 = vunpack.c.h.b16 %v873
    %v4793 = vunpack.c.l.b16 %v874
    %v4794 = vunpack.c.h.b16 %v874
    %v4795 = vunpack.c.l.b16 %v875
    %v4796 = vunpack.c.h.b16 %v875
    %v4797 = vunpack.c.l.b16 %v876
    %v4798 = vunpack.c.h.b16 %v876
    %v4799 = vunpack.c.l.b16 %v877
    %v4800 = vunpack.c.h.b16 %v877
    %v4801 = vunpack.c.l.b16 %v878
    %v4802 = vunpack.c.h.b16 %v878
    %v4803 = vunpack.c.l.b16 %v879
    %v4804 = vunpack.c.h.b16 %v879
    %v4805 = vunpack.c.l.b16 %v880
    %v4806 = vunpack.c.h.b16 %v880
    %v4807 = vunpack.c.l.b16 %v881
    %v4808 = vunpack.c.h.b16 %v881
    %v4809 = vunpack.c.l.b16 %v882
    %v4810 = vunpack.c.h.b16 %v882
    %v4811 = vunpack.c.l.b16 %v883
    %v4812 = vunpack.c.h.b16 %v883
    %v4813 = vunpack.c.l.b16 %v884
    %v4814 = vunpack.c.h.b16 %v884
    %v4815 = vunpack.c.l.b16 %v885
    %v4816 = vunpack.c.h.b16 %v885
    %v4817 = vunpack.c.l.b16 %v886
    %v4818 = vunpack.c.h.b16 %v886
    %v4819 = vunpack.c.l.b16 %v887
    %v4820 = vunpack.c.h.b16 %v887
    %v4821 = vunpack.c.l.b16 %v888
    %v4822 = vunpack.c.h.b16 %v888
    %v4823 = vunpack.c.l.b16 %v889
    %v4824 = vunpack.c.h.b16 %v889
    %v4825 = vunpack.c.l.b16 %v890
    %v4826 = vunpack.c.h.b16 %v890
    %v4827 = vunpack.c.l.b16 %v891
    %v4828 = vunpack.c.h.b16 %v891
    %v4829 = vunpack.c.l.b16 %v892
    %v4830 = vunpack.c.h.b16 %v892
    %v4831 = vunpack.c.l.b16 %v893
    %v4832 = vunpack.c.h.b16 %v893
    %v4833 = vunpack.c.l.b16 %v894
    %v4834 = vunpack.c.h.b16 %v894
    %v4835 = vunpack.c.l.b16 %v895
    %v4836 = vunpack.c.h.b16 %v895
    %v4837 = vunpack.c.l.b16 %v896
    %v4838 = vunpack.c.h.b16 %v896
    %v4839 = vunpack.c.l.b16 %v897
    %v4840 = vunpack.c.h.b16 %v897
    %v4841 = vunpack.c.l.b16 %v898
    %v4842 = vunpack.c.h.b16 %v898
    %v4843 = vunpack.c.l.b16 %v899
    %v4844 = vunpack.c.h.b16 %v899
    %v4845 = vunpack.c.l.b16 %v900
    %v4846 = vunpack.c.h.b16 %v900
    %v4847 = vunpack.c.l.b16 %v901
    %v4848 = vunpack.c.h.b16 %v901
    %v4849 = vunpack.c.l.b16 %v902
    %v4850 = vunpack.c.h.b16 %v902
    %v4851 = vunpack.c.l.b16 %v903
    %v4852 = vunpack.c.h.b16 %v903
    %v4853 = vunpack.c.l.b16 %v904
    %v4854 = vunpack.c.h.b16 %v904
    %v4855 = vunpack.c.l.b16 %v905
    %v4856 = vunpack.c.h.b16 %v905
    %v4857 = vunpack.c.l.b16 %v906
    %v4858 = vunpack.c.h.b16 %v906
    %v4859 = vunpack.c.l.b16 %v907
    %v4860 = vunpack.c.h.b16 %v907
    %v4861 = vunpack.c.l.b16 %v908
    %v4862 = vunpack.c.h.b16 %v908
    %v4863 = vunpack.c.l.b16 %v909
    %v4864 = vunpack.c.h.b16 %v909
    %v4865 = vunpack.c.l.b16 %v910
    %v4866 = vunpack.c.h.b16 %v910
    %v4867 = vunpack.c.l.b16 %v911
    %v4868 = vunpack.c.h.b16 %v911
    %v4869 = vunpack.c.l.b16 %v912
    %v4870 = vunpack.c.h.b16 %v912
    %v4871 = vunpack.c.l.b16 %v913
    %v4872 = vunpack.c.h.b16 %v913
    %v4873 = vunpack.c.l.b16 %v914
    %v4874 = vunpack.c.h.b16 %v914
    %v4875 = vunpack.c.l.b16 %v915
    %v4876 = vunpack.c.h.b16 %v915
    %v4877 = vunpack.c.l.b16 %v916
    %v4878 = vunpack.c.h.b16 %v916
    %v4879 = vunpack.c.l.b16 %v917
    %v4880 = vunpack.c.h.b16 %v917
    %v4881 = vunpack.c.l.b16 %v918
    %v4882 = vunpack.c.h.b16 %v918
    %v4883 = vunpack.c.l.b16 %v919
    %v4884 = vunpack.c.h.b16 %v919
    %v4885 = vunpack.c.l.b16 %v920
    %v4886 = vunpack.c.h.b16 %v920
    %v4887 = vunpack.c.l.b16 %v921
    %v4888 = vunpack.c.h.b16 %v921
    %v4889 = vunpack.c.l.b16 %v922
    %v4890 = vunpack.c.h.b16 %v922
    %v4891 = vunpack.c.l.b16 %v923
    %v4892 = vunpack.c.h.b16 %v923
    %v4893 = vunpack.c.l.b16 %v924
    %v4894 = vunpack.c.h.b16 %v924
    %v4895 = vunpack.c.l.b16 %v925
    %v4896 = vunpack.c.h.b16 %v925
    %v4897 = vunpack.c.l.b16 %v926
    %v4898 = vunpack.c.h.b16 %v926
    %v4899 = vunpack.c.l.b16 %v927
    %v4900 = vunpack.c.h.b16 %v927
    %v4901 = vunpack.c.l.b16 %v928
    %v4902 = vunpack.c.h.b16 %v928
    %v4903 = vunpack.c.l.b16 %v929
    %v4904 = vunpack.c.h.b16 %v929
    %v4905 = vunpack.c.l.b16 %v930
    %v4906 = vunpack.c.h.b16 %v930
    %v4907 = vunpack.c.l.b16 %v931
    %v4908 = vunpack.c.h.b16 %v931
    %v4909 = vunpack.c.l.b16 %v932
    %v4910 = vunpack.c.h.b16 %v932
    %v4911 = vunpack.c.l.b16 %v933
    %v4912 = vunpack.c.h.b16 %v933
    %v4913 = vunpack.c.l.b16 %v934
    %v4914 = vunpack.c.h.b16 %v934
    %v4915 = vunpack.c.l.b16 %v935
    %v4916 = vunpack.c.h.b16 %v935
    %v4917 = vunpack.c.l.b16 %v936
    %v4918 = vunpack.c.h.b16 %v936
    %v4919 = vunpack.c.l.b16 %v937
    %v4920 = vunpack.c.h.b16 %v937
    %v4921 = vunpack.c.l.b16 %v938
    %v4922 = vunpack.c.h.b16 %v938
    %v4923 = vunpack.c.l.b16 %v939
    %v4924 = vunpack.c.h.b16 %v939
    %v4925 = vunpack.c.l.b16 %v940
    %v4926 = vunpack.c.h.b16 %v940
    %v4927 = vunpack.c.l.b16 %v941
    %v4928 = vunpack.c.h.b16 %v941
    %v4929 = vunpack.c.l.b16 %v942
    %v4930 = vunpack.c.h.b16 %v942
    %v4931 = vunpack.c.l.b16 %v943
    %v4932 = vunpack.c.h.b16 %v943
    %v4933 = vunpack.c.l.b16 %v944
    %v4934 = vunpack.c.h.b16 %v944
    %v4935 = vunpack.c.l.b16 %v945
    %v4936 = vunpack.c.h.b16 %v945
    %v4937 = vunpack.c.l.b16 %v946
    %v4938 = vunpack.c.h.b16 %v946
    %v4939 = vunpack.c.l.b16 %v947
    %v4940 = vunpack.c.h.b16 %v947
    %v4941 = vunpack.c.l.b16 %v948
    %v4942 = vunpack.c.h.b16 %v948
    %v4943 = vunpack.c.l.b16 %v949
    %v4944 = vunpack.c.h.b16 %v949
    %v4945 = vunpack.c.l.b16 %v950
    %v4946 = vunpack.c.h.b16 %v950
    %v4947 = vunpack.c.l.b16 %v951
    %v4948 = vunpack.c.h.b16 %v951
    %v4949 = vunpack.c.l.b16 %v952
    %v4950 = vunpack.c.h.b16 %v952
    %v4951 = vunpack.c.l.b16 %v953
    %v4952 = vunpack.c.h.b16 %v953
    %v4953 = vunpack.c.l.b16 %v954
    %v4954 = vunpack.c.h.b16 %v954
    %v4955 = vunpack.c.l.b16 %v955
    %v4956 = vunpack.c.h.b16 %v955
    %v4957 = vunpack.c.l.b16 %v956
    %v4958 = vunpack.c.h.b16 %v956
    %v4959 = vunpack.c.l.b16 %v957
    %v4960 = vunpack.c.h.b16 %v957
    %v4961 = vunpack.c.l.b16 %v958
    %v4962 = vunpack.c.h.b16 %v958
    %v4963 = vunpack.c.l.b16 %v959
    %v4964 = vunpack.c.h.b16 %v959
    %v4965 = vunpack.c.l.b16 %v960
    %v4966 = vunpack.c.h.b16 %v960
    %v4967 = vunpack.c.l.b16 %v961
    %v4968 = vunpack.c.h.b16 %v961
    %v4969 = vunpack.c.l.b16 %v962
    %v4970 = vunpack.c.h.b16 %v962
    %v4971 = vunpack.c.l.b16 %v963
    %v4972 = vunpack.c.h.b16 %v963
    %v4973 = vunpack.c.l.b16 %v964
    %v4974 = vunpack.c.h.b16 %v964
    %v4975 = vunpack.c.l.b16 %v965
    %v4976 = vunpack.c.h.b16 %v965
    %v4977 = vunpack.c.l.b16 %v966
    %v4978 = vunpack.c.h.b16 %v966
    %v4979 = vunpack.c.l.b16 %v967
    %v4980 = vunpack.c.h.b16 %v967
    %v4981 = vunpack.c.l.b16 %v968
    %v4982 = vunpack.c.h.b16 %v968
    %v4983 = vunpack.c.l.b16 %v969
    %v4984 = vunpack.c.h.b16 %v969
    %v4985 = vunpack.c.l.b16 %v970
    %v4986 = vunpack.c.h.b16 %v970
    %v4987 = vunpack.c.l.b16 %v971
    %v4988 = vunpack.c.h.b16 %v971
    %v4989 = vunpack.c.l.b16 %v972
    %v4990 = vunpack.c.h.b16 %v972
    %v4991 = vunpack.c.l.b16 %v973
    %v4992 = vunpack.c.h.b16 %v973
    %v4993 = vunpack.c.l.b16 %v974
    %v4994 = vunpack.c.h.b16 %v974
    %v4995 = vunpack.c.l.b16 %v975
    %v4996 = vunpack.c.h.b16 %v975
    %v4997 = vunpack.c.l.b16 %v976
    %v4998 = vunpack.c.h.b16 %v976
    %v4999 = vunpack.c.l.b16 %v977
    %v5000 = vunpack.c.h.b16 %v977
    %v5001 = vunpack.c.l.b16 %v978
    %v5002 = vunpack.c.h.b16 %v978
    %v5003 = vunpack.c.l.b16 %v979
    %v5004 = vunpack.c.h.b16 %v979
    %v5005 = vunpack.c.l.b16 %v980
    %v5006 = vunpack.c.h.b16 %v980
    %v5007 = vunpack.c.l.b16 %v981
    %v5008 = vunpack.c.h.b16 %v981
    %v5009 = vunpack.c.l.b16 %v982
    %v5010 = vunpack.c.h.b16 %v982
    %v5011 = vunpack.c.l.b16 %v983
    %v5012 = vunpack.c.h.b16 %v983
    %v5013 = vunpack.c.l.b16 %v984
    %v5014 = vunpack.c.h.b16 %v984
    %v5015 = vunpack.c.l.b16 %v985
    %v5016 = vunpack.c.h.b16 %v985
    %v5017 = vunpack.c.l.b16 %v986
    %v5018 = vunpack.c.h.b16 %v986
    %v5019 = vunpack.c.l.b16 %v987
    %v5020 = vunpack.c.h.b16 %v987
    %v5021 = vunpack.c.l.b16 %v988
    %v5022 = vunpack.c.h.b16 %v988
    %v5023 = vunpack.c.l.b16 %v989
    %v5024 = vunpack.c.h.b16 %v989
    %v5025 = vunpack.c.l.b16 %v990
    %v5026 = vunpack.c.h.b16 %v990
    %v5027 = vunpack.c.l.b16 %v991
    %v5028 = vunpack.c.h.b16 %v991
    %v5029 = vunpack.c.l.b16 %v992
    %v5030 = vunpack.c.h.b16 %v992
    %v5031 = vunpack.c.l.b16 %v993
    %v5032 = vunpack.c.h.b16 %v993
    %v5033 = vunpack.c.l.b16 %v994
    %v5034 = vunpack.c.h.b16 %v994
    %v5035 = vunpack.c.l.b16 %v995
    %v5036 = vunpack.c.h.b16 %v995
    %v5037 = vunpack.c.l.b16 %v996
    %v5038 = vunpack.c.h.b16 %v996
    %v5039 = vunpack.c.l.b16 %v997
    %v5040 = vunpack.c.h.b16 %v997
    %v5041 = vunpack.c.l.b16 %v998
    %v5042 = vunpack.c.h.b16 %v998
    %v5043 = vunpack.c.l.b16 %v999
    %v5044 = vunpack.c.h.b16 %v999
    %v5045 = vunpack.c.l.b16 %v1000
    %v5046 = vunpack.c.h.b16 %v1000
    %v5047 = vunpack.c.l.b16 %v1001
    %v5048 = vunpack.c.h.b16 %v1001
    %v5049 = vunpack.c.l.b16 %v1002
    %v5050 = vunpack.c.h.b16 %v1002
    %v5051 = vunpack.c.l.b16 %v1003
    %v5052 = vunpack.c.h.b16 %v1003
    %v5053 = vunpack.c.l.b16 %v1004
    %v5054 = vunpack.c.h.b16 %v1004
    %v5055 = vunpack.c.l.b16 %v1005
    %v5056 = vunpack.c.h.b16 %v1005
    %v5057 = vunpack.c.l.b16 %v1006
    %v5058 = vunpack.c.h.b16 %v1006
    %v5059 = vunpack.c.l.b16 %v1007
    %v5060 = vunpack.c.h.b16 %v1007
    %v5061 = vunpack.c.l.b16 %v1008
    %v5062 = vunpack.c.h.b16 %v1008
    %v5063 = vunpack.c.l.b16 %v1009
    %v5064 = vunpack.c.h.b16 %v1009
    %v5065 = vunpack.c.l.b16 %v1010
    %v5066 = vunpack.c.h.b16 %v1010
    %v5067 = vunpack.c.l.b16 %v1011
    %v5068 = vunpack.c.h.b16 %v1011
    %v5069 = vunpack.c.l.b16 %v1012
    %v5070 = vunpack.c.h.b16 %v1012
    %v5071 = vunpack.c.l.b16 %v1013
    %v5072 = vunpack.c.h.b16 %v1013
    %v5073 = vunpack.c.l.b16 %v1014
    %v5074 = vunpack.c.h.b16 %v1014
    %v5075 = vunpack.c.l.b16 %v1015
    %v5076 = vunpack.c.h.b16 %v1015
    %v5077 = vunpack.c.l.b16 %v1016
    %v5078 = vunpack.c.h.b16 %v1016
    %v5079 = vunpack.c.l.b16 %v1017
    %v5080 = vunpack.c.h.b16 %v1017
    %v5081 = vunpack.c.l.b16 %v1018
    %v5082 = vunpack.c.h.b16 %v1018
    %v5083 = vunpack.c.l.b16 %v1019
    %v5084 = vunpack.c.h.b16 %v1019
    %v5085 = vunpack.c.l.b16 %v1020
    %v5086 = vunpack.c.h.b16 %v1020
    %v5087 = vunpack.c.l.b16 %v1021
    %v5088 = vunpack.c.h.b16 %v1021
    %v5089 = vunpack.c.l.b16 %v1022
    %v5090 = vunpack.c.h.b16 %v1022
    %v5091 = vunpack.c.l.b16 %v1023
    %v5092 = vunpack.c.h.b16 %v1023
    %v5093 = vunpack.c.l.b16 %v1024
    %v5094 = vunpack.c.h.b16 %v1024
    %v5095 = vunpack.c.l.b16 %v1025
    %v5096 = vunpack.c.h.b16 %v1025
    %v5097 = vunpack.c.l.b16 %v1026
    %v5098 = vunpack.c.h.b16 %v1026
    %v5099 = vunpack.c.l.b16 %v1027
    %v5100 = vunpack.c.h.b16 %v1027
    %v5101 = vunpack.c.l.b16 %v1028
    %v5102 = vunpack.c.h.b16 %v1028
    %v5103 = vunpack.c.l.b16 %v1029
    %v5104 = vunpack.c.h.b16 %v1029
    %v5105 = vunpack.c.l.b16 %v1030
    %v5106 = vunpack.c.h.b16 %v1030
    %v5107 = vunpack.c.l.b16 %v1031
    %v5108 = vunpack.c.h.b16 %v1031
    %v5109 = vunpack.c.l.b16 %v1032
    %v5110 = vunpack.c.h.b16 %v1032
    %v5111 = vunpack.c.l.b16 %v1033
    %v5112 = vunpack.c.h.b16 %v1033
    %v5113 = vunpack.c.l.b16 %v1034
    %v5114 = vunpack.c.h.b16 %v1034
    %v5115 = vunpack.c.l.b16 %v1035
    %v5116 = vunpack.c.h.b16 %v1035
    %v5117 = vunpack.c.l.b16 %v1036
    %v5118 = vunpack.c.h.b16 %v1036
    %v5119 = vunpack.c.l.b16 %v1037
    %v5120 = vunpack.c.h.b16 %v1037
    %v5121 = vunpack.c.l.b16 %v1038
    %v5122 = vunpack.c.h.b16 %v1038
    %v5123 = vunpack.c.l.b16 %v1039
    %v5124 = vunpack.c.h.b16 %v1039
    %v5125 = vunpack.c.l.b16 %v1040
    %v5126 = vunpack.c.h.b16 %v1040
    %v5127 = vunpack.c.l.b16 %v1041
    %v5128 = vunpack.c.h.b16 %v1041
    %v5129 = vunpack.c.l.b16 %v1042
    %v5130 = vunpack.c.h.b16 %v1042
    %v5131 = vunpack.c.l.b16 %v1043
    %v5132 = vunpack.c.h.b16 %v1043
    %v5133 = vunpack.c.l.b16 %v1044
    %v5134 = vunpack.c.h.b16 %v1044
    %v5135 = vunpack.c.l.b16 %v1045
    %v5136 = vunpack.c.h.b16 %v1045
    %v5137 = vunpack.c.l.b16 %v1046
    %v5138 = vunpack.c.h.b16 %v1046
    %v5139 = vunpack.c.l.b16 %v1047
    %v5140 = vunpack.c.h.b16 %v1047
    %v5141 = vunpack.c.l.b16 %v1048
    %v5142 = vunpack.c.h.b16 %v1048
    %v5143 = vunpack.c.l.b16 %v1049
    %v5144 = vunpack.c.h.b16 %v1049
    %v5145 = vunpack.c.l.b16 %v1050
    %v5146 = vunpack.c.h.b16 %v1050
    %v5147 = vunpack.c.l.b16 %v1051
    %v5148 = vunpack.c.h.b16 %v1051
    %v5149 = vunpack.c.l.b16 %v1052
    %v5150 = vunpack.c.h.b16 %v1052
    %v5151 = vunpack.c.l.b16 %v1053
    %v5152 = vunpack.c.h.b16 %v1053
    %v5153 = vunpack.c.l.b16 %v1054
    %v5154 = vunpack.c.h.b16 %v1054
    %v5155 = vunpack.c.l.b16 %v1055
    %v5156 = vunpack.c.h.b16 %v1055
    %v5157 = vunpack.c.l.b16 %v1056
    %v5158 = vunpack.c.h.b16 %v1056
    %v5159 = vunpack.c.l.b16 %v1057
    %v5160 = vunpack.c.h.b16 %v1057
    %v5161 = vunpack.c.l.b16 %v1058
    %v5162 = vunpack.c.h.b16 %v1058
    %v5163 = vunpack.c.l.b16 %v1059
    %v5164 = vunpack.c.h.b16 %v1059
    %v5165 = vunpack.c.l.b16 %v1060
    %v5166 = vunpack.c.h.b16 %v1060
    %v5167 = vunpack.c.l.b16 %v1061
    %v5168 = vunpack.c.h.b16 %v1061
    %v5169 = vunpack.c.l.b16 %v1062
    %v5170 = vunpack.c.h.b16 %v1062
    %v5171 = vunpack.c.l.b16 %v1063
    %v5172 = vunpack.c.h.b16 %v1063
    %v5173 = vunpack.c.l.b16 %v1064
    %v5174 = vunpack.c.h.b16 %v1064
    %v5175 = vunpack.c.l.b16 %v1065
    %v5176 = vunpack.c.h.b16 %v1065
    %v5177 = vunpack.c.l.b16 %v1066
    %v5178 = vunpack.c.h.b16 %v1066
    %v5179 = vunpack.c.l.b16 %v1067
    %v5180 = vunpack.c.h.b16 %v1067
    %v5181 = vunpack.c.l.b16 %v1068
    %v5182 = vunpack.c.h.b16 %v1068
    %v5183 = vunpack.c.l.b16 %v1069
    %v5184 = vunpack.c.h.b16 %v1069
    %v5185 = vunpack.c.l.b16 %v1070
    %v5186 = vunpack.c.h.b16 %v1070
    %v5187 = vunpack.c.l.b16 %v1071
    %v5188 = vunpack.c.h.b16 %v1071
    %v5189 = vunpack.c.l.b16 %v1072
    %v5190 = vunpack.c.h.b16 %v1072
    %v5191 = vunpack.c.l.b16 %v1073
    %v5192 = vunpack.c.h.b16 %v1073
    %v5193 = vunpack.c.l.b16 %v1074
    %v5194 = vunpack.c.h.b16 %v1074
    %v5195 = vunpack.c.l.b16 %v1075
    %v5196 = vunpack.c.h.b16 %v1075
    %v5197 = vunpack.c.l.b16 %v1076
    %v5198 = vunpack.c.h.b16 %v1076
    %v5199 = vunpack.c.l.b16 %v1077
    %v5200 = vunpack.c.h.b16 %v1077
    %v5201 = vunpack.c.l.b16 %v1078
    %v5202 = vunpack.c.h.b16 %v1078
    %v5203 = vunpack.c.l.b16 %v1079
    %v5204 = vunpack.c.h.b16 %v1079
    %v5205 = vunpack.c.l.b16 %v1080
    %v5206 = vunpack.c.h.b16 %v1080
    %v5207 = vunpack.c.l.b16 %v1081
    %v5208 = vunpack.c.h.b16 %v1081
    %v5209 = vunpack.c.l.b16 %v1082
    %v5210 = vunpack.c.h.b16 %v1082
    %v5211 = vunpack.c.l.b16 %v1083
    %v5212 = vunpack.c.h.b16 %v1083
    %v5213 = vunpack.c.l.b16 %v1084
    %v5214 = vunpack.c.h.b16 %v1084
    %v5215 = vunpack.c.l.b16 %v1085
    %v5216 = vunpack.c.h.b16 %v1085
    %v5217 = vunpack.c.l.b16 %v1086
    %v5218 = vunpack.c.h.b16 %v1086
    %v5219 = vunpack.c.l.b16 %v1087
    %v5220 = vunpack.c.h.b16 %v1087
    %v5221 = vunpack.c.l.b16 %v1088
    %v5222 = vunpack.c.h.b16 %v1088
    %v5223 = vunpack.c.l.b16 %v1089
    %v5224 = vunpack.c.h.b16 %v1089
    %v5225 = vunpack.c.l.b16 %v1090
    %v5226 = vunpack.c.h.b16 %v1090
    %v5227 = vunpack.c.l.b16 %v1091
    %v5228 = vunpack.c.h.b16 %v1091
    %v5229 = vunpack.c.l.b16 %v1092
    %v5230 = vunpack.c.h.b16 %v1092
    %v5231 = vunpack.c.l.b16 %v1093
    %v5232 = vunpack.c.h.b16 %v1093
    %v5233 = vunpack.c.l.b16 %v1094
    %v5234 = vunpack.c.h.b16 %v1094
    %v5235 = vunpack.c.l.b16 %v1095
    %v5236 = vunpack.c.h.b16 %v1095
    %v5237 = vunpack.c.l.b16 %v1096
    %v5238 = vunpack.c.h.b16 %v1096
    %v5239 = vunpack.c.l.b16 %v1097
    %v5240 = vunpack.c.h.b16 %v1097
    %v5241 = vunpack.c.l.b16 %v1098
    %v5242 = vunpack.c.h.b16 %v1098
    %v5243 = vunpack.c.l.b16 %v1099
    %v5244 = vunpack.c.h.b16 %v1099
    %v5245 = vunpack.c.l.b16 %v1100
    %v5246 = vunpack.c.h.b16 %v1100
    %v5247 = vunpack.c.l.b16 %v1101
    %v5248 = vunpack.c.h.b16 %v1101
    %v5249 = vunpack.c.l.b16 %v1102
    %v5250 = vunpack.c.h.b16 %v1102
    %v5251 = vunpack.c.l.b16 %v1103
    %v5252 = vunpack.c.h.b16 %v1103
    %v5253 = vunpack.c.l.b16 %v1104
    %v5254 = vunpack.c.h.b16 %v1104
    %v5255 = vunpack.c.l.b16 %v1105
    %v5256 = vunpack.c.h.b16 %v1105
    %v5257 = vunpack.c.l.b16 %v1106
    %v5258 = vunpack.c.h.b16 %v1106
    %v5259 = vunpack.c.l.b16 %v1107
    %v5260 = vunpack.c.h.b16 %v1107
    %v5261 = vunpack.c.l.b16 %v1108
    %v5262 = vunpack.c.h.b16 %v1108
    %v5263 = vunpack.c.l.b16 %v1109
    %v5264 = vunpack.c.h.b16 %v1109
    %v5265 = vunpack.c.l.b16 %v1110
    %v5266 = vunpack.c.h.b16 %v1110
    %v5267 = vunpack.c.l.b16 %v1111
    %v5268 = vunpack.c.h.b16 %v1111
    %v5269 = vunpack.c.l.b16 %v1112
    %v5270 = vunpack.c.h.b16 %v1112
    %v5271 = vunpack.c.l.b16 %v1113
    %v5272 = vunpack.c.h.b16 %v1113
    %v5273 = vunpack.c.l.b16 %v1114
    %v5274 = vunpack.c.h.b16 %v1114
    %v5275 = vunpack.c.l.b16 %v1115
    %v5276 = vunpack.c.h.b16 %v1115
    %v5277 = vunpack.c.l.b16 %v1116
    %v5278 = vunpack.c.h.b16 %v1116
    %v5279 = vunpack.c.l.b16 %v1117
    %v5280 = vunpack.c.h.b16 %v1117
    %v5281 = vunpack.c.l.b16 %v1118
    %v5282 = vunpack.c.h.b16 %v1118
    %v5283 = vunpack.c.l.b16 %v1119
    %v5284 = vunpack.c.h.b16 %v1119
    %v5285 = vunpack.c.l.b16 %v1120
    %v5286 = vunpack.c.h.b16 %v1120
    %v5287 = vunpack.c.l.b16 %v1121
    %v5288 = vunpack.c.h.b16 %v1121
    %v5289 = vunpack.c.l.b16 %v1122
    %v5290 = vunpack.c.h.b16 %v1122
    %v5291 = vunpack.c.l.b16 %v1123
    %v5292 = vunpack.c.h.b16 %v1123
    %v5293 = vunpack.c.l.b16 %v1124
    %v5294 = vunpack.c.h.b16 %v1124
    %v5295 = vunpack.c.l.b16 %v1125
    %v5296 = vunpack.c.h.b16 %v1125
    %v5297 = vunpack.c.l.b16 %v1126
    %v5298 = vunpack.c.h.b16 %v1126
    %v5299 = vunpack.c.l.b16 %v1127
    %v5300 = vunpack.c.h.b16 %v1127
    %v5301 = vunpack.c.l.b16 %v1128
    %v5302 = vunpack.c.h.b16 %v1128
    %v5303 = vunpack.c.l.b16 %v1129
    %v5304 = vunpack.c.h.b16 %v1129
    %v5305 = vunpack.c.l.b16 %v1130
    %v5306 = vunpack.c.h.b16 %v1130
    %v5307 = vunpack.c.l.b16 %v1131
    %v5308 = vunpack.c.h.b16 %v1131
    %v5309 = vunpack.c.l.b16 %v1132
    %v5310 = vunpack.c.h.b16 %v1132
    %v5311 = vunpack.c.l.b16 %v1133
    %v5312 = vunpack.c.h.b16 %v1133
    %v5313 = vunpack.c.l.b16 %v1134
    %v5314 = vunpack.c.h.b16 %v1134
    %v5315 = vunpack.c.l.b16 %v1135
    %v5316 = vunpack.c.h.b16 %v1135
    %v5317 = vunpack.c.l.b16 %v1136
    %v5318 = vunpack.c.h.b16 %v1136
    %v5319 = vunpack.c.l.b16 %v1137
    %v5320 = vunpack.c.h.b16 %v1137
    %v5321 = vunpack.c.l.b16 %v1138
    %v5322 = vunpack.c.h.b16 %v1138
    %v5323 = vunpack.c.l.b16 %v1139
    %v5324 = vunpack.c.h.b16 %v1139
    %v5325 = vunpack.c.l.b16 %v1140
    %v5326 = vunpack.c.h.b16 %v1140
    %v5327 = vunpack.c.l.b16 %v1141
    %v5328 = vunpack.c.h.b16 %v1141
    %v5329 = vunpack.c.l.b16 %v1142
    %v5330 = vunpack.c.h.b16 %v1142
    %v5331 = vunpack.c.l.b16 %v1143
    %v5332 = vunpack.c.h.b16 %v1143
    %v5333 = vunpack.c.l.b16 %v1144
    %v5334 = vunpack.c.h.b16 %v1144
    %v5335 = vunpack.c.l.b16 %v1145
    %v5336 = vunpack.c.h.b16 %v1145
    %v5337 = vunpack.c.l.b16 %v1146
    %v5338 = vunpack.c.h.b16 %v1146
    %v5339 = vunpack.c.l.b16 %v1147
    %v5340 = vunpack.c.h.b16 %v1147
    %v5341 = vunpack.c.l.b16 %v1148
    %v5342 = vunpack.c.h.b16 %v1148
    %v5343 = vunpack.c.l.b16 %v1149
    %v5344 = vunpack.c.h.b16 %v1149
    %v5345 = vunpack.c.l.b16 %v1150
    %v5346 = vunpack.c.h.b16 %v1150
    %v5347 = vunpack.c.l.b16 %v1151
    %v5348 = vunpack.c.h.b16 %v1151
    %v5349 = vunpack.c.l.b16 %v1152
    %v5350 = vunpack.c.h.b16 %v1152
    %v5351 = vunpack.c.l.b16 %v1153
    %v5352 = vunpack.c.h.b16 %v1153
    %v5353 = vunpack.c.l.b16 %v1154
    %v5354 = vunpack.c.h.b16 %v1154
    %v5355 = vunpack.c.l.b16 %v1155
    %v5356 = vunpack.c.h.b16 %v1155
    %v5357 = vunpack.c.l.b16 %v1156
    %v5358 = vunpack.c.h.b16 %v1156
    %v5359 = vunpack.c.l.b16 %v1157
    %v5360 = vunpack.c.h.b16 %v1157
    %v5361 = vunpack.c.l.b16 %v1158
    %v5362 = vunpack.c.h.b16 %v1158
    %v5363 = vunpack.c.l.b16 %v1159
    %v5364 = vunpack.c.h.b16 %v1159
    %v5365 = vunpack.c.l.b16 %v1160
    %v5366 = vunpack.c.h.b16 %v1160
    %v5367 = vunpack.c.l.b16 %v1161
    %v5368 = vunpack.c.h.b16 %v1161
    %v5369 = vunpack.c.l.b16 %v1162
    %v5370 = vunpack.c.h.b16 %v1162
    %v5371 = vunpack.c.l.b16 %v1163
    %v5372 = vunpack.c.h.b16 %v1163
    %v5373 = vunpack.c.l.b16 %v1164
    %v5374 = vunpack.c.h.b16 %v1164
    %v5375 = vunpack.c.l.b16 %v1165
    %v5376 = vunpack.c.h.b16 %v1165
    %v5377 = vunpack.c.l.b16 %v1166
    %v5378 = vunpack.c.h.b16 %v1166
    %v5379 = vunpack.c.l.b16 %v1167
    %v5380 = vunpack.c.h.b16 %v1167
    %v5381 = vunpack.c.l.b16 %v1168
    %v5382 = vunpack.c.h.b16 %v1168
    %v5383 = vunpack.c.l.b16 %v1169
    %v5384 = vunpack.c.h.b16 %v1169
    %v5385 = vunpack.c.l.b16 %v1170
    %v5386 = vunpack.c.h.b16 %v1170
    %v5387 = vunpack.c.l.b16 %v1171
    %v5388 = vunpack.c.h.b16 %v1171
    %v5389 = vunpack.c.l.b16 %v1172
    %v5390 = vunpack.c.h.b16 %v1172
    %v5391 = vunpack.c.l.b16 %v1173
    %v5392 = vunpack.c.h.b16 %v1173
    %v5393 = vunpack.c.l.b16 %v1174
    %v5394 = vunpack.c.h.b16 %v1174
    %v5395 = vunpack.c.l.b16 %v1175
    %v5396 = vunpack.c.h.b16 %v1175
    %v5397 = vunpack.c.l.b16 %v1176
    %v5398 = vunpack.c.h.b16 %v1176
    %v5399 = vunpack.c.l.b16 %v1177
    %v5400 = vunpack.c.h.b16 %v1177
    %v5401 = vunpack.c.l.b16 %v1178
    %v5402 = vunpack.c.h.b16 %v1178
    %v5403 = vunpack.c.l.b16 %v1179
    %v5404 = vunpack.c.h.b16 %v1179
    %v5405 = vunpack.c.l.b16 %v1180
    %v5406 = vunpack.c.h.b16 %v1180
    %v5407 = vunpack.c.l.b16 %v1181
    %v5408 = vunpack.c.h.b16 %v1181
    %v5409 = vunpack.c.l.b16 %v1182
    %v5410 = vunpack.c.h.b16 %v1182
    %v5411 = vunpack.c.l.b16 %v1183
    %v5412 = vunpack.c.h.b16 %v1183
    %v5413 = vunpack.c.l.b16 %v1184
    %v5414 = vunpack.c.h.b16 %v1184
    %v5415 = vunpack.c.l.b16 %v1185
    %v5416 = vunpack.c.h.b16 %v1185
    %v5417 = vunpack.c.l.b16 %v1186
    %v5418 = vunpack.c.h.b16 %v1186
    %v5419 = vunpack.c.l.b16 %v1187
    %v5420 = vunpack.c.h.b16 %v1187
    %v5421 = vunpack.c.l.b16 %v1188
    %v5422 = vunpack.c.h.b16 %v1188
    %v5423 = vunpack.c.l.b16 %v1189
    %v5424 = vunpack.c.h.b16 %v1189
    %v5425 = vunpack.c.l.b16 %v1190
    %v5426 = vunpack.c.h.b16 %v1190
    %v5427 = vunpack.c.l.b16 %v1191
    %v5428 = vunpack.c.h.b16 %v1191
    %v5429 = vunpack.c.l.b16 %v1192
    %v5430 = vunpack.c.h.b16 %v1192
    %v5431 = vunpack.c.l.b16 %v1193
    %v5432 = vunpack.c.h.b16 %v1193
    %v5433 = vunpack.c.l.b16 %v1194
    %v5434 = vunpack.c.h.b16 %v1194
    %v5435 = vunpack.c.l.b16 %v1195
    %v5436 = vunpack.c.h.b16 %v1195
    %v5437 = vunpack.c.l.b16 %v1196
    %v5438 = vunpack.c.h.b16 %v1196
    %v5439 = vunpack.c.l.b16 %v1197
    %v5440 = vunpack.c.h.b16 %v1197
    %v5441 = vunpack.c.l.b16 %v1198
    %v5442 = vunpack.c.h.b16 %v1198
    %v5443 = vunpack.c.l.b16 %v1199
    %v5444 = vunpack.c.h.b16 %v1199
    %v5445 = vunpack.c.l.b16 %v1200
    %v5446 = vunpack.c.h.b16 %v1200
    %v5447 = vunpack.c.l.b16 %v1201
    %v5448 = vunpack.c.h.b16 %v1201
    %v5449 = vunpack.c.l.b16 %v1202
    %v5450 = vunpack.c.h.b16 %v1202
    %v5451 = vunpack.c.l.b16 %v1203
    %v5452 = vunpack.c.h.b16 %v1203
    %v5453 = vunpack.c.l.b16 %v1204
    %v5454 = vunpack.c.h.b16 %v1204
    %v5455 = vunpack.c.l.b16 %v1205
    %v5456 = vunpack.c.h.b16 %v1205
    %v5457 = vunpack.c.l.b16 %v1206
    %v5458 = vunpack.c.h.b16 %v1206
    %v5459 = vunpack.c.l.b16 %v1207
    %v5460 = vunpack.c.h.b16 %v1207
    %v5461 = vunpack.c.l.b16 %v1208
    %v5462 = vunpack.c.h.b16 %v1208
    %v5463 = vunpack.c.l.b16 %v1209
    %v5464 = vunpack.c.h.b16 %v1209
    %v5465 = vunpack.c.l.b16 %v1210
    %v5466 = vunpack.c.h.b16 %v1210
    %v5467 = vunpack.c.l.b16 %v1211
    %v5468 = vunpack.c.h.b16 %v1211
    %v5469 = vunpack.c.l.b16 %v1212
    %v5470 = vunpack.c.h.b16 %v1212
    %v5471 = vunpack.c.l.b16 %v1213
    %v5472 = vunpack.c.h.b16 %v1213
    %v5473 = vunpack.c.l.b16 %v1214
    %v5474 = vunpack.c.h.b16 %v1214
    %v5475 = vunpack.c.l.b16 %v1215
    %v5476 = vunpack.c.h.b16 %v1215
    %v5477 = vunpack.c.l.b16 %v1216
    %v5478 = vunpack.c.h.b16 %v1216
    %v5479 = vunpack.c.l.b16 %v1217
    %v5480 = vunpack.c.h.b16 %v1217
    %v5481 = vunpack.c.l.b16 %v1218
    %v5482 = vunpack.c.h.b16 %v1218
    %v5483 = vunpack.c.l.b16 %v1219
    %v5484 = vunpack.c.h.b16 %v1219
    %v5485 = vunpack.c.l.b16 %v1220
    %v5486 = vunpack.c.h.b16 %v1220
    %v5487 = vunpack.c.l.b16 %v1221
    %v5488 = vunpack.c.h.b16 %v1221
    %v5489 = vunpack.c.l.b16 %v1222
    %v5490 = vunpack.c.h.b16 %v1222
    %v5491 = vunpack.c.l.b16 %v1223
    %v5492 = vunpack.c.h.b16 %v1223
    %v5493 = vunpack.c.l.b16 %v1224
    %v5494 = vunpack.c.h.b16 %v1224
    %v5495 = vunpack.c.l.b16 %v1225
    %v5496 = vunpack.c.h.b16 %v1225
    %v5497 = vunpack.c.l.b16 %v1226
    %v5498 = vunpack.c.h.b16 %v1226
    %v5499 = vunpack.c.l.b16 %v1227
    %v5500 = vunpack.c.h.b16 %v1227
    %v5501 = vunpack.c.l.b16 %v1228
    %v5502 = vunpack.c.h.b16 %v1228
    %v5503 = vunpack.c.l.b16 %v1229
    %v5504 = vunpack.c.h.b16 %v1229
    %v5505 = vunpack.c.l.b16 %v1230
    %v5506 = vunpack.c.h.b16 %v1230
    %v5507 = vunpack.c.l.b16 %v1231
    %v5508 = vunpack.c.h.b16 %v1231
    %v5509 = vunpack.c.l.b16 %v1232
    %v5510 = vunpack.c.h.b16 %v1232
    %v5511 = vunpack.c.l.b16 %v1233
    %v5512 = vunpack.c.h.b16 %v1233
    %v5513 = vunpack.c.l.b16 %v1234
    %v5514 = vunpack.c.h.b16 %v1234
    %v5515 = vunpack.c.l.b16 %v1235
    %v5516 = vunpack.c.h.b16 %v1235
    %v5517 = vunpack.c.l.b16 %v1236
    %v5518 = vunpack.c.h.b16 %v1236
    %v5519 = vunpack.c.l.b16 %v1237
    %v5520 = vunpack.c.h.b16 %v1237
    %v5521 = vunpack.c.l.b16 %v1238
    %v5522 = vunpack.c.h.b16 %v1238
    %v5523 = vunpack.c.l.b16 %v1239
    %v5524 = vunpack.c.h.b16 %v1239
    %v5525 = vunpack.c.l.b16 %v1240
    %v5526 = vunpack.c.h.b16 %v1240
    %v5527 = vunpack.c.l.b16 %v1241
    %v5528 = vunpack.c.h.b16 %v1241
    %v5529 = vunpack.c.l.b16 %v1242
    %v5530 = vunpack.c.h.b16 %v1242
    %v5531 = vunpack.c.l.b16 %v1243
    %v5532 = vunpack.c.h.b16 %v1243
    %v5533 = vunpack.c.l.b16 %v1244
    %v5534 = vunpack.c.h.b16 %v1244
    %v5535 = vunpack.c.l.b16 %v1245
    %v5536 = vunpack.c.h.b16 %v1245
    %v5537 = vunpack.c.l.b16 %v1246
    %v5538 = vunpack.c.h.b16 %v1246
    %v5539 = vunpack.c.l.b16 %v1247
    %v5540 = vunpack.c.h.b16 %v1247
    %v5541 = vunpack.c.l.b16 %v1248
    %v5542 = vunpack.c.h.b16 %v1248
    %v5543 = vunpack.c.l.b16 %v1249
    %v5544 = vunpack.c.h.b16 %v1249
    %v5545 = vunpack.c.l.b16 %v1250
    %v5546 = vunpack.c.h.b16 %v1250
    %v5547 = vunpack.c.l.b16 %v1251
    %v5548 = vunpack.c.h.b16 %v1251
    %v5549 = vunpack.c.l.b16 %v1252
    %v5550 = vunpack.c.h.b16 %v1252
    %v5551 = vunpack.c.l.b16 %v1253
    %v5552 = vunpack.c.h.b16 %v1253
    %v5553 = vunpack.c.l.b16 %v1254
    %v5554 = vunpack.c.h.b16 %v1254
    %v5555 = vunpack.c.l.b16 %v1255
    %v5556 = vunpack.c.h.b16 %v1255
    %v5557 = vunpack.c.l.b16 %v1256
    %v5558 = vunpack.c.h.b16 %v1256
    %v5559 = vunpack.c.l.b16 %v1257
    %v5560 = vunpack.c.h.b16 %v1257
    %v5561 = vunpack.c.l.b16 %v1258
    %v5562 = vunpack.c.h.b16 %v1258
    %v5563 = vunpack.c.l.b16 %v1259
    %v5564 = vunpack.c.h.b16 %v1259
    %v5565 = vunpack.c.l.b16 %v1260
    %v5566 = vunpack.c.h.b16 %v1260
    %v5567 = vunpack.c.l.b16 %v1261
    %v5568 = vunpack.c.h.b16 %v1261
    %v5569 = vunpack.c.l.b16 %v1262
    %v5570 = vunpack.c.h.b16 %v1262
    %v5571 = vunpack.c.l.b16 %v1263
    %v5572 = vunpack.c.h.b16 %v1263
    %v5573 = vunpack.c.l.b16 %v1264
    %v5574 = vunpack.c.h.b16 %v1264
    %v5575 = vunpack.c.l.b16 %v1265
    %v5576 = vunpack.c.h.b16 %v1265
    %v5577 = vunpack.c.l.b16 %v1266
    %v5578 = vunpack.c.h.b16 %v1266
    %v5579 = vunpack.c.l.b16 %v1267
    %v5580 = vunpack.c.h.b16 %v1267
    %v5581 = vunpack.c.l.b16 %v1268
    %v5582 = vunpack.c.h.b16 %v1268
    %v5583 = vunpack.c.l.b16 %v1269
    %v5584 = vunpack.c.h.b16 %v1269
    %v5585 = vunpack.c.l.b16 %v1270
    %v5586 = vunpack.c.h.b16 %v1270
    %v5587 = vunpack.c.l.b16 %v1271
    %v5588 = vunpack.c.h.b16 %v1271
    %v5589 = vunpack.c.l.b16 %v1272
    %v5590 = vunpack.c.h.b16 %v1272
    %v5591 = vunpack.c.l.b16 %v1273
    %v5592 = vunpack.c.h.b16 %v1273
    %v5593 = vunpack.c.l.b16 %v1274
    %v5594 = vunpack.c.h.b16 %v1274
    %v5595 = vunpack.c.l.b16 %v1275
    %v5596 = vunpack.c.h.b16 %v1275
    %v5597 = vunpack.c.l.b16 %v1276
    %v5598 = vunpack.c.h.b16 %v1276
    %v5599 = vunpack.c.l.b16 %v1277
    %v5600 = vunpack.c.h.b16 %v1277
    %v5601 = vunpack.c.l.b16 %v1278
    %v5602 = vunpack.c.h.b16 %v1278
    %v5603 = vunpack.c.l.b16 %v1279
    %v5604 = vunpack.c.h.b16 %v1279
    %v5605 = vunpack.c.l.b16 %v1280
    %v5606 = vunpack.c.h.b16 %v1280
    %v5607 = vunpack.c.l.b16 %v1281
    %v5608 = vunpack.c.h.b16 %v1281
    %v5609 = vunpack.c.l.b16 %v1282
    %v5610 = vunpack.c.h.b16 %v1282
    %v5611 = vunpack.c.l.b16 %v1283
    %v5612 = vunpack.c.h.b16 %v1283
    %v5613 = vunpack.c.l.b16 %v1284
    %v5614 = vunpack.c.h.b16 %v1284
    %v5615 = vunpack.c.l.b16 %v1285
    %v5616 = vunpack.c.h.b16 %v1285
    %v5617 = vunpack.c.l.b16 %v1286
    %v5618 = vunpack.c.h.b16 %v1286
    %v5619 = vunpack.c.l.b16 %v1287
    %v5620 = vunpack.c.h.b16 %v1287
    %v5621 = vunpack.c.l.b16 %v1288
    %v5622 = vunpack.c.h.b16 %v1288
    %v5623 = vunpack.c.l.b16 %v1289
    %v5624 = vunpack.c.h.b16 %v1289
    %v5625 = vunpack.c.l.b16 %v1290
    %v5626 = vunpack.c.h.b16 %v1290
    %v5627 = vunpack.c.l.b16 %v1291
    %v5628 = vunpack.c.h.b16 %v1291
    %v5629 = vunpack.c.l.b16 %v1292
    %v5630 = vunpack.c.h.b16 %v1292
    %v5631 = vunpack.c.l.b16 %v1293
    %v5632 = vunpack.c.h.b16 %v1293
    %v5633 = vunpack.c.l.b16 %v1294
    %v5634 = vunpack.c.h.b16 %v1294
    %v5635 = vunpack.c.l.b16 %v1295
    %v5636 = vunpack.c.h.b16 %v1295
    %v5637 = vunpack.c.l.b16 %v1296
    %v5638 = vunpack.c.h.b16 %v1296
    %v5639 = vunpack.c.l.b16 %v1297
    %v5640 = vunpack.c.h.b16 %v1297
    %v5641 = vunpack.c.l.b16 %v1298
    %v5642 = vunpack.c.h.b16 %v1298
    %v5643 = vunpack.c.l.b16 %v1299
    %v5644 = vunpack.c.h.b16 %v1299
    %v5645 = vunpack.c.l.b16 %v1300
    %v5646 = vunpack.c.h.b16 %v1300
    %v5647 = vunpack.c.l.b16 %v1301
    %v5648 = vunpack.c.h.b16 %v1301
    %v5649 = vunpack.c.l.b16 %v1302
    %v5650 = vunpack.c.h.b16 %v1302
    %v5651 = vunpack.c.l.b16 %v1303
    %v5652 = vunpack.c.h.b16 %v1303
    %v5653 = vunpack.c.l.b16 %v1304
    %v5654 = vunpack.c.h.b16 %v1304
    %v5655 = vunpack.c.l.b16 %v1305
    %v5656 = vunpack.c.h.b16 %v1305
    %v5657 = vunpack.c.l.b16 %v1306
    %v5658 = vunpack.c.h.b16 %v1306
    %v5659 = vunpack.c.l.b16 %v1307
    %v5660 = vunpack.c.h.b16 %v1307
    %v5661 = vunpack.c.l.b16 %v1308
    %v5662 = vunpack.c.h.b16 %v1308
    %v5663 = vunpack.c.l.b16 %v1309
    %v5664 = vunpack.c.h.b16 %v1309
    %v5665 = vunpack.c.l.b16 %v1310
    %v5666 = vunpack.c.h.b16 %v1310
    %v5667 = vunpack.c.l.b16 %v1311
    %v5668 = vunpack.c.h.b16 %v1311
    %v5669 = vunpack.c.l.b16 %v1312
    %v5670 = vunpack.c.h.b16 %v1312
    %v5671 = vunpack.c.l.b16 %v1313
    %v5672 = vunpack.c.h.b16 %v1313
    %v5673 = vunpack.c.l.b16 %v1314
    %v5674 = vunpack.c.h.b16 %v1314
    %v5675 = vunpack.c.l.b16 %v1315
    %v5676 = vunpack.c.h.b16 %v1315
    %v5677 = vunpack.c.l.b16 %v1316
    %v5678 = vunpack.c.h.b16 %v1316
    %v5679 = vunpack.c.l.b16 %v1317
    %v5680 = vunpack.c.h.b16 %v1317
    %v5681 = vunpack.c.l.b16 %v1318
    %v5682 = vunpack.c.h.b16 %v1318
    %v5683 = vunpack.c.l.b16 %v1319
    %v5684 = vunpack.c.h.b16 %v1319
    %v5685 = vunpack.c.l.b16 %v1320
    %v5686 = vunpack.c.h.b16 %v1320
    %v5687 = vunpack.c.l.b16 %v1321
    %v5688 = vunpack.c.h.b16 %v1321
    %v5689 = vunpack.c.l.b16 %v1322
    %v5690 = vunpack.c.h.b16 %v1322
    %v5691 = vunpack.c.l.b16 %v1323
    %v5692 = vunpack.c.h.b16 %v1323
    %v5693 = vunpack.c.l.b16 %v1324
    %v5694 = vunpack.c.h.b16 %v1324
    %v5695 = vunpack.c.l.b16 %v1325
    %v5696 = vunpack.c.h.b16 %v1325
    %v5697 = vunpack.c.l.b16 %v1326
    %v5698 = vunpack.c.h.b16 %v1326
    %v5699 = vunpack.c.l.b16 %v1327
    %v5700 = vunpack.c.h.b16 %v1327
    %v5701 = vunpack.c.l.b16 %v1328
    %v5702 = vunpack.c.h.b16 %v1328
    %v5703 = vunpack.c.l.b16 %v1329
    %v5704 = vunpack.c.h.b16 %v1329
    %v5705 = vunpack.c.l.b16 %v1330
    %v5706 = vunpack.c.h.b16 %v1330
    %v5707 = vunpack.c.l.b16 %v1331
    %v5708 = vunpack.c.h.b16 %v1331
    %v5709 = vunpack.c.l.b16 %v1332
    %v5710 = vunpack.c.h.b16 %v1332
    %v5711 = vunpack.c.l.b16 %v1333
    %v5712 = vunpack.c.h.b16 %v1333
    %v5713 = vunpack.c.l.b16 %v1334
    %v5714 = vunpack.c.h.b16 %v1334
    %v5715 = vunpack.c.l.b16 %v1335
    %v5716 = vunpack.c.h.b16 %v1335
    %v5717 = vunpack.c.l.b16 %v1336
    %v5718 = vunpack.c.h.b16 %v1336
    %v5719 = vunpack.c.l.b16 %v1337
    %v5720 = vunpack.c.h.b16 %v1337
    %v5721 = vunpack.c.l.b16 %v1338
    %v5722 = vunpack.c.h.b16 %v1338
    %v5723 = vunpack.c.l.b16 %v1339
    %v5724 = vunpack.c.h.b16 %v1339
    %v5725 = vunpack.c.l.b16 %v1340
    %v5726 = vunpack.c.h.b16 %v1340
    %v5727 = vunpack.c.l.b16 %v1341
    %v5728 = vunpack.c.h.b16 %v1341
    %v5729 = vunpack.c.l.b16 %v1342
    %v5730 = vunpack.c.h.b16 %v1342
    %v5731 = vunpack.c.l.b16 %v1343
    %v5732 = vunpack.c.h.b16 %v1343
    %v5733 = vunpack.c.l.b16 %v1344
    %v5734 = vunpack.c.h.b16 %v1344
    %v5735 = vunpack.c.l.b16 %v1345
    %v5736 = vunpack.c.h.b16 %v1345
    %v5737 = vunpack.c.l.b16 %v1346
    %v5738 = vunpack.c.h.b16 %v1346
    %v5739 = vunpack.c.l.b16 %v1347
    %v5740 = vunpack.c.h.b16 %v1347
    %v5741 = vunpack.c.l.b16 %v1348
    %v5742 = vunpack.c.h.b16 %v1348
    %v5743 = vunpack.c.l.b16 %v1349
    %v5744 = vunpack.c.h.b16 %v1349
    %v5745 = vunpack.c.l.b16 %v1350
    %v5746 = vunpack.c.h.b16 %v1350
    %v5747 = vunpack.c.l.b16 %v1351
    %v5748 = vunpack.c.h.b16 %v1351
    %v5749 = vunpack.c.l.b16 %v1352
    %v5750 = vunpack.c.h.b16 %v1352
    %v5751 = vunpack.c.l.b16 %v1353
    %v5752 = vunpack.c.h.b16 %v1353
    %v5753 = vunpack.c.l.b16 %v1354
    %v5754 = vunpack.c.h.b16 %v1354
    %v5755 = vunpack.c.l.b16 %v1355
    %v5756 = vunpack.c.h.b16 %v1355
    %v5757 = vunpack.c.l.b16 %v1356
    %v5758 = vunpack.c.h.b16 %v1356
    %v5759 = vunpack.c.l.b16 %v1357
    %v5760 = vunpack.c.h.b16 %v1357
    %v5761 = vunpack.c.l.b16 %v1358
    %v5762 = vunpack.c.h.b16 %v1358
    %v5763 = vunpack.c.l.b16 %v1359
    %v5764 = vunpack.c.h.b16 %v1359
    %v5765 = vunpack.c.l.b16 %v1360
    %v5766 = vunpack.c.h.b16 %v1360
    %v5767 = vunpack.c.l.b16 %v1361
    %v5768 = vunpack.c.h.b16 %v1361
    %v5769 = vunpack.c.l.b16 %v1362
    %v5770 = vunpack.c.h.b16 %v1362
    %v5771 = vunpack.c.l.b16 %v1363
    %v5772 = vunpack.c.h.b16 %v1363
    %v5773 = vunpack.c.l.b16 %v1364
    %v5774 = vunpack.c.h.b16 %v1364
    %v5775 = vunpack.c.l.b16 %v1365
    %v5776 = vunpack.c.h.b16 %v1365
    %v5777 = vunpack.c.l.b16 %v1366
    %v5778 = vunpack.c.h.b16 %v1366
    %v5779 = vunpack.c.l.b16 %v1367
    %v5780 = vunpack.c.h.b16 %v1367
    %v5781 = vunpack.c.l.b16 %v1368
    %v5782 = vunpack.c.h.b16 %v1368
    %v5783 = vunpack.c.l.b16 %v1369
    %v5784 = vunpack.c.h.b16 %v1369
    %v5785 = vunpack.c.l.b16 %v1370
    %v5786 = vunpack.c.h.b16 %v1370
    %v5787 = vunpack.c.l.b16 %v1371
    %v5788 = vunpack.c.h.b16 %v1371
    %v5789 = vunpack.c.l.b16 %v1372
    %v5790 = vunpack.c.h.b16 %v1372
    %v5791 = vunpack.c.l.b16 %v1373
    %v5792 = vunpack.c.h.b16 %v1373
    %v5793 = vunpack.c.l.b16 %v1374
    %v5794 = vunpack.c.h.b16 %v1374
    %v5795 = vunpack.c.l.b16 %v1375
    %v5796 = vunpack.c.h.b16 %v1375
    %v5797 = vunpack.c.l.b16 %v1376
    %v5798 = vunpack.c.h.b16 %v1376
    %v5799 = vunpack.c.l.b16 %v1377
    %v5800 = vunpack.c.h.b16 %v1377
    %v5801 = vunpack.c.l.b16 %v1378
    %v5802 = vunpack.c.h.b16 %v1378
    %v5803 = vunpack.c.l.b16 %v1379
    %v5804 = vunpack.c.h.b16 %v1379
    %v5805 = vunpack.c.l.b16 %v1380
    %v5806 = vunpack.c.h.b16 %v1380
    %v5807 = vunpack.c.l.b16 %v1381
    %v5808 = vunpack.c.h.b16 %v1381
    %v5809 = vunpack.c.l.b16 %v1382
    %v5810 = vunpack.c.h.b16 %v1382
    %v5811 = vunpack.c.l.b16 %v1383
    %v5812 = vunpack.c.h.b16 %v1383
    %v5813 = vunpack.c.l.b16 %v1384
    %v5814 = vunpack.c.h.b16 %v1384
    %v5815 = vunpack.c.l.b16 %v1385
    %v5816 = vunpack.c.h.b16 %v1385
    %v5817 = vunpack.c.l.b16 %v1386
    %v5818 = vunpack.c.h.b16 %v1386
    %v5819 = vunpack.c.l.b16 %v1387
    %v5820 = vunpack.c.h.b16 %v1387
    %v5821 = vunpack.c.l.b16 %v1388
    %v5822 = vunpack.c.h.b16 %v1388
    %v5823 = vunpack.c.l.b16 %v1389
    %v5824 = vunpack.c.h.b16 %v1389
    %v5825 = vunpack.c.l.b16 %v1390
    %v5826 = vunpack.c.h.b16 %v1390
    %v5827 = vunpack.c.l.b16 %v1391
    %v5828 = vunpack.c.h.b16 %v1391
    %v5829 = vunpack.c.l.b16 %v1392
    %v5830 = vunpack.c.h.b16 %v1392
    %v5831 = vunpack.c.l.b16 %v1393
    %v5832 = vunpack.c.h.b16 %v1393
    %v5833 = vunpack.c.l.b16 %v1394
    %v5834 = vunpack.c.h.b16 %v1394
    %v5835 = vunpack.c.l.b16 %v1395
    %v5836 = vunpack.c.h.b16 %v1395
    %v5837 = vunpack.c.l.b16 %v1396
    %v5838 = vunpack.c.h.b16 %v1396
    %v5839 = vunpack.c.l.b16 %v1397
    %v5840 = vunpack.c.h.b16 %v1397
    %v5841 = vunpack.c.l.b16 %v1398
    %v5842 = vunpack.c.h.b16 %v1398
    %v5843 = vunpack.c.l.b16 %v1399
    %v5844 = vunpack.c.h.b16 %v1399
    %v5845 = vunpack.c.l.b16 %v1400
    %v5846 = vunpack.c.h.b16 %v1400
    %v5847 = vunpack.c.l.b16 %v1401
    %v5848 = vunpack.c.h.b16 %v1401
    %v5849 = vunpack.c.l.b16 %v1402
    %v5850 = vunpack.c.h.b16 %v1402
    %v5851 = vunpack.c.l.b16 %v1403
    %v5852 = vunpack.c.h.b16 %v1403
    %v5853 = vunpack.c.l.b16 %v1404
    %v5854 = vunpack.c.h.b16 %v1404
    %v5855 = vunpack.c.l.b16 %v1405
    %v5856 = vunpack.c.h.b16 %v1405
    %v5857 = vunpack.c.l.b16 %v1406
    %v5858 = vunpack.c.h.b16 %v1406
    %v5859 = vunpack.c.l.b16 %v1407
    %v5860 = vunpack.c.h.b16 %v1407
    %v5861 = vunpack.c.l.b16 %v1408
    %v5862 = vunpack.c.h.b16 %v1408
    %v5863 = vunpack.c.l.b16 %v1409
    %v5864 = vunpack.c.h.b16 %v1409
    %v5865 = vunpack.c.l.b16 %v1410
    %v5866 = vunpack.c.h.b16 %v1410
    %v5867 = vunpack.c.l.b16 %v1411
    %v5868 = vunpack.c.h.b16 %v1411
    %v5869 = vunpack.c.l.b16 %v1412
    %v5870 = vunpack.c.h.b16 %v1412
    %v5871 = vunpack.c.l.b16 %v1413
    %v5872 = vunpack.c.h.b16 %v1413
    %v5873 = vunpack.c.l.b16 %v1414
    %v5874 = vunpack.c.h.b16 %v1414
    %v5875 = vunpack.c.l.b16 %v1415
    %v5876 = vunpack.c.h.b16 %v1415
    %v5877 = vunpack.c.l.b16 %v1416
    %v5878 = vunpack.c.h.b16 %v1416
    %v5879 = vunpack.c.l.b16 %v1417
    %v5880 = vunpack.c.h.b16 %v1417
    %v5881 = vunpack.c.l.b16 %v1418
    %v5882 = vunpack.c.h.b16 %v1418
    %v5883 = vunpack.c.l.b16 %v1419
    %v5884 = vunpack.c.h.b16 %v1419
    %v5885 = vunpack.c.l.b16 %v1420
    %v5886 = vunpack.c.h.b16 %v1420
    %v5887 = vunpack.c.l.b16 %v1421
    %v5888 = vunpack.c.h.b16 %v1421
    %v5889 = vunpack.c.l.b16 %v1422
    %v5890 = vunpack.c.h.b16 %v1422
    %v5891 = vunpack.c.l.b16 %v1423
    %v5892 = vunpack.c.h.b16 %v1423
    %v5893 = vunpack.c.l.b16 %v1424
    %v5894 = vunpack.c.h.b16 %v1424
    %v5895 = vunpack.c.l.b16 %v1425
    %v5896 = vunpack.c.h.b16 %v1425
    %v5897 = vunpack.c.l.b16 %v1426
    %v5898 = vunpack.c.h.b16 %v1426
    %v5899 = vunpack.c.l.b16 %v1427
    %v5900 = vunpack.c.h.b16 %v1427
    %v5901 = vunpack.c.l.b16 %v1428
    %v5902 = vunpack.c.h.b16 %v1428
    %v5903 = vunpack.c.l.b16 %v1429
    %v5904 = vunpack.c.h.b16 %v1429
    %v5905 = vunpack.c.l.b16 %v1430
    %v5906 = vunpack.c.h.b16 %v1430
    %v5907 = vunpack.c.l.b16 %v1431
    %v5908 = vunpack.c.h.b16 %v1431
    %v5909 = vunpack.c.l.b16 %v1432
    %v5910 = vunpack.c.h.b16 %v1432
    %v5911 = vunpack.c.l.b16 %v1433
    %v5912 = vunpack.c.h.b16 %v1433
    %v5913 = vunpack.c.l.b16 %v1434
    %v5914 = vunpack.c.h.b16 %v1434
    %v5915 = vunpack.c.l.b16 %v1435
    %v5916 = vunpack.c.h.b16 %v1435
    %v5917 = vunpack.c.l.b16 %v1436
    %v5918 = vunpack.c.h.b16 %v1436
    %v5919 = vunpack.c.l.b16 %v1437
    %v5920 = vunpack.c.h.b16 %v1437
    %v5921 = vunpack.c.l.b16 %v1438
    %v5922 = vunpack.c.h.b16 %v1438
    %v5923 = vunpack.c.l.b16 %v1439
    %v5924 = vunpack.c.h.b16 %v1439
    %v5925 = vunpack.c.l.b16 %v1440
    %v5926 = vunpack.c.h.b16 %v1440
    %v5927 = vunpack.c.l.b16 %v1441
    %v5928 = vunpack.c.h.b16 %v1441
    %v5929 = vunpack.c.l.b16 %v1442
    %v5930 = vunpack.c.h.b16 %v1442
    %v5931 = vunpack.c.l.b16 %v1443
    %v5932 = vunpack.c.h.b16 %v1443
    %v5933 = vunpack.c.l.b16 %v1444
    %v5934 = vunpack.c.h.b16 %v1444
    %v5935 = vunpack.c.l.b16 %v1445
    %v5936 = vunpack.c.h.b16 %v1445
    %v5937 = vunpack.c.l.b16 %v1446
    %v5938 = vunpack.c.h.b16 %v1446
    %v5939 = vunpack.c.l.b16 %v1447
    %v5940 = vunpack.c.h.b16 %v1447
    %v5941 = vunpack.c.l.b16 %v1448
    %v5942 = vunpack.c.h.b16 %v1448
    %v5943 = vunpack.c.l.b16 %v1449
    %v5944 = vunpack.c.h.b16 %v1449
    %v5945 = vunpack.c.l.b16 %v1450
    %v5946 = vunpack.c.h.b16 %v1450
    %v5947 = vunpack.c.l.b16 %v1451
    %v5948 = vunpack.c.h.b16 %v1451
    %v5949 = vunpack.c.l.b16 %v1452
    %v5950 = vunpack.c.h.b16 %v1452
    %v5951 = vunpack.c.l.b16 %v1453
    %v5952 = vunpack.c.h.b16 %v1453
    %v5953 = vunpack.c.l.b16 %v1454
    %v5954 = vunpack.c.h.b16 %v1454
    %v5955 = vunpack.c.l.b16 %v1455
    %v5956 = vunpack.c.h.b16 %v1455
    %v5957 = vunpack.c.l.b16 %v1456
    %v5958 = vunpack.c.h.b16 %v1456
    %v5959 = vunpack.c.l.b16 %v1457
    %v5960 = vunpack.c.h.b16 %v1457
    %v5961 = vunpack.c.l.b16 %v1458
    %v5962 = vunpack.c.h.b16 %v1458
    %v5963 = vunpack.c.l.b16 %v1459
    %v5964 = vunpack.c.h.b16 %v1459
    %v5965 = vunpack.c.l.b16 %v1460
    %v5966 = vunpack.c.h.b16 %v1460
    %v5967 = vunpack.c.l.b16 %v1461
    %v5968 = vunpack.c.h.b16 %v1461
    %v5969 = vunpack.c.l.b16 %v1462
    %v5970 = vunpack.c.h.b16 %v1462
    %v5971 = vunpack.c.l.b16 %v1463
    %v5972 = vunpack.c.h.b16 %v1463
    %v5973 = vunpack.c.l.b16 %v1464
    %v5974 = vunpack.c.h.b16 %v1464
    %v5975 = vunpack.c.l.b16 %v1465
    %v5976 = vunpack.c.h.b16 %v1465
    %v5977 = vunpack.c.l.b16 %v1466
    %v5978 = vunpack.c.h.b16 %v1466
    %v5979 = vunpack.c.l.b16 %v1467
    %v5980 = vunpack.c.h.b16 %v1467
    %v5981 = vunpack.c.l.b16 %v1468
    %v5982 = vunpack.c.h.b16 %v1468
    %v5983 = vunpack.c.l.b16 %v1469
    %v5984 = vunpack.c.h.b16 %v1469
    %v5985 = vunpack.c.l.b16 %v1470
    %v5986 = vunpack.c.h.b16 %v1470
    %v5987 = vunpack.c.l.b16 %v1471
    %v5988 = vunpack.c.h.b16 %v1471
    %v5989 = vunpack.c.l.b16 %v1472
    %v5990 = vunpack.c.h.b16 %v1472
    %v5991 = vunpack.c.l.b16 %v1473
    %v5992 = vunpack.c.h.b16 %v1473
    %v5993 = vunpack.c.l.b16 %v1474
    %v5994 = vunpack.c.h.b16 %v1474
    %v5995 = vunpack.c.l.b16 %v1475
    %v5996 = vunpack.c.h.b16 %v1475
    %v5997 = vunpack.c.l.b16 %v1476
    %v5998 = vunpack.c.h.b16 %v1476
    %v5999 = vunpack.c.l.b16 %v1477
    %v6000 = vunpack.c.h.b16 %v1477
    %v6001 = vunpack.c.l.b16 %v1478
    %v6002 = vunpack.c.h.b16 %v1478
    %v6003 = vunpack.c.l.b16 %v1479
    %v6004 = vunpack.c.h.b16 %v1479
    %v6005 = vunpack.c.l.b16 %v1480
    %v6006 = vunpack.c.h.b16 %v1480
    %v6007 = vunpack.c.l.b16 %v1481
    %v6008 = vunpack.c.h.b16 %v1481
    %v6009 = vunpack.c.l.b16 %v1482
    %v6010 = vunpack.c.h.b16 %v1482
    %v6011 = vunpack.c.l.b16 %v1483
    %v6012 = vunpack.c.h.b16 %v1483
    %v6013 = vunpack.c.l.b16 %v1484
    %v6014 = vunpack.c.h.b16 %v1484
    %v6015 = vunpack.c.l.b16 %v1485
    %v6016 = vunpack.c.h.b16 %v1485
    %v6017 = vunpack.c.l.b16 %v1486
    %v6018 = vunpack.c.h.b16 %v1486
    %v6019 = vunpack.c.l.b16 %v1487
    %v6020 = vunpack.c.h.b16 %v1487
    %v6021 = vunpack.c.l.b16 %v1488
    %v6022 = vunpack.c.h.b16 %v1488
    %v6023 = vunpack.c.l.b16 %v1489
    %v6024 = vunpack.c.h.b16 %v1489
    %v6025 = vunpack.c.l.b16 %v1490
    %v6026 = vunpack.c.h.b16 %v1490
    %v6027 = vunpack.c.l.b16 %v1491
    %v6028 = vunpack.c.h.b16 %v1491
    %v6029 = vunpack.c.l.b16 %v1492
    %v6030 = vunpack.c.h.b16 %v1492
    %v6031 = vunpack.c.l.b16 %v1493
    %v6032 = vunpack.c.h.b16 %v1493
    %v6033 = vunpack.c.l.b16 %v1494
    %v6034 = vunpack.c.h.b16 %v1494
    %v6035 = vunpack.c.l.b16 %v1495
    %v6036 = vunpack.c.h.b16 %v1495
    %v6037 = vunpack.c.l.b16 %v1496
    %v6038 = vunpack.c.h.b16 %v1496
    %v6039 = vunpack.c.l.b16 %v1497
    %v6040 = vunpack.c.h.b16 %v1497
    %v6041 = vunpack.c.l.b16 %v1498
    %v6042 = vunpack.c.h.b16 %v1498
    %v6043 = vunpack.c.l.b16 %v1499
    %v6044 = vunpack.c.h.b16 %v1499
    %v6045 = vunpack.c.l.b16 %v1500
    %v6046 = vunpack.c.h.b16 %v1500
    %v6047 = vunpack.c.l.b16 %v1501
    %v6048 = vunpack.c.h.b16 %v1501
    %v6049 = vunpack.c.l.b16 %v1502
    %v6050 = vunpack.c.h.b16 %v1502
    %v6051 = vunpack.c.l.b16 %v1503
    %v6052 = vunpack.c.h.b16 %v1503
    %v6053 = vunpack.c.l.b16 %v1504
    %v6054 = vunpack.c.h.b16 %v1504
    %v6055 = vunpack.c.l.b16 %v1505
    %v6056 = vunpack.c.h.b16 %v1505
    %v6057 = vunpack.c.l.b16 %v1506
    %v6058 = vunpack.c.h.b16 %v1506
    %v6059 = vunpack.c.l.b16 %v1507
    %v6060 = vunpack.c.h.b16 %v1507
    %v6061 = vunpack.c.l.b16 %v1508
    %v6062 = vunpack.c.h.b16 %v1508
    %v6063 = vunpack.c.l.b16 %v1509
    %v6064 = vunpack.c.h.b16 %v1509
    %v6065 = vunpack.c.l.b16 %v1510
    %v6066 = vunpack.c.h.b16 %v1510
    %v6067 = vunpack.c.l.b16 %v1511
    %v6068 = vunpack.c.h.b16 %v1511
    %v6069 = vunpack.c.l.b16 %v1512
    %v6070 = vunpack.c.h.b16 %v1512
    %v6071 = vunpack.c.l.b16 %v1513
    %v6072 = vunpack.c.h.b16 %v1513
    %v6073 = vunpack.c.l.b16 %v1514
    %v6074 = vunpack.c.h.b16 %v1514
    %v6075 = vunpack.c.l.b16 %v1515
    %v6076 = vunpack.c.h.b16 %v1515
    %v6077 = vunpack.c.l.b16 %v1516
    %v6078 = vunpack.c.h.b16 %v1516
    %v6079 = vunpack.c.l.b16 %v1517
    %v6080 = vunpack.c.h.b16 %v1517
    %v6081 = vunpack.c.l.b16 %v1518
    %v6082 = vunpack.c.h.b16 %v1518
    %v6083 = vunpack.c.l.b16 %v1519
    %v6084 = vunpack.c.h.b16 %v1519
    %v6085 = vunpack.c.l.b16 %v1520
    %v6086 = vunpack.c.h.b16 %v1520
    %v6087 = vunpack.c.l.b16 %v1521
    %v6088 = vunpack.c.h.b16 %v1521
    %v6089 = vunpack.c.l.b16 %v1522
    %v6090 = vunpack.c.h.b16 %v1522
    %v6091 = vunpack.c.l.b16 %v1523
    %v6092 = vunpack.c.h.b16 %v1523
    %v6093 = vunpack.c.l.b16 %v1524
    %v6094 = vunpack.c.h.b16 %v1524
    %v6095 = vunpack.c.l.b16 %v1525
    %v6096 = vunpack.c.h.b16 %v1525
    %v6097 = vunpack.c.l.b16 %v1526
    %v6098 = vunpack.c.h.b16 %v1526
    %v6099 = vunpack.c.l.b16 %v1527
    %v6100 = vunpack.c.h.b16 %v1527
    %v6101 = vunpack.c.l.b16 %v1528
    %v6102 = vunpack.c.h.b16 %v1528
    %v6103 = vunpack.c.l.b16 %v1529
    %v6104 = vunpack.c.h.b16 %v1529
    %v6105 = vunpack.c.l.b16 %v1530
    %v6106 = vunpack.c.h.b16 %v1530
    %v6107 = vunpack.c.l.b16 %v1531
    %v6108 = vunpack.c.h.b16 %v1531
    %v6109 = vunpack.c.l.b16 %v1532
    %v6110 = vunpack.c.h.b16 %v1532
    %v6111 = vunpack.c.l.b16 %v1533
    %v6112 = vunpack.c.h.b16 %v1533
    %v6113 = vunpack.c.l.b16 %v1534
    %v6114 = vunpack.c.h.b16 %v1534
    %v6115 = vunpack.c.l.b16 %v1535
    %v6116 = vunpack.c.h.b16 %v1535
    %v6117 = vunpack.c.l.b16 %v1536
    %v6118 = vunpack.c.h.b16 %v1536
    %v6119 = vunpack.c.l.b16 %v1537
    %v6120 = vunpack.c.h.b16 %v1537
    %v6121 = vunpack.c.l.b16 %v1538
    %v6122 = vunpack.c.h.b16 %v1538
    %v6123 = vunpack.c.l.b16 %v1539
    %v6124 = vunpack.c.h.b16 %v1539
    %v6125 = vunpack.c.l.b16 %v1540
    %v6126 = vunpack.c.h.b16 %v1540
    %v6127 = vunpack.c.l.b16 %v1541
    %v6128 = vunpack.c.h.b16 %v1541
    %v6129 = vunpack.c.l.b16 %v1542
    %v6130 = vunpack.c.h.b16 %v1542
    %v6131 = vunpack.c.l.b16 %v1543
    %v6132 = vunpack.c.h.b16 %v1543
    %v6133 = vunpack.c.l.b16 %v1544
    %v6134 = vunpack.c.h.b16 %v1544
    %v6135 = vunpack.c.l.b16 %v1545
    %v6136 = vunpack.c.h.b16 %v1545
    %v6137 = vunpack.c.l.b16 %v1546
    %v6138 = vunpack.c.h.b16 %v1546
    %v6139 = vunpack.c.l.b16 %v1547
    %v6140 = vunpack.c.h.b16 %v1547
    %v6141 = vunpack.c.l.b16 %v1548
    %v6142 = vunpack.c.h.b16 %v1548
    %v6143 = vunpack.c.l.b16 %v1549
    %v6144 = vunpack.c.h.b16 %v1549
    %v6145 = vunpack.c.l.b16 %v1550
    %v6146 = vunpack.c.h.b16 %v1550
    %v6147 = vunpack.c.l.b16 %v1551
    %v6148 = vunpack.c.h.b16 %v1551
    %v6149 = vunpack.c.l.b16 %v1552
    %v6150 = vunpack.c.h.b16 %v1552
    %v6151 = vunpack.c.l.b16 %v1553
    %v6152 = vunpack.c.h.b16 %v1553
    %v6153 = vunpack.c.l.b16 %v1554
    %v6154 = vunpack.c.h.b16 %v1554
    %v6155 = vunpack.c.l.b16 %v1555
    %v6156 = vunpack.c.h.b16 %v1555
    %v6157 = vunpack.c.l.b16 %v1556
    %v6158 = vunpack.c.h.b16 %v1556
    %v6159 = vunpack.c.l.b16 %v1557
    %v6160 = vunpack.c.h.b16 %v1557
    %v6161 = vunpack.c.l.b16 %v1558
    %v6162 = vunpack.c.h.b16 %v1558
    %v6163 = vunpack.c.l.b16 %v1559
    %v6164 = vunpack.c.h.b16 %v1559
    %v6165 = vunpack.c.l.b16 %v1560
    %v6166 = vunpack.c.h.b16 %v1560
    %v6167 = vunpack.c.l.b16 %v1561
    %v6168 = vunpack.c.h.b16 %v1561
    %v6169 = vunpack.c.l.b16 %v1562
    %v6170 = vunpack.c.h.b16 %v1562
    %v6171 = vunpack.c.l.b16 %v1563
    %v6172 = vunpack.c.h.b16 %v1563
    %v6173 = vunpack.c.l.b16 %v1564
    %v6174 = vunpack.c.h.b16 %v1564
    %v6175 = vunpack.c.l.b16 %v1565
    %v6176 = vunpack.c.h.b16 %v1565
    %v6177 = vunpack.c.l.b16 %v1566
    %v6178 = vunpack.c.h.b16 %v1566
    %v6179 = vunpack.c.l.b16 %v1567
    %v6180 = vunpack.c.h.b16 %v1567
    %v6181 = vunpack.c.l.b16 %v1568
    %v6182 = vunpack.c.h.b16 %v1568
    %v6183 = vunpack.c.l.b16 %v1569
    %v6184 = vunpack.c.h.b16 %v1569
    %v6185 = vunpack.c.l.b16 %v1570
    %v6186 = vunpack.c.h.b16 %v1570
    %v6187 = vunpack.c.l.b16 %v1571
    %v6188 = vunpack.c.h.b16 %v1571
    %v6189 = vunpack.c.l.b16 %v1572
    %v6190 = vunpack.c.h.b16 %v1572
    %v6191 = vunpack.c.l.b16 %v1573
    %v6192 = vunpack.c.h.b16 %v1573
    %v6193 = vunpack.c.l.b16 %v1574
    %v6194 = vunpack.c.h.b16 %v1574
    %v6195 = vunpack.c.l.b16 %v1575
    %v6196 = vunpack.c.h.b16 %v1575
    %v6197 = vunpack.c.l.b16 %v1576
    %v6198 = vunpack.c.h.b16 %v1576
    %v6199 = vunpack.c.l.b16 %v1577
    %v6200 = vunpack.c.h.b16 %v1577
    %v6201 = vunpack.c.l.b16 %v1578
    %v6202 = vunpack.c.h.b16 %v1578
    %v6203 = vunpack.c.l.b16 %v1579
    %v6204 = vunpack.c.h.b16 %v1579
    %v6205 = vunpack.c.l.b16 %v1580
    %v6206 = vunpack.c.h.b16 %v1580
    %v6207 = vunpack.c.l.b16 %v1581
    %v6208 = vunpack.c.h.b16 %v1581
    %v6209 = vunpack.c.l.b16 %v1582
    %v6210 = vunpack.c.h.b16 %v1582
    %v6211 = vunpack.c.l.b16 %v1583
    %v6212 = vunpack.c.h.b16 %v1583
    %v6213 = vunpack.c.l.b16 %v1584
    %v6214 = vunpack.c.h.b16 %v1584
    %v6215 = vunpack.c.l.b16 %v1585
    %v6216 = vunpack.c.h.b16 %v1585
    %v6217 = vunpack.c.l.b16 %v1586
    %v6218 = vunpack.c.h.b16 %v1586
    %v6219 = vunpack.c.l.b16 %v1587
    %v6220 = vunpack.c.h.b16 %v1587
    %v6221 = vunpack.c.l.b16 %v1588
    %v6222 = vunpack.c.h.b16 %v1588
    %v6223 = vunpack.c.l.b16 %v1589
    %v6224 = vunpack.c.h.b16 %v1589
    %v6225 = vunpack.c.l.b16 %v1590
    %v6226 = vunpack.c.h.b16 %v1590
    %v6227 = vunpack.c.l.b16 %v1591
    %v6228 = vunpack.c.h.b16 %v1591
    %v6229 = vunpack.c.l.b16 %v1592
    %v6230 = vunpack.c.h.b16 %v1592
    %v6231 = vunpack.c.l.b16 %v1593
    %v6232 = vunpack.c.h.b16 %v1593
    %v6233 = vunpack.c.l.b16 %v1594
    %v6234 = vunpack.c.h.b16 %v1594
    %v6235 = vunpack.c.l.b16 %v1595
    %v6236 = vunpack.c.h.b16 %v1595
    %v6237 = vunpack.c.l.b16 %v1596
    %v6238 = vunpack.c.h.b16 %v1596
    %v6239 = vunpack.c.l.b16 %v1597
    %v6240 = vunpack.c.h.b16 %v1597
    %v6241 = vunpack.c.l.b16 %v1598
    %v6242 = vunpack.c.h.b16 %v1598
    %v6243 = vunpack.c.l.b16 %v1599
    %v6244 = vunpack.c.h.b16 %v1599
    %v6245 = vunpack.c.l.b16 %v1600
    %v6246 = vunpack.c.h.b16 %v1600
    %v6247 = vunpack.c.l.b16 %v1601
    %v6248 = vunpack.c.h.b16 %v1601
    %v6249 = vunpack.c.l.b16 %v1602
    %v6250 = vunpack.c.h.b16 %v1602
    %v6251 = vunpack.c.l.b16 %v1603
    %v6252 = vunpack.c.h.b16 %v1603
    %v6253 = vunpack.c.l.b16 %v1604
    %v6254 = vunpack.c.h.b16 %v1604
    %v6255 = vunpack.c.l.b16 %v1605
    %v6256 = vunpack.c.h.b16 %v1605
    %v6257 = vunpack.c.l.b16 %v1606
    %v6258 = vunpack.c.h.b16 %v1606
    %v6259 = vunpack.c.l.b16 %v1607
    %v6260 = vunpack.c.h.b16 %v1607
    %v6261 = vunpack.c.l.b16 %v1608
    %v6262 = vunpack.c.h.b16 %v1608
    %v6263 = vunpack.c.l.b16 %v1609
    %v6264 = vunpack.c.h.b16 %v1609
    %v6265 = vunpack.c.l.b16 %v1610
    %v6266 = vunpack.c.h.b16 %v1610
    %v6267 = vunpack.c.l.b16 %v1611
    %v6268 = vunpack.c.h.b16 %v1611
    %v6269 = vunpack.c.l.b16 %v1612
    %v6270 = vunpack.c.h.b16 %v1612
    %v6271 = vunpack.c.l.b16 %v1613
    %v6272 = vunpack.c.h.b16 %v1613
    %v6273 = vunpack.c.l.b16 %v1614
    %v6274 = vunpack.c.h.b16 %v1614
    %v6275 = vunpack.c.l.b16 %v1615
    %v6276 = vunpack.c.h.b16 %v1615
    %v6277 = vunpack.c.l.b16 %v1616
    %v6278 = vunpack.c.h.b16 %v1616
    %v6279 = vunpack.c.l.b16 %v1617
    %v6280 = vunpack.c.h.b16 %v1617
    %v6281 = vunpack.c.l.b16 %v1618
    %v6282 = vunpack.c.h.b16 %v1618
    %v6283 = vunpack.c.l.b16 %v1619
    %v6284 = vunpack.c.h.b16 %v1619
    %v6285 = vunpack.c.l.b16 %v1620
    %v6286 = vunpack.c.h.b16 %v1620
    %v6287 = vunpack.c.l.b16 %v1621
    %v6288 = vunpack.c.h.b16 %v1621
    %v6289 = vunpack.c.l.b16 %v1622
    %v6290 = vunpack.c.h.b16 %v1622
    %v6291 = vunpack.c.l.b16 %v1623
    %v6292 = vunpack.c.h.b16 %v1623
    %v6293 = vunpack.c.l.b16 %v1624
    %v6294 = vunpack.c.h.b16 %v1624
    %v6295 = vunpack.c.l.b16 %v1625
    %v6296 = vunpack.c.h.b16 %v1625
    %v6297 = vunpack.c.l.b16 %v1626
    %v6298 = vunpack.c.h.b16 %v1626
    %v6299 = vunpack.c.l.b16 %v1627
    %v6300 = vunpack.c.h.b16 %v1627
    %v6301 = vunpack.c.l.b16 %v1628
    %v6302 = vunpack.c.h.b16 %v1628
    %v6303 = vunpack.c.l.b16 %v1629
    %v6304 = vunpack.c.h.b16 %v1629
    %v6305 = vunpack.c.l.b16 %v1630
    %v6306 = vunpack.c.h.b16 %v1630
    %v6307 = vunpack.c.l.b16 %v1631
    %v6308 = vunpack.c.h.b16 %v1631
    %v6309 = vunpack.c.l.b16 %v1632
    %v6310 = vunpack.c.h.b16 %v1632
    %v6311 = vunpack.c.l.b16 %v1633
    %v6312 = vunpack.c.h.b16 %v1633
    %v6313 = vunpack.c.l.b16 %v1634
    %v6314 = vunpack.c.h.b16 %v1634
    %v6315 = vunpack.c.l.b16 %v1635
    %v6316 = vunpack.c.h.b16 %v1635
    %v6317 = vunpack.c.l.b16 %v1636
    %v6318 = vunpack.c.h.b16 %v1636
    %v6319 = vunpack.c.l.b16 %v1637
    %v6320 = vunpack.c.h.b16 %v1637
    %v6321 = vunpack.c.l.b16 %v1638
    %v6322 = vunpack.c.h.b16 %v1638
    %v6323 = vunpack.c.l.b16 %v1639
    %v6324 = vunpack.c.h.b16 %v1639
    %v6325 = vunpack.c.l.b16 %v1640
    %v6326 = vunpack.c.h.b16 %v1640
    %v6327 = vunpack.c.l.b16 %v1641
    %v6328 = vunpack.c.h.b16 %v1641
    %v6329 = vunpack.c.l.b16 %v1642
    %v6330 = vunpack.c.h.b16 %v1642
    %v6331 = vunpack.c.l.b16 %v1643
    %v6332 = vunpack.c.h.b16 %v1643
    %v6333 = vunpack.c.l.b16 %v1644
    %v6334 = vunpack.c.h.b16 %v1644
    %v6335 = vunpack.c.l.b16 %v1645
    %v6336 = vunpack.c.h.b16 %v1645
    %v6337 = vunpack.c.l.b16 %v1646
    %v6338 = vunpack.c.h.b16 %v1646
    %v6339 = vpack.c.b16 %v3275, %v3267
    %v6340 = vpack.c.b16 %v3276, %v3268
    %v6341 = vpack.c.b16 %v3277, %v3269
    %v6342 = vpack.c.b16 %v3278, %v3270
    %v6343 = vpack.c.b16 %v3279, %v3271
    %v6344 = vpack.c.b16 %v3280, %v3272
    %v6345 = vpack.c.b16 %v3281, %v3273
    %v6346 = vpack.c.b16 %v3282, %v3274
    %v6347 = vpack.c.b16 %v3291, %v3283
    %v6348 = vpack.c.b16 %v3292, %v3284
    %v6349 = vpack.c.b16 %v3293, %v3285
    %v6350 = vpack.c.b16 %v3294, %v3286
    %v6351 = vpack.c.b16 %v3295, %v3287
    %v6352 = vpack.c.b16 %v3296, %v3288
    %v6353 = vpack.c.b16 %v3297, %v3289
    %v6354 = vpack.c.b16 %v3298, %v3290
    %v6355 = vpack.c.b16 %v3307, %v3299
    %v6356 = vpack.c.b16 %v3308, %v3300
    %v6357 = vpack.c.b16 %v3309, %v3301
    %v6358 = vpack.c.b16 %v3310, %v3302
    %v6359 = vpack.c.b16 %v3311, %v3303
    %v6360 = vpack.c.b16 %v3312, %v3304
    %v6361 = vpack.c.b16 %v3313, %v3305
    %v6362 = vpack.c.b16 %v3314, %v3306
    %v6363 = vpack.c.b16 %v3323, %v3315
    %v6364 = vpack.c.b16 %v3324, %v3316
    %v6365 = vpack.c.b16 %v3325, %v3317
    %v6366 = vpack.c.b16 %v3326, %v3318
    %v6367 = vpack.c.b16 %v3327, %v3319
    %v6368 = vpack.c.b16 %v3328, %v3320
    %v6369 = vpack.c.b16 %v3329, %v3321
    %v6370 = vpack.c.b16 %v3330, %v3322
    %v6371 = vpack.c.b16 %v3339, %v3331
    %v6372 = vpack.c.b16 %v3340, %v3332
    %v6373 = vpack.c.b16 %v3341, %v3333
    %v6374 = vpack.c.b16 %v3342, %v3334
    %v6375 = vpack.c.b16 %v3343, %v3335
    %v6376 = vpack.c.b16 %v3344, %v3336
    %v6377 = vpack.c.b16 %v3345, %v3337
    %v6378 = vpack.c.b16 %v3346, %v3338
    %v6379 = vpack.c.b16 %v3355, %v3347
    %v6380 = vpack.c.b16 %v3356, %v3348
    %v6381 = vpack.c.b16 %v3357, %v3349
    %v6382 = vpack.c.b16 %v3358, %v3350
    %v6383 = vpack.c.b16 %v3359, %v3351
    %v6384 = vpack.c.b16 %v3360, %v3352
    %v6385 = vpack.c.b16 %v3361, %v3353
    %v6386 = vpack.c.b16 %v3362, %v3354
    %v6387 = vpack.c.b16 %v3371, %v3363
    %v6388 = vpack.c.b16 %v3372, %v3364
    %v6389 = vpack.c.b16 %v3373, %v3365
    %v6390 = vpack.c.b16 %v3374, %v3366
    %v6391 = vpack.c.b16 %v3375, %v3367
    %v6392 = vpack.c.b16 %v3376, %v3368
    %v6393 = vpack.c.b16 %v3377, %v3369
    %v6394 = vpack.c.b16 %v3378, %v3370
    %v6395 = vpack.c.b16 %v3387, %v3379
    %v6396 = vpack.c.b16 %v3388, %v3380
    %v6397 = vpack.c.b16 %v3389, %v3381
    %v6398 = vpack.c.b16 %v3390, %v3382
    %v6399 = vpack.c.b16 %v3391, %v3383
    %v6400 = vpack.c.b16 %v3392, %v3384
    %v6401 = vpack.c.b16 %v3393, %v3385
    %v6402 = vpack.c.b16 %v3394, %v3386
    %v6403 = vpack.c.b16 %v3403, %v3395
    %v6404 = vpack.c.b16 %v3404, %v3396
    %v6405 = vpack.c.b16 %v3405, %v3397
    %v6406 = vpack.c.b16 %v3406, %v3398
    %v6407 = vpack.c.b16 %v3407, %v3399
    %v6408 = vpack.c.b16 %v3408, %v3400
    %v6409 = vpack.c.b16 %v3409, %v3401
    %v6410 = vpack.c.b16 %v3410, %v3402
    %v6411 = vpack.c.b16 %v3419, %v3411
    %v6412 = vpack.c.b16 %v3420, %v3412
    %v6413 = vpack.c.b16 %v3421, %v3413
    %v6414 = vpack.c.b16 %v3422, %v3414
    %v6415 = vpack.c.b16 %v3423, %v3415
    %v6416 = vpack.c.b16 %v3424, %v3416
    %v6417 = vpack.c.b16 %v3425, %v3417
    %v6418 = vpack.c.b16 %v3426, %v3418
    %v6419 = vpack.c.b16 %v3435, %v3427
    %v6420 = vpack.c.b16 %v3436, %v3428
    %v6421 = vpack.c.b16 %v3437, %v3429
    %v6422 = vpack.c.b16 %v3438, %v3430
    %v6423 = vpack.c.b16 %v3439, %v3431
    %v6424 = vpack.c.b16 %v3440, %v3432
    %v6425 = vpack.c.b16 %v3441, %v3433
    %v6426 = vpack.c.b16 %v3442, %v3434
    %v6427 = vpack.c.b16 %v3451, %v3443
    %v6428 = vpack.c.b16 %v3452, %v3444
    %v6429 = vpack.c.b16 %v3453, %v3445
    %v6430 = vpack.c.b16 %v3454, %v3446
    %v6431 = vpack.c.b16 %v3455, %v3447
    %v6432 = vpack.c.b16 %v3456, %v3448
    %v6433 = vpack.c.b16 %v3457, %v3449
    %v6434 = vpack.c.b16 %v3458, %v3450
    %v6435 = vpack.c.b16 %v3467, %v3459
    %v6436 = vpack.c.b16 %v3468, %v3460
    %v6437 = vpack.c.b16 %v3469, %v3461
    %v6438 = vpack.c.b16 %v3470, %v3462
    %v6439 = vpack.c.b16 %v3471, %v3463
    %v6440 = vpack.c.b16 %v3472, %v3464
    %v6441 = vpack.c.b16 %v3473, %v3465
    %v6442 = vpack.c.b16 %v3474, %v3466
    %v6443 = vpack.c.b16 %v3483, %v3475
    %v6444 = vpack.c.b16 %v3484, %v3476
    %v6445 = vpack.c.b16 %v3485, %v3477
    %v6446 = vpack.c.b16 %v3486, %v3478
    %v6447 = vpack.c.b16 %v3487, %v3479
    %v6448 = vpack.c.b16 %v3488, %v3480
    %v6449 = vpack.c.b16 %v3489, %v3481
    %v6450 = vpack.c.b16 %v3490, %v3482
    %v6451 = vpack.c.b16 %v3499, %v3491
    %v6452 = vpack.c.b16 %v3500, %v3492
    %v6453 = vpack.c.b16 %v3501, %v3493
    %v6454 = vpack.c.b16 %v3502, %v3494
    %v6455 = vpack.c.b16 %v3503, %v3495
    %v6456 = vpack.c.b16 %v3504, %v3496
    %v6457 = vpack.c.b16 %v3505, %v3497
    %v6458 = vpack.c.b16 %v3506, %v3498
    %v6459 = vpack.c.b16 %v3515, %v3507
    %v6460 = vpack.c.b16 %v3516, %v3508
    %v6461 = vpack.c.b16 %v3517, %v3509
    %v6462 = vpack.c.b16 %v3518, %v3510
    %v6463 = vpack.c.b16 %v3519, %v3511
    %v6464 = vpack.c.b16 %v3520, %v3512
    %v6465 = vpack.c.b16 %v3521, %v3513
    %v6466 = vpack.c.b16 %v3522, %v3514
    %v6467 = vpack.c.b16 %v3531, %v3523
    %v6468 = vpack.c.b16 %v3532, %v3524
    %v6469 = vpack.c.b16 %v3533, %v3525
    %v6470 = vpack.c.b16 %v3534, %v3526
    %v6471 = vpack.c.b16 %v3535, %v3527
    %v6472 = vpack.c.b16 %v3536, %v3528
    %v6473 = vpack.c.b16 %v3537, %v3529
    %v6474 = vpack.c.b16 %v3538, %v3530
    %v6475 = vpack.c.b16 %v3547, %v3539
    %v6476 = vpack.c.b16 %v3548, %v3540
    %v6477 = vpack.c.b16 %v3549, %v3541
    %v6478 = vpack.c.b16 %v3550, %v3542
    %v6479 = vpack.c.b16 %v3551, %v3543
    %v6480 = vpack.c.b16 %v3552, %v3544
    %v6481 = vpack.c.b16 %v3553, %v3545
    %v6482 = vpack.c.b16 %v3554, %v3546
    %v6483 = vpack.c.b16 %v3563, %v3555
    %v6484 = vpack.c.b16 %v3564, %v3556
    %v6485 = vpack.c.b16 %v3565, %v3557
    %v6486 = vpack.c.b16 %v3566, %v3558
    %v6487 = vpack.c.b16 %v3567, %v3559
    %v6488 = vpack.c.b16 %v3568, %v3560
    %v6489 = vpack.c.b16 %v3569, %v3561
    %v6490 = vpack.c.b16 %v3570, %v3562
    %v6491 = vpack.c.b16 %v3579, %v3571
    %v6492 = vpack.c.b16 %v3580, %v3572
    %v6493 = vpack.c.b16 %v3581, %v3573
    %v6494 = vpack.c.b16 %v3582, %v3574
    %v6495 = vpack.c.b16 %v3583, %v3575
    %v6496 = vpack.c.b16 %v3584, %v3576
    %v6497 = vpack.c.b16 %v3585, %v3577
    %v6498 = vpack.c.b16 %v3586, %v3578
    %v6499 = vpack.c.b16 %v3595, %v3587
    %v6500 = vpack.c.b16 %v3596, %v3588
    %v6501 = vpack.c.b16 %v3597, %v3589
    %v6502 = vpack.c.b16 %v3598, %v3590
    %v6503 = vpack.c.b16 %v3599, %v3591
    %v6504 = vpack.c.b16 %v3600, %v3592
    %v6505 = vpack.c.b16 %v3601, %v3593
    %v6506 = vpack.c.b16 %v3602, %v3594
    %v6507 = vpack.c.b16 %v3611, %v3603
    %v6508 = vpack.c.b16 %v3612, %v3604
    %v6509 = vpack.c.b16 %v3613, %v3605
    %v6510 = vpack.c.b16 %v3614, %v3606
    %v6511 = vpack.c.b16 %v3615, %v3607
    %v6512 = vpack.c.b16 %v3616, %v3608
    %v6513 = vpack.c.b16 %v3617, %v3609
    %v6514 = vpack.c.b16 %v3618, %v3610
    %v6515 = vpack.c.b16 %v3627, %v3619
    %v6516 = vpack.c.b16 %v3628, %v3620
    %v6517 = vpack.c.b16 %v3629, %v3621
    %v6518 = vpack.c.b16 %v3630, %v3622
    %v6519 = vpack.c.b16 %v3631, %v3623
    %v6520 = vpack.c.b16 %v3632, %v3624
    %v6521 = vpack.c.b16 %v3633, %v3625
    %v6522 = vpack.c.b16 %v3634, %v3626
    %v6523 = vpack.c.b16 %v3643, %v3635
    %v6524 = vpack.c.b16 %v3644, %v3636
    %v6525 = vpack.c.b16 %v3645, %v3637
    %v6526 = vpack.c.b16 %v3646, %v3638
    %v6527 = vpack.c.b16 %v3647, %v3639
    %v6528 = vpack.c.b16 %v3648, %v3640
    %v6529 = vpack.c.b16 %v3649, %v3641
    %v6530 = vpack.c.b16 %v3650, %v3642
    %v6531 = vpack.c.b16 %v3659, %v3651
    %v6532 = vpack.c.b16 %v3660, %v3652
    %v6533 = vpack.c.b16 %v3661, %v3653
    %v6534 = vpack.c.b16 %v3662, %v3654
    %v6535 = vpack.c.b16 %v3663, %v3655
    %v6536 = vpack.c.b16 %v3664, %v3656
    %v6537 = vpack.c.b16 %v3665, %v3657
    %v6538 = vpack.c.b16 %v3666, %v3658
    %v6539 = vpack.c.b16 %v3675, %v3667
    %v6540 = vpack.c.b16 %v3676, %v3668
    %v6541 = vpack.c.b16 %v3677, %v3669
    %v6542 = vpack.c.b16 %v3678, %v3670
    %v6543 = vpack.c.b16 %v3679, %v3671
    %v6544 = vpack.c.b16 %v3680, %v3672
    %v6545 = vpack.c.b16 %v3681, %v3673
    %v6546 = vpack.c.b16 %v3682, %v3674
    %v6547 = vpack.c.b16 %v3691, %v3683
    %v6548 = vpack.c.b16 %v3692, %v3684
    %v6549 = vpack.c.b16 %v3693, %v3685
    %v6550 = vpack.c.b16 %v3694, %v3686
    %v6551 = vpack.c.b16 %v3695, %v3687
    %v6552 = vpack.c.b16 %v3696, %v3688
    %v6553 = vpack.c.b16 %v3697, %v3689
    %v6554 = vpack.c.b16 %v3698, %v3690
    %v6555 = vpack.c.b16 %v3707, %v3699
    %v6556 = vpack.c.b16 %v3708, %v3700
    %v6557 = vpack.c.b16 %v3709, %v3701
    %v6558 = vpack.c.b16 %v3710, %v3702
    %v6559 = vpack.c.b16 %v3711, %v3703
    %v6560 = vpack.c.b16 %v3712, %v3704
    %v6561 = vpack.c.b16 %v3713, %v3705
    %v6562 = vpack.c.b16 %v3714, %v3706
    %v6563 = vpack.c.b16 %v3723, %v3715
    %v6564 = vpack.c.b16 %v3724, %v3716
    %v6565 = vpack.c.b16 %v3725, %v3717
    %v6566 = vpack.c.b16 %v3726, %v3718
    %v6567 = vpack.c.b16 %v3727, %v3719
    %v6568 = vpack.c.b16 %v3728, %v3720
    %v6569 = vpack.c.b16 %v3729, %v3721
    %v6570 = vpack.c.b16 %v3730, %v3722
    %v6571 = vpack.c.b16 %v3739, %v3731
    %v6572 = vpack.c.b16 %v3740, %v3732
    %v6573 = vpack.c.b16 %v3741, %v3733
    %v6574 = vpack.c.b16 %v3742, %v3734
    %v6575 = vpack.c.b16 %v3743, %v3735
    %v6576 = vpack.c.b16 %v3744, %v3736
    %v6577 = vpack.c.b16 %v3745, %v3737
    %v6578 = vpack.c.b16 %v3746, %v3738
    %v6579 = vpack.c.b16 %v3755, %v3747
    %v6580 = vpack.c.b16 %v3756, %v3748
    %v6581 = vpack.c.b16 %v3757, %v3749
    %v6582 = vpack.c.b16 %v3758, %v3750
    %v6583 = vpack.c.b16 %v3759, %v3751
    %v6584 = vpack.c.b16 %v3760, %v3752
    %v6585 = vpack.c.b16 %v3761, %v3753
    %v6586 = vpack.c.b16 %v3762, %v3754
    %v6587 = vpack.c.b16 %v3771, %v3763
    %v6588 = vpack.c.b16 %v3772, %v3764
    %v6589 = vpack.c.b16 %v3773, %v3765
    %v6590 = vpack.c.b16 %v3774, %v3766
    %v6591 = vpack.c.b16 %v3775, %v3767
    %v6592 = vpack.c.b16 %v3776, %v3768
    %v6593 = vpack.c.b16 %v3777, %v3769
    %v6594 = vpack.c.b16 %v3778, %v3770
    %v6595 = vpack.c.b16 %v3787, %v3779
    %v6596 = vpack.c.b16 %v3788, %v3780
    %v6597 = vpack.c.b16 %v3789, %v3781
    %v6598 = vpack.c.b16 %v3790, %v3782
    %v6599 = vpack.c.b16 %v3791, %v3783
    %v6600 = vpack.c.b16 %v3792, %v3784
    %v6601 = vpack.c.b16 %v3793, %v3785
    %v6602 = vpack.c.b16 %v3794, %v3786
    %v6603 = vpack.c.b16 %v3803, %v3795
    %v6604 = vpack.c.b16 %v3804, %v3796
    %v6605 = vpack.c.b16 %v3805, %v3797
    %v6606 = vpack.c.b16 %v3806, %v3798
    %v6607 = vpack.c.b16 %v3807, %v3799
    %v6608 = vpack.c.b16 %v3808, %v3800
    %v6609 = vpack.c.b16 %v3809, %v3801
    %v6610 = vpack.c.b16 %v3810, %v3802
    %v6611 = vpack.c.b16 %v3819, %v3811
    %v6612 = vpack.c.b16 %v3820, %v3812
    %v6613 = vpack.c.b16 %v3821, %v3813
    %v6614 = vpack.c.b16 %v3822, %v3814
    %v6615 = vpack.c.b16 %v3823, %v3815
    %v6616 = vpack.c.b16 %v3824, %v3816
    %v6617 = vpack.c.b16 %v3825, %v3817
    %v6618 = vpack.c.b16 %v3826, %v3818
    %v6619 = vpack.c.b16 %v3835, %v3827
    %v6620 = vpack.c.b16 %v3836, %v3828
    %v6621 = vpack.c.b16 %v3837, %v3829
    %v6622 = vpack.c.b16 %v3838, %v3830
    %v6623 = vpack.c.b16 %v3839, %v3831
    %v6624 = vpack.c.b16 %v3840, %v3832
    %v6625 = vpack.c.b16 %v3841, %v3833
    %v6626 = vpack.c.b16 %v3842, %v3834
    %v6627 = vpack.c.b16 %v3851, %v3843
    %v6628 = vpack.c.b16 %v3852, %v3844
    %v6629 = vpack.c.b16 %v3853, %v3845
    %v6630 = vpack.c.b16 %v3854, %v3846
    %v6631 = vpack.c.b16 %v3855, %v3847
    %v6632 = vpack.c.b16 %v3856, %v3848
    %v6633 = vpack.c.b16 %v3857, %v3849
    %v6634 = vpack.c.b16 %v3858, %v3850
    %v6635 = vpack.c.b16 %v3867, %v3859
    %v6636 = vpack.c.b16 %v3868, %v3860
    %v6637 = vpack.c.b16 %v3869, %v3861
    %v6638 = vpack.c.b16 %v3870, %v3862
    %v6639 = vpack.c.b16 %v3871, %v3863
    %v6640 = vpack.c.b16 %v3872, %v3864
    %v6641 = vpack.c.b16 %v3873, %v3865
    %v6642 = vpack.c.b16 %v3874, %v3866
    %v6643 = vpack.c.b16 %v3883, %v3875
    %v6644 = vpack.c.b16 %v3884, %v3876
    %v6645 = vpack.c.b16 %v3885, %v3877
    %v6646 = vpack.c.b16 %v3886, %v3878
    %v6647 = vpack.c.b16 %v3887, %v3879
    %v6648 = vpack.c.b16 %v3888, %v3880
    %v6649 = vpack.c.b16 %v3889, %v3881
    %v6650 = vpack.c.b16 %v3890, %v3882
    %v6651 = vpack.c.b16 %v3899, %v3891
    %v6652 = vpack.c.b16 %v3900, %v3892
    %v6653 = vpack.c.b16 %v3901, %v3893
    %v6654 = vpack.c.b16 %v3902, %v3894
    %v6655 = vpack.c.b16 %v3903, %v3895
    %v6656 = vpack.c.b16 %v3904, %v3896
    %v6657 = vpack.c.b16 %v3905, %v3897
    %v6658 = vpack.c.b16 %v3906, %v3898
    %v6659 = vpack.c.b16 %v3915, %v3907
    %v6660 = vpack.c.b16 %v3916, %v3908
    %v6661 = vpack.c.b16 %v3917, %v3909
    %v6662 = vpack.c.b16 %v3918, %v3910
    %v6663 = vpack.c.b16 %v3919, %v3911
    %v6664 = vpack.c.b16 %v3920, %v3912
    %v6665 = vpack.c.b16 %v3921, %v3913
    %v6666 = vpack.c.b16 %v3922, %v3914
    %v6667 = vpack.c.b16 %v3931, %v3923
    %v6668 = vpack.c.b16 %v3932, %v3924
    %v6669 = vpack.c.b16 %v3933, %v3925
    %v6670 = vpack.c.b16 %v3934, %v3926
    %v6671 = vpack.c.b16 %v3935, %v3927
    %v6672 = vpack.c.b16 %v3936, %v3928
    %v6673 = vpack.c.b16 %v3937, %v3929
    %v6674 = vpack.c.b16 %v3938, %v3930
    %v6675 = vpack.c.b16 %v3947, %v3939
    %v6676 = vpack.c.b16 %v3948, %v3940
    %v6677 = vpack.c.b16 %v3949, %v3941
    %v6678 = vpack.c.b16 %v3950, %v3942
    %v6679 = vpack.c.b16 %v3951, %v3943
    %v6680 = vpack.c.b16 %v3952, %v3944
    %v6681 = vpack.c.b16 %v3953, %v3945
    %v6682 = vpack.c.b16 %v3954, %v3946
    %v6683 = vpack.c.b16 %v3963, %v3955
    %v6684 = vpack.c.b16 %v3964, %v3956
    %v6685 = vpack.c.b16 %v3965, %v3957
    %v6686 = vpack.c.b16 %v3966, %v3958
    %v6687 = vpack.c.b16 %v3967, %v3959
    %v6688 = vpack.c.b16 %v3968, %v3960
    %v6689 = vpack.c.b16 %v3969, %v3961
    %v6690 = vpack.c.b16 %v3970, %v3962
    %v6691 = vpack.c.b16 %v3979, %v3971
    %v6692 = vpack.c.b16 %v3980, %v3972
    %v6693 = vpack.c.b16 %v3981, %v3973
    %v6694 = vpack.c.b16 %v3982, %v3974
    %v6695 = vpack.c.b16 %v3983, %v3975
    %v6696 = vpack.c.b16 %v3984, %v3976
    %v6697 = vpack.c.b16 %v3985, %v3977
    %v6698 = vpack.c.b16 %v3986, %v3978
    %v6699 = vpack.c.b16 %v3995, %v3987
    %v6700 = vpack.c.b16 %v3996, %v3988
    %v6701 = vpack.c.b16 %v3997, %v3989
    %v6702 = vpack.c.b16 %v3998, %v3990
    %v6703 = vpack.c.b16 %v3999, %v3991
    %v6704 = vpack.c.b16 %v4000, %v3992
    %v6705 = vpack.c.b16 %v4001, %v3993
    %v6706 = vpack.c.b16 %v4002, %v3994
    %v6707 = vpack.c.b16 %v4011, %v4003
    %v6708 = vpack.c.b16 %v4012, %v4004
    %v6709 = vpack.c.b16 %v4013, %v4005
    %v6710 = vpack.c.b16 %v4014, %v4006
    %v6711 = vpack.c.b16 %v4015, %v4007
    %v6712 = vpack.c.b16 %v4016, %v4008
    %v6713 = vpack.c.b16 %v4017, %v4009
    %v6714 = vpack.c.b16 %v4018, %v4010
    %v6715 = vpack.c.b16 %v4027, %v4019
    %v6716 = vpack.c.b16 %v4028, %v4020
    %v6717 = vpack.c.b16 %v4029, %v4021
    %v6718 = vpack.c.b16 %v4030, %v4022
    %v6719 = vpack.c.b16 %v4031, %v4023
    %v6720 = vpack.c.b16 %v4032, %v4024
    %v6721 = vpack.c.b16 %v4033, %v4025
    %v6722 = vpack.c.b16 %v4034, %v4026
    %v6723 = vpack.c.b16 %v4043, %v4035
    %v6724 = vpack.c.b16 %v4044, %v4036
    %v6725 = vpack.c.b16 %v4045, %v4037
    %v6726 = vpack.c.b16 %v4046, %v4038
    %v6727 = vpack.c.b16 %v4047, %v4039
    %v6728 = vpack.c.b16 %v4048, %v4040
    %v6729 = vpack.c.b16 %v4049, %v4041
    %v6730 = vpack.c.b16 %v4050, %v4042
    %v6731 = vpack.c.b16 %v4059, %v4051
    %v6732 = vpack.c.b16 %v4060, %v4052
    %v6733 = vpack.c.b16 %v4061, %v4053
    %v6734 = vpack.c.b16 %v4062, %v4054
    %v6735 = vpack.c.b16 %v4063, %v4055
    %v6736 = vpack.c.b16 %v4064, %v4056
    %v6737 = vpack.c.b16 %v4065, %v4057
    %v6738 = vpack.c.b16 %v4066, %v4058
    %v6739 = vpack.c.b16 %v4075, %v4067
    %v6740 = vpack.c.b16 %v4076, %v4068
    %v6741 = vpack.c.b16 %v4077, %v4069
    %v6742 = vpack.c.b16 %v4078, %v4070
    %v6743 = vpack.c.b16 %v4079, %v4071
    %v6744 = vpack.c.b16 %v4080, %v4072
    %v6745 = vpack.c.b16 %v4081, %v4073
    %v6746 = vpack.c.b16 %v4082, %v4074
    %v6747 = vpack.c.b16 %v4091, %v4083
    %v6748 = vpack.c.b16 %v4092, %v4084
    %v6749 = vpack.c.b16 %v4093, %v4085
    %v6750 = vpack.c.b16 %v4094, %v4086
    %v6751 = vpack.c.b16 %v4095, %v4087
    %v6752 = vpack.c.b16 %v4096, %v4088
    %v6753 = vpack.c.b16 %v4097, %v4089
    %v6754 = vpack.c.b16 %v4098, %v4090
    %v6755 = vpack.c.b16 %v4107, %v4099
    %v6756 = vpack.c.b16 %v4108, %v4100
    %v6757 = vpack.c.b16 %v4109, %v4101
    %v6758 = vpack.c.b16 %v4110, %v4102
    %v6759 = vpack.c.b16 %v4111, %v4103
    %v6760 = vpack.c.b16 %v4112, %v4104
    %v6761 = vpack.c.b16 %v4113, %v4105
    %v6762 = vpack.c.b16 %v4114, %v4106
    %v6763 = vpack.c.b16 %v4123, %v4115
    %v6764 = vpack.c.b16 %v4124, %v4116
    %v6765 = vpack.c.b16 %v4125, %v4117
    %v6766 = vpack.c.b16 %v4126, %v4118
    %v6767 = vpack.c.b16 %v4127, %v4119
    %v6768 = vpack.c.b16 %v4128, %v4120
    %v6769 = vpack.c.b16 %v4129, %v4121
    %v6770 = vpack.c.b16 %v4130, %v4122
    %v6771 = vpack.c.b16 %v4139, %v4131
    %v6772 = vpack.c.b16 %v4140, %v4132
    %v6773 = vpack.c.b16 %v4141, %v4133
    %v6774 = vpack.c.b16 %v4142, %v4134
    %v6775 = vpack.c.b16 %v4143, %v4135
    %v6776 = vpack.c.b16 %v4144, %v4136
    %v6777 = vpack.c.b16 %v4145, %v4137
    %v6778 = vpack.c.b16 %v4146, %v4138
    %v6779 = vpack.c.b16 %v4155, %v4147
    %v6780 = vpack.c.b16 %v4156, %v4148
    %v6781 = vpack.c.b16 %v4157, %v4149
    %v6782 = vpack.c.b16 %v4158, %v4150
    %v6783 = vpack.c.b16 %v4159, %v4151
    %v6784 = vpack.c.b16 %v4160, %v4152
    %v6785 = vpack.c.b16 %v4161, %v4153
    %v6786 = vpack.c.b16 %v4162, %v4154
    %v6787 = vpack.c.b16 %v4171, %v4163
    %v6788 = vpack.c.b16 %v4172, %v4164
    %v6789 = vpack.c.b16 %v4173, %v4165
    %v6790 = vpack.c.b16 %v4174, %v4166
    %v6791 = vpack.c.b16 %v4175, %v4167
    %v6792 = vpack.c.b16 %v4176, %v4168
    %v6793 = vpack.c.b16 %v4177, %v4169
    %v6794 = vpack.c.b16 %v4178, %v4170
    %v6795 = vpack.c.b16 %v4187, %v4179
    %v6796 = vpack.c.b16 %v4188, %v4180
    %v6797 = vpack.c.b16 %v4189, %v4181
    %v6798 = vpack.c.b16 %v4190, %v4182
    %v6799 = vpack.c.b16 %v4191, %v4183
    %v6800 = vpack.c.b16 %v4192, %v4184
    %v6801 = vpack.c.b16 %v4193, %v4185
    %v6802 = vpack.c.b16 %v4194, %v4186
    %v6803 = vpack.c.b16 %v4203, %v4195
    %v6804 = vpack.c.b16 %v4204, %v4196
    %v6805 = vpack.c.b16 %v4205, %v4197
    %v6806 = vpack.c.b16 %v4206, %v4198
    %v6807 = vpack.c.b16 %v4207, %v4199
    %v6808 = vpack.c.b16 %v4208, %v4200
    %v6809 = vpack.c.b16 %v4209, %v4201
    %v6810 = vpack.c.b16 %v4210, %v4202
    %v6811 = vpack.c.b16 %v4219, %v4211
    %v6812 = vpack.c.b16 %v4220, %v4212
    %v6813 = vpack.c.b16 %v4221, %v4213
    %v6814 = vpack.c.b16 %v4222, %v4214
    %v6815 = vpack.c.b16 %v4223, %v4215
    %v6816 = vpack.c.b16 %v4224, %v4216
    %v6817 = vpack.c.b16 %v4225, %v4217
    %v6818 = vpack.c.b16 %v4226, %v4218
    %v6819 = vpack.c.b16 %v4235, %v4227
    %v6820 = vpack.c.b16 %v4236, %v4228
    %v6821 = vpack.c.b16 %v4237, %v4229
    %v6822 = vpack.c.b16 %v4238, %v4230
    %v6823 = vpack.c.b16 %v4239, %v4231
    %v6824 = vpack.c.b16 %v4240, %v4232
    %v6825 = vpack.c.b16 %v4241, %v4233
    %v6826 = vpack.c.b16 %v4242, %v4234
    %v6827 = vpack.c.b16 %v4251, %v4243
    %v6828 = vpack.c.b16 %v4252, %v4244
    %v6829 = vpack.c.b16 %v4253, %v4245
    %v6830 = vpack.c.b16 %v4254, %v4246
    %v6831 = vpack.c.b16 %v4255, %v4247
    %v6832 = vpack.c.b16 %v4256, %v4248
    %v6833 = vpack.c.b16 %v4257, %v4249
    %v6834 = vpack.c.b16 %v4258, %v4250
    %v6835 = vpack.c.b16 %v4267, %v4259
    %v6836 = vpack.c.b16 %v4268, %v4260
    %v6837 = vpack.c.b16 %v4269, %v4261
    %v6838 = vpack.c.b16 %v4270, %v4262
    %v6839 = vpack.c.b16 %v4271, %v4263
    %v6840 = vpack.c.b16 %v4272, %v4264
    %v6841 = vpack.c.b16 %v4273, %v4265
    %v6842 = vpack.c.b16 %v4274, %v4266
    %v6843 = vpack.c.b16 %v4283, %v4275
    %v6844 = vpack.c.b16 %v4284, %v4276
    %v6845 = vpack.c.b16 %v4285, %v4277
    %v6846 = vpack.c.b16 %v4286, %v4278
    %v6847 = vpack.c.b16 %v4287, %v4279
    %v6848 = vpack.c.b16 %v4288, %v4280
    %v6849 = vpack.c.b16 %v4289, %v4281
    %v6850 = vpack.c.b16 %v4290, %v4282
    %v6851 = vpack.c.b16 %v4299, %v4291
    %v6852 = vpack.c.b16 %v4300, %v4292
    %v6853 = vpack.c.b16 %v4301, %v4293
    %v6854 = vpack.c.b16 %v4302, %v4294
    %v6855 = vpack.c.b16 %v4303, %v4295
    %v6856 = vpack.c.b16 %v4304, %v4296
    %v6857 = vpack.c.b16 %v4305, %v4297
    %v6858 = vpack.c.b16 %v4306, %v4298
    %v6859 = vpack.c.b16 %v4315, %v4307
    %v6860 = vpack.c.b16 %v4316, %v4308
    %v6861 = vpack.c.b16 %v4317, %v4309
    %v6862 = vpack.c.b16 %v4318, %v4310
    %v6863 = vpack.c.b16 %v4319, %v4311
    %v6864 = vpack.c.b16 %v4320, %v4312
    %v6865 = vpack.c.b16 %v4321, %v4313
    %v6866 = vpack.c.b16 %v4322, %v4314
    %v6867 = vpack.c.b16 %v4331, %v4323
    %v6868 = vpack.c.b16 %v4332, %v4324
    %v6869 = vpack.c.b16 %v4333, %v4325
    %v6870 = vpack.c.b16 %v4334, %v4326
    %v6871 = vpack.c.b16 %v4335, %v4327
    %v6872 = vpack.c.b16 %v4336, %v4328
    %v6873 = vpack.c.b16 %v4337, %v4329
    %v6874 = vpack.c.b16 %v4338, %v4330
    %v6875 = vpack.c.b16 %v4347, %v4339
    %v6876 = vpack.c.b16 %v4348, %v4340
    %v6877 = vpack.c.b16 %v4349, %v4341
    %v6878 = vpack.c.b16 %v4350, %v4342
    %v6879 = vpack.c.b16 %v4351, %v4343
    %v6880 = vpack.c.b16 %v4352, %v4344
    %v6881 = vpack.c.b16 %v4353, %v4345
    %v6882 = vpack.c.b16 %v4354, %v4346
    %v6883 = vpack.c.b16 %v4363, %v4355
    %v6884 = vpack.c.b16 %v4364, %v4356
    %v6885 = vpack.c.b16 %v4365, %v4357
    %v6886 = vpack.c.b16 %v4366, %v4358
    %v6887 = vpack.c.b16 %v4367, %v4359
    %v6888 = vpack.c.b16 %v4368, %v4360
    %v6889 = vpack.c.b16 %v4369, %v4361
    %v6890 = vpack.c.b16 %v4370, %v4362
    %v6891 = vpack.c.b16 %v4379, %v4371
    %v6892 = vpack.c.b16 %v4380, %v4372
    %v6893 = vpack.c.b16 %v4381, %v4373
    %v6894 = vpack.c.b16 %v4382, %v4374
    %v6895 = vpack.c.b16 %v4383, %v4375
    %v6896 = vpack.c.b16 %v4384, %v4376
    %v6897 = vpack.c.b16 %v4385, %v4377
    %v6898 = vpack.c.b16 %v4386, %v4378
    %v6899 = vpack.c.b16 %v4395, %v4387
    %v6900 = vpack.c.b16 %v4396, %v4388
    %v6901 = vpack.c.b16 %v4397, %v4389
    %v6902 = vpack.c.b16 %v4398, %v4390
    %v6903 = vpack.c.b16 %v4399, %v4391
    %v6904 = vpack.c.b16 %v4400, %v4392
    %v6905 = vpack.c.b16 %v4401, %v4393
    %v6906 = vpack.c.b16 %v4402, %v4394
    %v6907 = vpack.c.b16 %v4411, %v4403
    %v6908 = vpack.c.b16 %v4412, %v4404
    %v6909 = vpack.c.b16 %v4413, %v4405
    %v6910 = vpack.c.b16 %v4414, %v4406
    %v6911 = vpack.c.b16 %v4415, %v4407
    %v6912 = vpack.c.b16 %v4416, %v4408
    %v6913 = vpack.c.b16 %v4417, %v4409
    %v6914 = vpack.c.b16 %v4418, %v4410
    %v6915 = vpack.c.b16 %v4427, %v4419
    %v6916 = vpack.c.b16 %v4428, %v4420
    %v6917 = vpack.c.b16 %v4429, %v4421
    %v6918 = vpack.c.b16 %v4430, %v4422
    %v6919 = vpack.c.b16 %v4431, %v4423
    %v6920 = vpack.c.b16 %v4432, %v4424
    %v6921 = vpack.c.b16 %v4433, %v4425
    %v6922 = vpack.c.b16 %v4434, %v4426
    %v6923 = vpack.c.b16 %v4443, %v4435
    %v6924 = vpack.c.b16 %v4444, %v4436
    %v6925 = vpack.c.b16 %v4445, %v4437
    %v6926 = vpack.c.b16 %v4446, %v4438
    %v6927 = vpack.c.b16 %v4447, %v4439
    %v6928 = vpack.c.b16 %v4448, %v4440
    %v6929 = vpack.c.b16 %v4449, %v4441
    %v6930 = vpack.c.b16 %v4450, %v4442
    %v6931 = vpack.c.b16 %v4459, %v4451
    %v6932 = vpack.c.b16 %v4460, %v4452
    %v6933 = vpack.c.b16 %v4461, %v4453
    %v6934 = vpack.c.b16 %v4462, %v4454
    %v6935 = vpack.c.b16 %v4463, %v4455
    %v6936 = vpack.c.b16 %v4464, %v4456
    %v6937 = vpack.c.b16 %v4465, %v4457
    %v6938 = vpack.c.b16 %v4466, %v4458
    %v6939 = vpack.c.b16 %v4475, %v4467
    %v6940 = vpack.c.b16 %v4476, %v4468
    %v6941 = vpack.c.b16 %v4477, %v4469
    %v6942 = vpack.c.b16 %v4478, %v4470
    %v6943 = vpack.c.b16 %v4479, %v4471
    %v6944 = vpack.c.b16 %v4480, %v4472
    %v6945 = vpack.c.b16 %v4481, %v4473
    %v6946 = vpack.c.b16 %v4482, %v4474
    %v6947 = vpack.c.b16 %v4491, %v4483
    %v6948 = vpack.c.b16 %v4492, %v4484
    %v6949 = vpack.c.b16 %v4493, %v4485
    %v6950 = vpack.c.b16 %v4494, %v4486
    %v6951 = vpack.c.b16 %v4495, %v4487
    %v6952 = vpack.c.b16 %v4496, %v4488
    %v6953 = vpack.c.b16 %v4497, %v4489
    %v6954 = vpack.c.b16 %v4498, %v4490
    %v6955 = vpack.c.b16 %v4507, %v4499
    %v6956 = vpack.c.b16 %v4508, %v4500
    %v6957 = vpack.c.b16 %v4509, %v4501
    %v6958 = vpack.c.b16 %v4510, %v4502
    %v6959 = vpack.c.b16 %v4511, %v4503
    %v6960 = vpack.c.b16 %v4512, %v4504
    %v6961 = vpack.c.b16 %v4513, %v4505
    %v6962 = vpack.c.b16 %v4514, %v4506
    %v6963 = vpack.c.b16 %v4523, %v4515
    %v6964 = vpack.c.b16 %v4524, %v4516
    %v6965 = vpack.c.b16 %v4525, %v4517
    %v6966 = vpack.c.b16 %v4526, %v4518
    %v6967 = vpack.c.b16 %v4527, %v4519
    %v6968 = vpack.c.b16 %v4528, %v4520
    %v6969 = vpack.c.b16 %v4529, %v4521
    %v6970 = vpack.c.b16 %v4530, %v4522
    %v6971 = vpack.c.b16 %v4539, %v4531
    %v6972 = vpack.c.b16 %v4540, %v4532
    %v6973 = vpack.c.b16 %v4541, %v4533
    %v6974 = vpack.c.b16 %v4542, %v4534
    %v6975 = vpack.c.b16 %v4543, %v4535
    %v6976 = vpack.c.b16 %v4544, %v4536
    %v6977 = vpack.c.b16 %v4545, %v4537
    %v6978 = vpack.c.b16 %v4546, %v4538
    %v6979 = vpack.c.b16 %v4555, %v4547
    %v6980 = vpack.c.b16 %v4556, %v4548
    %v6981 = vpack.c.b16 %v4557, %v4549
    %v6982 = vpack.c.b16 %v4558, %v4550
    %v6983 = vpack.c.b16 %v4559, %v4551
    %v6984 = vpack.c.b16 %v4560, %v4552
    %v6985 = vpack.c.b16 %v4561, %v4553
    %v6986 = vpack.c.b16 %v4562, %v4554
    %v6987 = vpack.c.b16 %v4571, %v4563
    %v6988 = vpack.c.b16 %v4572, %v4564
    %v6989 = vpack.c.b16 %v4573, %v4565
    %v6990 = vpack.c.b16 %v4574, %v4566
    %v6991 = vpack.c.b16 %v4575, %v4567
    %v6992 = vpack.c.b16 %v4576, %v4568
    %v6993 = vpack.c.b16 %v4577, %v4569
    %v6994 = vpack.c.b16 %v4578, %v4570
    %v6995 = vpack.c.b16 %v4587, %v4579
    %v6996 = vpack.c.b16 %v4588, %v4580
    %v6997 = vpack.c.b16 %v4589, %v4581
    %v6998 = vpack.c.b16 %v4590, %v4582
    %v6999 = vpack.c.b16 %v4591, %v4583
    %v7000 = vpack.c.b16 %v4592, %v4584
    %v7001 = vpack.c.b16 %v4593, %v4585
    %v7002 = vpack.c.b16 %v4594, %v4586
    %v7003 = vpack.c.b16 %v4603, %v4595
    %v7004 = vpack.c.b16 %v4604, %v4596
    %v7005 = vpack.c.b16 %v4605, %v4597
    %v7006 = vpack.c.b16 %v4606, %v4598
    %v7007 = vpack.c.b16 %v4607, %v4599
    %v7008 = vpack.c.b16 %v4608, %v4600
    %v7009 = vpack.c.b16 %v4609, %v4601
    %v7010 = vpack.c.b16 %v4610, %v4602
    %v7011 = vpack.c.b16 %v4619, %v4611
    %v7012 = vpack.c.b16 %v4620, %v4612
    %v7013 = vpack.c.b16 %v4621, %v4613
    %v7014 = vpack.c.b16 %v4622, %v4614
    %v7015 = vpack.c.b16 %v4623, %v4615
    %v7016 = vpack.c.b16 %v4624, %v4616
    %v7017 = vpack.c.b16 %v4625, %v4617
    %v7018 = vpack.c.b16 %v4626, %v4618
    %v7019 = vpack.c.b16 %v4635, %v4627
    %v7020 = vpack.c.b16 %v4636, %v4628
    %v7021 = vpack.c.b16 %v4637, %v4629
    %v7022 = vpack.c.b16 %v4638, %v4630
    %v7023 = vpack.c.b16 %v4639, %v4631
    %v7024 = vpack.c.b16 %v4640, %v4632
    %v7025 = vpack.c.b16 %v4641, %v4633
    %v7026 = vpack.c.b16 %v4642, %v4634
    %v7027 = vpack.c.b16 %v4651, %v4643
    %v7028 = vpack.c.b16 %v4652, %v4644
    %v7029 = vpack.c.b16 %v4653, %v4645
    %v7030 = vpack.c.b16 %v4654, %v4646
    %v7031 = vpack.c.b16 %v4655, %v4647
    %v7032 = vpack.c.b16 %v4656, %v4648
    %v7033 = vpack.c.b16 %v4657, %v4649
    %v7034 = vpack.c.b16 %v4658, %v4650
    %v7035 = vpack.c.b16 %v4667, %v4659
    %v7036 = vpack.c.b16 %v4668, %v4660
    %v7037 = vpack.c.b16 %v4669, %v4661
    %v7038 = vpack.c.b16 %v4670, %v4662
    %v7039 = vpack.c.b16 %v4671, %v4663
    %v7040 = vpack.c.b16 %v4672, %v4664
    %v7041 = vpack.c.b16 %v4673, %v4665
    %v7042 = vpack.c.b16 %v4674, %v4666
    %v7043 = vpack.c.b16 %v4683, %v4675
    %v7044 = vpack.c.b16 %v4684, %v4676
    %v7045 = vpack.c.b16 %v4685, %v4677
    %v7046 = vpack.c.b16 %v4686, %v4678
    %v7047 = vpack.c.b16 %v4687, %v4679
    %v7048 = vpack.c.b16 %v4688, %v4680
    %v7049 = vpack.c.b16 %v4689, %v4681
    %v7050 = vpack.c.b16 %v4690, %v4682
    %v7051 = vpack.c.b16 %v4699, %v4691
    %v7052 = vpack.c.b16 %v4700, %v4692
    %v7053 = vpack.c.b16 %v4701, %v4693
    %v7054 = vpack.c.b16 %v4702, %v4694
    %v7055 = vpack.c.b16 %v4703, %v4695
    %v7056 = vpack.c.b16 %v4704, %v4696
    %v7057 = vpack.c.b16 %v4705, %v4697
    %v7058 = vpack.c.b16 %v4706, %v4698
    %v7059 = vpack.c.b16 %v4715, %v4707
    %v7060 = vpack.c.b16 %v4716, %v4708
    %v7061 = vpack.c.b16 %v4717, %v4709
    %v7062 = vpack.c.b16 %v4718, %v4710
    %v7063 = vpack.c.b16 %v4719, %v4711
    %v7064 = vpack.c.b16 %v4720, %v4712
    %v7065 = vpack.c.b16 %v4721, %v4713
    %v7066 = vpack.c.b16 %v4722, %v4714
    %v7067 = vpack.c.b16 %v4731, %v4723
    %v7068 = vpack.c.b16 %v4732, %v4724
    %v7069 = vpack.c.b16 %v4733, %v4725
    %v7070 = vpack.c.b16 %v4734, %v4726
    %v7071 = vpack.c.b16 %v4735, %v4727
    %v7072 = vpack.c.b16 %v4736, %v4728
    %v7073 = vpack.c.b16 %v4737, %v4729
    %v7074 = vpack.c.b16 %v4738, %v4730
    %v7075 = vpack.c.b16 %v4747, %v4739
    %v7076 = vpack.c.b16 %v4748, %v4740
    %v7077 = vpack.c.b16 %v4749, %v4741
    %v7078 = vpack.c.b16 %v4750, %v4742
    %v7079 = vpack.c.b16 %v4751, %v4743
    %v7080 = vpack.c.b16 %v4752, %v4744
    %v7081 = vpack.c.b16 %v4753, %v4745
    %v7082 = vpack.c.b16 %v4754, %v4746
    %v7083 = vpack.c.b16 %v4763, %v4755
    %v7084 = vpack.c.b16 %v4764, %v4756
    %v7085 = vpack.c.b16 %v4765, %v4757
    %v7086 = vpack.c.b16 %v4766, %v4758
    %v7087 = vpack.c.b16 %v4767, %v4759
    %v7088 = vpack.c.b16 %v4768, %v4760
    %v7089 = vpack.c.b16 %v4769, %v4761
    %v7090 = vpack.c.b16 %v4770, %v4762
    %v7091 = vpack.c.b16 %v4779, %v4771
    %v7092 = vpack.c.b16 %v4780, %v4772
    %v7093 = vpack.c.b16 %v4781, %v4773
    %v7094 = vpack.c.b16 %v4782, %v4774
    %v7095 = vpack.c.b16 %v4783, %v4775
    %v7096 = vpack.c.b16 %v4784, %v4776
    %v7097 = vpack.c.b16 %v4785, %v4777
    %v7098 = vpack.c.b16 %v4786, %v4778
    %v7099 = vpack.c.b16 %v4795, %v4787
    %v7100 = vpack.c.b16 %v4796, %v4788
    %v7101 = vpack.c.b16 %v4797, %v4789
    %v7102 = vpack.c.b16 %v4798, %v4790
    %v7103 = vpack.c.b16 %v4799, %v4791
    %v7104 = vpack.c.b16 %v4800, %v4792
    %v7105 = vpack.c.b16 %v4801, %v4793
    %v7106 = vpack.c.b16 %v4802, %v4794
    %v7107 = vpack.c.b16 %v4811, %v4803
    %v7108 = vpack.c.b16 %v4812, %v4804
    %v7109 = vpack.c.b16 %v4813, %v4805
    %v7110 = vpack.c.b16 %v4814, %v4806
    %v7111 = vpack.c.b16 %v4815, %v4807
    %v7112 = vpack.c.b16 %v4816, %v4808
    %v7113 = vpack.c.b16 %v4817, %v4809
    %v7114 = vpack.c.b16 %v4818, %v4810
    %v7115 = vpack.c.b16 %v4827, %v4819
    %v7116 = vpack.c.b16 %v4828, %v4820
    %v7117 = vpack.c.b16 %v4829, %v4821
    %v7118 = vpack.c.b16 %v4830, %v4822
    %v7119 = vpack.c.b16 %v4831, %v4823
    %v7120 = vpack.c.b16 %v4832, %v4824
    %v7121 = vpack.c.b16 %v4833, %v4825
    %v7122 = vpack.c.b16 %v4834, %v4826
    %v7123 = vpack.c.b16 %v4843, %v4835
    %v7124 = vpack.c.b16 %v4844, %v4836
    %v7125 = vpack.c.b16 %v4845, %v4837
    %v7126 = vpack.c.b16 %v4846, %v4838
    %v7127 = vpack.c.b16 %v4847, %v4839
    %v7128 = vpack.c.b16 %v4848, %v4840
    %v7129 = vpack.c.b16 %v4849, %v4841
    %v7130 = vpack.c.b16 %v4850, %v4842
    %v7131 = vpack.c.b16 %v4859, %v4851
    %v7132 = vpack.c.b16 %v4860, %v4852
    %v7133 = vpack.c.b16 %v4861, %v4853
    %v7134 = vpack.c.b16 %v4862, %v4854
    %v7135 = vpack.c.b16 %v4863, %v4855
    %v7136 = vpack.c.b16 %v4864, %v4856
    %v7137 = vpack.c.b16 %v4865, %v4857
    %v7138 = vpack.c.b16 %v4866, %v4858
    %v7139 = vpack.c.b16 %v4875, %v4867
    %v7140 = vpack.c.b16 %v4876, %v4868
    %v7141 = vpack.c.b16 %v4877, %v4869
    %v7142 = vpack.c.b16 %v4878, %v4870
    %v7143 = vpack.c.b16 %v4879, %v4871
    %v7144 = vpack.c.b16 %v4880, %v4872
    %v7145 = vpack.c.b16 %v4881, %v4873
    %v7146 = vpack.c.b16 %v4882, %v4874
    %v7147 = vpack.c.b16 %v4891, %v4883
    %v7148 = vpack.c.b16 %v4892, %v4884
    %v7149 = vpack.c.b16 %v4893, %v4885
    %v7150 = vpack.c.b16 %v4894, %v4886
    %v7151 = vpack.c.b16 %v4895, %v4887
    %v7152 = vpack.c.b16 %v4896, %v4888
    %v7153 = vpack.c.b16 %v4897, %v4889
    %v7154 = vpack.c.b16 %v4898, %v4890
    %v7155 = vpack.c.b16 %v4907, %v4899
    %v7156 = vpack.c.b16 %v4908, %v4900
    %v7157 = vpack.c.b16 %v4909, %v4901
    %v7158 = vpack.c.b16 %v4910, %v4902
    %v7159 = vpack.c.b16 %v4911, %v4903
    %v7160 = vpack.c.b16 %v4912, %v4904
    %v7161 = vpack.c.b16 %v4913, %v4905
    %v7162 = vpack.c.b16 %v4914, %v4906
    %v7163 = vpack.c.b16 %v4923, %v4915
    %v7164 = vpack.c.b16 %v4924, %v4916
    %v7165 = vpack.c.b16 %v4925, %v4917
    %v7166 = vpack.c.b16 %v4926, %v4918
    %v7167 = vpack.c.b16 %v4927, %v4919
    %v7168 = vpack.c.b16 %v4928, %v4920
    %v7169 = vpack.c.b16 %v4929, %v4921
    %v7170 = vpack.c.b16 %v4930, %v4922
    %v7171 = vpack.c.b16 %v4939, %v4931
    %v7172 = vpack.c.b16 %v4940, %v4932
    %v7173 = vpack.c.b16 %v4941, %v4933
    %v7174 = vpack.c.b16 %v4942, %v4934
    %v7175 = vpack.c.b16 %v4943, %v4935
    %v7176 = vpack.c.b16 %v4944, %v4936
    %v7177 = vpack.c.b16 %v4945, %v4937
    %v7178 = vpack.c.b16 %v4946, %v4938
    %v7179 = vpack.c.b16 %v4955, %v4947
    %v7180 = vpack.c.b16 %v4956, %v4948
    %v7181 = vpack.c.b16 %v4957, %v4949
    %v7182 = vpack.c.b16 %v4958, %v4950
    %v7183 = vpack.c.b16 %v4959, %v4951
    %v7184 = vpack.c.b16 %v4960, %v4952
    %v7185 = vpack.c.b16 %v4961, %v4953
    %v7186 = vpack.c.b16 %v4962, %v4954
    %v7187 = vpack.c.b16 %v4971, %v4963
    %v7188 = vpack.c.b16 %v4972, %v4964
    %v7189 = vpack.c.b16 %v4973, %v4965
    %v7190 = vpack.c.b16 %v4974, %v4966
    %v7191 = vpack.c.b16 %v4975, %v4967
    %v7192 = vpack.c.b16 %v4976, %v4968
    %v7193 = vpack.c.b16 %v4977, %v4969
    %v7194 = vpack.c.b16 %v4978, %v4970
    %v7195 = vpack.c.b16 %v4987, %v4979
    %v7196 = vpack.c.b16 %v4988, %v4980
    %v7197 = vpack.c.b16 %v4989, %v4981
    %v7198 = vpack.c.b16 %v4990, %v4982
    %v7199 = vpack.c.b16 %v4991, %v4983
    %v7200 = vpack.c.b16 %v4992, %v4984
    %v7201 = vpack.c.b16 %v4993, %v4985
    %v7202 = vpack.c.b16 %v4994, %v4986
    %v7203 = vpack.c.b16 %v5003, %v4995
    %v7204 = vpack.c.b16 %v5004, %v4996
    %v7205 = vpack.c.b16 %v5005, %v4997
    %v7206 = vpack.c.b16 %v5006, %v4998
    %v7207 = vpack.c.b16 %v5007, %v4999
    %v7208 = vpack.c.b16 %v5008, %v5000
    %v7209 = vpack.c.b16 %v5009, %v5001
    %v7210 = vpack.c.b16 %v5010, %v5002
    %v7211 = vpack.c.b16 %v5019, %v5011
    %v7212 = vpack.c.b16 %v5020, %v5012
    %v7213 = vpack.c.b16 %v5021, %v5013
    %v7214 = vpack.c.b16 %v5022, %v5014
    %v7215 = vpack.c.b16 %v5023, %v5015
    %v7216 = vpack.c.b16 %v5024, %v5016
    %v7217 = vpack.c.b16 %v5025, %v5017
    %v7218 = vpack.c.b16 %v5026, %v5018
    %v7219 = vpack.c.b16 %v5035, %v5027
    %v7220 = vpack.c.b16 %v5036, %v5028
    %v7221 = vpack.c.b16 %v5037, %v5029
    %v7222 = vpack.c.b16 %v5038, %v5030
    %v7223 = vpack.c.b16 %v5039, %v5031
    %v7224 = vpack.c.b16 %v5040, %v5032
    %v7225 = vpack.c.b16 %v5041, %v5033
    %v7226 = vpack.c.b16 %v5042, %v5034
    %v7227 = vpack.c.b16 %v5051, %v5043
    %v7228 = vpack.c.b16 %v5052, %v5044
    %v7229 = vpack.c.b16 %v5053, %v5045
    %v7230 = vpack.c.b16 %v5054, %v5046
    %v7231 = vpack.c.b16 %v5055, %v5047
    %v7232 = vpack.c.b16 %v5056, %v5048
    %v7233 = vpack.c.b16 %v5057, %v5049
    %v7234 = vpack.c.b16 %v5058, %v5050
    %v7235 = vpack.c.b16 %v5067, %v5059
    %v7236 = vpack.c.b16 %v5068, %v5060
    %v7237 = vpack.c.b16 %v5069, %v5061
    %v7238 = vpack.c.b16 %v5070, %v5062
    %v7239 = vpack.c.b16 %v5071, %v5063
    %v7240 = vpack.c.b16 %v5072, %v5064
    %v7241 = vpack.c.b16 %v5073, %v5065
    %v7242 = vpack.c.b16 %v5074, %v5066
    %v7243 = vpack.c.b16 %v5083, %v5075
    %v7244 = vpack.c.b16 %v5084, %v5076
    %v7245 = vpack.c.b16 %v5085, %v5077
    %v7246 = vpack.c.b16 %v5086, %v5078
    %v7247 = vpack.c.b16 %v5087, %v5079
    %v7248 = vpack.c.b16 %v5088, %v5080
    %v7249 = vpack.c.b16 %v5089, %v5081
    %v7250 = vpack.c.b16 %v5090, %v5082
    %v7251 = vpack.c.b16 %v5099, %v5091
    %v7252 = vpack.c.b16 %v5100, %v5092
    %v7253 = vpack.c.b16 %v5101, %v5093
    %v7254 = vpack.c.b16 %v5102, %v5094
    %v7255 = vpack.c.b16 %v5103, %v5095
    %v7256 = vpack.c.b16 %v5104, %v5096
    %v7257 = vpack.c.b16 %v5105, %v5097
    %v7258 = vpack.c.b16 %v5106, %v5098
    %v7259 = vpack.c.b16 %v5115, %v5107
    %v7260 = vpack.c.b16 %v5116, %v5108
    %v7261 = vpack.c.b16 %v5117, %v5109
    %v7262 = vpack.c.b16 %v5118, %v5110
    %v7263 = vpack.c.b16 %v5119, %v5111
    %v7264 = vpack.c.b16 %v5120, %v5112
    %v7265 = vpack.c.b16 %v5121, %v5113
    %v7266 = vpack.c.b16 %v5122, %v5114
    %v7267 = vpack.c.b16 %v5131, %v5123
    %v7268 = vpack.c.b16 %v5132, %v5124
    %v7269 = vpack.c.b16 %v5133, %v5125
    %v7270 = vpack.c.b16 %v5134, %v5126
    %v7271 = vpack.c.b16 %v5135, %v5127
    %v7272 = vpack.c.b16 %v5136, %v5128
    %v7273 = vpack.c.b16 %v5137, %v5129
    %v7274 = vpack.c.b16 %v5138, %v5130
    %v7275 = vpack.c.b16 %v5147, %v5139
    %v7276 = vpack.c.b16 %v5148, %v5140
    %v7277 = vpack.c.b16 %v5149, %v5141
    %v7278 = vpack.c.b16 %v5150, %v5142
    %v7279 = vpack.c.b16 %v5151, %v5143
    %v7280 = vpack.c.b16 %v5152, %v5144
    %v7281 = vpack.c.b16 %v5153, %v5145
    %v7282 = vpack.c.b16 %v5154, %v5146
    %v7283 = vpack.c.b16 %v5163, %v5155
    %v7284 = vpack.c.b16 %v5164, %v5156
    %v7285 = vpack.c.b16 %v5165, %v5157
    %v7286 = vpack.c.b16 %v5166, %v5158
    %v7287 = vpack.c.b16 %v5167, %v5159
    %v7288 = vpack.c.b16 %v5168, %v5160
    %v7289 = vpack.c.b16 %v5169, %v5161
    %v7290 = vpack.c.b16 %v5170, %v5162
    %v7291 = vpack.c.b16 %v5179, %v5171
    %v7292 = vpack.c.b16 %v5180, %v5172
    %v7293 = vpack.c.b16 %v5181, %v5173
    %v7294 = vpack.c.b16 %v5182, %v5174
    %v7295 = vpack.c.b16 %v5183, %v5175
    %v7296 = vpack.c.b16 %v5184, %v5176
    %v7297 = vpack.c.b16 %v5185, %v5177
    %v7298 = vpack.c.b16 %v5186, %v5178
    %v7299 = vpack.c.b16 %v5195, %v5187
    %v7300 = vpack.c.b16 %v5196, %v5188
    %v7301 = vpack.c.b16 %v5197, %v5189
    %v7302 = vpack.c.b16 %v5198, %v5190
    %v7303 = vpack.c.b16 %v5199, %v5191
    %v7304 = vpack.c.b16 %v5200, %v5192
    %v7305 = vpack.c.b16 %v5201, %v5193
    %v7306 = vpack.c.b16 %v5202, %v5194
    %v7307 = vpack.c.b16 %v5211, %v5203
    %v7308 = vpack.c.b16 %v5212, %v5204
    %v7309 = vpack.c.b16 %v5213, %v5205
    %v7310 = vpack.c.b16 %v5214, %v5206
    %v7311 = vpack.c.b16 %v5215, %v5207
    %v7312 = vpack.c.b16 %v5216, %v5208
    %v7313 = vpack.c.b16 %v5217, %v5209
    %v7314 = vpack.c.b16 %v5218, %v5210
    %v7315 = vpack.c.b16 %v5227, %v5219
    %v7316 = vpack.c.b16 %v5228, %v5220
    %v7317 = vpack.c.b16 %v5229, %v5221
    %v7318 = vpack.c.b16 %v5230, %v5222
    %v7319 = vpack.c.b16 %v5231, %v5223
    %v7320 = vpack.c.b16 %v5232, %v5224
    %v7321 = vpack.c.b16 %v5233, %v5225
    %v7322 = vpack.c.b16 %v5234, %v5226
    %v7323 = vpack.c.b16 %v5243, %v5235
    %v7324 = vpack.c.b16 %v5244, %v5236
    %v7325 = vpack.c.b16 %v5245, %v5237
    %v7326 = vpack.c.b16 %v5246, %v5238
    %v7327 = vpack.c.b16 %v5247, %v5239
    %v7328 = vpack.c.b16 %v5248, %v5240
    %v7329 = vpack.c.b16 %v5249, %v5241
    %v7330 = vpack.c.b16 %v5250, %v5242
    %v7331 = vpack.c.b16 %v5259, %v5251
    %v7332 = vpack.c.b16 %v5260, %v5252
    %v7333 = vpack.c.b16 %v5261, %v5253
    %v7334 = vpack.c.b16 %v5262, %v5254
    %v7335 = vpack.c.b16 %v5263, %v5255
    %v7336 = vpack.c.b16 %v5264, %v5256
    %v7337 = vpack.c.b16 %v5265, %v5257
    %v7338 = vpack.c.b16 %v5266, %v5258
    %v7339 = vpack.c.b16 %v5275, %v5267
    %v7340 = vpack.c.b16 %v5276, %v5268
    %v7341 = vpack.c.b16 %v5277, %v5269
    %v7342 = vpack.c.b16 %v5278, %v5270
    %v7343 = vpack.c.b16 %v5279, %v5271
    %v7344 = vpack.c.b16 %v5280, %v5272
    %v7345 = vpack.c.b16 %v5281, %v5273
    %v7346 = vpack.c.b16 %v5282, %v5274
    %v7347 = vpack.c.b16 %v5291, %v5283
    %v7348 = vpack.c.b16 %v5292, %v5284
    %v7349 = vpack.c.b16 %v5293, %v5285
    %v7350 = vpack.c.b16 %v5294, %v5286
    %v7351 = vpack.c.b16 %v5295, %v5287
    %v7352 = vpack.c.b16 %v5296, %v5288
    %v7353 = vpack.c.b16 %v5297, %v5289
    %v7354 = vpack.c.b16 %v5298, %v5290
    %v7355 = vpack.c.b16 %v5307, %v5299
    %v7356 = vpack.c.b16 %v5308, %v5300
    %v7357 = vpack.c.b16 %v5309, %v5301
    %v7358 = vpack.c.b16 %v5310, %v5302
    %v7359 = vpack.c.b16 %v5311, %v5303
    %v7360 = vpack.c.b16 %v5312, %v5304
    %v7361 = vpack.c.b16 %v5313, %v5305
    %v7362 = vpack.c.b16 %v5314, %v5306
    %v7363 = vpack.c.b16 %v5323, %v5315
    %v7364 = vpack.c.b16 %v5324, %v5316
    %v7365 = vpack.c.b16 %v5325, %v5317
    %v7366 = vpack.c.b16 %v5326, %v5318
    %v7367 = vpack.c.b16 %v5327, %v5319
    %v7368 = vpack.c.b16 %v5328, %v5320
    %v7369 = vpack.c.b16 %v5329, %v5321
    %v7370 = vpack.c.b16 %v5330, %v5322
    %v7371 = vpack.c.b16 %v5339, %v5331
    %v7372 = vpack.c.b16 %v5340, %v5332
    %v7373 = vpack.c.b16 %v5341, %v5333
    %v7374 = vpack.c.b16 %v5342, %v5334
    %v7375 = vpack.c.b16 %v5343, %v5335
    %v7376 = vpack.c.b16 %v5344, %v5336
    %v7377 = vpack.c.b16 %v5345, %v5337
    %v7378 = vpack.c.b16 %v5346, %v5338
    %v7379 = vpack.c.b16 %v5355, %v5347
    %v7380 = vpack.c.b16 %v5356, %v5348
    %v7381 = vpack.c.b16 %v5357, %v5349
    %v7382 = vpack.c.b16 %v5358, %v5350
    %v7383 = vpack.c.b16 %v5359, %v5351
    %v7384 = vpack.c.b16 %v5360, %v5352
    %v7385 = vpack.c.b16 %v5361, %v5353
    %v7386 = vpack.c.b16 %v5362, %v5354
    %v7387 = vpack.c.b16 %v5371, %v5363
    %v7388 = vpack.c.b16 %v5372, %v5364
    %v7389 = vpack.c.b16 %v5373, %v5365
    %v7390 = vpack.c.b16 %v5374, %v5366
    %v7391 = vpack.c.b16 %v5375, %v5367
    %v7392 = vpack.c.b16 %v5376, %v5368
    %v7393 = vpack.c.b16 %v5377, %v5369
    %v7394 = vpack.c.b16 %v5378, %v5370
    %v7395 = vpack.c.b16 %v5387, %v5379
    %v7396 = vpack.c.b16 %v5388, %v5380
    %v7397 = vpack.c.b16 %v5389, %v5381
    %v7398 = vpack.c.b16 %v5390, %v5382
    %v7399 = vpack.c.b16 %v5391, %v5383
    %v7400 = vpack.c.b16 %v5392, %v5384
    %v7401 = vpack.c.b16 %v5393, %v5385
    %v7402 = vpack.c.b16 %v5394, %v5386
    %v7403 = vpack.c.b16 %v5403, %v5395
    %v7404 = vpack.c.b16 %v5404, %v5396
    %v7405 = vpack.c.b16 %v5405, %v5397
    %v7406 = vpack.c.b16 %v5406, %v5398
    %v7407 = vpack.c.b16 %v5407, %v5399
    %v7408 = vpack.c.b16 %v5408, %v5400
    %v7409 = vpack.c.b16 %v5409, %v5401
    %v7410 = vpack.c.b16 %v5410, %v5402
    %v7411 = vpack.c.b16 %v5419, %v5411
    %v7412 = vpack.c.b16 %v5420, %v5412
    %v7413 = vpack.c.b16 %v5421, %v5413
    %v7414 = vpack.c.b16 %v5422, %v5414
    %v7415 = vpack.c.b16 %v5423, %v5415
    %v7416 = vpack.c.b16 %v5424, %v5416
    %v7417 = vpack.c.b16 %v5425, %v5417
    %v7418 = vpack.c.b16 %v5426, %v5418
    %v7419 = vpack.c.b16 %v5435, %v5427
    %v7420 = vpack.c.b16 %v5436, %v5428
    %v7421 = vpack.c.b16 %v5437, %v5429
    %v7422 = vpack.c.b16 %v5438, %v5430
    %v7423 = vpack.c.b16 %v5439, %v5431
    %v7424 = vpack.c.b16 %v5440, %v5432
    %v7425 = vpack.c.b16 %v5441, %v5433
    %v7426 = vpack.c.b16 %v5442, %v5434
    %v7427 = vpack.c.b16 %v5451, %v5443
    %v7428 = vpack.c.b16 %v5452, %v5444
    %v7429 = vpack.c.b16 %v5453, %v5445
    %v7430 = vpack.c.b16 %v5454, %v5446
    %v7431 = vpack.c.b16 %v5455, %v5447
    %v7432 = vpack.c.b16 %v5456, %v5448
    %v7433 = vpack.c.b16 %v5457, %v5449
    %v7434 = vpack.c.b16 %v5458, %v5450
    %v7435 = vpack.c.b16 %v5467, %v5459
    %v7436 = vpack.c.b16 %v5468, %v5460
    %v7437 = vpack.c.b16 %v5469, %v5461
    %v7438 = vpack.c.b16 %v5470, %v5462
    %v7439 = vpack.c.b16 %v5471, %v5463
    %v7440 = vpack.c.b16 %v5472, %v5464
    %v7441 = vpack.c.b16 %v5473, %v5465
    %v7442 = vpack.c.b16 %v5474, %v5466
    %v7443 = vpack.c.b16 %v5483, %v5475
    %v7444 = vpack.c.b16 %v5484, %v5476
    %v7445 = vpack.c.b16 %v5485, %v5477
    %v7446 = vpack.c.b16 %v5486, %v5478
    %v7447 = vpack.c.b16 %v5487, %v5479
    %v7448 = vpack.c.b16 %v5488, %v5480
    %v7449 = vpack.c.b16 %v5489, %v5481
    %v7450 = vpack.c.b16 %v5490, %v5482
    %v7451 = vpack.c.b16 %v5499, %v5491
    %v7452 = vpack.c.b16 %v5500, %v5492
    %v7453 = vpack.c.b16 %v5501, %v5493
    %v7454 = vpack.c.b16 %v5502, %v5494
    %v7455 = vpack.c.b16 %v5503, %v5495
    %v7456 = vpack.c.b16 %v5504, %v5496
    %v7457 = vpack.c.b16 %v5505, %v5497
    %v7458 = vpack.c.b16 %v5506, %v5498
    %v7459 = vpack.c.b16 %v5515, %v5507
    %v7460 = vpack.c.b16 %v5516, %v5508
    %v7461 = vpack.c.b16 %v5517, %v5509
    %v7462 = vpack.c.b16 %v5518, %v5510
    %v7463 = vpack.c.b16 %v5519, %v5511
    %v7464 = vpack.c.b16 %v5520, %v5512
    %v7465 = vpack.c.b16 %v5521, %v5513
    %v7466 = vpack.c.b16 %v5522, %v5514
    %v7467 = vpack.c.b16 %v5531, %v5523
    %v7468 = vpack.c.b16 %v5532, %v5524
    %v7469 = vpack.c.b16 %v5533, %v5525
    %v7470 = vpack.c.b16 %v5534, %v5526
    %v7471 = vpack.c.b16 %v5535, %v5527
    %v7472 = vpack.c.b16 %v5536, %v5528
    %v7473 = vpack.c.b16 %v5537, %v5529
    %v7474 = vpack.c.b16 %v5538, %v5530
    %v7475 = vpack.c.b16 %v5547, %v5539
    %v7476 = vpack.c.b16 %v5548, %v5540
    %v7477 = vpack.c.b16 %v5549, %v5541
    %v7478 = vpack.c.b16 %v5550, %v5542
    %v7479 = vpack.c.b16 %v5551, %v5543
    %v7480 = vpack.c.b16 %v5552, %v5544
    %v7481 = vpack.c.b16 %v5553, %v5545
    %v7482 = vpack.c.b16 %v5554, %v5546
    %v7483 = vpack.c.b16 %v5563, %v5555
    %v7484 = vpack.c.b16 %v5564, %v5556
    %v7485 = vpack.c.b16 %v5565, %v5557
    %v7486 = vpack.c.b16 %v5566, %v5558
    %v7487 = vpack.c.b16 %v5567, %v5559
    %v7488 = vpack.c.b16 %v5568, %v5560
    %v7489 = vpack.c.b16 %v5569, %v5561
    %v7490 = vpack.c.b16 %v5570, %v5562
    %v7491 = vpack.c.b16 %v5579, %v5571
    %v7492 = vpack.c.b16 %v5580, %v5572
    %v7493 = vpack.c.b16 %v5581, %v5573
    %v7494 = vpack.c.b16 %v5582, %v5574
    %v7495 = vpack.c.b16 %v5583, %v5575
    %v7496 = vpack.c.b16 %v5584, %v5576
    %v7497 = vpack.c.b16 %v5585, %v5577
    %v7498 = vpack.c.b16 %v5586, %v5578
    %v7499 = vpack.c.b16 %v5595, %v5587
    %v7500 = vpack.c.b16 %v5596, %v5588
    %v7501 = vpack.c.b16 %v5597, %v5589
    %v7502 = vpack.c.b16 %v5598, %v5590
    %v7503 = vpack.c.b16 %v5599, %v5591
    %v7504 = vpack.c.b16 %v5600, %v5592
    %v7505 = vpack.c.b16 %v5601, %v5593
    %v7506 = vpack.c.b16 %v5602, %v5594
    %v7507 = vpack.c.b16 %v5611, %v5603
    %v7508 = vpack.c.b16 %v5612, %v5604
    %v7509 = vpack.c.b16 %v5613, %v5605
    %v7510 = vpack.c.b16 %v5614, %v5606
    %v7511 = vpack.c.b16 %v5615, %v5607
    %v7512 = vpack.c.b16 %v5616, %v5608
    %v7513 = vpack.c.b16 %v5617, %v5609
    %v7514 = vpack.c.b16 %v5618, %v5610
    %v7515 = vpack.c.b16 %v5627, %v5619
    %v7516 = vpack.c.b16 %v5628, %v5620
    %v7517 = vpack.c.b16 %v5629, %v5621
    %v7518 = vpack.c.b16 %v5630, %v5622
    %v7519 = vpack.c.b16 %v5631, %v5623
    %v7520 = vpack.c.b16 %v5632, %v5624
    %v7521 = vpack.c.b16 %v5633, %v5625
    %v7522 = vpack.c.b16 %v5634, %v5626
    %v7523 = vpack.c.b16 %v5643, %v5635
    %v7524 = vpack.c.b16 %v5644, %v5636
    %v7525 = vpack.c.b16 %v5645, %v5637
    %v7526 = vpack.c.b16 %v5646, %v5638
    %v7527 = vpack.c.b16 %v5647, %v5639
    %v7528 = vpack.c.b16 %v5648, %v5640
    %v7529 = vpack.c.b16 %v5649, %v5641
    %v7530 = vpack.c.b16 %v5650, %v5642
    %v7531 = vpack.c.b16 %v5659, %v5651
    %v7532 = vpack.c.b16 %v5660, %v5652
    %v7533 = vpack.c.b16 %v5661, %v5653
    %v7534 = vpack.c.b16 %v5662, %v5654
    %v7535 = vpack.c.b16 %v5663, %v5655
    %v7536 = vpack.c.b16 %v5664, %v5656
    %v7537 = vpack.c.b16 %v5665, %v5657
    %v7538 = vpack.c.b16 %v5666, %v5658
    %v7539 = vpack.c.b16 %v5675, %v5667
    %v7540 = vpack.c.b16 %v5676, %v5668
    %v7541 = vpack.c.b16 %v5677, %v5669
    %v7542 = vpack.c.b16 %v5678, %v5670
    %v7543 = vpack.c.b16 %v5679, %v5671
    %v7544 = vpack.c.b16 %v5680, %v5672
    %v7545 = vpack.c.b16 %v5681, %v5673
    %v7546 = vpack.c.b16 %v5682, %v5674
    %v7547 = vpack.c.b16 %v5691, %v5683
    %v7548 = vpack.c.b16 %v5692, %v5684
    %v7549 = vpack.c.b16 %v5693, %v5685
    %v7550 = vpack.c.b16 %v5694, %v5686
    %v7551 = vpack.c.b16 %v5695, %v5687
    %v7552 = vpack.c.b16 %v5696, %v5688
    %v7553 = vpack.c.b16 %v5697, %v5689
    %v7554 = vpack.c.b16 %v5698, %v5690
    %v7555 = vpack.c.b16 %v5707, %v5699
    %v7556 = vpack.c.b16 %v5708, %v5700
    %v7557 = vpack.c.b16 %v5709, %v5701
    %v7558 = vpack.c.b16 %v5710, %v5702
    %v7559 = vpack.c.b16 %v5711, %v5703
    %v7560 = vpack.c.b16 %v5712, %v5704
    %v7561 = vpack.c.b16 %v5713, %v5705
    %v7562 = vpack.c.b16 %v5714, %v5706
    %v7563 = vpack.c.b16 %v5723, %v5715
    %v7564 = vpack.c.b16 %v5724, %v5716
    %v7565 = vpack.c.b16 %v5725, %v5717
    %v7566 = vpack.c.b16 %v5726, %v5718
    %v7567 = vpack.c.b16 %v5727, %v5719
    %v7568 = vpack.c.b16 %v5728, %v5720
    %v7569 = vpack.c.b16 %v5729, %v5721
    %v7570 = vpack.c.b16 %v5730, %v5722
    %v7571 = vpack.c.b16 %v5739, %v5731
    %v7572 = vpack.c.b16 %v5740, %v5732
    %v7573 = vpack.c.b16 %v5741, %v5733
    %v7574 = vpack.c.b16 %v5742, %v5734
    %v7575 = vpack.c.b16 %v5743, %v5735
    %v7576 = vpack.c.b16 %v5744, %v5736
    %v7577 = vpack.c.b16 %v5745, %v5737
    %v7578 = vpack.c.b16 %v5746, %v5738
    %v7579 = vpack.c.b16 %v5755, %v5747
    %v7580 = vpack.c.b16 %v5756, %v5748
    %v7581 = vpack.c.b16 %v5757, %v5749
    %v7582 = vpack.c.b16 %v5758, %v5750
    %v7583 = vpack.c.b16 %v5759, %v5751
    %v7584 = vpack.c.b16 %v5760, %v5752
    %v7585 = vpack.c.b16 %v5761, %v5753
    %v7586 = vpack.c.b16 %v5762, %v5754
    %v7587 = vpack.c.b16 %v5771, %v5763
    %v7588 = vpack.c.b16 %v5772, %v5764
    %v7589 = vpack.c.b16 %v5773, %v5765
    %v7590 = vpack.c.b16 %v5774, %v5766
    %v7591 = vpack.c.b16 %v5775, %v5767
    %v7592 = vpack.c.b16 %v5776, %v5768
    %v7593 = vpack.c.b16 %v5777, %v5769
    %v7594 = vpack.c.b16 %v5778, %v5770
    %v7595 = vpack.c.b16 %v5787, %v5779
    %v7596 = vpack.c.b16 %v5788, %v5780
    %v7597 = vpack.c.b16 %v5789, %v5781
    %v7598 = vpack.c.b16 %v5790, %v5782
    %v7599 = vpack.c.b16 %v5791, %v5783
    %v7600 = vpack.c.b16 %v5792, %v5784
    %v7601 = vpack.c.b16 %v5793, %v5785
    %v7602 = vpack.c.b16 %v5794, %v5786
    %v7603 = vpack.c.b16 %v5803, %v5795
    %v7604 = vpack.c.b16 %v5804, %v5796
    %v7605 = vpack.c.b16 %v5805, %v5797
    %v7606 = vpack.c.b16 %v5806, %v5798
    %v7607 = vpack.c.b16 %v5807, %v5799
    %v7608 = vpack.c.b16 %v5808, %v5800
    %v7609 = vpack.c.b16 %v5809, %v5801
    %v7610 = vpack.c.b16 %v5810, %v5802
    %v7611 = vpack.c.b16 %v5819, %v5811
    %v7612 = vpack.c.b16 %v5820, %v5812
    %v7613 = vpack.c.b16 %v5821, %v5813
    %v7614 = vpack.c.b16 %v5822, %v5814
    %v7615 = vpack.c.b16 %v5823, %v5815
    %v7616 = vpack.c.b16 %v5824, %v5816
    %v7617 = vpack.c.b16 %v5825, %v5817
    %v7618 = vpack.c.b16 %v5826, %v5818
    %v7619 = vpack.c.b16 %v5835, %v5827
    %v7620 = vpack.c.b16 %v5836, %v5828
    %v7621 = vpack.c.b16 %v5837, %v5829
    %v7622 = vpack.c.b16 %v5838, %v5830
    %v7623 = vpack.c.b16 %v5839, %v5831
    %v7624 = vpack.c.b16 %v5840, %v5832
    %v7625 = vpack.c.b16 %v5841, %v5833
    %v7626 = vpack.c.b16 %v5842, %v5834
    %v7627 = vpack.c.b16 %v5851, %v5843
    %v7628 = vpack.c.b16 %v5852, %v5844
    %v7629 = vpack.c.b16 %v5853, %v5845
    %v7630 = vpack.c.b16 %v5854, %v5846
    %v7631 = vpack.c.b16 %v5855, %v5847
    %v7632 = vpack.c.b16 %v5856, %v5848
    %v7633 = vpack.c.b16 %v5857, %v5849
    %v7634 = vpack.c.b16 %v5858, %v5850
    %v7635 = vpack.c.b16 %v5867, %v5859
    %v7636 = vpack.c.b16 %v5868, %v5860
    %v7637 = vpack.c.b16 %v5869, %v5861
    %v7638 = vpack.c.b16 %v5870, %v5862
    %v7639 = vpack.c.b16 %v5871, %v5863
    %v7640 = vpack.c.b16 %v5872, %v5864
    %v7641 = vpack.c.b16 %v5873, %v5865
    %v7642 = vpack.c.b16 %v5874, %v5866
    %v7643 = vpack.c.b16 %v5883, %v5875
    %v7644 = vpack.c.b16 %v5884, %v5876
    %v7645 = vpack.c.b16 %v5885, %v5877
    %v7646 = vpack.c.b16 %v5886, %v5878
    %v7647 = vpack.c.b16 %v5887, %v5879
    %v7648 = vpack.c.b16 %v5888, %v5880
    %v7649 = vpack.c.b16 %v5889, %v5881
    %v7650 = vpack.c.b16 %v5890, %v5882
    %v7651 = vpack.c.b16 %v5899, %v5891
    %v7652 = vpack.c.b16 %v5900, %v5892
    %v7653 = vpack.c.b16 %v5901, %v5893
    %v7654 = vpack.c.b16 %v5902, %v5894
    %v7655 = vpack.c.b16 %v5903, %v5895
    %v7656 = vpack.c.b16 %v5904, %v5896
    %v7657 = vpack.c.b16 %v5905, %v5897
    %v7658 = vpack.c.b16 %v5906, %v5898
    %v7659 = vpack.c.b16 %v5915, %v5907
    %v7660 = vpack.c.b16 %v5916, %v5908
    %v7661 = vpack.c.b16 %v5917, %v5909
    %v7662 = vpack.c.b16 %v5918, %v5910
    %v7663 = vpack.c.b16 %v5919, %v5911
    %v7664 = vpack.c.b16 %v5920, %v5912
    %v7665 = vpack.c.b16 %v5921, %v5913
    %v7666 = vpack.c.b16 %v5922, %v5914
    %v7667 = vpack.c.b16 %v5931, %v5923
    %v7668 = vpack.c.b16 %v5932, %v5924
    %v7669 = vpack.c.b16 %v5933, %v5925
    %v7670 = vpack.c.b16 %v5934, %v5926
    %v7671 = vpack.c.b16 %v5935, %v5927
    %v7672 = vpack.c.b16 %v5936, %v5928
    %v7673 = vpack.c.b16 %v5937, %v5929
    %v7674 = vpack.c.b16 %v5938, %v5930
    %v7675 = vpack.c.b16 %v5947, %v5939
    %v7676 = vpack.c.b16 %v5948, %v5940
    %v7677 = vpack.c.b16 %v5949, %v5941
    %v7678 = vpack.c.b16 %v5950, %v5942
    %v7679 = vpack.c.b16 %v5951, %v5943
    %v7680 = vpack.c.b16 %v5952, %v5944
    %v7681 = vpack.c.b16 %v5953, %v5945
    %v7682 = vpack.c.b16 %v5954, %v5946
    %v7683 = vpack.c.b16 %v5963, %v5955
    %v7684 = vpack.c.b16 %v5964, %v5956
    %v7685 = vpack.c.b16 %v5965, %v5957
    %v7686 = vpack.c.b16 %v5966, %v5958
    %v7687 = vpack.c.b16 %v5967, %v5959
    %v7688 = vpack.c.b16 %v5968, %v5960
    %v7689 = vpack.c.b16 %v5969, %v5961
    %v7690 = vpack.c.b16 %v5970, %v5962
    %v7691 = vpack.c.b16 %v5979, %v5971
    %v7692 = vpack.c.b16 %v5980, %v5972
    %v7693 = vpack.c.b16 %v5981, %v5973
    %v7694 = vpack.c.b16 %v5982, %v5974
    %v7695 = vpack.c.b16 %v5983, %v5975
    %v7696 = vpack.c.b16 %v5984, %v5976
    %v7697 = vpack.c.b16 %v5985, %v5977
    %v7698 = vpack.c.b16 %v5986, %v5978
    %v7699 = vpack.c.b16 %v5995, %v5987
    %v7700 = vpack.c.b16 %v5996, %v5988
    %v7701 = vpack.c.b16 %v5997, %v5989
    %v7702 = vpack.c.b16 %v5998, %v5990
    %v7703 = vpack.c.b16 %v5999, %v5991
    %v7704 = vpack.c.b16 %v6000, %v5992
    %v7705 = vpack.c.b16 %v6001, %v5993
    %v7706 = vpack.c.b16 %v6002, %v5994
    %v7707 = vpack.c.b16 %v6011, %v6003
    %v7708 = vpack.c.b16 %v6012, %v6004
    %v7709 = vpack.c.b16 %v6013, %v6005
    %v7710 = vpack.c.b16 %v6014, %v6006
    %v7711 = vpack.c.b16 %v6015, %v6007
    %v7712 = vpack.c.b16 %v6016, %v6008
    %v7713 = vpack.c.b16 %v6017, %v6009
    %v7714 = vpack.c.b16 %v6018, %v6010
    %v7715 = vpack.c.b16 %v6027, %v6019
    %v7716 = vpack.c.b16 %v6028, %v6020
    %v7717 = vpack.c.b16 %v6029, %v6021
    %v7718 = vpack.c.b16 %v6030, %v6022
    %v7719 = vpack.c.b16 %v6031, %v6023
    %v7720 = vpack.c.b16 %v6032, %v6024
    %v7721 = vpack.c.b16 %v6033, %v6025
    %v7722 = vpack.c.b16 %v6034, %v6026
    %v7723 = vpack.c.b16 %v6043, %v6035
    %v7724 = vpack.c.b16 %v6044, %v6036
    %v7725 = vpack.c.b16 %v6045, %v6037
    %v7726 = vpack.c.b16 %v6046, %v6038
    %v7727 = vpack.c.b16 %v6047, %v6039
    %v7728 = vpack.c.b16 %v6048, %v6040
    %v7729 = vpack.c.b16 %v6049, %v6041
    %v7730 = vpack.c.b16 %v6050, %v6042
    %v7731 = vpack.c.b16 %v6059, %v6051
    %v7732 = vpack.c.b16 %v6060, %v6052
    %v7733 = vpack.c.b16 %v6061, %v6053
    %v7734 = vpack.c.b16 %v6062, %v6054
    %v7735 = vpack.c.b16 %v6063, %v6055
    %v7736 = vpack.c.b16 %v6064, %v6056
    %v7737 = vpack.c.b16 %v6065, %v6057
    %v7738 = vpack.c.b16 %v6066, %v6058
    %v7739 = vpack.c.b16 %v6075, %v6067
    %v7740 = vpack.c.b16 %v6076, %v6068
    %v7741 = vpack.c.b16 %v6077, %v6069
    %v7742 = vpack.c.b16 %v6078, %v6070
    %v7743 = vpack.c.b16 %v6079, %v6071
    %v7744 = vpack.c.b16 %v6080, %v6072
    %v7745 = vpack.c.b16 %v6081, %v6073
    %v7746 = vpack.c.b16 %v6082, %v6074
    %v7747 = vpack.c.b16 %v6091, %v6083
    %v7748 = vpack.c.b16 %v6092, %v6084
    %v7749 = vpack.c.b16 %v6093, %v6085
    %v7750 = vpack.c.b16 %v6094, %v6086
    %v7751 = vpack.c.b16 %v6095, %v6087
    %v7752 = vpack.c.b16 %v6096, %v6088
    %v7753 = vpack.c.b16 %v6097, %v6089
    %v7754 = vpack.c.b16 %v6098, %v6090
    %v7755 = vpack.c.b16 %v6107, %v6099
    %v7756 = vpack.c.b16 %v6108, %v6100
    %v7757 = vpack.c.b16 %v6109, %v6101
    %v7758 = vpack.c.b16 %v6110, %v6102
    %v7759 = vpack.c.b16 %v6111, %v6103
    %v7760 = vpack.c.b16 %v6112, %v6104
    %v7761 = vpack.c.b16 %v6113, %v6105
    %v7762 = vpack.c.b16 %v6114, %v6106
    %v7763 = vpack.c.b16 %v6123, %v6115
    %v7764 = vpack.c.b16 %v6124, %v6116
    %v7765 = vpack.c.b16 %v6125, %v6117
    %v7766 = vpack.c.b16 %v6126, %v6118
    %v7767 = vpack.c.b16 %v6127, %v6119
    %v7768 = vpack.c.b16 %v6128, %v6120
    %v7769 = vpack.c.b16 %v6129, %v6121
    %v7770 = vpack.c.b16 %v6130, %v6122
    %v7771 = vpack.c.b16 %v6139, %v6131
    %v7772 = vpack.c.b16 %v6140, %v6132
    %v7773 = vpack.c.b16 %v6141, %v6133
    %v7774 = vpack.c.b16 %v6142, %v6134
    %v7775 = vpack.c.b16 %v6143, %v6135
    %v7776 = vpack.c.b16 %v6144, %v6136
    %v7777 = vpack.c.b16 %v6145, %v6137
    %v7778 = vpack.c.b16 %v6146, %v6138
    %v7779 = vpack.c.b16 %v6155, %v6147
    %v7780 = vpack.c.b16 %v6156, %v6148
    %v7781 = vpack.c.b16 %v6157, %v6149
    %v7782 = vpack.c.b16 %v6158, %v6150
    %v7783 = vpack.c.b16 %v6159, %v6151
    %v7784 = vpack.c.b16 %v6160, %v6152
    %v7785 = vpack.c.b16 %v6161, %v6153
    %v7786 = vpack.c.b16 %v6162, %v6154
    %v7787 = vpack.c.b16 %v6171, %v6163
    %v7788 = vpack.c.b16 %v6172, %v6164
    %v7789 = vpack.c.b16 %v6173, %v6165
    %v7790 = vpack.c.b16 %v6174, %v6166
    %v7791 = vpack.c.b16 %v6175, %v6167
    %v7792 = vpack.c.b16 %v6176, %v6168
    %v7793 = vpack.c.b16 %v6177, %v6169
    %v7794 = vpack.c.b16 %v6178, %v6170
    %v7795 = vpack.c.b16 %v6187, %v6179
    %v7796 = vpack.c.b16 %v6188, %v6180
    %v7797 = vpack.c.b16 %v6189, %v6181
    %v7798 = vpack.c.b16 %v6190, %v6182
    %v7799 = vpack.c.b16 %v6191, %v6183
    %v7800 = vpack.c.b16 %v6192, %v6184
    %v7801 = vpack.c.b16 %v6193, %v6185
    %v7802 = vpack.c.b16 %v6194, %v6186
    %v7803 = vpack.c.b16 %v6203, %v6195
    %v7804 = vpack.c.b16 %v6204, %v6196
    %v7805 = vpack.c.b16 %v6205, %v6197
    %v7806 = vpack.c.b16 %v6206, %v6198
    %v7807 = vpack.c.b16 %v6207, %v6199
    %v7808 = vpack.c.b16 %v6208, %v6200
    %v7809 = vpack.c.b16 %v6209, %v6201
    %v7810 = vpack.c.b16 %v6210, %v6202
    %v7811 = vpack.c.b16 %v6219, %v6211
    %v7812 = vpack.c.b16 %v6220, %v6212
    %v7813 = vpack.c.b16 %v6221, %v6213
    %v7814 = vpack.c.b16 %v6222, %v6214
    %v7815 = vpack.c.b16 %v6223, %v6215
    %v7816 = vpack.c.b16 %v6224, %v6216
    %v7817 = vpack.c.b16 %v6225, %v6217
    %v7818 = vpack.c.b16 %v6226, %v6218
    %v7819 = vpack.c.b16 %v6235, %v6227
    %v7820 = vpack.c.b16 %v6236, %v6228
    %v7821 = vpack.c.b16 %v6237, %v6229
    %v7822 = vpack.c.b16 %v6238, %v6230
    %v7823 = vpack.c.b16 %v6239, %v6231
    %v7824 = vpack.c.b16 %v6240, %v6232
    %v7825 = vpack.c.b16 %v6241, %v6233
    %v7826 = vpack.c.b16 %v6242, %v6234
    %v7827 = vpack.c.b16 %v6251, %v6243
    %v7828 = vpack.c.b16 %v6252, %v6244
    %v7829 = vpack.c.b16 %v6253, %v6245
    %v7830 = vpack.c.b16 %v6254, %v6246
    %v7831 = vpack.c.b16 %v6255, %v6247
    %v7832 = vpack.c.b16 %v6256, %v6248
    %v7833 = vpack.c.b16 %v6257, %v6249
    %v7834 = vpack.c.b16 %v6258, %v6250
    %v7835 = vpack.c.b16 %v6267, %v6259
    %v7836 = vpack.c.b16 %v6268, %v6260
    %v7837 = vpack.c.b16 %v6269, %v6261
    %v7838 = vpack.c.b16 %v6270, %v6262
    %v7839 = vpack.c.b16 %v6271, %v6263
    %v7840 = vpack.c.b16 %v6272, %v6264
    %v7841 = vpack.c.b16 %v6273, %v6265
    %v7842 = vpack.c.b16 %v6274, %v6266
    %v7843 = vpack.c.b16 %v6283, %v6275
    %v7844 = vpack.c.b16 %v6284, %v6276
    %v7845 = vpack.c.b16 %v6285, %v6277
    %v7846 = vpack.c.b16 %v6286, %v6278
    %v7847 = vpack.c.b16 %v6287, %v6279
    %v7848 = vpack.c.b16 %v6288, %v6280
    %v7849 = vpack.c.b16 %v6289, %v6281
    %v7850 = vpack.c.b16 %v6290, %v6282
    %v7851 = vpack.c.b16 %v6299, %v6291
    %v7852 = vpack.c.b16 %v6300, %v6292
    %v7853 = vpack.c.b16 %v6301, %v6293
    %v7854 = vpack.c.b16 %v6302, %v6294
    %v7855 = vpack.c.b16 %v6303, %v6295
    %v7856 = vpack.c.b16 %v6304, %v6296
    %v7857 = vpack.c.b16 %v6305, %v6297
    %v7858 = vpack.c.b16 %v6306, %v6298
    %v7859 = vpack.c.b16 %v6315, %v6307
    %v7860 = vpack.c.b16 %v6316, %v6308
    %v7861 = vpack.c.b16 %v6317, %v6309
    %v7862 = vpack.c.b16 %v6318, %v6310
    %v7863 = vpack.c.b16 %v6319, %v6311
    %v7864 = vpack.c.b16 %v6320, %v6312
    %v7865 = vpack.c.b16 %v6321, %v6313
    %v7866 = vpack.c.b16 %v6322, %v6314
    %v7867 = vpack.c.b16 %v6331, %v6323
    %v7868 = vpack.c.b16 %v6332, %v6324
    %v7869 = vpack.c.b16 %v6333, %v6325
    %v7870 = vpack.c.b16 %v6334, %v6326
    %v7871 = vpack.c.b16 %v6335, %v6327
    %v7872 = vpack.c.b16 %v6336, %v6328
    %v7873 = vpack.c.b16 %v6337, %v6329
    %v7874 = vpack.c.b16 %v6338, %v6330
    %9411 = vmatpush.bf16.msra.mxu0 %v6395
    %9412 = vmatpush.bf16.msra.mxu0 %v6387
    %9413 = vmatpush.bf16.msra.mxu0 %v6379
    %9414 = vmatpush.bf16.msra.mxu0 %v6371
    %9415 = vmatpush.bf16.msra.mxu0 %v6363
    %9416 = vmatpush.bf16.msra.mxu0 %v6355
    %9417 = vmatpush.bf16.msra.mxu0 %v6347
    %9418 = vmatpush.bf16.msra.mxu0 %v6339
    %9419 = vmatmul.bf16.gmra.mxu0 %v1683
    %v9420 = vpop.f32.mrf.mxu0
    %v9421 = vadd.f32 0.0, %v9420
    %v9422 = vpop.f32.mrf.mxu0
    %9423 = vdwg.mxu0
    %9424 = vmatpush.bf16.msra.mxu0 %v6459
    %9425 = vmatpush.bf16.msra.mxu0 %v6451
    %9426 = vmatpush.bf16.msra.mxu0 %v6443
    %9427 = vmatpush.bf16.msra.mxu0 %v6435
    %9428 = vmatpush.bf16.msra.mxu0 %v6427
    %9429 = vmatpush.bf16.msra.mxu0 %v6419
    %9430 = vmatpush.bf16.msra.mxu0 %v6411
    %9431 = vmatpush.bf16.msra.mxu0 %v6403
    %9432 = vmatmul.bf16.gmra.mxu0 %v1684
    %v9433 = vpop.f32.mrf.mxu0
    %v9434 = vadd.f32 %v9421, %v9433
    %v9435 = vpop.f32.mrf.mxu0
    %9436 = vdwg.mxu0
    %9437 = vmatpush.bf16.msra.mxu0 %v6523
    %9438 = vmatpush.bf16.msra.mxu0 %v6515
    %9439 = vmatpush.bf16.msra.mxu0 %v6507
    %9440 = vmatpush.bf16.msra.mxu0 %v6499
    %9441 = vmatpush.bf16.msra.mxu0 %v6491
    %9442 = vmatpush.bf16.msra.mxu0 %v6483
    %9443 = vmatpush.bf16.msra.mxu0 %v6475
    %9444 = vmatpush.bf16.msra.mxu0 %v6467
    %9445 = vmatmul.bf16.gmra.mxu0 %v1685
    %v9446 = vpop.f32.mrf.mxu0
    %v9447 = vadd.f32 %v9434, %v9446
    %v9448 = vpop.f32.mrf.mxu0
    %9449 = vdwg.mxu0
    %9450 = vmatpush.bf16.msra.mxu0 %v6587
    %9451 = vmatpush.bf16.msra.mxu0 %v6579
    %9452 = vmatpush.bf16.msra.mxu0 %v6571
    %9453 = vmatpush.bf16.msra.mxu0 %v6563
    %9454 = vmatpush.bf16.msra.mxu0 %v6555
    %9455 = vmatpush.bf16.msra.mxu0 %v6547
    %9456 = vmatpush.bf16.msra.mxu0 %v6539
    %9457 = vmatpush.bf16.msra.mxu0 %v6531
    %9458 = vmatmul.bf16.gmra.mxu0 %v1686
    %v9459 = vpop.f32.mrf.mxu0
    %v9460 = vadd.f32 %v9447, %v9459
    %v9461 = vpop.f32.mrf.mxu0
    %9462 = vdwg.mxu0
    %9463 = vmatpush.bf16.msra.mxu0 %v6651
    %9464 = vmatpush.bf16.msra.mxu0 %v6643
    %9465 = vmatpush.bf16.msra.mxu0 %v6635
    %9466 = vmatpush.bf16.msra.mxu0 %v6627
    %9467 = vmatpush.bf16.msra.mxu0 %v6619
    %9468 = vmatpush.bf16.msra.mxu0 %v6611
    %9469 = vmatpush.bf16.msra.mxu0 %v6603
    %9470 = vmatpush.bf16.msra.mxu0 %v6595
    %9471 = vmatmul.bf16.gmra.mxu0 %v1687
    %v9472 = vpop.f32.mrf.mxu0
    %v9473 = vadd.f32 %v9460, %v9472
    %v9474 = vpop.f32.mrf.mxu0
    %9475 = vdwg.mxu0
    %9476 = vmatpush.bf16.msra.mxu0 %v6715
    %9477 = vmatpush.bf16.msra.mxu0 %v6707
    %9478 = vmatpush.bf16.msra.mxu0 %v6699
    %9479 = vmatpush.bf16.msra.mxu0 %v6691
    %9480 = vmatpush.bf16.msra.mxu0 %v6683
    %9481 = vmatpush.bf16.msra.mxu0 %v6675
    %9482 = vmatpush.bf16.msra.mxu0 %v6667
    %9483 = vmatpush.bf16.msra.mxu0 %v6659
    %9484 = vmatmul.bf16.gmra.mxu0 %v1688
    %v9485 = vpop.f32.mrf.mxu0
    %v9486 = vadd.f32 %v9473, %v9485
    %v9487 = vpop.f32.mrf.mxu0
    %9488 = vdwg.mxu0
    %9489 = vmatpush.bf16.msra.mxu0 %v6779
    %9490 = vmatpush.bf16.msra.mxu0 %v6771
    %9491 = vmatpush.bf16.msra.mxu0 %v6763
    %9492 = vmatpush.bf16.msra.mxu0 %v6755
    %9493 = vmatpush.bf16.msra.mxu0 %v6747
    %9494 = vmatpush.bf16.msra.mxu0 %v6739
    %9495 = vmatpush.bf16.msra.mxu0 %v6731
    %9496 = vmatpush.bf16.msra.mxu0 %v6723
    %9497 = vmatmul.bf16.gmra.mxu0 %v1689
    %v9498 = vpop.f32.mrf.mxu0
    %v9499 = vadd.f32 %v9486, %v9498
    %v9500 = vpop.f32.mrf.mxu0
    %9501 = vdwg.mxu0
    %9502 = vmatpush.bf16.msra.mxu0 %v6843
    %9503 = vmatpush.bf16.msra.mxu0 %v6835
    %9504 = vmatpush.bf16.msra.mxu0 %v6827
    %9505 = vmatpush.bf16.msra.mxu0 %v6819
    %9506 = vmatpush.bf16.msra.mxu0 %v6811
    %9507 = vmatpush.bf16.msra.mxu0 %v6803
    %9508 = vmatpush.bf16.msra.mxu0 %v6795
    %9509 = vmatpush.bf16.msra.mxu0 %v6787
    %9510 = vmatmul.bf16.gmra.mxu0 %v1690
    %v9511 = vpop.f32.mrf.mxu0
    %v9512 = vadd.f32 %v9499, %v9511
    %v9513 = vpop.f32.mrf.mxu0
    %9514 = vdwg.mxu0
    %9515 = vmatpush.bf16.msra.mxu0 %v6907
    %9516 = vmatpush.bf16.msra.mxu0 %v6899
    %9517 = vmatpush.bf16.msra.mxu0 %v6891
    %9518 = vmatpush.bf16.msra.mxu0 %v6883
    %9519 = vmatpush.bf16.msra.mxu0 %v6875
    %9520 = vmatpush.bf16.msra.mxu0 %v6867
    %9521 = vmatpush.bf16.msra.mxu0 %v6859
    %9522 = vmatpush.bf16.msra.mxu0 %v6851
    %9523 = vmatmul.bf16.gmra.mxu0 %v1691
    %v9524 = vpop.f32.mrf.mxu0
    %v9525 = vadd.f32 %v9512, %v9524
    %v9526 = vpop.f32.mrf.mxu0
    %9527 = vdwg.mxu0
    %9528 = vmatpush.bf16.msra.mxu0 %v6971
    %9529 = vmatpush.bf16.msra.mxu0 %v6963
    %9530 = vmatpush.bf16.msra.mxu0 %v6955
    %9531 = vmatpush.bf16.msra.mxu0 %v6947
    %9532 = vmatpush.bf16.msra.mxu0 %v6939
    %9533 = vmatpush.bf16.msra.mxu0 %v6931
    %9534 = vmatpush.bf16.msra.mxu0 %v6923
    %9535 = vmatpush.bf16.msra.mxu0 %v6915
    %9536 = vmatmul.bf16.gmra.mxu0 %v1692
    %v9537 = vpop.f32.mrf.mxu0
    %v9538 = vadd.f32 %v9525, %v9537
    %v9539 = vpop.f32.mrf.mxu0
    %9540 = vdwg.mxu0
    %9541 = vmatpush.bf16.msra.mxu0 %v7035
    %9542 = vmatpush.bf16.msra.mxu0 %v7027
    %9543 = vmatpush.bf16.msra.mxu0 %v7019
    %9544 = vmatpush.bf16.msra.mxu0 %v7011
    %9545 = vmatpush.bf16.msra.mxu0 %v7003
    %9546 = vmatpush.bf16.msra.mxu0 %v6995
    %9547 = vmatpush.bf16.msra.mxu0 %v6987
    %9548 = vmatpush.bf16.msra.mxu0 %v6979
    %9549 = vmatmul.bf16.gmra.mxu0 %v1693
    %v9550 = vpop.f32.mrf.mxu0
    %v9551 = vadd.f32 %v9538, %v9550
    %v9552 = vpop.f32.mrf.mxu0
    %9553 = vdwg.mxu0
    %9554 = vmatpush.bf16.msra.mxu0 %v7099
    %9555 = vmatpush.bf16.msra.mxu0 %v7091
    %9556 = vmatpush.bf16.msra.mxu0 %v7083
    %9557 = vmatpush.bf16.msra.mxu0 %v7075
    %9558 = vmatpush.bf16.msra.mxu0 %v7067
    %9559 = vmatpush.bf16.msra.mxu0 %v7059
    %9560 = vmatpush.bf16.msra.mxu0 %v7051
    %9561 = vmatpush.bf16.msra.mxu0 %v7043
    %9562 = vmatmul.bf16.gmra.mxu0 %v1694
    %v9563 = vpop.f32.mrf.mxu0
    %v9564 = vadd.f32 %v9551, %v9563
    %v9565 = vpop.f32.mrf.mxu0
    %9566 = vdwg.mxu0
    %9567 = vmatpush.bf16.msra.mxu0 %v7163
    %9568 = vmatpush.bf16.msra.mxu0 %v7155
    %9569 = vmatpush.bf16.msra.mxu0 %v7147
    %9570 = vmatpush.bf16.msra.mxu0 %v7139
    %9571 = vmatpush.bf16.msra.mxu0 %v7131
    %9572 = vmatpush.bf16.msra.mxu0 %v7123
    %9573 = vmatpush.bf16.msra.mxu0 %v7115
    %9574 = vmatpush.bf16.msra.mxu0 %v7107
    %9575 = vmatmul.bf16.gmra.mxu0 %v1695
    %v9576 = vpop.f32.mrf.mxu0
    %v9577 = vadd.f32 %v9564, %v9576
    %v9578 = vpop.f32.mrf.mxu0
    %9579 = vdwg.mxu0
    %9580 = vmatpush.bf16.msra.mxu0 %v7227
    %9581 = vmatpush.bf16.msra.mxu0 %v7219
    %9582 = vmatpush.bf16.msra.mxu0 %v7211
    %9583 = vmatpush.bf16.msra.mxu0 %v7203
    %9584 = vmatpush.bf16.msra.mxu0 %v7195
    %9585 = vmatpush.bf16.msra.mxu0 %v7187
    %9586 = vmatpush.bf16.msra.mxu0 %v7179
    %9587 = vmatpush.bf16.msra.mxu0 %v7171
    %9588 = vmatmul.bf16.gmra.mxu0 %v1696
    %v9589 = vpop.f32.mrf.mxu0
    %v9590 = vadd.f32 %v9577, %v9589
    %v9591 = vpop.f32.mrf.mxu0
    %9592 = vdwg.mxu0
    %9593 = vmatpush.bf16.msra.mxu0 %v7291
    %9594 = vmatpush.bf16.msra.mxu0 %v7283
    %9595 = vmatpush.bf16.msra.mxu0 %v7275
    %9596 = vmatpush.bf16.msra.mxu0 %v7267
    %9597 = vmatpush.bf16.msra.mxu0 %v7259
    %9598 = vmatpush.bf16.msra.mxu0 %v7251
    %9599 = vmatpush.bf16.msra.mxu0 %v7243
    %9600 = vmatpush.bf16.msra.mxu0 %v7235
    %9601 = vmatmul.bf16.gmra.mxu0 %v1697
    %v9602 = vpop.f32.mrf.mxu0
    %v9603 = vadd.f32 %v9590, %v9602
    %v9604 = vpop.f32.mrf.mxu0
    %9605 = vdwg.mxu0
    %9606 = vmatpush.bf16.msra.mxu0 %v7355
    %9607 = vmatpush.bf16.msra.mxu0 %v7347
    %9608 = vmatpush.bf16.msra.mxu0 %v7339
    %9609 = vmatpush.bf16.msra.mxu0 %v7331
    %9610 = vmatpush.bf16.msra.mxu0 %v7323
    %9611 = vmatpush.bf16.msra.mxu0 %v7315
    %9612 = vmatpush.bf16.msra.mxu0 %v7307
    %9613 = vmatpush.bf16.msra.mxu0 %v7299
    %9614 = vmatmul.bf16.gmra.mxu0 %v1698
    %v9615 = vpop.f32.mrf.mxu0
    %v9616 = vadd.f32 %v9603, %v9615
    %v9617 = vpop.f32.mrf.mxu0
    %9618 = vdwg.mxu0
    %9619 = vmatpush.bf16.msra.mxu0 %v7419
    %9620 = vmatpush.bf16.msra.mxu0 %v7411
    %9621 = vmatpush.bf16.msra.mxu0 %v7403
    %9622 = vmatpush.bf16.msra.mxu0 %v7395
    %9623 = vmatpush.bf16.msra.mxu0 %v7387
    %9624 = vmatpush.bf16.msra.mxu0 %v7379
    %9625 = vmatpush.bf16.msra.mxu0 %v7371
    %9626 = vmatpush.bf16.msra.mxu0 %v7363
    %9627 = vmatmul.bf16.gmra.mxu0 %v1699
    %v9628 = vpop.f32.mrf.mxu0
    %v9629 = vadd.f32 %v9616, %v9628
    %v9630 = vpop.f32.mrf.mxu0
    %9631 = vdwg.mxu0
    %9632 = vmatpush.bf16.msra.mxu0 %v7483
    %9633 = vmatpush.bf16.msra.mxu0 %v7475
    %9634 = vmatpush.bf16.msra.mxu0 %v7467
    %9635 = vmatpush.bf16.msra.mxu0 %v7459
    %9636 = vmatpush.bf16.msra.mxu0 %v7451
    %9637 = vmatpush.bf16.msra.mxu0 %v7443
    %9638 = vmatpush.bf16.msra.mxu0 %v7435
    %9639 = vmatpush.bf16.msra.mxu0 %v7427
    %9640 = vmatmul.bf16.gmra.mxu0 %v1700
    %v9641 = vpop.f32.mrf.mxu0
    %v9642 = vadd.f32 %v9629, %v9641
    %v9643 = vpop.f32.mrf.mxu0
    %9644 = vdwg.mxu0
    %9645 = vmatpush.bf16.msra.mxu0 %v7547
    %9646 = vmatpush.bf16.msra.mxu0 %v7539
    %9647 = vmatpush.bf16.msra.mxu0 %v7531
    %9648 = vmatpush.bf16.msra.mxu0 %v7523
    %9649 = vmatpush.bf16.msra.mxu0 %v7515
    %9650 = vmatpush.bf16.msra.mxu0 %v7507
    %9651 = vmatpush.bf16.msra.mxu0 %v7499
    %9652 = vmatpush.bf16.msra.mxu0 %v7491
    %9653 = vmatmul.bf16.gmra.mxu0 %v1701
    %v9654 = vpop.f32.mrf.mxu0
    %v9655 = vadd.f32 %v9642, %v9654
    %v9656 = vpop.f32.mrf.mxu0
    %9657 = vdwg.mxu0
    %9658 = vmatpush.bf16.msra.mxu0 %v7611
    %9659 = vmatpush.bf16.msra.mxu0 %v7603
    %9660 = vmatpush.bf16.msra.mxu0 %v7595
    %9661 = vmatpush.bf16.msra.mxu0 %v7587
    %9662 = vmatpush.bf16.msra.mxu0 %v7579
    %9663 = vmatpush.bf16.msra.mxu0 %v7571
    %9664 = vmatpush.bf16.msra.mxu0 %v7563
    %9665 = vmatpush.bf16.msra.mxu0 %v7555
    %9666 = vmatmul.bf16.gmra.mxu0 %v1702
    %v9667 = vpop.f32.mrf.mxu0
    %v9668 = vadd.f32 %v9655, %v9667
    %v9669 = vpop.f32.mrf.mxu0
    %9670 = vdwg.mxu0
    %9671 = vmatpush.bf16.msra.mxu0 %v7675
    %9672 = vmatpush.bf16.msra.mxu0 %v7667
    %9673 = vmatpush.bf16.msra.mxu0 %v7659
    %9674 = vmatpush.bf16.msra.mxu0 %v7651
    %9675 = vmatpush.bf16.msra.mxu0 %v7643
    %9676 = vmatpush.bf16.msra.mxu0 %v7635
    %9677 = vmatpush.bf16.msra.mxu0 %v7627
    %9678 = vmatpush.bf16.msra.mxu0 %v7619
    %9679 = vmatmul.bf16.gmra.mxu0 %v1703
    %v9680 = vpop.f32.mrf.mxu0
    %v9681 = vadd.f32 %v9668, %v9680
    %v9682 = vpop.f32.mrf.mxu0
    %9683 = vdwg.mxu0
    %9684 = vmatpush.bf16.msra.mxu0 %v7739
    %9685 = vmatpush.bf16.msra.mxu0 %v7731
    %9686 = vmatpush.bf16.msra.mxu0 %v7723
    %9687 = vmatpush.bf16.msra.mxu0 %v7715
    %9688 = vmatpush.bf16.msra.mxu0 %v7707
    %9689 = vmatpush.bf16.msra.mxu0 %v7699
    %9690 = vmatpush.bf16.msra.mxu0 %v7691
    %9691 = vmatpush.bf16.msra.mxu0 %v7683
    %9692 = vmatmul.bf16.gmra.mxu0 %v1704
    %v9693 = vpop.f32.mrf.mxu0
    %v9694 = vadd.f32 %v9681, %v9693
    %v9695 = vpop.f32.mrf.mxu0
    %9696 = vdwg.mxu0
    %9697 = vmatpush.bf16.msra.mxu0 %v7803
    %9698 = vmatpush.bf16.msra.mxu0 %v7795
    %9699 = vmatpush.bf16.msra.mxu0 %v7787
    %9700 = vmatpush.bf16.msra.mxu0 %v7779
    %9701 = vmatpush.bf16.msra.mxu0 %v7771
    %9702 = vmatpush.bf16.msra.mxu0 %v7763
    %9703 = vmatpush.bf16.msra.mxu0 %v7755
    %9704 = vmatpush.bf16.msra.mxu0 %v7747
    %9705 = vmatmul.bf16.gmra.mxu0 %v1705
    %v9706 = vpop.f32.mrf.mxu0
    %v9707 = vadd.f32 %v9694, %v9706
    %v9708 = vpop.f32.mrf.mxu0
    %9709 = vdwg.mxu0
    %9710 = vmatpush.bf16.msra.mxu0 %v7867
    %9711 = vmatpush.bf16.msra.mxu0 %v7859
    %9712 = vmatpush.bf16.msra.mxu0 %v7851
    %9713 = vmatpush.bf16.msra.mxu0 %v7843
    %9714 = vmatpush.bf16.msra.mxu0 %v7835
    %9715 = vmatpush.bf16.msra.mxu0 %v7827
    %9716 = vmatpush.bf16.msra.mxu0 %v7819
    %9717 = vmatpush.bf16.msra.mxu0 %v7811
    %9718 = vmatmul.bf16.gmra.mxu0 %v1706
    %v9719 = vpop.f32.mrf.mxu0
    %v9720 = vadd.f32 %v9707, %v9719
    %v9721 = vpop.f32.mrf.mxu0
    %9722 = vdwg.mxu0
    %9723 = vmatpush.bf16.msra.mxu0 %v6396
    %9724 = vmatpush.bf16.msra.mxu0 %v6388
    %9725 = vmatpush.bf16.msra.mxu0 %v6380
    %9726 = vmatpush.bf16.msra.mxu0 %v6372
    %9727 = vmatpush.bf16.msra.mxu0 %v6364
    %9728 = vmatpush.bf16.msra.mxu0 %v6356
    %9729 = vmatpush.bf16.msra.mxu0 %v6348
    %9730 = vmatpush.bf16.msra.mxu0 %v6340
    %9731 = vmatmul.bf16.gmra.mxu0 %v1683
    %v9732 = vpop.f32.mrf.mxu0
    %v9733 = vadd.f32 0.0, %v9732
    %v9734 = vpop.f32.mrf.mxu0
    %9735 = vdwg.mxu0
    %9736 = vmatpush.bf16.msra.mxu0 %v6460
    %9737 = vmatpush.bf16.msra.mxu0 %v6452
    %9738 = vmatpush.bf16.msra.mxu0 %v6444
    %9739 = vmatpush.bf16.msra.mxu0 %v6436
    %9740 = vmatpush.bf16.msra.mxu0 %v6428
    %9741 = vmatpush.bf16.msra.mxu0 %v6420
    %9742 = vmatpush.bf16.msra.mxu0 %v6412
    %9743 = vmatpush.bf16.msra.mxu0 %v6404
    %9744 = vmatmul.bf16.gmra.mxu0 %v1684
    %v9745 = vpop.f32.mrf.mxu0
    %v9746 = vadd.f32 %v9733, %v9745
    %v9747 = vpop.f32.mrf.mxu0
    %9748 = vdwg.mxu0
    %9749 = vmatpush.bf16.msra.mxu0 %v6524
    %9750 = vmatpush.bf16.msra.mxu0 %v6516
    %9751 = vmatpush.bf16.msra.mxu0 %v6508
    %9752 = vmatpush.bf16.msra.mxu0 %v6500
    %9753 = vmatpush.bf16.msra.mxu0 %v6492
    %9754 = vmatpush.bf16.msra.mxu0 %v6484
    %9755 = vmatpush.bf16.msra.mxu0 %v6476
    %9756 = vmatpush.bf16.msra.mxu0 %v6468
    %9757 = vmatmul.bf16.gmra.mxu0 %v1685
    %v9758 = vpop.f32.mrf.mxu0
    %v9759 = vadd.f32 %v9746, %v9758
    %v9760 = vpop.f32.mrf.mxu0
    %9761 = vdwg.mxu0
    %9762 = vmatpush.bf16.msra.mxu0 %v6588
    %9763 = vmatpush.bf16.msra.mxu0 %v6580
    %9764 = vmatpush.bf16.msra.mxu0 %v6572
    %9765 = vmatpush.bf16.msra.mxu0 %v6564
    %9766 = vmatpush.bf16.msra.mxu0 %v6556
    %9767 = vmatpush.bf16.msra.mxu0 %v6548
    %9768 = vmatpush.bf16.msra.mxu0 %v6540
    %9769 = vmatpush.bf16.msra.mxu0 %v6532
    %9770 = vmatmul.bf16.gmra.mxu0 %v1686
    %v9771 = vpop.f32.mrf.mxu0
    %v9772 = vadd.f32 %v9759, %v9771
    %v9773 = vpop.f32.mrf.mxu0
    %9774 = vdwg.mxu0
    %9775 = vmatpush.bf16.msra.mxu0 %v6652
    %9776 = vmatpush.bf16.msra.mxu0 %v6644
    %9777 = vmatpush.bf16.msra.mxu0 %v6636
    %9778 = vmatpush.bf16.msra.mxu0 %v6628
    %9779 = vmatpush.bf16.msra.mxu0 %v6620
    %9780 = vmatpush.bf16.msra.mxu0 %v6612
    %9781 = vmatpush.bf16.msra.mxu0 %v6604
    %9782 = vmatpush.bf16.msra.mxu0 %v6596
    %9783 = vmatmul.bf16.gmra.mxu0 %v1687
    %v9784 = vpop.f32.mrf.mxu0
    %v9785 = vadd.f32 %v9772, %v9784
    %v9786 = vpop.f32.mrf.mxu0
    %9787 = vdwg.mxu0
    %9788 = vmatpush.bf16.msra.mxu0 %v6716
    %9789 = vmatpush.bf16.msra.mxu0 %v6708
    %9790 = vmatpush.bf16.msra.mxu0 %v6700
    %9791 = vmatpush.bf16.msra.mxu0 %v6692
    %9792 = vmatpush.bf16.msra.mxu0 %v6684
    %9793 = vmatpush.bf16.msra.mxu0 %v6676
    %9794 = vmatpush.bf16.msra.mxu0 %v6668
    %9795 = vmatpush.bf16.msra.mxu0 %v6660
    %9796 = vmatmul.bf16.gmra.mxu0 %v1688
    %v9797 = vpop.f32.mrf.mxu0
    %v9798 = vadd.f32 %v9785, %v9797
    %v9799 = vpop.f32.mrf.mxu0
    %9800 = vdwg.mxu0
    %9801 = vmatpush.bf16.msra.mxu0 %v6780
    %9802 = vmatpush.bf16.msra.mxu0 %v6772
    %9803 = vmatpush.bf16.msra.mxu0 %v6764
    %9804 = vmatpush.bf16.msra.mxu0 %v6756
    %9805 = vmatpush.bf16.msra.mxu0 %v6748
    %9806 = vmatpush.bf16.msra.mxu0 %v6740
    %9807 = vmatpush.bf16.msra.mxu0 %v6732
    %9808 = vmatpush.bf16.msra.mxu0 %v6724
    %9809 = vmatmul.bf16.gmra.mxu0 %v1689
    %v9810 = vpop.f32.mrf.mxu0
    %v9811 = vadd.f32 %v9798, %v9810
    %v9812 = vpop.f32.mrf.mxu0
    %9813 = vdwg.mxu0
    %9814 = vmatpush.bf16.msra.mxu0 %v6844
    %9815 = vmatpush.bf16.msra.mxu0 %v6836
    %9816 = vmatpush.bf16.msra.mxu0 %v6828
    %9817 = vmatpush.bf16.msra.mxu0 %v6820
    %9818 = vmatpush.bf16.msra.mxu0 %v6812
    %9819 = vmatpush.bf16.msra.mxu0 %v6804
    %9820 = vmatpush.bf16.msra.mxu0 %v6796
    %9821 = vmatpush.bf16.msra.mxu0 %v6788
    %9822 = vmatmul.bf16.gmra.mxu0 %v1690
    %v9823 = vpop.f32.mrf.mxu0
    %v9824 = vadd.f32 %v9811, %v9823
    %v9825 = vpop.f32.mrf.mxu0
    %9826 = vdwg.mxu0
    %9827 = vmatpush.bf16.msra.mxu0 %v6908
    %9828 = vmatpush.bf16.msra.mxu0 %v6900
    %9829 = vmatpush.bf16.msra.mxu0 %v6892
    %9830 = vmatpush.bf16.msra.mxu0 %v6884
    %9831 = vmatpush.bf16.msra.mxu0 %v6876
    %9832 = vmatpush.bf16.msra.mxu0 %v6868
    %9833 = vmatpush.bf16.msra.mxu0 %v6860
    %9834 = vmatpush.bf16.msra.mxu0 %v6852
    %9835 = vmatmul.bf16.gmra.mxu0 %v1691
    %v9836 = vpop.f32.mrf.mxu0
    %v9837 = vadd.f32 %v9824, %v9836
    %v9838 = vpop.f32.mrf.mxu0
    %9839 = vdwg.mxu0
    %9840 = vmatpush.bf16.msra.mxu0 %v6972
    %9841 = vmatpush.bf16.msra.mxu0 %v6964
    %9842 = vmatpush.bf16.msra.mxu0 %v6956
    %9843 = vmatpush.bf16.msra.mxu0 %v6948
    %9844 = vmatpush.bf16.msra.mxu0 %v6940
    %9845 = vmatpush.bf16.msra.mxu0 %v6932
    %9846 = vmatpush.bf16.msra.mxu0 %v6924
    %9847 = vmatpush.bf16.msra.mxu0 %v6916
    %9848 = vmatmul.bf16.gmra.mxu0 %v1692
    %v9849 = vpop.f32.mrf.mxu0
    %v9850 = vadd.f32 %v9837, %v9849
    %v9851 = vpop.f32.mrf.mxu0
    %9852 = vdwg.mxu0
    %9853 = vmatpush.bf16.msra.mxu0 %v7036
    %9854 = vmatpush.bf16.msra.mxu0 %v7028
    %9855 = vmatpush.bf16.msra.mxu0 %v7020
    %9856 = vmatpush.bf16.msra.mxu0 %v7012
    %9857 = vmatpush.bf16.msra.mxu0 %v7004
    %9858 = vmatpush.bf16.msra.mxu0 %v6996
    %9859 = vmatpush.bf16.msra.mxu0 %v6988
    %9860 = vmatpush.bf16.msra.mxu0 %v6980
    %9861 = vmatmul.bf16.gmra.mxu0 %v1693
    %v9862 = vpop.f32.mrf.mxu0
    %v9863 = vadd.f32 %v9850, %v9862
    %v9864 = vpop.f32.mrf.mxu0
    %9865 = vdwg.mxu0
    %9866 = vmatpush.bf16.msra.mxu0 %v7100
    %9867 = vmatpush.bf16.msra.mxu0 %v7092
    %9868 = vmatpush.bf16.msra.mxu0 %v7084
    %9869 = vmatpush.bf16.msra.mxu0 %v7076
    %9870 = vmatpush.bf16.msra.mxu0 %v7068
    %9871 = vmatpush.bf16.msra.mxu0 %v7060
    %9872 = vmatpush.bf16.msra.mxu0 %v7052
    %9873 = vmatpush.bf16.msra.mxu0 %v7044
    %9874 = vmatmul.bf16.gmra.mxu0 %v1694
    %v9875 = vpop.f32.mrf.mxu0
    %v9876 = vadd.f32 %v9863, %v9875
    %v9877 = vpop.f32.mrf.mxu0
    %9878 = vdwg.mxu0
    %9879 = vmatpush.bf16.msra.mxu0 %v7164
    %9880 = vmatpush.bf16.msra.mxu0 %v7156
    %9881 = vmatpush.bf16.msra.mxu0 %v7148
    %9882 = vmatpush.bf16.msra.mxu0 %v7140
    %9883 = vmatpush.bf16.msra.mxu0 %v7132
    %9884 = vmatpush.bf16.msra.mxu0 %v7124
    %9885 = vmatpush.bf16.msra.mxu0 %v7116
    %9886 = vmatpush.bf16.msra.mxu0 %v7108
    %9887 = vmatmul.bf16.gmra.mxu0 %v1695
    %v9888 = vpop.f32.mrf.mxu0
    %v9889 = vadd.f32 %v9876, %v9888
    %v9890 = vpop.f32.mrf.mxu0
    %9891 = vdwg.mxu0
    %9892 = vmatpush.bf16.msra.mxu0 %v7228
    %9893 = vmatpush.bf16.msra.mxu0 %v7220
    %9894 = vmatpush.bf16.msra.mxu0 %v7212
    %9895 = vmatpush.bf16.msra.mxu0 %v7204
    %9896 = vmatpush.bf16.msra.mxu0 %v7196
    %9897 = vmatpush.bf16.msra.mxu0 %v7188
    %9898 = vmatpush.bf16.msra.mxu0 %v7180
    %9899 = vmatpush.bf16.msra.mxu0 %v7172
    %9900 = vmatmul.bf16.gmra.mxu0 %v1696
    %v9901 = vpop.f32.mrf.mxu0
    %v9902 = vadd.f32 %v9889, %v9901
    %v9903 = vpop.f32.mrf.mxu0
    %9904 = vdwg.mxu0
    %9905 = vmatpush.bf16.msra.mxu0 %v7292
    %9906 = vmatpush.bf16.msra.mxu0 %v7284
    %9907 = vmatpush.bf16.msra.mxu0 %v7276
    %9908 = vmatpush.bf16.msra.mxu0 %v7268
    %9909 = vmatpush.bf16.msra.mxu0 %v7260
    %9910 = vmatpush.bf16.msra.mxu0 %v7252
    %9911 = vmatpush.bf16.msra.mxu0 %v7244
    %9912 = vmatpush.bf16.msra.mxu0 %v7236
    %9913 = vmatmul.bf16.gmra.mxu0 %v1697
    %v9914 = vpop.f32.mrf.mxu0
    %v9915 = vadd.f32 %v9902, %v9914
    %v9916 = vpop.f32.mrf.mxu0
    %9917 = vdwg.mxu0
    %9918 = vmatpush.bf16.msra.mxu0 %v7356
    %9919 = vmatpush.bf16.msra.mxu0 %v7348
    %9920 = vmatpush.bf16.msra.mxu0 %v7340
    %9921 = vmatpush.bf16.msra.mxu0 %v7332
    %9922 = vmatpush.bf16.msra.mxu0 %v7324
    %9923 = vmatpush.bf16.msra.mxu0 %v7316
    %9924 = vmatpush.bf16.msra.mxu0 %v7308
    %9925 = vmatpush.bf16.msra.mxu0 %v7300
    %9926 = vmatmul.bf16.gmra.mxu0 %v1698
    %v9927 = vpop.f32.mrf.mxu0
    %v9928 = vadd.f32 %v9915, %v9927
    %v9929 = vpop.f32.mrf.mxu0
    %9930 = vdwg.mxu0
    %9931 = vmatpush.bf16.msra.mxu0 %v7420
    %9932 = vmatpush.bf16.msra.mxu0 %v7412
    %9933 = vmatpush.bf16.msra.mxu0 %v7404
    %9934 = vmatpush.bf16.msra.mxu0 %v7396
    %9935 = vmatpush.bf16.msra.mxu0 %v7388
    %9936 = vmatpush.bf16.msra.mxu0 %v7380
    %9937 = vmatpush.bf16.msra.mxu0 %v7372
    %9938 = vmatpush.bf16.msra.mxu0 %v7364
    %9939 = vmatmul.bf16.gmra.mxu0 %v1699
    %v9940 = vpop.f32.mrf.mxu0
    %v9941 = vadd.f32 %v9928, %v9940
    %v9942 = vpop.f32.mrf.mxu0
    %9943 = vdwg.mxu0
    %9944 = vmatpush.bf16.msra.mxu0 %v7484
    %9945 = vmatpush.bf16.msra.mxu0 %v7476
    %9946 = vmatpush.bf16.msra.mxu0 %v7468
    %9947 = vmatpush.bf16.msra.mxu0 %v7460
    %9948 = vmatpush.bf16.msra.mxu0 %v7452
    %9949 = vmatpush.bf16.msra.mxu0 %v7444
    %9950 = vmatpush.bf16.msra.mxu0 %v7436
    %9951 = vmatpush.bf16.msra.mxu0 %v7428
    %9952 = vmatmul.bf16.gmra.mxu0 %v1700
    %v9953 = vpop.f32.mrf.mxu0
    %v9954 = vadd.f32 %v9941, %v9953
    %v9955 = vpop.f32.mrf.mxu0
    %9956 = vdwg.mxu0
    %9957 = vmatpush.bf16.msra.mxu0 %v7548
    %9958 = vmatpush.bf16.msra.mxu0 %v7540
    %9959 = vmatpush.bf16.msra.mxu0 %v7532
    %9960 = vmatpush.bf16.msra.mxu0 %v7524
    %9961 = vmatpush.bf16.msra.mxu0 %v7516
    %9962 = vmatpush.bf16.msra.mxu0 %v7508
    %9963 = vmatpush.bf16.msra.mxu0 %v7500
    %9964 = vmatpush.bf16.msra.mxu0 %v7492
    %9965 = vmatmul.bf16.gmra.mxu0 %v1701
    %v9966 = vpop.f32.mrf.mxu0
    %v9967 = vadd.f32 %v9954, %v9966
    %v9968 = vpop.f32.mrf.mxu0
    %9969 = vdwg.mxu0
    %9970 = vmatpush.bf16.msra.mxu0 %v7612
    %9971 = vmatpush.bf16.msra.mxu0 %v7604
    %9972 = vmatpush.bf16.msra.mxu0 %v7596
    %9973 = vmatpush.bf16.msra.mxu0 %v7588
    %9974 = vmatpush.bf16.msra.mxu0 %v7580
    %9975 = vmatpush.bf16.msra.mxu0 %v7572
    %9976 = vmatpush.bf16.msra.mxu0 %v7564
    %9977 = vmatpush.bf16.msra.mxu0 %v7556
    %9978 = vmatmul.bf16.gmra.mxu0 %v1702
    %v9979 = vpop.f32.mrf.mxu0
    %v9980 = vadd.f32 %v9967, %v9979
    %v9981 = vpop.f32.mrf.mxu0
    %9982 = vdwg.mxu0
    %9983 = vmatpush.bf16.msra.mxu0 %v7676
    %9984 = vmatpush.bf16.msra.mxu0 %v7668
    %9985 = vmatpush.bf16.msra.mxu0 %v7660
    %9986 = vmatpush.bf16.msra.mxu0 %v7652
    %9987 = vmatpush.bf16.msra.mxu0 %v7644
    %9988 = vmatpush.bf16.msra.mxu0 %v7636
    %9989 = vmatpush.bf16.msra.mxu0 %v7628
    %9990 = vmatpush.bf16.msra.mxu0 %v7620
    %9991 = vmatmul.bf16.gmra.mxu0 %v1703
    %v9992 = vpop.f32.mrf.mxu0
    %v9993 = vadd.f32 %v9980, %v9992
    %v9994 = vpop.f32.mrf.mxu0
    %9995 = vdwg.mxu0
    %9996 = vmatpush.bf16.msra.mxu0 %v7740
    %9997 = vmatpush.bf16.msra.mxu0 %v7732
    %9998 = vmatpush.bf16.msra.mxu0 %v7724
    %9999 = vmatpush.bf16.msra.mxu0 %v7716
    %10000 = vmatpush.bf16.msra.mxu0 %v7708
    %10001 = vmatpush.bf16.msra.mxu0 %v7700
    %10002 = vmatpush.bf16.msra.mxu0 %v7692
    %10003 = vmatpush.bf16.msra.mxu0 %v7684
    %10004 = vmatmul.bf16.gmra.mxu0 %v1704
    %v10005 = vpop.f32.mrf.mxu0
    %v10006 = vadd.f32 %v9993, %v10005
    %v10007 = vpop.f32.mrf.mxu0
    %10008 = vdwg.mxu0
    %10009 = vmatpush.bf16.msra.mxu0 %v7804
    %10010 = vmatpush.bf16.msra.mxu0 %v7796
    %10011 = vmatpush.bf16.msra.mxu0 %v7788
    %10012 = vmatpush.bf16.msra.mxu0 %v7780
    %10013 = vmatpush.bf16.msra.mxu0 %v7772
    %10014 = vmatpush.bf16.msra.mxu0 %v7764
    %10015 = vmatpush.bf16.msra.mxu0 %v7756
    %10016 = vmatpush.bf16.msra.mxu0 %v7748
    %10017 = vmatmul.bf16.gmra.mxu0 %v1705
    %v10018 = vpop.f32.mrf.mxu0
    %v10019 = vadd.f32 %v10006, %v10018
    %v10020 = vpop.f32.mrf.mxu0
    %10021 = vdwg.mxu0
    %10022 = vmatpush.bf16.msra.mxu0 %v7868
    %10023 = vmatpush.bf16.msra.mxu0 %v7860
    %10024 = vmatpush.bf16.msra.mxu0 %v7852
    %10025 = vmatpush.bf16.msra.mxu0 %v7844
    %10026 = vmatpush.bf16.msra.mxu0 %v7836
    %10027 = vmatpush.bf16.msra.mxu0 %v7828
    %10028 = vmatpush.bf16.msra.mxu0 %v7820
    %10029 = vmatpush.bf16.msra.mxu0 %v7812
    %10030 = vmatmul.bf16.gmra.mxu0 %v1706
    %v10031 = vpop.f32.mrf.mxu0
    %v10032 = vadd.f32 %v10019, %v10031
    %v10033 = vpop.f32.mrf.mxu0
    %10034 = vdwg.mxu0
    %10035 = vmatpush.bf16.msra.mxu0 %v6397
    %10036 = vmatpush.bf16.msra.mxu0 %v6389
    %10037 = vmatpush.bf16.msra.mxu0 %v6381
    %10038 = vmatpush.bf16.msra.mxu0 %v6373
    %10039 = vmatpush.bf16.msra.mxu0 %v6365
    %10040 = vmatpush.bf16.msra.mxu0 %v6357
    %10041 = vmatpush.bf16.msra.mxu0 %v6349
    %10042 = vmatpush.bf16.msra.mxu0 %v6341
    %10043 = vmatmul.bf16.gmra.mxu0 %v1683
    %v10044 = vpop.f32.mrf.mxu0
    %v10045 = vadd.f32 0.0, %v10044
    %v10046 = vpop.f32.mrf.mxu0
    %10047 = vdwg.mxu0
    %10048 = vmatpush.bf16.msra.mxu0 %v6461
    %10049 = vmatpush.bf16.msra.mxu0 %v6453
    %10050 = vmatpush.bf16.msra.mxu0 %v6445
    %10051 = vmatpush.bf16.msra.mxu0 %v6437
    %10052 = vmatpush.bf16.msra.mxu0 %v6429
    %10053 = vmatpush.bf16.msra.mxu0 %v6421
    %10054 = vmatpush.bf16.msra.mxu0 %v6413
    %10055 = vmatpush.bf16.msra.mxu0 %v6405
    %10056 = vmatmul.bf16.gmra.mxu0 %v1684
    %v10057 = vpop.f32.mrf.mxu0
    %v10058 = vadd.f32 %v10045, %v10057
    %v10059 = vpop.f32.mrf.mxu0
    %10060 = vdwg.mxu0
    %10061 = vmatpush.bf16.msra.mxu0 %v6525
    %10062 = vmatpush.bf16.msra.mxu0 %v6517
    %10063 = vmatpush.bf16.msra.mxu0 %v6509
    %10064 = vmatpush.bf16.msra.mxu0 %v6501
    %10065 = vmatpush.bf16.msra.mxu0 %v6493
    %10066 = vmatpush.bf16.msra.mxu0 %v6485
    %10067 = vmatpush.bf16.msra.mxu0 %v6477
    %10068 = vmatpush.bf16.msra.mxu0 %v6469
    %10069 = vmatmul.bf16.gmra.mxu0 %v1685
    %v10070 = vpop.f32.mrf.mxu0
    %v10071 = vadd.f32 %v10058, %v10070
    %v10072 = vpop.f32.mrf.mxu0
    %10073 = vdwg.mxu0
    %10074 = vmatpush.bf16.msra.mxu0 %v6589
    %10075 = vmatpush.bf16.msra.mxu0 %v6581
    %10076 = vmatpush.bf16.msra.mxu0 %v6573
    %10077 = vmatpush.bf16.msra.mxu0 %v6565
    %10078 = vmatpush.bf16.msra.mxu0 %v6557
    %10079 = vmatpush.bf16.msra.mxu0 %v6549
    %10080 = vmatpush.bf16.msra.mxu0 %v6541
    %10081 = vmatpush.bf16.msra.mxu0 %v6533
    %10082 = vmatmul.bf16.gmra.mxu0 %v1686
    %v10083 = vpop.f32.mrf.mxu0
    %v10084 = vadd.f32 %v10071, %v10083
    %v10085 = vpop.f32.mrf.mxu0
    %10086 = vdwg.mxu0
    %10087 = vmatpush.bf16.msra.mxu0 %v6653
    %10088 = vmatpush.bf16.msra.mxu0 %v6645
    %10089 = vmatpush.bf16.msra.mxu0 %v6637
    %10090 = vmatpush.bf16.msra.mxu0 %v6629
    %10091 = vmatpush.bf16.msra.mxu0 %v6621
    %10092 = vmatpush.bf16.msra.mxu0 %v6613
    %10093 = vmatpush.bf16.msra.mxu0 %v6605
    %10094 = vmatpush.bf16.msra.mxu0 %v6597
    %10095 = vmatmul.bf16.gmra.mxu0 %v1687
    %v10096 = vpop.f32.mrf.mxu0
    %v10097 = vadd.f32 %v10084, %v10096
    %v10098 = vpop.f32.mrf.mxu0
    %10099 = vdwg.mxu0
    %10100 = vmatpush.bf16.msra.mxu0 %v6717
    %10101 = vmatpush.bf16.msra.mxu0 %v6709
    %10102 = vmatpush.bf16.msra.mxu0 %v6701
    %10103 = vmatpush.bf16.msra.mxu0 %v6693
    %10104 = vmatpush.bf16.msra.mxu0 %v6685
    %10105 = vmatpush.bf16.msra.mxu0 %v6677
    %10106 = vmatpush.bf16.msra.mxu0 %v6669
    %10107 = vmatpush.bf16.msra.mxu0 %v6661
    %10108 = vmatmul.bf16.gmra.mxu0 %v1688
    %v10109 = vpop.f32.mrf.mxu0
    %v10110 = vadd.f32 %v10097, %v10109
    %v10111 = vpop.f32.mrf.mxu0
    %10112 = vdwg.mxu0
    %10113 = vmatpush.bf16.msra.mxu0 %v6781
    %10114 = vmatpush.bf16.msra.mxu0 %v6773
    %10115 = vmatpush.bf16.msra.mxu0 %v6765
    %10116 = vmatpush.bf16.msra.mxu0 %v6757
    %10117 = vmatpush.bf16.msra.mxu0 %v6749
    %10118 = vmatpush.bf16.msra.mxu0 %v6741
    %10119 = vmatpush.bf16.msra.mxu0 %v6733
    %10120 = vmatpush.bf16.msra.mxu0 %v6725
    %10121 = vmatmul.bf16.gmra.mxu0 %v1689
    %v10122 = vpop.f32.mrf.mxu0
    %v10123 = vadd.f32 %v10110, %v10122
    %v10124 = vpop.f32.mrf.mxu0
    %10125 = vdwg.mxu0
    %10126 = vmatpush.bf16.msra.mxu0 %v6845
    %10127 = vmatpush.bf16.msra.mxu0 %v6837
    %10128 = vmatpush.bf16.msra.mxu0 %v6829
    %10129 = vmatpush.bf16.msra.mxu0 %v6821
    %10130 = vmatpush.bf16.msra.mxu0 %v6813
    %10131 = vmatpush.bf16.msra.mxu0 %v6805
    %10132 = vmatpush.bf16.msra.mxu0 %v6797
    %10133 = vmatpush.bf16.msra.mxu0 %v6789
    %10134 = vmatmul.bf16.gmra.mxu0 %v1690
    %v10135 = vpop.f32.mrf.mxu0
    %v10136 = vadd.f32 %v10123, %v10135
    %v10137 = vpop.f32.mrf.mxu0
    %10138 = vdwg.mxu0
    %10139 = vmatpush.bf16.msra.mxu0 %v6909
    %10140 = vmatpush.bf16.msra.mxu0 %v6901
    %10141 = vmatpush.bf16.msra.mxu0 %v6893
    %10142 = vmatpush.bf16.msra.mxu0 %v6885
    %10143 = vmatpush.bf16.msra.mxu0 %v6877
    %10144 = vmatpush.bf16.msra.mxu0 %v6869
    %10145 = vmatpush.bf16.msra.mxu0 %v6861
    %10146 = vmatpush.bf16.msra.mxu0 %v6853
    %10147 = vmatmul.bf16.gmra.mxu0 %v1691
    %v10148 = vpop.f32.mrf.mxu0
    %v10149 = vadd.f32 %v10136, %v10148
    %v10150 = vpop.f32.mrf.mxu0
    %10151 = vdwg.mxu0
    %10152 = vmatpush.bf16.msra.mxu0 %v6973
    %10153 = vmatpush.bf16.msra.mxu0 %v6965
    %10154 = vmatpush.bf16.msra.mxu0 %v6957
    %10155 = vmatpush.bf16.msra.mxu0 %v6949
    %10156 = vmatpush.bf16.msra.mxu0 %v6941
    %10157 = vmatpush.bf16.msra.mxu0 %v6933
    %10158 = vmatpush.bf16.msra.mxu0 %v6925
    %10159 = vmatpush.bf16.msra.mxu0 %v6917
    %10160 = vmatmul.bf16.gmra.mxu0 %v1692
    %v10161 = vpop.f32.mrf.mxu0
    %v10162 = vadd.f32 %v10149, %v10161
    %v10163 = vpop.f32.mrf.mxu0
    %10164 = vdwg.mxu0
    %10165 = vmatpush.bf16.msra.mxu0 %v7037
    %10166 = vmatpush.bf16.msra.mxu0 %v7029
    %10167 = vmatpush.bf16.msra.mxu0 %v7021
    %10168 = vmatpush.bf16.msra.mxu0 %v7013
    %10169 = vmatpush.bf16.msra.mxu0 %v7005
    %10170 = vmatpush.bf16.msra.mxu0 %v6997
    %10171 = vmatpush.bf16.msra.mxu0 %v6989
    %10172 = vmatpush.bf16.msra.mxu0 %v6981
    %10173 = vmatmul.bf16.gmra.mxu0 %v1693
    %v10174 = vpop.f32.mrf.mxu0
    %v10175 = vadd.f32 %v10162, %v10174
    %v10176 = vpop.f32.mrf.mxu0
    %10177 = vdwg.mxu0
    %10178 = vmatpush.bf16.msra.mxu0 %v7101
    %10179 = vmatpush.bf16.msra.mxu0 %v7093
    %10180 = vmatpush.bf16.msra.mxu0 %v7085
    %10181 = vmatpush.bf16.msra.mxu0 %v7077
    %10182 = vmatpush.bf16.msra.mxu0 %v7069
    %10183 = vmatpush.bf16.msra.mxu0 %v7061
    %10184 = vmatpush.bf16.msra.mxu0 %v7053
    %10185 = vmatpush.bf16.msra.mxu0 %v7045
    %10186 = vmatmul.bf16.gmra.mxu0 %v1694
    %v10187 = vpop.f32.mrf.mxu0
    %v10188 = vadd.f32 %v10175, %v10187
    %v10189 = vpop.f32.mrf.mxu0
    %10190 = vdwg.mxu0
    %10191 = vmatpush.bf16.msra.mxu0 %v7165
    %10192 = vmatpush.bf16.msra.mxu0 %v7157
    %10193 = vmatpush.bf16.msra.mxu0 %v7149
    %10194 = vmatpush.bf16.msra.mxu0 %v7141
    %10195 = vmatpush.bf16.msra.mxu0 %v7133
    %10196 = vmatpush.bf16.msra.mxu0 %v7125
    %10197 = vmatpush.bf16.msra.mxu0 %v7117
    %10198 = vmatpush.bf16.msra.mxu0 %v7109
    %10199 = vmatmul.bf16.gmra.mxu0 %v1695
    %v10200 = vpop.f32.mrf.mxu0
    %v10201 = vadd.f32 %v10188, %v10200
    %v10202 = vpop.f32.mrf.mxu0
    %10203 = vdwg.mxu0
    %10204 = vmatpush.bf16.msra.mxu0 %v7229
    %10205 = vmatpush.bf16.msra.mxu0 %v7221
    %10206 = vmatpush.bf16.msra.mxu0 %v7213
    %10207 = vmatpush.bf16.msra.mxu0 %v7205
    %10208 = vmatpush.bf16.msra.mxu0 %v7197
    %10209 = vmatpush.bf16.msra.mxu0 %v7189
    %10210 = vmatpush.bf16.msra.mxu0 %v7181
    %10211 = vmatpush.bf16.msra.mxu0 %v7173
    %10212 = vmatmul.bf16.gmra.mxu0 %v1696
    %v10213 = vpop.f32.mrf.mxu0
    %v10214 = vadd.f32 %v10201, %v10213
    %v10215 = vpop.f32.mrf.mxu0
    %10216 = vdwg.mxu0
    %10217 = vmatpush.bf16.msra.mxu0 %v7293
    %10218 = vmatpush.bf16.msra.mxu0 %v7285
    %10219 = vmatpush.bf16.msra.mxu0 %v7277
    %10220 = vmatpush.bf16.msra.mxu0 %v7269
    %10221 = vmatpush.bf16.msra.mxu0 %v7261
    %10222 = vmatpush.bf16.msra.mxu0 %v7253
    %10223 = vmatpush.bf16.msra.mxu0 %v7245
    %10224 = vmatpush.bf16.msra.mxu0 %v7237
    %10225 = vmatmul.bf16.gmra.mxu0 %v1697
    %v10226 = vpop.f32.mrf.mxu0
    %v10227 = vadd.f32 %v10214, %v10226
    %v10228 = vpop.f32.mrf.mxu0
    %10229 = vdwg.mxu0
    %10230 = vmatpush.bf16.msra.mxu0 %v7357
    %10231 = vmatpush.bf16.msra.mxu0 %v7349
    %10232 = vmatpush.bf16.msra.mxu0 %v7341
    %10233 = vmatpush.bf16.msra.mxu0 %v7333
    %10234 = vmatpush.bf16.msra.mxu0 %v7325
    %10235 = vmatpush.bf16.msra.mxu0 %v7317
    %10236 = vmatpush.bf16.msra.mxu0 %v7309
    %10237 = vmatpush.bf16.msra.mxu0 %v7301
    %10238 = vmatmul.bf16.gmra.mxu0 %v1698
    %v10239 = vpop.f32.mrf.mxu0
    %v10240 = vadd.f32 %v10227, %v10239
    %v10241 = vpop.f32.mrf.mxu0
    %10242 = vdwg.mxu0
    %10243 = vmatpush.bf16.msra.mxu0 %v7421
    %10244 = vmatpush.bf16.msra.mxu0 %v7413
    %10245 = vmatpush.bf16.msra.mxu0 %v7405
    %10246 = vmatpush.bf16.msra.mxu0 %v7397
    %10247 = vmatpush.bf16.msra.mxu0 %v7389
    %10248 = vmatpush.bf16.msra.mxu0 %v7381
    %10249 = vmatpush.bf16.msra.mxu0 %v7373
    %10250 = vmatpush.bf16.msra.mxu0 %v7365
    %10251 = vmatmul.bf16.gmra.mxu0 %v1699
    %v10252 = vpop.f32.mrf.mxu0
    %v10253 = vadd.f32 %v10240, %v10252
    %v10254 = vpop.f32.mrf.mxu0
    %10255 = vdwg.mxu0
    %10256 = vmatpush.bf16.msra.mxu0 %v7485
    %10257 = vmatpush.bf16.msra.mxu0 %v7477
    %10258 = vmatpush.bf16.msra.mxu0 %v7469
    %10259 = vmatpush.bf16.msra.mxu0 %v7461
    %10260 = vmatpush.bf16.msra.mxu0 %v7453
    %10261 = vmatpush.bf16.msra.mxu0 %v7445
    %10262 = vmatpush.bf16.msra.mxu0 %v7437
    %10263 = vmatpush.bf16.msra.mxu0 %v7429
    %10264 = vmatmul.bf16.gmra.mxu0 %v1700
    %v10265 = vpop.f32.mrf.mxu0
    %v10266 = vadd.f32 %v10253, %v10265
    %v10267 = vpop.f32.mrf.mxu0
    %10268 = vdwg.mxu0
    %10269 = vmatpush.bf16.msra.mxu0 %v7549
    %10270 = vmatpush.bf16.msra.mxu0 %v7541
    %10271 = vmatpush.bf16.msra.mxu0 %v7533
    %10272 = vmatpush.bf16.msra.mxu0 %v7525
    %10273 = vmatpush.bf16.msra.mxu0 %v7517
    %10274 = vmatpush.bf16.msra.mxu0 %v7509
    %10275 = vmatpush.bf16.msra.mxu0 %v7501
    %10276 = vmatpush.bf16.msra.mxu0 %v7493
    %10277 = vmatmul.bf16.gmra.mxu0 %v1701
    %v10278 = vpop.f32.mrf.mxu0
    %v10279 = vadd.f32 %v10266, %v10278
    %v10280 = vpop.f32.mrf.mxu0
    %10281 = vdwg.mxu0
    %10282 = vmatpush.bf16.msra.mxu0 %v7613
    %10283 = vmatpush.bf16.msra.mxu0 %v7605
    %10284 = vmatpush.bf16.msra.mxu0 %v7597
    %10285 = vmatpush.bf16.msra.mxu0 %v7589
    %10286 = vmatpush.bf16.msra.mxu0 %v7581
    %10287 = vmatpush.bf16.msra.mxu0 %v7573
    %10288 = vmatpush.bf16.msra.mxu0 %v7565
    %10289 = vmatpush.bf16.msra.mxu0 %v7557
    %10290 = vmatmul.bf16.gmra.mxu0 %v1702
    %v10291 = vpop.f32.mrf.mxu0
    %v10292 = vadd.f32 %v10279, %v10291
    %v10293 = vpop.f32.mrf.mxu0
    %10294 = vdwg.mxu0
    %10295 = vmatpush.bf16.msra.mxu0 %v7677
    %10296 = vmatpush.bf16.msra.mxu0 %v7669
    %10297 = vmatpush.bf16.msra.mxu0 %v7661
    %10298 = vmatpush.bf16.msra.mxu0 %v7653
    %10299 = vmatpush.bf16.msra.mxu0 %v7645
    %10300 = vmatpush.bf16.msra.mxu0 %v7637
    %10301 = vmatpush.bf16.msra.mxu0 %v7629
    %10302 = vmatpush.bf16.msra.mxu0 %v7621
    %10303 = vmatmul.bf16.gmra.mxu0 %v1703
    %v10304 = vpop.f32.mrf.mxu0
    %v10305 = vadd.f32 %v10292, %v10304
    %v10306 = vpop.f32.mrf.mxu0
    %10307 = vdwg.mxu0
    %10308 = vmatpush.bf16.msra.mxu0 %v7741
    %10309 = vmatpush.bf16.msra.mxu0 %v7733
    %10310 = vmatpush.bf16.msra.mxu0 %v7725
    %10311 = vmatpush.bf16.msra.mxu0 %v7717
    %10312 = vmatpush.bf16.msra.mxu0 %v7709
    %10313 = vmatpush.bf16.msra.mxu0 %v7701
    %10314 = vmatpush.bf16.msra.mxu0 %v7693
    %10315 = vmatpush.bf16.msra.mxu0 %v7685
    %10316 = vmatmul.bf16.gmra.mxu0 %v1704
    %v10317 = vpop.f32.mrf.mxu0
    %v10318 = vadd.f32 %v10305, %v10317
    %v10319 = vpop.f32.mrf.mxu0
    %10320 = vdwg.mxu0
    %10321 = vmatpush.bf16.msra.mxu0 %v7805
    %10322 = vmatpush.bf16.msra.mxu0 %v7797
    %10323 = vmatpush.bf16.msra.mxu0 %v7789
    %10324 = vmatpush.bf16.msra.mxu0 %v7781
    %10325 = vmatpush.bf16.msra.mxu0 %v7773
    %10326 = vmatpush.bf16.msra.mxu0 %v7765
    %10327 = vmatpush.bf16.msra.mxu0 %v7757
    %10328 = vmatpush.bf16.msra.mxu0 %v7749
    %10329 = vmatmul.bf16.gmra.mxu0 %v1705
    %v10330 = vpop.f32.mrf.mxu0
    %v10331 = vadd.f32 %v10318, %v10330
    %v10332 = vpop.f32.mrf.mxu0
    %10333 = vdwg.mxu0
    %10334 = vmatpush.bf16.msra.mxu0 %v7869
    %10335 = vmatpush.bf16.msra.mxu0 %v7861
    %10336 = vmatpush.bf16.msra.mxu0 %v7853
    %10337 = vmatpush.bf16.msra.mxu0 %v7845
    %10338 = vmatpush.bf16.msra.mxu0 %v7837
    %10339 = vmatpush.bf16.msra.mxu0 %v7829
    %10340 = vmatpush.bf16.msra.mxu0 %v7821
    %10341 = vmatpush.bf16.msra.mxu0 %v7813
    %10342 = vmatmul.bf16.gmra.mxu0 %v1706
    %v10343 = vpop.f32.mrf.mxu0
    %v10344 = vadd.f32 %v10331, %v10343
    %v10345 = vpop.f32.mrf.mxu0
    %10346 = vdwg.mxu0
    %10347 = vmatpush.bf16.msra.mxu0 %v6398
    %10348 = vmatpush.bf16.msra.mxu0 %v6390
    %10349 = vmatpush.bf16.msra.mxu0 %v6382
    %10350 = vmatpush.bf16.msra.mxu0 %v6374
    %10351 = vmatpush.bf16.msra.mxu0 %v6366
    %10352 = vmatpush.bf16.msra.mxu0 %v6358
    %10353 = vmatpush.bf16.msra.mxu0 %v6350
    %10354 = vmatpush.bf16.msra.mxu0 %v6342
    %10355 = vmatmul.bf16.gmra.mxu0 %v1683
    %v10356 = vpop.f32.mrf.mxu0
    %v10357 = vadd.f32 0.0, %v10356
    %v10358 = vpop.f32.mrf.mxu0
    %10359 = vdwg.mxu0
    %10360 = vmatpush.bf16.msra.mxu0 %v6462
    %10361 = vmatpush.bf16.msra.mxu0 %v6454
    %10362 = vmatpush.bf16.msra.mxu0 %v6446
    %10363 = vmatpush.bf16.msra.mxu0 %v6438
    %10364 = vmatpush.bf16.msra.mxu0 %v6430
    %10365 = vmatpush.bf16.msra.mxu0 %v6422
    %10366 = vmatpush.bf16.msra.mxu0 %v6414
    %10367 = vmatpush.bf16.msra.mxu0 %v6406
    %10368 = vmatmul.bf16.gmra.mxu0 %v1684
    %v10369 = vpop.f32.mrf.mxu0
    %v10370 = vadd.f32 %v10357, %v10369
    %v10371 = vpop.f32.mrf.mxu0
    %10372 = vdwg.mxu0
    %10373 = vmatpush.bf16.msra.mxu0 %v6526
    %10374 = vmatpush.bf16.msra.mxu0 %v6518
    %10375 = vmatpush.bf16.msra.mxu0 %v6510
    %10376 = vmatpush.bf16.msra.mxu0 %v6502
    %10377 = vmatpush.bf16.msra.mxu0 %v6494
    %10378 = vmatpush.bf16.msra.mxu0 %v6486
    %10379 = vmatpush.bf16.msra.mxu0 %v6478
    %10380 = vmatpush.bf16.msra.mxu0 %v6470
    %10381 = vmatmul.bf16.gmra.mxu0 %v1685
    %v10382 = vpop.f32.mrf.mxu0
    %v10383 = vadd.f32 %v10370, %v10382
    %v10384 = vpop.f32.mrf.mxu0
    %10385 = vdwg.mxu0
    %10386 = vmatpush.bf16.msra.mxu0 %v6590
    %10387 = vmatpush.bf16.msra.mxu0 %v6582
    %10388 = vmatpush.bf16.msra.mxu0 %v6574
    %10389 = vmatpush.bf16.msra.mxu0 %v6566
    %10390 = vmatpush.bf16.msra.mxu0 %v6558
    %10391 = vmatpush.bf16.msra.mxu0 %v6550
    %10392 = vmatpush.bf16.msra.mxu0 %v6542
    %10393 = vmatpush.bf16.msra.mxu0 %v6534
    %10394 = vmatmul.bf16.gmra.mxu0 %v1686
    %v10395 = vpop.f32.mrf.mxu0
    %v10396 = vadd.f32 %v10383, %v10395
    %v10397 = vpop.f32.mrf.mxu0
    %10398 = vdwg.mxu0
    %10399 = vmatpush.bf16.msra.mxu0 %v6654
    %10400 = vmatpush.bf16.msra.mxu0 %v6646
    %10401 = vmatpush.bf16.msra.mxu0 %v6638
    %10402 = vmatpush.bf16.msra.mxu0 %v6630
    %10403 = vmatpush.bf16.msra.mxu0 %v6622
    %10404 = vmatpush.bf16.msra.mxu0 %v6614
    %10405 = vmatpush.bf16.msra.mxu0 %v6606
    %10406 = vmatpush.bf16.msra.mxu0 %v6598
    %10407 = vmatmul.bf16.gmra.mxu0 %v1687
    %v10408 = vpop.f32.mrf.mxu0
    %v10409 = vadd.f32 %v10396, %v10408
    %v10410 = vpop.f32.mrf.mxu0
    %10411 = vdwg.mxu0
    %10412 = vmatpush.bf16.msra.mxu0 %v6718
    %10413 = vmatpush.bf16.msra.mxu0 %v6710
    %10414 = vmatpush.bf16.msra.mxu0 %v6702
    %10415 = vmatpush.bf16.msra.mxu0 %v6694
    %10416 = vmatpush.bf16.msra.mxu0 %v6686
    %10417 = vmatpush.bf16.msra.mxu0 %v6678
    %10418 = vmatpush.bf16.msra.mxu0 %v6670
    %10419 = vmatpush.bf16.msra.mxu0 %v6662
    %10420 = vmatmul.bf16.gmra.mxu0 %v1688
    %v10421 = vpop.f32.mrf.mxu0
    %v10422 = vadd.f32 %v10409, %v10421
    %v10423 = vpop.f32.mrf.mxu0
    %10424 = vdwg.mxu0
    %10425 = vmatpush.bf16.msra.mxu0 %v6782
    %10426 = vmatpush.bf16.msra.mxu0 %v6774
    %10427 = vmatpush.bf16.msra.mxu0 %v6766
    %10428 = vmatpush.bf16.msra.mxu0 %v6758
    %10429 = vmatpush.bf16.msra.mxu0 %v6750
    %10430 = vmatpush.bf16.msra.mxu0 %v6742
    %10431 = vmatpush.bf16.msra.mxu0 %v6734
    %10432 = vmatpush.bf16.msra.mxu0 %v6726
    %10433 = vmatmul.bf16.gmra.mxu0 %v1689
    %v10434 = vpop.f32.mrf.mxu0
    %v10435 = vadd.f32 %v10422, %v10434
    %v10436 = vpop.f32.mrf.mxu0
    %10437 = vdwg.mxu0
    %10438 = vmatpush.bf16.msra.mxu0 %v6846
    %10439 = vmatpush.bf16.msra.mxu0 %v6838
    %10440 = vmatpush.bf16.msra.mxu0 %v6830
    %10441 = vmatpush.bf16.msra.mxu0 %v6822
    %10442 = vmatpush.bf16.msra.mxu0 %v6814
    %10443 = vmatpush.bf16.msra.mxu0 %v6806
    %10444 = vmatpush.bf16.msra.mxu0 %v6798
    %10445 = vmatpush.bf16.msra.mxu0 %v6790
    %10446 = vmatmul.bf16.gmra.mxu0 %v1690
    %v10447 = vpop.f32.mrf.mxu0
    %v10448 = vadd.f32 %v10435, %v10447
    %v10449 = vpop.f32.mrf.mxu0
    %10450 = vdwg.mxu0
    %10451 = vmatpush.bf16.msra.mxu0 %v6910
    %10452 = vmatpush.bf16.msra.mxu0 %v6902
    %10453 = vmatpush.bf16.msra.mxu0 %v6894
    %10454 = vmatpush.bf16.msra.mxu0 %v6886
    %10455 = vmatpush.bf16.msra.mxu0 %v6878
    %10456 = vmatpush.bf16.msra.mxu0 %v6870
    %10457 = vmatpush.bf16.msra.mxu0 %v6862
    %10458 = vmatpush.bf16.msra.mxu0 %v6854
    %10459 = vmatmul.bf16.gmra.mxu0 %v1691
    %v10460 = vpop.f32.mrf.mxu0
    %v10461 = vadd.f32 %v10448, %v10460
    %v10462 = vpop.f32.mrf.mxu0
    %10463 = vdwg.mxu0
    %10464 = vmatpush.bf16.msra.mxu0 %v6974
    %10465 = vmatpush.bf16.msra.mxu0 %v6966
    %10466 = vmatpush.bf16.msra.mxu0 %v6958
    %10467 = vmatpush.bf16.msra.mxu0 %v6950
    %10468 = vmatpush.bf16.msra.mxu0 %v6942
    %10469 = vmatpush.bf16.msra.mxu0 %v6934
    %10470 = vmatpush.bf16.msra.mxu0 %v6926
    %10471 = vmatpush.bf16.msra.mxu0 %v6918
    %10472 = vmatmul.bf16.gmra.mxu0 %v1692
    %v10473 = vpop.f32.mrf.mxu0
    %v10474 = vadd.f32 %v10461, %v10473
    %v10475 = vpop.f32.mrf.mxu0
    %10476 = vdwg.mxu0
    %10477 = vmatpush.bf16.msra.mxu0 %v7038
    %10478 = vmatpush.bf16.msra.mxu0 %v7030
    %10479 = vmatpush.bf16.msra.mxu0 %v7022
    %10480 = vmatpush.bf16.msra.mxu0 %v7014
    %10481 = vmatpush.bf16.msra.mxu0 %v7006
    %10482 = vmatpush.bf16.msra.mxu0 %v6998
    %10483 = vmatpush.bf16.msra.mxu0 %v6990
    %10484 = vmatpush.bf16.msra.mxu0 %v6982
    %10485 = vmatmul.bf16.gmra.mxu0 %v1693
    %v10486 = vpop.f32.mrf.mxu0
    %v10487 = vadd.f32 %v10474, %v10486
    %v10488 = vpop.f32.mrf.mxu0
    %10489 = vdwg.mxu0
    %10490 = vmatpush.bf16.msra.mxu0 %v7102
    %10491 = vmatpush.bf16.msra.mxu0 %v7094
    %10492 = vmatpush.bf16.msra.mxu0 %v7086
    %10493 = vmatpush.bf16.msra.mxu0 %v7078
    %10494 = vmatpush.bf16.msra.mxu0 %v7070
    %10495 = vmatpush.bf16.msra.mxu0 %v7062
    %10496 = vmatpush.bf16.msra.mxu0 %v7054
    %10497 = vmatpush.bf16.msra.mxu0 %v7046
    %10498 = vmatmul.bf16.gmra.mxu0 %v1694
    %v10499 = vpop.f32.mrf.mxu0
    %v10500 = vadd.f32 %v10487, %v10499
    %v10501 = vpop.f32.mrf.mxu0
    %10502 = vdwg.mxu0
    %10503 = vmatpush.bf16.msra.mxu0 %v7166
    %10504 = vmatpush.bf16.msra.mxu0 %v7158
    %10505 = vmatpush.bf16.msra.mxu0 %v7150
    %10506 = vmatpush.bf16.msra.mxu0 %v7142
    %10507 = vmatpush.bf16.msra.mxu0 %v7134
    %10508 = vmatpush.bf16.msra.mxu0 %v7126
    %10509 = vmatpush.bf16.msra.mxu0 %v7118
    %10510 = vmatpush.bf16.msra.mxu0 %v7110
    %10511 = vmatmul.bf16.gmra.mxu0 %v1695
    %v10512 = vpop.f32.mrf.mxu0
    %v10513 = vadd.f32 %v10500, %v10512
    %v10514 = vpop.f32.mrf.mxu0
    %10515 = vdwg.mxu0
    %10516 = vmatpush.bf16.msra.mxu0 %v7230
    %10517 = vmatpush.bf16.msra.mxu0 %v7222
    %10518 = vmatpush.bf16.msra.mxu0 %v7214
    %10519 = vmatpush.bf16.msra.mxu0 %v7206
    %10520 = vmatpush.bf16.msra.mxu0 %v7198
    %10521 = vmatpush.bf16.msra.mxu0 %v7190
    %10522 = vmatpush.bf16.msra.mxu0 %v7182
    %10523 = vmatpush.bf16.msra.mxu0 %v7174
    %10524 = vmatmul.bf16.gmra.mxu0 %v1696
    %v10525 = vpop.f32.mrf.mxu0
    %v10526 = vadd.f32 %v10513, %v10525
    %v10527 = vpop.f32.mrf.mxu0
    %10528 = vdwg.mxu0
    %10529 = vmatpush.bf16.msra.mxu0 %v7294
    %10530 = vmatpush.bf16.msra.mxu0 %v7286
    %10531 = vmatpush.bf16.msra.mxu0 %v7278
    %10532 = vmatpush.bf16.msra.mxu0 %v7270
    %10533 = vmatpush.bf16.msra.mxu0 %v7262
    %10534 = vmatpush.bf16.msra.mxu0 %v7254
    %10535 = vmatpush.bf16.msra.mxu0 %v7246
    %10536 = vmatpush.bf16.msra.mxu0 %v7238
    %10537 = vmatmul.bf16.gmra.mxu0 %v1697
    %v10538 = vpop.f32.mrf.mxu0
    %v10539 = vadd.f32 %v10526, %v10538
    %v10540 = vpop.f32.mrf.mxu0
    %10541 = vdwg.mxu0
    %10542 = vmatpush.bf16.msra.mxu0 %v7358
    %10543 = vmatpush.bf16.msra.mxu0 %v7350
    %10544 = vmatpush.bf16.msra.mxu0 %v7342
    %10545 = vmatpush.bf16.msra.mxu0 %v7334
    %10546 = vmatpush.bf16.msra.mxu0 %v7326
    %10547 = vmatpush.bf16.msra.mxu0 %v7318
    %10548 = vmatpush.bf16.msra.mxu0 %v7310
    %10549 = vmatpush.bf16.msra.mxu0 %v7302
    %10550 = vmatmul.bf16.gmra.mxu0 %v1698
    %v10551 = vpop.f32.mrf.mxu0
    %v10552 = vadd.f32 %v10539, %v10551
    %v10553 = vpop.f32.mrf.mxu0
    %10554 = vdwg.mxu0
    %10555 = vmatpush.bf16.msra.mxu0 %v7422
    %10556 = vmatpush.bf16.msra.mxu0 %v7414
    %10557 = vmatpush.bf16.msra.mxu0 %v7406
    %10558 = vmatpush.bf16.msra.mxu0 %v7398
    %10559 = vmatpush.bf16.msra.mxu0 %v7390
    %10560 = vmatpush.bf16.msra.mxu0 %v7382
    %10561 = vmatpush.bf16.msra.mxu0 %v7374
    %10562 = vmatpush.bf16.msra.mxu0 %v7366
    %10563 = vmatmul.bf16.gmra.mxu0 %v1699
    %v10564 = vpop.f32.mrf.mxu0
    %v10565 = vadd.f32 %v10552, %v10564
    %v10566 = vpop.f32.mrf.mxu0
    %10567 = vdwg.mxu0
    %10568 = vmatpush.bf16.msra.mxu0 %v7486
    %10569 = vmatpush.bf16.msra.mxu0 %v7478
    %10570 = vmatpush.bf16.msra.mxu0 %v7470
    %10571 = vmatpush.bf16.msra.mxu0 %v7462
    %10572 = vmatpush.bf16.msra.mxu0 %v7454
    %10573 = vmatpush.bf16.msra.mxu0 %v7446
    %10574 = vmatpush.bf16.msra.mxu0 %v7438
    %10575 = vmatpush.bf16.msra.mxu0 %v7430
    %10576 = vmatmul.bf16.gmra.mxu0 %v1700
    %v10577 = vpop.f32.mrf.mxu0
    %v10578 = vadd.f32 %v10565, %v10577
    %v10579 = vpop.f32.mrf.mxu0
    %10580 = vdwg.mxu0
    %10581 = vmatpush.bf16.msra.mxu0 %v7550
    %10582 = vmatpush.bf16.msra.mxu0 %v7542
    %10583 = vmatpush.bf16.msra.mxu0 %v7534
    %10584 = vmatpush.bf16.msra.mxu0 %v7526
    %10585 = vmatpush.bf16.msra.mxu0 %v7518
    %10586 = vmatpush.bf16.msra.mxu0 %v7510
    %10587 = vmatpush.bf16.msra.mxu0 %v7502
    %10588 = vmatpush.bf16.msra.mxu0 %v7494
    %10589 = vmatmul.bf16.gmra.mxu0 %v1701
    %v10590 = vpop.f32.mrf.mxu0
    %v10591 = vadd.f32 %v10578, %v10590
    %v10592 = vpop.f32.mrf.mxu0
    %10593 = vdwg.mxu0
    %10594 = vmatpush.bf16.msra.mxu0 %v7614
    %10595 = vmatpush.bf16.msra.mxu0 %v7606
    %10596 = vmatpush.bf16.msra.mxu0 %v7598
    %10597 = vmatpush.bf16.msra.mxu0 %v7590
    %10598 = vmatpush.bf16.msra.mxu0 %v7582
    %10599 = vmatpush.bf16.msra.mxu0 %v7574
    %10600 = vmatpush.bf16.msra.mxu0 %v7566
    %10601 = vmatpush.bf16.msra.mxu0 %v7558
    %10602 = vmatmul.bf16.gmra.mxu0 %v1702
    %v10603 = vpop.f32.mrf.mxu0
    %v10604 = vadd.f32 %v10591, %v10603
    %v10605 = vpop.f32.mrf.mxu0
    %10606 = vdwg.mxu0
    %10607 = vmatpush.bf16.msra.mxu0 %v7678
    %10608 = vmatpush.bf16.msra.mxu0 %v7670
    %10609 = vmatpush.bf16.msra.mxu0 %v7662
    %10610 = vmatpush.bf16.msra.mxu0 %v7654
    %10611 = vmatpush.bf16.msra.mxu0 %v7646
    %10612 = vmatpush.bf16.msra.mxu0 %v7638
    %10613 = vmatpush.bf16.msra.mxu0 %v7630
    %10614 = vmatpush.bf16.msra.mxu0 %v7622
    %10615 = vmatmul.bf16.gmra.mxu0 %v1703
    %v10616 = vpop.f32.mrf.mxu0
    %v10617 = vadd.f32 %v10604, %v10616
    %v10618 = vpop.f32.mrf.mxu0
    %10619 = vdwg.mxu0
    %10620 = vmatpush.bf16.msra.mxu0 %v7742
    %10621 = vmatpush.bf16.msra.mxu0 %v7734
    %10622 = vmatpush.bf16.msra.mxu0 %v7726
    %10623 = vmatpush.bf16.msra.mxu0 %v7718
    %10624 = vmatpush.bf16.msra.mxu0 %v7710
    %10625 = vmatpush.bf16.msra.mxu0 %v7702
    %10626 = vmatpush.bf16.msra.mxu0 %v7694
    %10627 = vmatpush.bf16.msra.mxu0 %v7686
    %10628 = vmatmul.bf16.gmra.mxu0 %v1704
    %v10629 = vpop.f32.mrf.mxu0
    %v10630 = vadd.f32 %v10617, %v10629
    %v10631 = vpop.f32.mrf.mxu0
    %10632 = vdwg.mxu0
    %10633 = vmatpush.bf16.msra.mxu0 %v7806
    %10634 = vmatpush.bf16.msra.mxu0 %v7798
    %10635 = vmatpush.bf16.msra.mxu0 %v7790
    %10636 = vmatpush.bf16.msra.mxu0 %v7782
    %10637 = vmatpush.bf16.msra.mxu0 %v7774
    %10638 = vmatpush.bf16.msra.mxu0 %v7766
    %10639 = vmatpush.bf16.msra.mxu0 %v7758
    %10640 = vmatpush.bf16.msra.mxu0 %v7750
    %10641 = vmatmul.bf16.gmra.mxu0 %v1705
    %v10642 = vpop.f32.mrf.mxu0
    %v10643 = vadd.f32 %v10630, %v10642
    %v10644 = vpop.f32.mrf.mxu0
    %10645 = vdwg.mxu0
    %10646 = vmatpush.bf16.msra.mxu0 %v7870
    %10647 = vmatpush.bf16.msra.mxu0 %v7862
    %10648 = vmatpush.bf16.msra.mxu0 %v7854
    %10649 = vmatpush.bf16.msra.mxu0 %v7846
    %10650 = vmatpush.bf16.msra.mxu0 %v7838
    %10651 = vmatpush.bf16.msra.mxu0 %v7830
    %10652 = vmatpush.bf16.msra.mxu0 %v7822
    %10653 = vmatpush.bf16.msra.mxu0 %v7814
    %10654 = vmatmul.bf16.gmra.mxu0 %v1706
    %v10655 = vpop.f32.mrf.mxu0
    %v10656 = vadd.f32 %v10643, %v10655
    %v10657 = vpop.f32.mrf.mxu0
    %10658 = vdwg.mxu0
    %10659 = vmatpush.bf16.msra.mxu0 %v6399
    %10660 = vmatpush.bf16.msra.mxu0 %v6391
    %10661 = vmatpush.bf16.msra.mxu0 %v6383
    %10662 = vmatpush.bf16.msra.mxu0 %v6375
    %10663 = vmatpush.bf16.msra.mxu0 %v6367
    %10664 = vmatpush.bf16.msra.mxu0 %v6359
    %10665 = vmatpush.bf16.msra.mxu0 %v6351
    %10666 = vmatpush.bf16.msra.mxu0 %v6343
    %10667 = vmatmul.bf16.gmra.mxu0 %v1683
    %v10668 = vpop.f32.mrf.mxu0
    %v10669 = vadd.f32 0.0, %v10668
    %v10670 = vpop.f32.mrf.mxu0
    %10671 = vdwg.mxu0
    %10672 = vmatpush.bf16.msra.mxu0 %v6463
    %10673 = vmatpush.bf16.msra.mxu0 %v6455
    %10674 = vmatpush.bf16.msra.mxu0 %v6447
    %10675 = vmatpush.bf16.msra.mxu0 %v6439
    %10676 = vmatpush.bf16.msra.mxu0 %v6431
    %10677 = vmatpush.bf16.msra.mxu0 %v6423
    %10678 = vmatpush.bf16.msra.mxu0 %v6415
    %10679 = vmatpush.bf16.msra.mxu0 %v6407
    %10680 = vmatmul.bf16.gmra.mxu0 %v1684
    %v10681 = vpop.f32.mrf.mxu0
    %v10682 = vadd.f32 %v10669, %v10681
    %v10683 = vpop.f32.mrf.mxu0
    %10684 = vdwg.mxu0
    %10685 = vmatpush.bf16.msra.mxu0 %v6527
    %10686 = vmatpush.bf16.msra.mxu0 %v6519
    %10687 = vmatpush.bf16.msra.mxu0 %v6511
    %10688 = vmatpush.bf16.msra.mxu0 %v6503
    %10689 = vmatpush.bf16.msra.mxu0 %v6495
    %10690 = vmatpush.bf16.msra.mxu0 %v6487
    %10691 = vmatpush.bf16.msra.mxu0 %v6479
    %10692 = vmatpush.bf16.msra.mxu0 %v6471
    %10693 = vmatmul.bf16.gmra.mxu0 %v1685
    %v10694 = vpop.f32.mrf.mxu0
    %v10695 = vadd.f32 %v10682, %v10694
    %v10696 = vpop.f32.mrf.mxu0
    %10697 = vdwg.mxu0
    %10698 = vmatpush.bf16.msra.mxu0 %v6591
    %10699 = vmatpush.bf16.msra.mxu0 %v6583
    %10700 = vmatpush.bf16.msra.mxu0 %v6575
    %10701 = vmatpush.bf16.msra.mxu0 %v6567
    %10702 = vmatpush.bf16.msra.mxu0 %v6559
    %10703 = vmatpush.bf16.msra.mxu0 %v6551
    %10704 = vmatpush.bf16.msra.mxu0 %v6543
    %10705 = vmatpush.bf16.msra.mxu0 %v6535
    %10706 = vmatmul.bf16.gmra.mxu0 %v1686
    %v10707 = vpop.f32.mrf.mxu0
    %v10708 = vadd.f32 %v10695, %v10707
    %v10709 = vpop.f32.mrf.mxu0
    %10710 = vdwg.mxu0
    %10711 = vmatpush.bf16.msra.mxu0 %v6655
    %10712 = vmatpush.bf16.msra.mxu0 %v6647
    %10713 = vmatpush.bf16.msra.mxu0 %v6639
    %10714 = vmatpush.bf16.msra.mxu0 %v6631
    %10715 = vmatpush.bf16.msra.mxu0 %v6623
    %10716 = vmatpush.bf16.msra.mxu0 %v6615
    %10717 = vmatpush.bf16.msra.mxu0 %v6607
    %10718 = vmatpush.bf16.msra.mxu0 %v6599
    %10719 = vmatmul.bf16.gmra.mxu0 %v1687
    %v10720 = vpop.f32.mrf.mxu0
    %v10721 = vadd.f32 %v10708, %v10720
    %v10722 = vpop.f32.mrf.mxu0
    %10723 = vdwg.mxu0
    %10724 = vmatpush.bf16.msra.mxu0 %v6719
    %10725 = vmatpush.bf16.msra.mxu0 %v6711
    %10726 = vmatpush.bf16.msra.mxu0 %v6703
    %10727 = vmatpush.bf16.msra.mxu0 %v6695
    %10728 = vmatpush.bf16.msra.mxu0 %v6687
    %10729 = vmatpush.bf16.msra.mxu0 %v6679
    %10730 = vmatpush.bf16.msra.mxu0 %v6671
    %10731 = vmatpush.bf16.msra.mxu0 %v6663
    %10732 = vmatmul.bf16.gmra.mxu0 %v1688
    %v10733 = vpop.f32.mrf.mxu0
    %v10734 = vadd.f32 %v10721, %v10733
    %v10735 = vpop.f32.mrf.mxu0
    %10736 = vdwg.mxu0
    %10737 = vmatpush.bf16.msra.mxu0 %v6783
    %10738 = vmatpush.bf16.msra.mxu0 %v6775
    %10739 = vmatpush.bf16.msra.mxu0 %v6767
    %10740 = vmatpush.bf16.msra.mxu0 %v6759
    %10741 = vmatpush.bf16.msra.mxu0 %v6751
    %10742 = vmatpush.bf16.msra.mxu0 %v6743
    %10743 = vmatpush.bf16.msra.mxu0 %v6735
    %10744 = vmatpush.bf16.msra.mxu0 %v6727
    %10745 = vmatmul.bf16.gmra.mxu0 %v1689
    %v10746 = vpop.f32.mrf.mxu0
    %v10747 = vadd.f32 %v10734, %v10746
    %v10748 = vpop.f32.mrf.mxu0
    %10749 = vdwg.mxu0
    %10750 = vmatpush.bf16.msra.mxu0 %v6847
    %10751 = vmatpush.bf16.msra.mxu0 %v6839
    %10752 = vmatpush.bf16.msra.mxu0 %v6831
    %10753 = vmatpush.bf16.msra.mxu0 %v6823
    %10754 = vmatpush.bf16.msra.mxu0 %v6815
    %10755 = vmatpush.bf16.msra.mxu0 %v6807
    %10756 = vmatpush.bf16.msra.mxu0 %v6799
    %10757 = vmatpush.bf16.msra.mxu0 %v6791
    %10758 = vmatmul.bf16.gmra.mxu0 %v1690
    %v10759 = vpop.f32.mrf.mxu0
    %v10760 = vadd.f32 %v10747, %v10759
    %v10761 = vpop.f32.mrf.mxu0
    %10762 = vdwg.mxu0
    %10763 = vmatpush.bf16.msra.mxu0 %v6911
    %10764 = vmatpush.bf16.msra.mxu0 %v6903
    %10765 = vmatpush.bf16.msra.mxu0 %v6895
    %10766 = vmatpush.bf16.msra.mxu0 %v6887
    %10767 = vmatpush.bf16.msra.mxu0 %v6879
    %10768 = vmatpush.bf16.msra.mxu0 %v6871
    %10769 = vmatpush.bf16.msra.mxu0 %v6863
    %10770 = vmatpush.bf16.msra.mxu0 %v6855
    %10771 = vmatmul.bf16.gmra.mxu0 %v1691
    %v10772 = vpop.f32.mrf.mxu0
    %v10773 = vadd.f32 %v10760, %v10772
    %v10774 = vpop.f32.mrf.mxu0
    %10775 = vdwg.mxu0
    %10776 = vmatpush.bf16.msra.mxu0 %v6975
    %10777 = vmatpush.bf16.msra.mxu0 %v6967
    %10778 = vmatpush.bf16.msra.mxu0 %v6959
    %10779 = vmatpush.bf16.msra.mxu0 %v6951
    %10780 = vmatpush.bf16.msra.mxu0 %v6943
    %10781 = vmatpush.bf16.msra.mxu0 %v6935
    %10782 = vmatpush.bf16.msra.mxu0 %v6927
    %10783 = vmatpush.bf16.msra.mxu0 %v6919
    %10784 = vmatmul.bf16.gmra.mxu0 %v1692
    %v10785 = vpop.f32.mrf.mxu0
    %v10786 = vadd.f32 %v10773, %v10785
    %v10787 = vpop.f32.mrf.mxu0
    %10788 = vdwg.mxu0
    %10789 = vmatpush.bf16.msra.mxu0 %v7039
    %10790 = vmatpush.bf16.msra.mxu0 %v7031
    %10791 = vmatpush.bf16.msra.mxu0 %v7023
    %10792 = vmatpush.bf16.msra.mxu0 %v7015
    %10793 = vmatpush.bf16.msra.mxu0 %v7007
    %10794 = vmatpush.bf16.msra.mxu0 %v6999
    %10795 = vmatpush.bf16.msra.mxu0 %v6991
    %10796 = vmatpush.bf16.msra.mxu0 %v6983
    %10797 = vmatmul.bf16.gmra.mxu0 %v1693
    %v10798 = vpop.f32.mrf.mxu0
    %v10799 = vadd.f32 %v10786, %v10798
    %v10800 = vpop.f32.mrf.mxu0
    %10801 = vdwg.mxu0
    %10802 = vmatpush.bf16.msra.mxu0 %v7103
    %10803 = vmatpush.bf16.msra.mxu0 %v7095
    %10804 = vmatpush.bf16.msra.mxu0 %v7087
    %10805 = vmatpush.bf16.msra.mxu0 %v7079
    %10806 = vmatpush.bf16.msra.mxu0 %v7071
    %10807 = vmatpush.bf16.msra.mxu0 %v7063
    %10808 = vmatpush.bf16.msra.mxu0 %v7055
    %10809 = vmatpush.bf16.msra.mxu0 %v7047
    %10810 = vmatmul.bf16.gmra.mxu0 %v1694
    %v10811 = vpop.f32.mrf.mxu0
    %v10812 = vadd.f32 %v10799, %v10811
    %v10813 = vpop.f32.mrf.mxu0
    %10814 = vdwg.mxu0
    %10815 = vmatpush.bf16.msra.mxu0 %v7167
    %10816 = vmatpush.bf16.msra.mxu0 %v7159
    %10817 = vmatpush.bf16.msra.mxu0 %v7151
    %10818 = vmatpush.bf16.msra.mxu0 %v7143
    %10819 = vmatpush.bf16.msra.mxu0 %v7135
    %10820 = vmatpush.bf16.msra.mxu0 %v7127
    %10821 = vmatpush.bf16.msra.mxu0 %v7119
    %10822 = vmatpush.bf16.msra.mxu0 %v7111
    %10823 = vmatmul.bf16.gmra.mxu0 %v1695
    %v10824 = vpop.f32.mrf.mxu0
    %v10825 = vadd.f32 %v10812, %v10824
    %v10826 = vpop.f32.mrf.mxu0
    %10827 = vdwg.mxu0
    %10828 = vmatpush.bf16.msra.mxu0 %v7231
    %10829 = vmatpush.bf16.msra.mxu0 %v7223
    %10830 = vmatpush.bf16.msra.mxu0 %v7215
    %10831 = vmatpush.bf16.msra.mxu0 %v7207
    %10832 = vmatpush.bf16.msra.mxu0 %v7199
    %10833 = vmatpush.bf16.msra.mxu0 %v7191
    %10834 = vmatpush.bf16.msra.mxu0 %v7183
    %10835 = vmatpush.bf16.msra.mxu0 %v7175
    %10836 = vmatmul.bf16.gmra.mxu0 %v1696
    %v10837 = vpop.f32.mrf.mxu0
    %v10838 = vadd.f32 %v10825, %v10837
    %v10839 = vpop.f32.mrf.mxu0
    %10840 = vdwg.mxu0
    %10841 = vmatpush.bf16.msra.mxu0 %v7295
    %10842 = vmatpush.bf16.msra.mxu0 %v7287
    %10843 = vmatpush.bf16.msra.mxu0 %v7279
    %10844 = vmatpush.bf16.msra.mxu0 %v7271
    %10845 = vmatpush.bf16.msra.mxu0 %v7263
    %10846 = vmatpush.bf16.msra.mxu0 %v7255
    %10847 = vmatpush.bf16.msra.mxu0 %v7247
    %10848 = vmatpush.bf16.msra.mxu0 %v7239
    %10849 = vmatmul.bf16.gmra.mxu0 %v1697
    %v10850 = vpop.f32.mrf.mxu0
    %v10851 = vadd.f32 %v10838, %v10850
    %v10852 = vpop.f32.mrf.mxu0
    %10853 = vdwg.mxu0
    %10854 = vmatpush.bf16.msra.mxu0 %v7359
    %10855 = vmatpush.bf16.msra.mxu0 %v7351
    %10856 = vmatpush.bf16.msra.mxu0 %v7343
    %10857 = vmatpush.bf16.msra.mxu0 %v7335
    %10858 = vmatpush.bf16.msra.mxu0 %v7327
    %10859 = vmatpush.bf16.msra.mxu0 %v7319
    %10860 = vmatpush.bf16.msra.mxu0 %v7311
    %10861 = vmatpush.bf16.msra.mxu0 %v7303
    %10862 = vmatmul.bf16.gmra.mxu0 %v1698
    %v10863 = vpop.f32.mrf.mxu0
    %v10864 = vadd.f32 %v10851, %v10863
    %v10865 = vpop.f32.mrf.mxu0
    %10866 = vdwg.mxu0
    %10867 = vmatpush.bf16.msra.mxu0 %v7423
    %10868 = vmatpush.bf16.msra.mxu0 %v7415
    %10869 = vmatpush.bf16.msra.mxu0 %v7407
    %10870 = vmatpush.bf16.msra.mxu0 %v7399
    %10871 = vmatpush.bf16.msra.mxu0 %v7391
    %10872 = vmatpush.bf16.msra.mxu0 %v7383
    %10873 = vmatpush.bf16.msra.mxu0 %v7375
    %10874 = vmatpush.bf16.msra.mxu0 %v7367
    %10875 = vmatmul.bf16.gmra.mxu0 %v1699
    %v10876 = vpop.f32.mrf.mxu0
    %v10877 = vadd.f32 %v10864, %v10876
    %v10878 = vpop.f32.mrf.mxu0
    %10879 = vdwg.mxu0
    %10880 = vmatpush.bf16.msra.mxu0 %v7487
    %10881 = vmatpush.bf16.msra.mxu0 %v7479
    %10882 = vmatpush.bf16.msra.mxu0 %v7471
    %10883 = vmatpush.bf16.msra.mxu0 %v7463
    %10884 = vmatpush.bf16.msra.mxu0 %v7455
    %10885 = vmatpush.bf16.msra.mxu0 %v7447
    %10886 = vmatpush.bf16.msra.mxu0 %v7439
    %10887 = vmatpush.bf16.msra.mxu0 %v7431
    %10888 = vmatmul.bf16.gmra.mxu0 %v1700
    %v10889 = vpop.f32.mrf.mxu0
    %v10890 = vadd.f32 %v10877, %v10889
    %v10891 = vpop.f32.mrf.mxu0
    %10892 = vdwg.mxu0
    %10893 = vmatpush.bf16.msra.mxu0 %v7551
    %10894 = vmatpush.bf16.msra.mxu0 %v7543
    %10895 = vmatpush.bf16.msra.mxu0 %v7535
    %10896 = vmatpush.bf16.msra.mxu0 %v7527
    %10897 = vmatpush.bf16.msra.mxu0 %v7519
    %10898 = vmatpush.bf16.msra.mxu0 %v7511
    %10899 = vmatpush.bf16.msra.mxu0 %v7503
    %10900 = vmatpush.bf16.msra.mxu0 %v7495
    %10901 = vmatmul.bf16.gmra.mxu0 %v1701
    %v10902 = vpop.f32.mrf.mxu0
    %v10903 = vadd.f32 %v10890, %v10902
    %v10904 = vpop.f32.mrf.mxu0
    %10905 = vdwg.mxu0
    %10906 = vmatpush.bf16.msra.mxu0 %v7615
    %10907 = vmatpush.bf16.msra.mxu0 %v7607
    %10908 = vmatpush.bf16.msra.mxu0 %v7599
    %10909 = vmatpush.bf16.msra.mxu0 %v7591
    %10910 = vmatpush.bf16.msra.mxu0 %v7583
    %10911 = vmatpush.bf16.msra.mxu0 %v7575
    %10912 = vmatpush.bf16.msra.mxu0 %v7567
    %10913 = vmatpush.bf16.msra.mxu0 %v7559
    %10914 = vmatmul.bf16.gmra.mxu0 %v1702
    %v10915 = vpop.f32.mrf.mxu0
    %v10916 = vadd.f32 %v10903, %v10915
    %v10917 = vpop.f32.mrf.mxu0
    %10918 = vdwg.mxu0
    %10919 = vmatpush.bf16.msra.mxu0 %v7679
    %10920 = vmatpush.bf16.msra.mxu0 %v7671
    %10921 = vmatpush.bf16.msra.mxu0 %v7663
    %10922 = vmatpush.bf16.msra.mxu0 %v7655
    %10923 = vmatpush.bf16.msra.mxu0 %v7647
    %10924 = vmatpush.bf16.msra.mxu0 %v7639
    %10925 = vmatpush.bf16.msra.mxu0 %v7631
    %10926 = vmatpush.bf16.msra.mxu0 %v7623
    %10927 = vmatmul.bf16.gmra.mxu0 %v1703
    %v10928 = vpop.f32.mrf.mxu0
    %v10929 = vadd.f32 %v10916, %v10928
    %v10930 = vpop.f32.mrf.mxu0
    %10931 = vdwg.mxu0
    %10932 = vmatpush.bf16.msra.mxu0 %v7743
    %10933 = vmatpush.bf16.msra.mxu0 %v7735
    %10934 = vmatpush.bf16.msra.mxu0 %v7727
    %10935 = vmatpush.bf16.msra.mxu0 %v7719
    %10936 = vmatpush.bf16.msra.mxu0 %v7711
    %10937 = vmatpush.bf16.msra.mxu0 %v7703
    %10938 = vmatpush.bf16.msra.mxu0 %v7695
    %10939 = vmatpush.bf16.msra.mxu0 %v7687
    %10940 = vmatmul.bf16.gmra.mxu0 %v1704
    %v10941 = vpop.f32.mrf.mxu0
    %v10942 = vadd.f32 %v10929, %v10941
    %v10943 = vpop.f32.mrf.mxu0
    %10944 = vdwg.mxu0
    %10945 = vmatpush.bf16.msra.mxu0 %v7807
    %10946 = vmatpush.bf16.msra.mxu0 %v7799
    %10947 = vmatpush.bf16.msra.mxu0 %v7791
    %10948 = vmatpush.bf16.msra.mxu0 %v7783
    %10949 = vmatpush.bf16.msra.mxu0 %v7775
    %10950 = vmatpush.bf16.msra.mxu0 %v7767
    %10951 = vmatpush.bf16.msra.mxu0 %v7759
    %10952 = vmatpush.bf16.msra.mxu0 %v7751
    %10953 = vmatmul.bf16.gmra.mxu0 %v1705
    %v10954 = vpop.f32.mrf.mxu0
    %v10955 = vadd.f32 %v10942, %v10954
    %v10956 = vpop.f32.mrf.mxu0
    %10957 = vdwg.mxu0
    %10958 = vmatpush.bf16.msra.mxu0 %v7871
    %10959 = vmatpush.bf16.msra.mxu0 %v7863
    %10960 = vmatpush.bf16.msra.mxu0 %v7855
    %10961 = vmatpush.bf16.msra.mxu0 %v7847
    %10962 = vmatpush.bf16.msra.mxu0 %v7839
    %10963 = vmatpush.bf16.msra.mxu0 %v7831
    %10964 = vmatpush.bf16.msra.mxu0 %v7823
    %10965 = vmatpush.bf16.msra.mxu0 %v7815
    %10966 = vmatmul.bf16.gmra.mxu0 %v1706
    %v10967 = vpop.f32.mrf.mxu0
    %v10968 = vadd.f32 %v10955, %v10967
    %v10969 = vpop.f32.mrf.mxu0
    %10970 = vdwg.mxu0
    %10971 = vmatpush.bf16.msra.mxu0 %v6400
    %10972 = vmatpush.bf16.msra.mxu0 %v6392
    %10973 = vmatpush.bf16.msra.mxu0 %v6384
    %10974 = vmatpush.bf16.msra.mxu0 %v6376
    %10975 = vmatpush.bf16.msra.mxu0 %v6368
    %10976 = vmatpush.bf16.msra.mxu0 %v6360
    %10977 = vmatpush.bf16.msra.mxu0 %v6352
    %10978 = vmatpush.bf16.msra.mxu0 %v6344
    %10979 = vmatmul.bf16.gmra.mxu0 %v1683
    %v10980 = vpop.f32.mrf.mxu0
    %v10981 = vadd.f32 0.0, %v10980
    %v10982 = vpop.f32.mrf.mxu0
    %10983 = vdwg.mxu0
    %10984 = vmatpush.bf16.msra.mxu0 %v6464
    %10985 = vmatpush.bf16.msra.mxu0 %v6456
    %10986 = vmatpush.bf16.msra.mxu0 %v6448
    %10987 = vmatpush.bf16.msra.mxu0 %v6440
    %10988 = vmatpush.bf16.msra.mxu0 %v6432
    %10989 = vmatpush.bf16.msra.mxu0 %v6424
    %10990 = vmatpush.bf16.msra.mxu0 %v6416
    %10991 = vmatpush.bf16.msra.mxu0 %v6408
    %10992 = vmatmul.bf16.gmra.mxu0 %v1684
    %v10993 = vpop.f32.mrf.mxu0
    %v10994 = vadd.f32 %v10981, %v10993
    %v10995 = vpop.f32.mrf.mxu0
    %10996 = vdwg.mxu0
    %10997 = vmatpush.bf16.msra.mxu0 %v6528
    %10998 = vmatpush.bf16.msra.mxu0 %v6520
    %10999 = vmatpush.bf16.msra.mxu0 %v6512
    %11000 = vmatpush.bf16.msra.mxu0 %v6504
    %11001 = vmatpush.bf16.msra.mxu0 %v6496
    %11002 = vmatpush.bf16.msra.mxu0 %v6488
    %11003 = vmatpush.bf16.msra.mxu0 %v6480
    %11004 = vmatpush.bf16.msra.mxu0 %v6472
    %11005 = vmatmul.bf16.gmra.mxu0 %v1685
    %v11006 = vpop.f32.mrf.mxu0
    %v11007 = vadd.f32 %v10994, %v11006
    %v11008 = vpop.f32.mrf.mxu0
    %11009 = vdwg.mxu0
    %11010 = vmatpush.bf16.msra.mxu0 %v6592
    %11011 = vmatpush.bf16.msra.mxu0 %v6584
    %11012 = vmatpush.bf16.msra.mxu0 %v6576
    %11013 = vmatpush.bf16.msra.mxu0 %v6568
    %11014 = vmatpush.bf16.msra.mxu0 %v6560
    %11015 = vmatpush.bf16.msra.mxu0 %v6552
    %11016 = vmatpush.bf16.msra.mxu0 %v6544
    %11017 = vmatpush.bf16.msra.mxu0 %v6536
    %11018 = vmatmul.bf16.gmra.mxu0 %v1686
    %v11019 = vpop.f32.mrf.mxu0
    %v11020 = vadd.f32 %v11007, %v11019
    %v11021 = vpop.f32.mrf.mxu0
    %11022 = vdwg.mxu0
    %11023 = vmatpush.bf16.msra.mxu0 %v6656
    %11024 = vmatpush.bf16.msra.mxu0 %v6648
    %11025 = vmatpush.bf16.msra.mxu0 %v6640
    %11026 = vmatpush.bf16.msra.mxu0 %v6632
    %11027 = vmatpush.bf16.msra.mxu0 %v6624
    %11028 = vmatpush.bf16.msra.mxu0 %v6616
    %11029 = vmatpush.bf16.msra.mxu0 %v6608
    %11030 = vmatpush.bf16.msra.mxu0 %v6600
    %11031 = vmatmul.bf16.gmra.mxu0 %v1687
    %v11032 = vpop.f32.mrf.mxu0
    %v11033 = vadd.f32 %v11020, %v11032
    %v11034 = vpop.f32.mrf.mxu0
    %11035 = vdwg.mxu0
    %11036 = vmatpush.bf16.msra.mxu0 %v6720
    %11037 = vmatpush.bf16.msra.mxu0 %v6712
    %11038 = vmatpush.bf16.msra.mxu0 %v6704
    %11039 = vmatpush.bf16.msra.mxu0 %v6696
    %11040 = vmatpush.bf16.msra.mxu0 %v6688
    %11041 = vmatpush.bf16.msra.mxu0 %v6680
    %11042 = vmatpush.bf16.msra.mxu0 %v6672
    %11043 = vmatpush.bf16.msra.mxu0 %v6664
    %11044 = vmatmul.bf16.gmra.mxu0 %v1688
    %v11045 = vpop.f32.mrf.mxu0
    %v11046 = vadd.f32 %v11033, %v11045
    %v11047 = vpop.f32.mrf.mxu0
    %11048 = vdwg.mxu0
    %11049 = vmatpush.bf16.msra.mxu0 %v6784
    %11050 = vmatpush.bf16.msra.mxu0 %v6776
    %11051 = vmatpush.bf16.msra.mxu0 %v6768
    %11052 = vmatpush.bf16.msra.mxu0 %v6760
    %11053 = vmatpush.bf16.msra.mxu0 %v6752
    %11054 = vmatpush.bf16.msra.mxu0 %v6744
    %11055 = vmatpush.bf16.msra.mxu0 %v6736
    %11056 = vmatpush.bf16.msra.mxu0 %v6728
    %11057 = vmatmul.bf16.gmra.mxu0 %v1689
    %v11058 = vpop.f32.mrf.mxu0
    %v11059 = vadd.f32 %v11046, %v11058
    %v11060 = vpop.f32.mrf.mxu0
    %11061 = vdwg.mxu0
    %11062 = vmatpush.bf16.msra.mxu0 %v6848
    %11063 = vmatpush.bf16.msra.mxu0 %v6840
    %11064 = vmatpush.bf16.msra.mxu0 %v6832
    %11065 = vmatpush.bf16.msra.mxu0 %v6824
    %11066 = vmatpush.bf16.msra.mxu0 %v6816
    %11067 = vmatpush.bf16.msra.mxu0 %v6808
    %11068 = vmatpush.bf16.msra.mxu0 %v6800
    %11069 = vmatpush.bf16.msra.mxu0 %v6792
    %11070 = vmatmul.bf16.gmra.mxu0 %v1690
    %v11071 = vpop.f32.mrf.mxu0
    %v11072 = vadd.f32 %v11059, %v11071
    %v11073 = vpop.f32.mrf.mxu0
    %11074 = vdwg.mxu0
    %11075 = vmatpush.bf16.msra.mxu0 %v6912
    %11076 = vmatpush.bf16.msra.mxu0 %v6904
    %11077 = vmatpush.bf16.msra.mxu0 %v6896
    %11078 = vmatpush.bf16.msra.mxu0 %v6888
    %11079 = vmatpush.bf16.msra.mxu0 %v6880
    %11080 = vmatpush.bf16.msra.mxu0 %v6872
    %11081 = vmatpush.bf16.msra.mxu0 %v6864
    %11082 = vmatpush.bf16.msra.mxu0 %v6856
    %11083 = vmatmul.bf16.gmra.mxu0 %v1691
    %v11084 = vpop.f32.mrf.mxu0
    %v11085 = vadd.f32 %v11072, %v11084
    %v11086 = vpop.f32.mrf.mxu0
    %11087 = vdwg.mxu0
    %11088 = vmatpush.bf16.msra.mxu0 %v6976
    %11089 = vmatpush.bf16.msra.mxu0 %v6968
    %11090 = vmatpush.bf16.msra.mxu0 %v6960
    %11091 = vmatpush.bf16.msra.mxu0 %v6952
    %11092 = vmatpush.bf16.msra.mxu0 %v6944
    %11093 = vmatpush.bf16.msra.mxu0 %v6936
    %11094 = vmatpush.bf16.msra.mxu0 %v6928
    %11095 = vmatpush.bf16.msra.mxu0 %v6920
    %11096 = vmatmul.bf16.gmra.mxu0 %v1692
    %v11097 = vpop.f32.mrf.mxu0
    %v11098 = vadd.f32 %v11085, %v11097
    %v11099 = vpop.f32.mrf.mxu0
    %11100 = vdwg.mxu0
    %11101 = vmatpush.bf16.msra.mxu0 %v7040
    %11102 = vmatpush.bf16.msra.mxu0 %v7032
    %11103 = vmatpush.bf16.msra.mxu0 %v7024
    %11104 = vmatpush.bf16.msra.mxu0 %v7016
    %11105 = vmatpush.bf16.msra.mxu0 %v7008
    %11106 = vmatpush.bf16.msra.mxu0 %v7000
    %11107 = vmatpush.bf16.msra.mxu0 %v6992
    %11108 = vmatpush.bf16.msra.mxu0 %v6984
    %11109 = vmatmul.bf16.gmra.mxu0 %v1693
    %v11110 = vpop.f32.mrf.mxu0
    %v11111 = vadd.f32 %v11098, %v11110
    %v11112 = vpop.f32.mrf.mxu0
    %11113 = vdwg.mxu0
    %11114 = vmatpush.bf16.msra.mxu0 %v7104
    %11115 = vmatpush.bf16.msra.mxu0 %v7096
    %11116 = vmatpush.bf16.msra.mxu0 %v7088
    %11117 = vmatpush.bf16.msra.mxu0 %v7080
    %11118 = vmatpush.bf16.msra.mxu0 %v7072
    %11119 = vmatpush.bf16.msra.mxu0 %v7064
    %11120 = vmatpush.bf16.msra.mxu0 %v7056
    %11121 = vmatpush.bf16.msra.mxu0 %v7048
    %11122 = vmatmul.bf16.gmra.mxu0 %v1694
    %v11123 = vpop.f32.mrf.mxu0
    %v11124 = vadd.f32 %v11111, %v11123
    %v11125 = vpop.f32.mrf.mxu0
    %11126 = vdwg.mxu0
    %11127 = vmatpush.bf16.msra.mxu0 %v7168
    %11128 = vmatpush.bf16.msra.mxu0 %v7160
    %11129 = vmatpush.bf16.msra.mxu0 %v7152
    %11130 = vmatpush.bf16.msra.mxu0 %v7144
    %11131 = vmatpush.bf16.msra.mxu0 %v7136
    %11132 = vmatpush.bf16.msra.mxu0 %v7128
    %11133 = vmatpush.bf16.msra.mxu0 %v7120
    %11134 = vmatpush.bf16.msra.mxu0 %v7112
    %11135 = vmatmul.bf16.gmra.mxu0 %v1695
    %v11136 = vpop.f32.mrf.mxu0
    %v11137 = vadd.f32 %v11124, %v11136
    %v11138 = vpop.f32.mrf.mxu0
    %11139 = vdwg.mxu0
    %11140 = vmatpush.bf16.msra.mxu0 %v7232
    %11141 = vmatpush.bf16.msra.mxu0 %v7224
    %11142 = vmatpush.bf16.msra.mxu0 %v7216
    %11143 = vmatpush.bf16.msra.mxu0 %v7208
    %11144 = vmatpush.bf16.msra.mxu0 %v7200
    %11145 = vmatpush.bf16.msra.mxu0 %v7192
    %11146 = vmatpush.bf16.msra.mxu0 %v7184
    %11147 = vmatpush.bf16.msra.mxu0 %v7176
    %11148 = vmatmul.bf16.gmra.mxu0 %v1696
    %v11149 = vpop.f32.mrf.mxu0
    %v11150 = vadd.f32 %v11137, %v11149
    %v11151 = vpop.f32.mrf.mxu0
    %11152 = vdwg.mxu0
    %11153 = vmatpush.bf16.msra.mxu0 %v7296
    %11154 = vmatpush.bf16.msra.mxu0 %v7288
    %11155 = vmatpush.bf16.msra.mxu0 %v7280
    %11156 = vmatpush.bf16.msra.mxu0 %v7272
    %11157 = vmatpush.bf16.msra.mxu0 %v7264
    %11158 = vmatpush.bf16.msra.mxu0 %v7256
    %11159 = vmatpush.bf16.msra.mxu0 %v7248
    %11160 = vmatpush.bf16.msra.mxu0 %v7240
    %11161 = vmatmul.bf16.gmra.mxu0 %v1697
    %v11162 = vpop.f32.mrf.mxu0
    %v11163 = vadd.f32 %v11150, %v11162
    %v11164 = vpop.f32.mrf.mxu0
    %11165 = vdwg.mxu0
    %11166 = vmatpush.bf16.msra.mxu0 %v7360
    %11167 = vmatpush.bf16.msra.mxu0 %v7352
    %11168 = vmatpush.bf16.msra.mxu0 %v7344
    %11169 = vmatpush.bf16.msra.mxu0 %v7336
    %11170 = vmatpush.bf16.msra.mxu0 %v7328
    %11171 = vmatpush.bf16.msra.mxu0 %v7320
    %11172 = vmatpush.bf16.msra.mxu0 %v7312
    %11173 = vmatpush.bf16.msra.mxu0 %v7304
    %11174 = vmatmul.bf16.gmra.mxu0 %v1698
    %v11175 = vpop.f32.mrf.mxu0
    %v11176 = vadd.f32 %v11163, %v11175
    %v11177 = vpop.f32.mrf.mxu0
    %11178 = vdwg.mxu0
    %11179 = vmatpush.bf16.msra.mxu0 %v7424
    %11180 = vmatpush.bf16.msra.mxu0 %v7416
    %11181 = vmatpush.bf16.msra.mxu0 %v7408
    %11182 = vmatpush.bf16.msra.mxu0 %v7400
    %11183 = vmatpush.bf16.msra.mxu0 %v7392
    %11184 = vmatpush.bf16.msra.mxu0 %v7384
    %11185 = vmatpush.bf16.msra.mxu0 %v7376
    %11186 = vmatpush.bf16.msra.mxu0 %v7368
    %11187 = vmatmul.bf16.gmra.mxu0 %v1699
    %v11188 = vpop.f32.mrf.mxu0
    %v11189 = vadd.f32 %v11176, %v11188
    %v11190 = vpop.f32.mrf.mxu0
    %11191 = vdwg.mxu0
    %11192 = vmatpush.bf16.msra.mxu0 %v7488
    %11193 = vmatpush.bf16.msra.mxu0 %v7480
    %11194 = vmatpush.bf16.msra.mxu0 %v7472
    %11195 = vmatpush.bf16.msra.mxu0 %v7464
    %11196 = vmatpush.bf16.msra.mxu0 %v7456
    %11197 = vmatpush.bf16.msra.mxu0 %v7448
    %11198 = vmatpush.bf16.msra.mxu0 %v7440
    %11199 = vmatpush.bf16.msra.mxu0 %v7432
    %11200 = vmatmul.bf16.gmra.mxu0 %v1700
    %v11201 = vpop.f32.mrf.mxu0
    %v11202 = vadd.f32 %v11189, %v11201
    %v11203 = vpop.f32.mrf.mxu0
    %11204 = vdwg.mxu0
    %11205 = vmatpush.bf16.msra.mxu0 %v7552
    %11206 = vmatpush.bf16.msra.mxu0 %v7544
    %11207 = vmatpush.bf16.msra.mxu0 %v7536
    %11208 = vmatpush.bf16.msra.mxu0 %v7528
    %11209 = vmatpush.bf16.msra.mxu0 %v7520
    %11210 = vmatpush.bf16.msra.mxu0 %v7512
    %11211 = vmatpush.bf16.msra.mxu0 %v7504
    %11212 = vmatpush.bf16.msra.mxu0 %v7496
    %11213 = vmatmul.bf16.gmra.mxu0 %v1701
    %v11214 = vpop.f32.mrf.mxu0
    %v11215 = vadd.f32 %v11202, %v11214
    %v11216 = vpop.f32.mrf.mxu0
    %11217 = vdwg.mxu0
    %11218 = vmatpush.bf16.msra.mxu0 %v7616
    %11219 = vmatpush.bf16.msra.mxu0 %v7608
    %11220 = vmatpush.bf16.msra.mxu0 %v7600
    %11221 = vmatpush.bf16.msra.mxu0 %v7592
    %11222 = vmatpush.bf16.msra.mxu0 %v7584
    %11223 = vmatpush.bf16.msra.mxu0 %v7576
    %11224 = vmatpush.bf16.msra.mxu0 %v7568
    %11225 = vmatpush.bf16.msra.mxu0 %v7560
    %11226 = vmatmul.bf16.gmra.mxu0 %v1702
    %v11227 = vpop.f32.mrf.mxu0
    %v11228 = vadd.f32 %v11215, %v11227
    %v11229 = vpop.f32.mrf.mxu0
    %11230 = vdwg.mxu0
    %11231 = vmatpush.bf16.msra.mxu0 %v7680
    %11232 = vmatpush.bf16.msra.mxu0 %v7672
    %11233 = vmatpush.bf16.msra.mxu0 %v7664
    %11234 = vmatpush.bf16.msra.mxu0 %v7656
    %11235 = vmatpush.bf16.msra.mxu0 %v7648
    %11236 = vmatpush.bf16.msra.mxu0 %v7640
    %11237 = vmatpush.bf16.msra.mxu0 %v7632
    %11238 = vmatpush.bf16.msra.mxu0 %v7624
    %11239 = vmatmul.bf16.gmra.mxu0 %v1703
    %v11240 = vpop.f32.mrf.mxu0
    %v11241 = vadd.f32 %v11228, %v11240
    %v11242 = vpop.f32.mrf.mxu0
    %11243 = vdwg.mxu0
    %11244 = vmatpush.bf16.msra.mxu0 %v7744
    %11245 = vmatpush.bf16.msra.mxu0 %v7736
    %11246 = vmatpush.bf16.msra.mxu0 %v7728
    %11247 = vmatpush.bf16.msra.mxu0 %v7720
    %11248 = vmatpush.bf16.msra.mxu0 %v7712
    %11249 = vmatpush.bf16.msra.mxu0 %v7704
    %11250 = vmatpush.bf16.msra.mxu0 %v7696
    %11251 = vmatpush.bf16.msra.mxu0 %v7688
    %11252 = vmatmul.bf16.gmra.mxu0 %v1704
    %v11253 = vpop.f32.mrf.mxu0
    %v11254 = vadd.f32 %v11241, %v11253
    %v11255 = vpop.f32.mrf.mxu0
    %11256 = vdwg.mxu0
    %11257 = vmatpush.bf16.msra.mxu0 %v7808
    %11258 = vmatpush.bf16.msra.mxu0 %v7800
    %11259 = vmatpush.bf16.msra.mxu0 %v7792
    %11260 = vmatpush.bf16.msra.mxu0 %v7784
    %11261 = vmatpush.bf16.msra.mxu0 %v7776
    %11262 = vmatpush.bf16.msra.mxu0 %v7768
    %11263 = vmatpush.bf16.msra.mxu0 %v7760
    %11264 = vmatpush.bf16.msra.mxu0 %v7752
    %11265 = vmatmul.bf16.gmra.mxu0 %v1705
    %v11266 = vpop.f32.mrf.mxu0
    %v11267 = vadd.f32 %v11254, %v11266
    %v11268 = vpop.f32.mrf.mxu0
    %11269 = vdwg.mxu0
    %11270 = vmatpush.bf16.msra.mxu0 %v7872
    %11271 = vmatpush.bf16.msra.mxu0 %v7864
    %11272 = vmatpush.bf16.msra.mxu0 %v7856
    %11273 = vmatpush.bf16.msra.mxu0 %v7848
    %11274 = vmatpush.bf16.msra.mxu0 %v7840
    %11275 = vmatpush.bf16.msra.mxu0 %v7832
    %11276 = vmatpush.bf16.msra.mxu0 %v7824
    %11277 = vmatpush.bf16.msra.mxu0 %v7816
    %11278 = vmatmul.bf16.gmra.mxu0 %v1706
    %v11279 = vpop.f32.mrf.mxu0
    %v11280 = vadd.f32 %v11267, %v11279
    %v11281 = vpop.f32.mrf.mxu0
    %11282 = vdwg.mxu0
    %11283 = vmatpush.bf16.msra.mxu0 %v6401
    %11284 = vmatpush.bf16.msra.mxu0 %v6393
    %11285 = vmatpush.bf16.msra.mxu0 %v6385
    %11286 = vmatpush.bf16.msra.mxu0 %v6377
    %11287 = vmatpush.bf16.msra.mxu0 %v6369
    %11288 = vmatpush.bf16.msra.mxu0 %v6361
    %11289 = vmatpush.bf16.msra.mxu0 %v6353
    %11290 = vmatpush.bf16.msra.mxu0 %v6345
    %11291 = vmatmul.bf16.gmra.mxu0 %v1683
    %v11292 = vpop.f32.mrf.mxu0
    %v11293 = vadd.f32 0.0, %v11292
    %v11294 = vpop.f32.mrf.mxu0
    %11295 = vdwg.mxu0
    %11296 = vmatpush.bf16.msra.mxu0 %v6465
    %11297 = vmatpush.bf16.msra.mxu0 %v6457
    %11298 = vmatpush.bf16.msra.mxu0 %v6449
    %11299 = vmatpush.bf16.msra.mxu0 %v6441
    %11300 = vmatpush.bf16.msra.mxu0 %v6433
    %11301 = vmatpush.bf16.msra.mxu0 %v6425
    %11302 = vmatpush.bf16.msra.mxu0 %v6417
    %11303 = vmatpush.bf16.msra.mxu0 %v6409
    %11304 = vmatmul.bf16.gmra.mxu0 %v1684
    %v11305 = vpop.f32.mrf.mxu0
    %v11306 = vadd.f32 %v11293, %v11305
    %v11307 = vpop.f32.mrf.mxu0
    %11308 = vdwg.mxu0
    %11309 = vmatpush.bf16.msra.mxu0 %v6529
    %11310 = vmatpush.bf16.msra.mxu0 %v6521
    %11311 = vmatpush.bf16.msra.mxu0 %v6513
    %11312 = vmatpush.bf16.msra.mxu0 %v6505
    %11313 = vmatpush.bf16.msra.mxu0 %v6497
    %11314 = vmatpush.bf16.msra.mxu0 %v6489
    %11315 = vmatpush.bf16.msra.mxu0 %v6481
    %11316 = vmatpush.bf16.msra.mxu0 %v6473
    %11317 = vmatmul.bf16.gmra.mxu0 %v1685
    %v11318 = vpop.f32.mrf.mxu0
    %v11319 = vadd.f32 %v11306, %v11318
    %v11320 = vpop.f32.mrf.mxu0
    %11321 = vdwg.mxu0
    %11322 = vmatpush.bf16.msra.mxu0 %v6593
    %11323 = vmatpush.bf16.msra.mxu0 %v6585
    %11324 = vmatpush.bf16.msra.mxu0 %v6577
    %11325 = vmatpush.bf16.msra.mxu0 %v6569
    %11326 = vmatpush.bf16.msra.mxu0 %v6561
    %11327 = vmatpush.bf16.msra.mxu0 %v6553
    %11328 = vmatpush.bf16.msra.mxu0 %v6545
    %11329 = vmatpush.bf16.msra.mxu0 %v6537
    %11330 = vmatmul.bf16.gmra.mxu0 %v1686
    %v11331 = vpop.f32.mrf.mxu0
    %v11332 = vadd.f32 %v11319, %v11331
    %v11333 = vpop.f32.mrf.mxu0
    %11334 = vdwg.mxu0
    %11335 = vmatpush.bf16.msra.mxu0 %v6657
    %11336 = vmatpush.bf16.msra.mxu0 %v6649
    %11337 = vmatpush.bf16.msra.mxu0 %v6641
    %11338 = vmatpush.bf16.msra.mxu0 %v6633
    %11339 = vmatpush.bf16.msra.mxu0 %v6625
    %11340 = vmatpush.bf16.msra.mxu0 %v6617
    %11341 = vmatpush.bf16.msra.mxu0 %v6609
    %11342 = vmatpush.bf16.msra.mxu0 %v6601
    %11343 = vmatmul.bf16.gmra.mxu0 %v1687
    %v11344 = vpop.f32.mrf.mxu0
    %v11345 = vadd.f32 %v11332, %v11344
    %v11346 = vpop.f32.mrf.mxu0
    %11347 = vdwg.mxu0
    %11348 = vmatpush.bf16.msra.mxu0 %v6721
    %11349 = vmatpush.bf16.msra.mxu0 %v6713
    %11350 = vmatpush.bf16.msra.mxu0 %v6705
    %11351 = vmatpush.bf16.msra.mxu0 %v6697
    %11352 = vmatpush.bf16.msra.mxu0 %v6689
    %11353 = vmatpush.bf16.msra.mxu0 %v6681
    %11354 = vmatpush.bf16.msra.mxu0 %v6673
    %11355 = vmatpush.bf16.msra.mxu0 %v6665
    %11356 = vmatmul.bf16.gmra.mxu0 %v1688
    %v11357 = vpop.f32.mrf.mxu0
    %v11358 = vadd.f32 %v11345, %v11357
    %v11359 = vpop.f32.mrf.mxu0
    %11360 = vdwg.mxu0
    %11361 = vmatpush.bf16.msra.mxu0 %v6785
    %11362 = vmatpush.bf16.msra.mxu0 %v6777
    %11363 = vmatpush.bf16.msra.mxu0 %v6769
    %11364 = vmatpush.bf16.msra.mxu0 %v6761
    %11365 = vmatpush.bf16.msra.mxu0 %v6753
    %11366 = vmatpush.bf16.msra.mxu0 %v6745
    %11367 = vmatpush.bf16.msra.mxu0 %v6737
    %11368 = vmatpush.bf16.msra.mxu0 %v6729
    %11369 = vmatmul.bf16.gmra.mxu0 %v1689
    %v11370 = vpop.f32.mrf.mxu0
    %v11371 = vadd.f32 %v11358, %v11370
    %v11372 = vpop.f32.mrf.mxu0
    %11373 = vdwg.mxu0
    %11374 = vmatpush.bf16.msra.mxu0 %v6849
    %11375 = vmatpush.bf16.msra.mxu0 %v6841
    %11376 = vmatpush.bf16.msra.mxu0 %v6833
    %11377 = vmatpush.bf16.msra.mxu0 %v6825
    %11378 = vmatpush.bf16.msra.mxu0 %v6817
    %11379 = vmatpush.bf16.msra.mxu0 %v6809
    %11380 = vmatpush.bf16.msra.mxu0 %v6801
    %11381 = vmatpush.bf16.msra.mxu0 %v6793
    %11382 = vmatmul.bf16.gmra.mxu0 %v1690
    %v11383 = vpop.f32.mrf.mxu0
    %v11384 = vadd.f32 %v11371, %v11383
    %v11385 = vpop.f32.mrf.mxu0
    %11386 = vdwg.mxu0
    %11387 = vmatpush.bf16.msra.mxu0 %v6913
    %11388 = vmatpush.bf16.msra.mxu0 %v6905
    %11389 = vmatpush.bf16.msra.mxu0 %v6897
    %11390 = vmatpush.bf16.msra.mxu0 %v6889
    %11391 = vmatpush.bf16.msra.mxu0 %v6881
    %11392 = vmatpush.bf16.msra.mxu0 %v6873
    %11393 = vmatpush.bf16.msra.mxu0 %v6865
    %11394 = vmatpush.bf16.msra.mxu0 %v6857
    %11395 = vmatmul.bf16.gmra.mxu0 %v1691
    %v11396 = vpop.f32.mrf.mxu0
    %v11397 = vadd.f32 %v11384, %v11396
    %v11398 = vpop.f32.mrf.mxu0
    %11399 = vdwg.mxu0
    %11400 = vmatpush.bf16.msra.mxu0 %v6977
    %11401 = vmatpush.bf16.msra.mxu0 %v6969
    %11402 = vmatpush.bf16.msra.mxu0 %v6961
    %11403 = vmatpush.bf16.msra.mxu0 %v6953
    %11404 = vmatpush.bf16.msra.mxu0 %v6945
    %11405 = vmatpush.bf16.msra.mxu0 %v6937
    %11406 = vmatpush.bf16.msra.mxu0 %v6929
    %11407 = vmatpush.bf16.msra.mxu0 %v6921
    %11408 = vmatmul.bf16.gmra.mxu0 %v1692
    %v11409 = vpop.f32.mrf.mxu0
    %v11410 = vadd.f32 %v11397, %v11409
    %v11411 = vpop.f32.mrf.mxu0
    %11412 = vdwg.mxu0
    %11413 = vmatpush.bf16.msra.mxu0 %v7041
    %11414 = vmatpush.bf16.msra.mxu0 %v7033
    %11415 = vmatpush.bf16.msra.mxu0 %v7025
    %11416 = vmatpush.bf16.msra.mxu0 %v7017
    %11417 = vmatpush.bf16.msra.mxu0 %v7009
    %11418 = vmatpush.bf16.msra.mxu0 %v7001
    %11419 = vmatpush.bf16.msra.mxu0 %v6993
    %11420 = vmatpush.bf16.msra.mxu0 %v6985
    %11421 = vmatmul.bf16.gmra.mxu0 %v1693
    %v11422 = vpop.f32.mrf.mxu0
    %v11423 = vadd.f32 %v11410, %v11422
    %v11424 = vpop.f32.mrf.mxu0
    %11425 = vdwg.mxu0
    %11426 = vmatpush.bf16.msra.mxu0 %v7105
    %11427 = vmatpush.bf16.msra.mxu0 %v7097
    %11428 = vmatpush.bf16.msra.mxu0 %v7089
    %11429 = vmatpush.bf16.msra.mxu0 %v7081
    %11430 = vmatpush.bf16.msra.mxu0 %v7073
    %11431 = vmatpush.bf16.msra.mxu0 %v7065
    %11432 = vmatpush.bf16.msra.mxu0 %v7057
    %11433 = vmatpush.bf16.msra.mxu0 %v7049
    %11434 = vmatmul.bf16.gmra.mxu0 %v1694
    %v11435 = vpop.f32.mrf.mxu0
    %v11436 = vadd.f32 %v11423, %v11435
    %v11437 = vpop.f32.mrf.mxu0
    %11438 = vdwg.mxu0
    %11439 = vmatpush.bf16.msra.mxu0 %v7169
    %11440 = vmatpush.bf16.msra.mxu0 %v7161
    %11441 = vmatpush.bf16.msra.mxu0 %v7153
    %11442 = vmatpush.bf16.msra.mxu0 %v7145
    %11443 = vmatpush.bf16.msra.mxu0 %v7137
    %11444 = vmatpush.bf16.msra.mxu0 %v7129
    %11445 = vmatpush.bf16.msra.mxu0 %v7121
    %11446 = vmatpush.bf16.msra.mxu0 %v7113
    %11447 = vmatmul.bf16.gmra.mxu0 %v1695
    %v11448 = vpop.f32.mrf.mxu0
    %v11449 = vadd.f32 %v11436, %v11448
    %v11450 = vpop.f32.mrf.mxu0
    %11451 = vdwg.mxu0
    %11452 = vmatpush.bf16.msra.mxu0 %v7233
    %11453 = vmatpush.bf16.msra.mxu0 %v7225
    %11454 = vmatpush.bf16.msra.mxu0 %v7217
    %11455 = vmatpush.bf16.msra.mxu0 %v7209
    %11456 = vmatpush.bf16.msra.mxu0 %v7201
    %11457 = vmatpush.bf16.msra.mxu0 %v7193
    %11458 = vmatpush.bf16.msra.mxu0 %v7185
    %11459 = vmatpush.bf16.msra.mxu0 %v7177
    %11460 = vmatmul.bf16.gmra.mxu0 %v1696
    %v11461 = vpop.f32.mrf.mxu0
    %v11462 = vadd.f32 %v11449, %v11461
    %v11463 = vpop.f32.mrf.mxu0
    %11464 = vdwg.mxu0
    %11465 = vmatpush.bf16.msra.mxu0 %v7297
    %11466 = vmatpush.bf16.msra.mxu0 %v7289
    %11467 = vmatpush.bf16.msra.mxu0 %v7281
    %11468 = vmatpush.bf16.msra.mxu0 %v7273
    %11469 = vmatpush.bf16.msra.mxu0 %v7265
    %11470 = vmatpush.bf16.msra.mxu0 %v7257
    %11471 = vmatpush.bf16.msra.mxu0 %v7249
    %11472 = vmatpush.bf16.msra.mxu0 %v7241
    %11473 = vmatmul.bf16.gmra.mxu0 %v1697
    %v11474 = vpop.f32.mrf.mxu0
    %v11475 = vadd.f32 %v11462, %v11474
    %v11476 = vpop.f32.mrf.mxu0
    %11477 = vdwg.mxu0
    %11478 = vmatpush.bf16.msra.mxu0 %v7361
    %11479 = vmatpush.bf16.msra.mxu0 %v7353
    %11480 = vmatpush.bf16.msra.mxu0 %v7345
    %11481 = vmatpush.bf16.msra.mxu0 %v7337
    %11482 = vmatpush.bf16.msra.mxu0 %v7329
    %11483 = vmatpush.bf16.msra.mxu0 %v7321
    %11484 = vmatpush.bf16.msra.mxu0 %v7313
    %11485 = vmatpush.bf16.msra.mxu0 %v7305
    %11486 = vmatmul.bf16.gmra.mxu0 %v1698
    %v11487 = vpop.f32.mrf.mxu0
    %v11488 = vadd.f32 %v11475, %v11487
    %v11489 = vpop.f32.mrf.mxu0
    %11490 = vdwg.mxu0
    %11491 = vmatpush.bf16.msra.mxu0 %v7425
    %11492 = vmatpush.bf16.msra.mxu0 %v7417
    %11493 = vmatpush.bf16.msra.mxu0 %v7409
    %11494 = vmatpush.bf16.msra.mxu0 %v7401
    %11495 = vmatpush.bf16.msra.mxu0 %v7393
    %11496 = vmatpush.bf16.msra.mxu0 %v7385
    %11497 = vmatpush.bf16.msra.mxu0 %v7377
    %11498 = vmatpush.bf16.msra.mxu0 %v7369
    %11499 = vmatmul.bf16.gmra.mxu0 %v1699
    %v11500 = vpop.f32.mrf.mxu0
    %v11501 = vadd.f32 %v11488, %v11500
    %v11502 = vpop.f32.mrf.mxu0
    %11503 = vdwg.mxu0
    %11504 = vmatpush.bf16.msra.mxu0 %v7489
    %11505 = vmatpush.bf16.msra.mxu0 %v7481
    %11506 = vmatpush.bf16.msra.mxu0 %v7473
    %11507 = vmatpush.bf16.msra.mxu0 %v7465
    %11508 = vmatpush.bf16.msra.mxu0 %v7457
    %11509 = vmatpush.bf16.msra.mxu0 %v7449
    %11510 = vmatpush.bf16.msra.mxu0 %v7441
    %11511 = vmatpush.bf16.msra.mxu0 %v7433
    %11512 = vmatmul.bf16.gmra.mxu0 %v1700
    %v11513 = vpop.f32.mrf.mxu0
    %v11514 = vadd.f32 %v11501, %v11513
    %v11515 = vpop.f32.mrf.mxu0
    %11516 = vdwg.mxu0
    %11517 = vmatpush.bf16.msra.mxu0 %v7553
    %11518 = vmatpush.bf16.msra.mxu0 %v7545
    %11519 = vmatpush.bf16.msra.mxu0 %v7537
    %11520 = vmatpush.bf16.msra.mxu0 %v7529
    %11521 = vmatpush.bf16.msra.mxu0 %v7521
    %11522 = vmatpush.bf16.msra.mxu0 %v7513
    %11523 = vmatpush.bf16.msra.mxu0 %v7505
    %11524 = vmatpush.bf16.msra.mxu0 %v7497
    %11525 = vmatmul.bf16.gmra.mxu0 %v1701
    %v11526 = vpop.f32.mrf.mxu0
    %v11527 = vadd.f32 %v11514, %v11526
    %v11528 = vpop.f32.mrf.mxu0
    %11529 = vdwg.mxu0
    %11530 = vmatpush.bf16.msra.mxu0 %v7617
    %11531 = vmatpush.bf16.msra.mxu0 %v7609
    %11532 = vmatpush.bf16.msra.mxu0 %v7601
    %11533 = vmatpush.bf16.msra.mxu0 %v7593
    %11534 = vmatpush.bf16.msra.mxu0 %v7585
    %11535 = vmatpush.bf16.msra.mxu0 %v7577
    %11536 = vmatpush.bf16.msra.mxu0 %v7569
    %11537 = vmatpush.bf16.msra.mxu0 %v7561
    %11538 = vmatmul.bf16.gmra.mxu0 %v1702
    %v11539 = vpop.f32.mrf.mxu0
    %v11540 = vadd.f32 %v11527, %v11539
    %v11541 = vpop.f32.mrf.mxu0
    %11542 = vdwg.mxu0
    %11543 = vmatpush.bf16.msra.mxu0 %v7681
    %11544 = vmatpush.bf16.msra.mxu0 %v7673
    %11545 = vmatpush.bf16.msra.mxu0 %v7665
    %11546 = vmatpush.bf16.msra.mxu0 %v7657
    %11547 = vmatpush.bf16.msra.mxu0 %v7649
    %11548 = vmatpush.bf16.msra.mxu0 %v7641
    %11549 = vmatpush.bf16.msra.mxu0 %v7633
    %11550 = vmatpush.bf16.msra.mxu0 %v7625
    %11551 = vmatmul.bf16.gmra.mxu0 %v1703
    %v11552 = vpop.f32.mrf.mxu0
    %v11553 = vadd.f32 %v11540, %v11552
    %v11554 = vpop.f32.mrf.mxu0
    %11555 = vdwg.mxu0
    %11556 = vmatpush.bf16.msra.mxu0 %v7745
    %11557 = vmatpush.bf16.msra.mxu0 %v7737
    %11558 = vmatpush.bf16.msra.mxu0 %v7729
    %11559 = vmatpush.bf16.msra.mxu0 %v7721
    %11560 = vmatpush.bf16.msra.mxu0 %v7713
    %11561 = vmatpush.bf16.msra.mxu0 %v7705
    %11562 = vmatpush.bf16.msra.mxu0 %v7697
    %11563 = vmatpush.bf16.msra.mxu0 %v7689
    %11564 = vmatmul.bf16.gmra.mxu0 %v1704
    %v11565 = vpop.f32.mrf.mxu0
    %v11566 = vadd.f32 %v11553, %v11565
    %v11567 = vpop.f32.mrf.mxu0
    %11568 = vdwg.mxu0
    %11569 = vmatpush.bf16.msra.mxu0 %v7809
    %11570 = vmatpush.bf16.msra.mxu0 %v7801
    %11571 = vmatpush.bf16.msra.mxu0 %v7793
    %11572 = vmatpush.bf16.msra.mxu0 %v7785
    %11573 = vmatpush.bf16.msra.mxu0 %v7777
    %11574 = vmatpush.bf16.msra.mxu0 %v7769
    %11575 = vmatpush.bf16.msra.mxu0 %v7761
    %11576 = vmatpush.bf16.msra.mxu0 %v7753
    %11577 = vmatmul.bf16.gmra.mxu0 %v1705
    %v11578 = vpop.f32.mrf.mxu0
    %v11579 = vadd.f32 %v11566, %v11578
    %v11580 = vpop.f32.mrf.mxu0
    %11581 = vdwg.mxu0
    %11582 = vmatpush.bf16.msra.mxu0 %v7873
    %11583 = vmatpush.bf16.msra.mxu0 %v7865
    %11584 = vmatpush.bf16.msra.mxu0 %v7857
    %11585 = vmatpush.bf16.msra.mxu0 %v7849
    %11586 = vmatpush.bf16.msra.mxu0 %v7841
    %11587 = vmatpush.bf16.msra.mxu0 %v7833
    %11588 = vmatpush.bf16.msra.mxu0 %v7825
    %11589 = vmatpush.bf16.msra.mxu0 %v7817
    %11590 = vmatmul.bf16.gmra.mxu0 %v1706
    %v11591 = vpop.f32.mrf.mxu0
    %v11592 = vadd.f32 %v11579, %v11591
    %v11593 = vpop.f32.mrf.mxu0
    %11594 = vdwg.mxu0
    %11595 = vmatpush.bf16.msra.mxu0 %v6402
    %11596 = vmatpush.bf16.msra.mxu0 %v6394
    %11597 = vmatpush.bf16.msra.mxu0 %v6386
    %11598 = vmatpush.bf16.msra.mxu0 %v6378
    %11599 = vmatpush.bf16.msra.mxu0 %v6370
    %11600 = vmatpush.bf16.msra.mxu0 %v6362
    %11601 = vmatpush.bf16.msra.mxu0 %v6354
    %11602 = vmatpush.bf16.msra.mxu0 %v6346
    %11603 = vmatmul.bf16.gmra.mxu0 %v1683
    %v11604 = vpop.f32.mrf.mxu0
    %v11605 = vadd.f32 0.0, %v11604
    %v11606 = vpop.f32.mrf.mxu0
    %11607 = vdwg.mxu0
    %11608 = vmatpush.bf16.msra.mxu0 %v6466
    %11609 = vmatpush.bf16.msra.mxu0 %v6458
    %11610 = vmatpush.bf16.msra.mxu0 %v6450
    %11611 = vmatpush.bf16.msra.mxu0 %v6442
    %11612 = vmatpush.bf16.msra.mxu0 %v6434
    %11613 = vmatpush.bf16.msra.mxu0 %v6426
    %11614 = vmatpush.bf16.msra.mxu0 %v6418
    %11615 = vmatpush.bf16.msra.mxu0 %v6410
    %11616 = vmatmul.bf16.gmra.mxu0 %v1684
    %v11617 = vpop.f32.mrf.mxu0
    %v11618 = vadd.f32 %v11605, %v11617
    %v11619 = vpop.f32.mrf.mxu0
    %11620 = vdwg.mxu0
    %11621 = vmatpush.bf16.msra.mxu0 %v6530
    %11622 = vmatpush.bf16.msra.mxu0 %v6522
    %11623 = vmatpush.bf16.msra.mxu0 %v6514
    %11624 = vmatpush.bf16.msra.mxu0 %v6506
    %11625 = vmatpush.bf16.msra.mxu0 %v6498
    %11626 = vmatpush.bf16.msra.mxu0 %v6490
    %11627 = vmatpush.bf16.msra.mxu0 %v6482
    %11628 = vmatpush.bf16.msra.mxu0 %v6474
    %11629 = vmatmul.bf16.gmra.mxu0 %v1685
    %v11630 = vpop.f32.mrf.mxu0
    %v11631 = vadd.f32 %v11618, %v11630
    %v11632 = vpop.f32.mrf.mxu0
    %11633 = vdwg.mxu0
    %11634 = vmatpush.bf16.msra.mxu0 %v6594
    %11635 = vmatpush.bf16.msra.mxu0 %v6586
    %11636 = vmatpush.bf16.msra.mxu0 %v6578
    %11637 = vmatpush.bf16.msra.mxu0 %v6570
    %11638 = vmatpush.bf16.msra.mxu0 %v6562
    %11639 = vmatpush.bf16.msra.mxu0 %v6554
    %11640 = vmatpush.bf16.msra.mxu0 %v6546
    %11641 = vmatpush.bf16.msra.mxu0 %v6538
    %11642 = vmatmul.bf16.gmra.mxu0 %v1686
    %v11643 = vpop.f32.mrf.mxu0
    %v11644 = vadd.f32 %v11631, %v11643
    %v11645 = vpop.f32.mrf.mxu0
    %11646 = vdwg.mxu0
    %11647 = vmatpush.bf16.msra.mxu0 %v6658
    %11648 = vmatpush.bf16.msra.mxu0 %v6650
    %11649 = vmatpush.bf16.msra.mxu0 %v6642
    %11650 = vmatpush.bf16.msra.mxu0 %v6634
    %11651 = vmatpush.bf16.msra.mxu0 %v6626
    %11652 = vmatpush.bf16.msra.mxu0 %v6618
    %11653 = vmatpush.bf16.msra.mxu0 %v6610
    %11654 = vmatpush.bf16.msra.mxu0 %v6602
    %11655 = vmatmul.bf16.gmra.mxu0 %v1687
    %v11656 = vpop.f32.mrf.mxu0
    %v11657 = vadd.f32 %v11644, %v11656
    %v11658 = vpop.f32.mrf.mxu0
    %11659 = vdwg.mxu0
    %11660 = vmatpush.bf16.msra.mxu0 %v6722
    %11661 = vmatpush.bf16.msra.mxu0 %v6714
    %11662 = vmatpush.bf16.msra.mxu0 %v6706
    %11663 = vmatpush.bf16.msra.mxu0 %v6698
    %11664 = vmatpush.bf16.msra.mxu0 %v6690
    %11665 = vmatpush.bf16.msra.mxu0 %v6682
    %11666 = vmatpush.bf16.msra.mxu0 %v6674
    %11667 = vmatpush.bf16.msra.mxu0 %v6666
    %11668 = vmatmul.bf16.gmra.mxu0 %v1688
    %v11669 = vpop.f32.mrf.mxu0
    %v11670 = vadd.f32 %v11657, %v11669
    %v11671 = vpop.f32.mrf.mxu0
    %11672 = vdwg.mxu0
    %11673 = vmatpush.bf16.msra.mxu0 %v6786
    %11674 = vmatpush.bf16.msra.mxu0 %v6778
    %11675 = vmatpush.bf16.msra.mxu0 %v6770
    %11676 = vmatpush.bf16.msra.mxu0 %v6762
    %11677 = vmatpush.bf16.msra.mxu0 %v6754
    %11678 = vmatpush.bf16.msra.mxu0 %v6746
    %11679 = vmatpush.bf16.msra.mxu0 %v6738
    %11680 = vmatpush.bf16.msra.mxu0 %v6730
    %11681 = vmatmul.bf16.gmra.mxu0 %v1689
    %v11682 = vpop.f32.mrf.mxu0
    %v11683 = vadd.f32 %v11670, %v11682
    %v11684 = vpop.f32.mrf.mxu0
    %11685 = vdwg.mxu0
    %11686 = vmatpush.bf16.msra.mxu0 %v6850
    %11687 = vmatpush.bf16.msra.mxu0 %v6842
    %11688 = vmatpush.bf16.msra.mxu0 %v6834
    %11689 = vmatpush.bf16.msra.mxu0 %v6826
    %11690 = vmatpush.bf16.msra.mxu0 %v6818
    %11691 = vmatpush.bf16.msra.mxu0 %v6810
    %11692 = vmatpush.bf16.msra.mxu0 %v6802
    %11693 = vmatpush.bf16.msra.mxu0 %v6794
    %11694 = vmatmul.bf16.gmra.mxu0 %v1690
    %v11695 = vpop.f32.mrf.mxu0
    %v11696 = vadd.f32 %v11683, %v11695
    %v11697 = vpop.f32.mrf.mxu0
    %11698 = vdwg.mxu0
    %11699 = vmatpush.bf16.msra.mxu0 %v6914
    %11700 = vmatpush.bf16.msra.mxu0 %v6906
    %11701 = vmatpush.bf16.msra.mxu0 %v6898
    %11702 = vmatpush.bf16.msra.mxu0 %v6890
    %11703 = vmatpush.bf16.msra.mxu0 %v6882
    %11704 = vmatpush.bf16.msra.mxu0 %v6874
    %11705 = vmatpush.bf16.msra.mxu0 %v6866
    %11706 = vmatpush.bf16.msra.mxu0 %v6858
    %11707 = vmatmul.bf16.gmra.mxu0 %v1691
    %v11708 = vpop.f32.mrf.mxu0
    %v11709 = vadd.f32 %v11696, %v11708
    %v11710 = vpop.f32.mrf.mxu0
    %11711 = vdwg.mxu0
    %11712 = vmatpush.bf16.msra.mxu0 %v6978
    %11713 = vmatpush.bf16.msra.mxu0 %v6970
    %11714 = vmatpush.bf16.msra.mxu0 %v6962
    %11715 = vmatpush.bf16.msra.mxu0 %v6954
    %11716 = vmatpush.bf16.msra.mxu0 %v6946
    %11717 = vmatpush.bf16.msra.mxu0 %v6938
    %11718 = vmatpush.bf16.msra.mxu0 %v6930
    %11719 = vmatpush.bf16.msra.mxu0 %v6922
    %11720 = vmatmul.bf16.gmra.mxu0 %v1692
    %v11721 = vpop.f32.mrf.mxu0
    %v11722 = vadd.f32 %v11709, %v11721
    %v11723 = vpop.f32.mrf.mxu0
    %11724 = vdwg.mxu0
    %11725 = vmatpush.bf16.msra.mxu0 %v7042
    %11726 = vmatpush.bf16.msra.mxu0 %v7034
    %11727 = vmatpush.bf16.msra.mxu0 %v7026
    %11728 = vmatpush.bf16.msra.mxu0 %v7018
    %11729 = vmatpush.bf16.msra.mxu0 %v7010
    %11730 = vmatpush.bf16.msra.mxu0 %v7002
    %11731 = vmatpush.bf16.msra.mxu0 %v6994
    %11732 = vmatpush.bf16.msra.mxu0 %v6986
    %11733 = vmatmul.bf16.gmra.mxu0 %v1693
    %v11734 = vpop.f32.mrf.mxu0
    %v11735 = vadd.f32 %v11722, %v11734
    %v11736 = vpop.f32.mrf.mxu0
    %11737 = vdwg.mxu0
    %11738 = vmatpush.bf16.msra.mxu0 %v7106
    %11739 = vmatpush.bf16.msra.mxu0 %v7098
    %11740 = vmatpush.bf16.msra.mxu0 %v7090
    %11741 = vmatpush.bf16.msra.mxu0 %v7082
    %11742 = vmatpush.bf16.msra.mxu0 %v7074
    %11743 = vmatpush.bf16.msra.mxu0 %v7066
    %11744 = vmatpush.bf16.msra.mxu0 %v7058
    %11745 = vmatpush.bf16.msra.mxu0 %v7050
    %11746 = vmatmul.bf16.gmra.mxu0 %v1694
    %v11747 = vpop.f32.mrf.mxu0
    %v11748 = vadd.f32 %v11735, %v11747
    %v11749 = vpop.f32.mrf.mxu0
    %11750 = vdwg.mxu0
    %11751 = vmatpush.bf16.msra.mxu0 %v7170
    %11752 = vmatpush.bf16.msra.mxu0 %v7162
    %11753 = vmatpush.bf16.msra.mxu0 %v7154
    %11754 = vmatpush.bf16.msra.mxu0 %v7146
    %11755 = vmatpush.bf16.msra.mxu0 %v7138
    %11756 = vmatpush.bf16.msra.mxu0 %v7130
    %11757 = vmatpush.bf16.msra.mxu0 %v7122
    %11758 = vmatpush.bf16.msra.mxu0 %v7114
    %11759 = vmatmul.bf16.gmra.mxu0 %v1695
    %v11760 = vpop.f32.mrf.mxu0
    %v11761 = vadd.f32 %v11748, %v11760
    %v11762 = vpop.f32.mrf.mxu0
    %11763 = vdwg.mxu0
    %11764 = vmatpush.bf16.msra.mxu0 %v7234
    %11765 = vmatpush.bf16.msra.mxu0 %v7226
    %11766 = vmatpush.bf16.msra.mxu0 %v7218
    %11767 = vmatpush.bf16.msra.mxu0 %v7210
    %11768 = vmatpush.bf16.msra.mxu0 %v7202
    %11769 = vmatpush.bf16.msra.mxu0 %v7194
    %11770 = vmatpush.bf16.msra.mxu0 %v7186
    %11771 = vmatpush.bf16.msra.mxu0 %v7178
    %11772 = vmatmul.bf16.gmra.mxu0 %v1696
    %v11773 = vpop.f32.mrf.mxu0
    %v11774 = vadd.f32 %v11761, %v11773
    %v11775 = vpop.f32.mrf.mxu0
    %11776 = vdwg.mxu0
    %11777 = vmatpush.bf16.msra.mxu0 %v7298
    %11778 = vmatpush.bf16.msra.mxu0 %v7290
    %11779 = vmatpush.bf16.msra.mxu0 %v7282
    %11780 = vmatpush.bf16.msra.mxu0 %v7274
    %11781 = vmatpush.bf16.msra.mxu0 %v7266
    %11782 = vmatpush.bf16.msra.mxu0 %v7258
    %11783 = vmatpush.bf16.msra.mxu0 %v7250
    %11784 = vmatpush.bf16.msra.mxu0 %v7242
    %11785 = vmatmul.bf16.gmra.mxu0 %v1697
    %v11786 = vpop.f32.mrf.mxu0
    %v11787 = vadd.f32 %v11774, %v11786
    %v11788 = vpop.f32.mrf.mxu0
    %11789 = vdwg.mxu0
    %11790 = vmatpush.bf16.msra.mxu0 %v7362
    %11791 = vmatpush.bf16.msra.mxu0 %v7354
    %11792 = vmatpush.bf16.msra.mxu0 %v7346
    %11793 = vmatpush.bf16.msra.mxu0 %v7338
    %11794 = vmatpush.bf16.msra.mxu0 %v7330
    %11795 = vmatpush.bf16.msra.mxu0 %v7322
    %11796 = vmatpush.bf16.msra.mxu0 %v7314
    %11797 = vmatpush.bf16.msra.mxu0 %v7306
    %11798 = vmatmul.bf16.gmra.mxu0 %v1698
    %v11799 = vpop.f32.mrf.mxu0
    %v11800 = vadd.f32 %v11787, %v11799
    %v11801 = vpop.f32.mrf.mxu0
    %11802 = vdwg.mxu0
    %11803 = vmatpush.bf16.msra.mxu0 %v7426
    %11804 = vmatpush.bf16.msra.mxu0 %v7418
    %11805 = vmatpush.bf16.msra.mxu0 %v7410
    %11806 = vmatpush.bf16.msra.mxu0 %v7402
    %11807 = vmatpush.bf16.msra.mxu0 %v7394
    %11808 = vmatpush.bf16.msra.mxu0 %v7386
    %11809 = vmatpush.bf16.msra.mxu0 %v7378
    %11810 = vmatpush.bf16.msra.mxu0 %v7370
    %11811 = vmatmul.bf16.gmra.mxu0 %v1699
    %v11812 = vpop.f32.mrf.mxu0
    %v11813 = vadd.f32 %v11800, %v11812
    %v11814 = vpop.f32.mrf.mxu0
    %11815 = vdwg.mxu0
    %11816 = vmatpush.bf16.msra.mxu0 %v7490
    %11817 = vmatpush.bf16.msra.mxu0 %v7482
    %11818 = vmatpush.bf16.msra.mxu0 %v7474
    %11819 = vmatpush.bf16.msra.mxu0 %v7466
    %11820 = vmatpush.bf16.msra.mxu0 %v7458
    %11821 = vmatpush.bf16.msra.mxu0 %v7450
    %11822 = vmatpush.bf16.msra.mxu0 %v7442
    %11823 = vmatpush.bf16.msra.mxu0 %v7434
    %11824 = vmatmul.bf16.gmra.mxu0 %v1700
    %v11825 = vpop.f32.mrf.mxu0
    %v11826 = vadd.f32 %v11813, %v11825
    %v11827 = vpop.f32.mrf.mxu0
    %11828 = vdwg.mxu0
    %11829 = vmatpush.bf16.msra.mxu0 %v7554
    %11830 = vmatpush.bf16.msra.mxu0 %v7546
    %11831 = vmatpush.bf16.msra.mxu0 %v7538
    %11832 = vmatpush.bf16.msra.mxu0 %v7530
    %11833 = vmatpush.bf16.msra.mxu0 %v7522
    %11834 = vmatpush.bf16.msra.mxu0 %v7514
    %11835 = vmatpush.bf16.msra.mxu0 %v7506
    %11836 = vmatpush.bf16.msra.mxu0 %v7498
    %11837 = vmatmul.bf16.gmra.mxu0 %v1701
    %v11838 = vpop.f32.mrf.mxu0
    %v11839 = vadd.f32 %v11826, %v11838
    %v11840 = vpop.f32.mrf.mxu0
    %11841 = vdwg.mxu0
    %11842 = vmatpush.bf16.msra.mxu0 %v7618
    %11843 = vmatpush.bf16.msra.mxu0 %v7610
    %11844 = vmatpush.bf16.msra.mxu0 %v7602
    %11845 = vmatpush.bf16.msra.mxu0 %v7594
    %11846 = vmatpush.bf16.msra.mxu0 %v7586
    %11847 = vmatpush.bf16.msra.mxu0 %v7578
    %11848 = vmatpush.bf16.msra.mxu0 %v7570
    %11849 = vmatpush.bf16.msra.mxu0 %v7562
    %11850 = vmatmul.bf16.gmra.mxu0 %v1702
    %v11851 = vpop.f32.mrf.mxu0
    %v11852 = vadd.f32 %v11839, %v11851
    %v11853 = vpop.f32.mrf.mxu0
    %11854 = vdwg.mxu0
    %11855 = vmatpush.bf16.msra.mxu0 %v7682
    %11856 = vmatpush.bf16.msra.mxu0 %v7674
    %11857 = vmatpush.bf16.msra.mxu0 %v7666
    %11858 = vmatpush.bf16.msra.mxu0 %v7658
    %11859 = vmatpush.bf16.msra.mxu0 %v7650
    %11860 = vmatpush.bf16.msra.mxu0 %v7642
    %11861 = vmatpush.bf16.msra.mxu0 %v7634
    %11862 = vmatpush.bf16.msra.mxu0 %v7626
    %11863 = vmatmul.bf16.gmra.mxu0 %v1703
    %v11864 = vpop.f32.mrf.mxu0
    %v11865 = vadd.f32 %v11852, %v11864
    %v11866 = vpop.f32.mrf.mxu0
    %11867 = vdwg.mxu0
    %11868 = vmatpush.bf16.msra.mxu0 %v7746
    %11869 = vmatpush.bf16.msra.mxu0 %v7738
    %11870 = vmatpush.bf16.msra.mxu0 %v7730
    %11871 = vmatpush.bf16.msra.mxu0 %v7722
    %11872 = vmatpush.bf16.msra.mxu0 %v7714
    %11873 = vmatpush.bf16.msra.mxu0 %v7706
    %11874 = vmatpush.bf16.msra.mxu0 %v7698
    %11875 = vmatpush.bf16.msra.mxu0 %v7690
    %11876 = vmatmul.bf16.gmra.mxu0 %v1704
    %v11877 = vpop.f32.mrf.mxu0
    %v11878 = vadd.f32 %v11865, %v11877
    %v11879 = vpop.f32.mrf.mxu0
    %11880 = vdwg.mxu0
    %11881 = vmatpush.bf16.msra.mxu0 %v7810
    %11882 = vmatpush.bf16.msra.mxu0 %v7802
    %11883 = vmatpush.bf16.msra.mxu0 %v7794
    %11884 = vmatpush.bf16.msra.mxu0 %v7786
    %11885 = vmatpush.bf16.msra.mxu0 %v7778
    %11886 = vmatpush.bf16.msra.mxu0 %v7770
    %11887 = vmatpush.bf16.msra.mxu0 %v7762
    %11888 = vmatpush.bf16.msra.mxu0 %v7754
    %11889 = vmatmul.bf16.gmra.mxu0 %v1705
    %v11890 = vpop.f32.mrf.mxu0
    %v11891 = vadd.f32 %v11878, %v11890
    %v11892 = vpop.f32.mrf.mxu0
    %11893 = vdwg.mxu0
    %11894 = vmatpush.bf16.msra.mxu0 %v7874
    %11895 = vmatpush.bf16.msra.mxu0 %v7866
    %11896 = vmatpush.bf16.msra.mxu0 %v7858
    %11897 = vmatpush.bf16.msra.mxu0 %v7850
    %11898 = vmatpush.bf16.msra.mxu0 %v7842
    %11899 = vmatpush.bf16.msra.mxu0 %v7834
    %11900 = vmatpush.bf16.msra.mxu0 %v7826
    %11901 = vmatpush.bf16.msra.mxu0 %v7818
    %11902 = vmatmul.bf16.gmra.mxu0 %v1706
    %v11903 = vpop.f32.mrf.mxu0
    %v11904 = vadd.f32 %v11891, %v11903
    %v11905 = vpop.f32.mrf.mxu0
    %11906 = vdwg.mxu0
    %v11907 = vadd.f32 %v91, %v9720
    %v11908 = vadd.f32 %v92, %v10032
    %v11909 = vadd.f32 %v93, %v10344
    %v11910 = vadd.f32 %v94, %v10656
    %v11911 = vadd.f32 %v95, %v10968
    %v11912 = vadd.f32 %v96, %v11280
    %v11913 = vadd.f32 %v97, %v11592
    %v11914 = vadd.f32 %v98, %v11904
    %11915 = vst [vmem:[#allocation2] sm:$0xff] %v11907
    %11916 = vst [vmem:[#allocation2 + $0x8] sm:$0xff] %v11908
    %11917 = vst [vmem:[#allocation2 + $0x10] sm:$0xff] %v11909
    %11918 = vst [vmem:[#allocation2 + $0x18] sm:$0xff] %v11910
    %11919 = vst [vmem:[#allocation2 + $0x20] sm:$0xff] %v11911
    %11920 = vst [vmem:[#allocation2 + $0x28] sm:$0xff] %v11912
    %11921 = vst [vmem:[#allocation2 + $0x30] sm:$0xff] %v11913
    %11922 = vst [vmem:[#allocation2 + $0x38] sm:$0xff] %v11914
    // Predicated region
    $region42: #{network_forward.1} parent=1 // pred_check
      %p11923 = pneg %p79
    $region43: #{network_forward.1} parent=1 // pred_check_branch
      %11925 = sbr.rel (%p11923) target = $region45
    $region44: #{network_forward.1} parent=1 // pred_region
      %v11926 = vld [vmem:[#allocation2] sm:$0xff]
      %v11927 = vld [vmem:[#allocation2 + $0x8] sm:$0xff]
      %v11928 = vld [vmem:[#allocation2 + $0x10] sm:$0xff]
      %v11929 = vld [vmem:[#allocation2 + $0x18] sm:$0xff]
      %v11930 = vld [vmem:[#allocation2 + $0x20] sm:$0xff]
      %v11931 = vld [vmem:[#allocation2 + $0x28] sm:$0xff]
      %v11932 = vld [vmem:[#allocation2 + $0x30] sm:$0xff]
      %v11933 = vld [vmem:[#allocation2 + $0x38] sm:$0xff]
      %v11934 = vld [vmem:[#allocation5] sm:$0xff]
      %v11936 = vperm.slane %v11934, 0
      %v11937 = vperm.slane %v11934, 1
      %v11938 = vperm.slane %v11934, 2
      %v11939 = vperm.slane %v11934, 3
      %v11940 = vperm.slane %v11934, 4
      %v11941 = vperm.slane %v11934, 5
      %v11942 = vperm.slane %v11934, 6
      %v11943 = vperm.slane %v11934, 7
      %v11952 = vadd.f32 %v11926, %v11936
      %v11953 = vadd.f32 %v11927, %v11937
      %v11954 = vadd.f32 %v11928, %v11938
      %v11955 = vadd.f32 %v11929, %v11939
      %v11956 = vadd.f32 %v11930, %v11940
      %v11957 = vadd.f32 %v11931, %v11941
      %v11958 = vadd.f32 %v11932, %v11942
      %v11959 = vadd.f32 %v11933, %v11943
      %v11960 = vmax.f32 %v11952, 0.0
      %v11961 = vmax.f32 %v11953, 0.0
      %v11962 = vmax.f32 %v11954, 0.0
      %v11963 = vmax.f32 %v11955, 0.0
      %v11964 = vmax.f32 %v11956, 0.0
      %v11965 = vmax.f32 %v11957, 0.0
      %v11966 = vmax.f32 %v11958, 0.0
      %v11967 = vmax.f32 %v11959, 0.0
      %v11968 = vpack.c.bf16 %v11960, %v11960
      %v11969 = vpack.c.bf16 %v11961, %v11961
      %v11970 = vpack.c.bf16 %v11962, %v11962
      %v11971 = vpack.c.bf16 %v11963, %v11963
      %v11972 = vpack.c.bf16 %v11964, %v11964
      %v11973 = vpack.c.bf16 %v11965, %v11965
      %v11974 = vpack.c.bf16 %v11966, %v11966
      %v11975 = vpack.c.bf16 %v11967, %v11967
      %v11976 = vld [vmem:[#allocation7] sm:$0xf]
      %v11977 = vld [vmem:[#allocation7 + $0x4] sm:$0xf]
      %v11978 = vld [vmem:[#allocation7 + $0x8] sm:$0xf]
      %v11979 = vld [vmem:[#allocation7 + $0xc] sm:$0xf]
      %v11980 = vld [vmem:[#allocation7 + $0x10] sm:$0xf]
      %v11981 = vld [vmem:[#allocation7 + $0x14] sm:$0xf]
      %v11982 = vld [vmem:[#allocation7 + $0x18] sm:$0xf]
      %v11983 = vld [vmem:[#allocation7 + $0x1c] sm:$0xf]
      %v11984 = vld [vmem:[#allocation7 + $0x20] sm:$0xf]
      %v11985 = vld [vmem:[#allocation7 + $0x24] sm:$0xf]
      %v11986 = vld [vmem:[#allocation7 + $0x28] sm:$0xf]
      %v11987 = vld [vmem:[#allocation7 + $0x2c] sm:$0xf]
      %v11988 = vld [vmem:[#allocation7 + $0x30] sm:$0xf]
      %v11989 = vld [vmem:[#allocation7 + $0x34] sm:$0xf]
      %v11990 = vld [vmem:[#allocation7 + $0x38] sm:$0xf]
      %v11991 = vld [vmem:[#allocation7 + $0x3c] sm:$0xf]
      %v11992 = vld [vmem:[#allocation7 + $0x40] sm:$0xf]
      %v11993 = vld [vmem:[#allocation7 + $0x44] sm:$0xf]
      %v11994 = vld [vmem:[#allocation7 + $0x48] sm:$0xf]
      %v11995 = vld [vmem:[#allocation7 + $0x4c] sm:$0xf]
      %v11996 = vld [vmem:[#allocation7 + $0x50] sm:$0xf]
      %v11997 = vld [vmem:[#allocation7 + $0x54] sm:$0xf]
      %v11998 = vld [vmem:[#allocation7 + $0x58] sm:$0xf]
      %v11999 = vld [vmem:[#allocation7 + $0x5c] sm:$0xf]
      %v12000 = vld [vmem:[#allocation7 + $0x60] sm:$0xf]
      %v12001 = vld [vmem:[#allocation7 + $0x64] sm:$0xf]
      %v12002 = vld [vmem:[#allocation7 + $0x68] sm:$0xf]
      %v12003 = vld [vmem:[#allocation7 + $0x6c] sm:$0xf]
      %v12004 = vld [vmem:[#allocation7 + $0x70] sm:$0xf]
      %v12005 = vld [vmem:[#allocation7 + $0x74] sm:$0xf]
      %v12006 = vld [vmem:[#allocation7 + $0x78] sm:$0xf]
      %v12007 = vld [vmem:[#allocation7 + $0x7c] sm:$0xf]
      %v12008 = vld [vmem:[#allocation7 + $0x80] sm:$0xf]
      %v12009 = vld [vmem:[#allocation7 + $0x84] sm:$0xf]
      %v12010 = vld [vmem:[#allocation7 + $0x88] sm:$0xf]
      %v12011 = vld [vmem:[#allocation7 + $0x8c] sm:$0xf]
      %v12012 = vld [vmem:[#allocation7 + $0x90] sm:$0xf]
      %v12013 = vld [vmem:[#allocation7 + $0x94] sm:$0xf]
      %v12014 = vld [vmem:[#allocation7 + $0x98] sm:$0xf]
      %v12015 = vld [vmem:[#allocation7 + $0x9c] sm:$0xf]
      %v12016 = vld [vmem:[#allocation7 + $0xa0] sm:$0xf]
      %v12017 = vld [vmem:[#allocation7 + $0xa4] sm:$0xf]
      %v12018 = vld [vmem:[#allocation7 + $0xa8] sm:$0xf]
      %v12019 = vld [vmem:[#allocation7 + $0xac] sm:$0xf]
      %v12020 = vld [vmem:[#allocation7 + $0xb0] sm:$0xf]
      %v12021 = vld [vmem:[#allocation7 + $0xb4] sm:$0xf]
      %v12022 = vld [vmem:[#allocation7 + $0xb8] sm:$0xf]
      %v12023 = vld [vmem:[#allocation7 + $0xbc] sm:$0xf]
      %v12024 = vld [vmem:[#allocation7 + $0xc0] sm:$0xf]
      %v12025 = vld [vmem:[#allocation7 + $0xc4] sm:$0xf]
      %v12026 = vld [vmem:[#allocation7 + $0xc8] sm:$0xf]
      %v12027 = vld [vmem:[#allocation7 + $0xcc] sm:$0xf]
      %v12028 = vld [vmem:[#allocation7 + $0xd0] sm:$0xf]
      %v12029 = vld [vmem:[#allocation7 + $0xd4] sm:$0xf]
      %v12030 = vld [vmem:[#allocation7 + $0xd8] sm:$0xf]
      %v12031 = vld [vmem:[#allocation7 + $0xdc] sm:$0xf]
      %v12032 = vld [vmem:[#allocation7 + $0xe0] sm:$0xf]
      %v12033 = vld [vmem:[#allocation7 + $0xe4] sm:$0xf]
      %v12034 = vld [vmem:[#allocation7 + $0xe8] sm:$0xf]
      %v12035 = vld [vmem:[#allocation7 + $0xec] sm:$0xf]
      %v12036 = vld [vmem:[#allocation7 + $0xf0] sm:$0xf]
      %v12037 = vld [vmem:[#allocation7 + $0xf4] sm:$0xf]
      %v12038 = vld [vmem:[#allocation7 + $0xf8] sm:$0xf]
      %v12039 = vld [vmem:[#allocation7 + $0xfc] sm:$0xf]
      %v12040 = vld [vmem:[#allocation7 + $0x100] sm:$0xf]
      %v12041 = vld [vmem:[#allocation7 + $0x104] sm:$0xf]
      %v12042 = vld [vmem:[#allocation7 + $0x108] sm:$0xf]
      %v12043 = vld [vmem:[#allocation7 + $0x10c] sm:$0xf]
      %v12044 = vld [vmem:[#allocation7 + $0x110] sm:$0xf]
      %v12045 = vld [vmem:[#allocation7 + $0x114] sm:$0xf]
      %v12046 = vld [vmem:[#allocation7 + $0x118] sm:$0xf]
      %v12047 = vld [vmem:[#allocation7 + $0x11c] sm:$0xf]
      %v12048 = vld [vmem:[#allocation7 + $0x120] sm:$0xf]
      %v12049 = vld [vmem:[#allocation7 + $0x124] sm:$0xf]
      %v12050 = vld [vmem:[#allocation7 + $0x128] sm:$0xf]
      %v12051 = vld [vmem:[#allocation7 + $0x12c] sm:$0xf]
      %v12052 = vld [vmem:[#allocation7 + $0x130] sm:$0xf]
      %v12053 = vld [vmem:[#allocation7 + $0x134] sm:$0xf]
      %v12054 = vld [vmem:[#allocation7 + $0x138] sm:$0xf]
      %v12055 = vld [vmem:[#allocation7 + $0x13c] sm:$0xf]
      %v12056 = vld [vmem:[#allocation7 + $0x140] sm:$0xf]
      %v12057 = vld [vmem:[#allocation7 + $0x144] sm:$0xf]
      %v12058 = vld [vmem:[#allocation7 + $0x148] sm:$0xf]
      %v12059 = vld [vmem:[#allocation7 + $0x14c] sm:$0xf]
      %v12060 = vld [vmem:[#allocation7 + $0x150] sm:$0xf]
      %v12061 = vld [vmem:[#allocation7 + $0x154] sm:$0xf]
      %v12062 = vld [vmem:[#allocation7 + $0x158] sm:$0xf]
      %v12063 = vld [vmem:[#allocation7 + $0x15c] sm:$0xf]
      %v12064 = vld [vmem:[#allocation7 + $0x160] sm:$0xf]
      %v12065 = vld [vmem:[#allocation7 + $0x164] sm:$0xf]
      %v12066 = vld [vmem:[#allocation7 + $0x168] sm:$0xf]
      %v12067 = vld [vmem:[#allocation7 + $0x16c] sm:$0xf]
      %v12068 = vld [vmem:[#allocation7 + $0x170] sm:$0xf]
      %v12069 = vld [vmem:[#allocation7 + $0x174] sm:$0xf]
      %v12070 = vld [vmem:[#allocation7 + $0x178] sm:$0xf]
      %v12071 = vld [vmem:[#allocation7 + $0x17c] sm:$0xf]
      %v12072 = vld [vmem:[#allocation7 + $0x180] sm:$0xf]
      %v12073 = vld [vmem:[#allocation7 + $0x184] sm:$0xf]
      %v12074 = vld [vmem:[#allocation7 + $0x188] sm:$0xf]
      %v12075 = vld [vmem:[#allocation7 + $0x18c] sm:$0xf]
      %v12076 = vld [vmem:[#allocation7 + $0x190] sm:$0xf]
      %v12077 = vld [vmem:[#allocation7 + $0x194] sm:$0xf]
      %v12078 = vld [vmem:[#allocation7 + $0x198] sm:$0xf]
      %v12079 = vld [vmem:[#allocation7 + $0x19c] sm:$0xf]
      %v12080 = vld [vmem:[#allocation7 + $0x1a0] sm:$0xf]
      %v12081 = vld [vmem:[#allocation7 + $0x1a4] sm:$0xf]
      %v12082 = vld [vmem:[#allocation7 + $0x1a8] sm:$0xf]
      %v12083 = vld [vmem:[#allocation7 + $0x1ac] sm:$0xf]
      %v12084 = vld [vmem:[#allocation7 + $0x1b0] sm:$0xf]
      %v12085 = vld [vmem:[#allocation7 + $0x1b4] sm:$0xf]
      %v12086 = vld [vmem:[#allocation7 + $0x1b8] sm:$0xf]
      %v12087 = vld [vmem:[#allocation7 + $0x1bc] sm:$0xf]
      %v12088 = vld [vmem:[#allocation7 + $0x1c0] sm:$0xf]
      %v12089 = vld [vmem:[#allocation7 + $0x1c4] sm:$0xf]
      %v12090 = vld [vmem:[#allocation7 + $0x1c8] sm:$0xf]
      %v12091 = vld [vmem:[#allocation7 + $0x1cc] sm:$0xf]
      %v12092 = vld [vmem:[#allocation7 + $0x1d0] sm:$0xf]
      %v12093 = vld [vmem:[#allocation7 + $0x1d4] sm:$0xf]
      %v12094 = vld [vmem:[#allocation7 + $0x1d8] sm:$0xf]
      %v12095 = vld [vmem:[#allocation7 + $0x1dc] sm:$0xf]
      %v12096 = vld [vmem:[#allocation7 + $0x1e0] sm:$0xf]
      %v12097 = vld [vmem:[#allocation7 + $0x1e4] sm:$0xf]
      %v12098 = vld [vmem:[#allocation7 + $0x1e8] sm:$0xf]
      %v12099 = vld [vmem:[#allocation7 + $0x1ec] sm:$0xf]
      %v12100 = vld [vmem:[#allocation7 + $0x1f0] sm:$0xf]
      %v12101 = vld [vmem:[#allocation7 + $0x1f4] sm:$0xf]
      %v12102 = vld [vmem:[#allocation7 + $0x1f8] sm:$0xf]
      %v12103 = vld [vmem:[#allocation7 + $0x1fc] sm:$0xf]
      %v12104 = vld [vmem:[#allocation8] sm:$0x1]
      %v12106 = vperm.slane %v12104, 0
      %v12236 = vunpack.c.l.b16 %v11976
      %v12237 = vunpack.c.l.b16 %v11977
      %v12238 = vunpack.c.l.b16 %v11978
      %v12239 = vunpack.c.l.b16 %v11979
      %v12240 = vunpack.c.l.b16 %v11980
      %v12241 = vunpack.c.l.b16 %v11981
      %v12242 = vunpack.c.l.b16 %v11982
      %v12243 = vunpack.c.l.b16 %v11983
      %v12244 = vunpack.c.l.b16 %v11984
      %v12245 = vunpack.c.l.b16 %v11985
      %v12246 = vunpack.c.l.b16 %v11986
      %v12247 = vunpack.c.l.b16 %v11987
      %v12248 = vunpack.c.l.b16 %v11988
      %v12249 = vunpack.c.l.b16 %v11989
      %v12250 = vunpack.c.l.b16 %v11990
      %v12251 = vunpack.c.l.b16 %v11991
      %v12252 = vunpack.c.l.b16 %v11992
      %v12253 = vunpack.c.l.b16 %v11993
      %v12254 = vunpack.c.l.b16 %v11994
      %v12255 = vunpack.c.l.b16 %v11995
      %v12256 = vunpack.c.l.b16 %v11996
      %v12257 = vunpack.c.l.b16 %v11997
      %v12258 = vunpack.c.l.b16 %v11998
      %v12259 = vunpack.c.l.b16 %v11999
      %v12260 = vunpack.c.l.b16 %v12000
      %v12261 = vunpack.c.l.b16 %v12001
      %v12262 = vunpack.c.l.b16 %v12002
      %v12263 = vunpack.c.l.b16 %v12003
      %v12264 = vunpack.c.l.b16 %v12004
      %v12265 = vunpack.c.l.b16 %v12005
      %v12266 = vunpack.c.l.b16 %v12006
      %v12267 = vunpack.c.l.b16 %v12007
      %v12268 = vunpack.c.l.b16 %v12008
      %v12269 = vunpack.c.l.b16 %v12009
      %v12270 = vunpack.c.l.b16 %v12010
      %v12271 = vunpack.c.l.b16 %v12011
      %v12272 = vunpack.c.l.b16 %v12012
      %v12273 = vunpack.c.l.b16 %v12013
      %v12274 = vunpack.c.l.b16 %v12014
      %v12275 = vunpack.c.l.b16 %v12015
      %v12276 = vunpack.c.l.b16 %v12016
      %v12277 = vunpack.c.l.b16 %v12017
      %v12278 = vunpack.c.l.b16 %v12018
      %v12279 = vunpack.c.l.b16 %v12019
      %v12280 = vunpack.c.l.b16 %v12020
      %v12281 = vunpack.c.l.b16 %v12021
      %v12282 = vunpack.c.l.b16 %v12022
      %v12283 = vunpack.c.l.b16 %v12023
      %v12284 = vunpack.c.l.b16 %v12024
      %v12285 = vunpack.c.l.b16 %v12025
      %v12286 = vunpack.c.l.b16 %v12026
      %v12287 = vunpack.c.l.b16 %v12027
      %v12288 = vunpack.c.l.b16 %v12028
      %v12289 = vunpack.c.l.b16 %v12029
      %v12290 = vunpack.c.l.b16 %v12030
      %v12291 = vunpack.c.l.b16 %v12031
      %v12292 = vunpack.c.l.b16 %v12032
      %v12293 = vunpack.c.l.b16 %v12033
      %v12294 = vunpack.c.l.b16 %v12034
      %v12295 = vunpack.c.l.b16 %v12035
      %v12296 = vunpack.c.l.b16 %v12036
      %v12297 = vunpack.c.l.b16 %v12037
      %v12298 = vunpack.c.l.b16 %v12038
      %v12299 = vunpack.c.l.b16 %v12039
      %v12300 = vunpack.c.l.b16 %v12040
      %v12301 = vunpack.c.l.b16 %v12041
      %v12302 = vunpack.c.l.b16 %v12042
      %v12303 = vunpack.c.l.b16 %v12043
      %v12304 = vunpack.c.l.b16 %v12044
      %v12305 = vunpack.c.l.b16 %v12045
      %v12306 = vunpack.c.l.b16 %v12046
      %v12307 = vunpack.c.l.b16 %v12047
      %v12308 = vunpack.c.l.b16 %v12048
      %v12309 = vunpack.c.l.b16 %v12049
      %v12310 = vunpack.c.l.b16 %v12050
      %v12311 = vunpack.c.l.b16 %v12051
      %v12312 = vunpack.c.l.b16 %v12052
      %v12313 = vunpack.c.l.b16 %v12053
      %v12314 = vunpack.c.l.b16 %v12054
      %v12315 = vunpack.c.l.b16 %v12055
      %v12316 = vunpack.c.l.b16 %v12056
      %v12317 = vunpack.c.l.b16 %v12057
      %v12318 = vunpack.c.l.b16 %v12058
      %v12319 = vunpack.c.l.b16 %v12059
      %v12320 = vunpack.c.l.b16 %v12060
      %v12321 = vunpack.c.l.b16 %v12061
      %v12322 = vunpack.c.l.b16 %v12062
      %v12323 = vunpack.c.l.b16 %v12063
      %v12324 = vunpack.c.l.b16 %v12064
      %v12325 = vunpack.c.l.b16 %v12065
      %v12326 = vunpack.c.l.b16 %v12066
      %v12327 = vunpack.c.l.b16 %v12067
      %v12328 = vunpack.c.l.b16 %v12068
      %v12329 = vunpack.c.l.b16 %v12069
      %v12330 = vunpack.c.l.b16 %v12070
      %v12331 = vunpack.c.l.b16 %v12071
      %v12332 = vunpack.c.l.b16 %v12072
      %v12333 = vunpack.c.l.b16 %v12073
      %v12334 = vunpack.c.l.b16 %v12074
      %v12335 = vunpack.c.l.b16 %v12075
      %v12336 = vunpack.c.l.b16 %v12076
      %v12337 = vunpack.c.l.b16 %v12077
      %v12338 = vunpack.c.l.b16 %v12078
      %v12339 = vunpack.c.l.b16 %v12079
      %v12340 = vunpack.c.l.b16 %v12080
      %v12341 = vunpack.c.l.b16 %v12081
      %v12342 = vunpack.c.l.b16 %v12082
      %v12343 = vunpack.c.l.b16 %v12083
      %v12344 = vunpack.c.l.b16 %v12084
      %v12345 = vunpack.c.l.b16 %v12085
      %v12346 = vunpack.c.l.b16 %v12086
      %v12347 = vunpack.c.l.b16 %v12087
      %v12348 = vunpack.c.l.b16 %v12088
      %v12349 = vunpack.c.l.b16 %v12089
      %v12350 = vunpack.c.l.b16 %v12090
      %v12351 = vunpack.c.l.b16 %v12091
      %v12352 = vunpack.c.l.b16 %v12092
      %v12353 = vunpack.c.l.b16 %v12093
      %v12354 = vunpack.c.l.b16 %v12094
      %v12355 = vunpack.c.l.b16 %v12095
      %v12356 = vunpack.c.l.b16 %v12096
      %v12357 = vunpack.c.l.b16 %v12097
      %v12358 = vunpack.c.l.b16 %v12098
      %v12359 = vunpack.c.l.b16 %v12099
      %v12360 = vunpack.c.l.b16 %v12100
      %v12361 = vunpack.c.l.b16 %v12101
      %v12362 = vunpack.c.l.b16 %v12102
      %v12363 = vunpack.c.l.b16 %v12103
      %v12364 = vpack.c.b16 %v12237, %v12236
      %v12365 = vpack.c.b16 %v12239, %v12238
      %v12366 = vpack.c.b16 %v12241, %v12240
      %v12367 = vpack.c.b16 %v12243, %v12242
      %v12368 = vpack.c.b16 %v12245, %v12244
      %v12369 = vpack.c.b16 %v12247, %v12246
      %v12370 = vpack.c.b16 %v12249, %v12248
      %v12371 = vpack.c.b16 %v12251, %v12250
      %v12372 = vpack.c.b16 %v12253, %v12252
      %v12373 = vpack.c.b16 %v12255, %v12254
      %v12374 = vpack.c.b16 %v12257, %v12256
      %v12375 = vpack.c.b16 %v12259, %v12258
      %v12376 = vpack.c.b16 %v12261, %v12260
      %v12377 = vpack.c.b16 %v12263, %v12262
      %v12378 = vpack.c.b16 %v12265, %v12264
      %v12379 = vpack.c.b16 %v12267, %v12266
      %v12380 = vpack.c.b16 %v12269, %v12268
      %v12381 = vpack.c.b16 %v12271, %v12270
      %v12382 = vpack.c.b16 %v12273, %v12272
      %v12383 = vpack.c.b16 %v12275, %v12274
      %v12384 = vpack.c.b16 %v12277, %v12276
      %v12385 = vpack.c.b16 %v12279, %v12278
      %v12386 = vpack.c.b16 %v12281, %v12280
      %v12387 = vpack.c.b16 %v12283, %v12282
      %v12388 = vpack.c.b16 %v12285, %v12284
      %v12389 = vpack.c.b16 %v12287, %v12286
      %v12390 = vpack.c.b16 %v12289, %v12288
      %v12391 = vpack.c.b16 %v12291, %v12290
      %v12392 = vpack.c.b16 %v12293, %v12292
      %v12393 = vpack.c.b16 %v12295, %v12294
      %v12394 = vpack.c.b16 %v12297, %v12296
      %v12395 = vpack.c.b16 %v12299, %v12298
      %v12396 = vpack.c.b16 %v12301, %v12300
      %v12397 = vpack.c.b16 %v12303, %v12302
      %v12398 = vpack.c.b16 %v12305, %v12304
      %v12399 = vpack.c.b16 %v12307, %v12306
      %v12400 = vpack.c.b16 %v12309, %v12308
      %v12401 = vpack.c.b16 %v12311, %v12310
      %v12402 = vpack.c.b16 %v12313, %v12312
      %v12403 = vpack.c.b16 %v12315, %v12314
      %v12404 = vpack.c.b16 %v12317, %v12316
      %v12405 = vpack.c.b16 %v12319, %v12318
      %v12406 = vpack.c.b16 %v12321, %v12320
      %v12407 = vpack.c.b16 %v12323, %v12322
      %v12408 = vpack.c.b16 %v12325, %v12324
      %v12409 = vpack.c.b16 %v12327, %v12326
      %v12410 = vpack.c.b16 %v12329, %v12328
      %v12411 = vpack.c.b16 %v12331, %v12330
      %v12412 = vpack.c.b16 %v12333, %v12332
      %v12413 = vpack.c.b16 %v12335, %v12334
      %v12414 = vpack.c.b16 %v12337, %v12336
      %v12415 = vpack.c.b16 %v12339, %v12338
      %v12416 = vpack.c.b16 %v12341, %v12340
      %v12417 = vpack.c.b16 %v12343, %v12342
      %v12418 = vpack.c.b16 %v12345, %v12344
      %v12419 = vpack.c.b16 %v12347, %v12346
      %v12420 = vpack.c.b16 %v12349, %v12348
      %v12421 = vpack.c.b16 %v12351, %v12350
      %v12422 = vpack.c.b16 %v12353, %v12352
      %v12423 = vpack.c.b16 %v12355, %v12354
      %v12424 = vpack.c.b16 %v12357, %v12356
      %v12425 = vpack.c.b16 %v12359, %v12358
      %v12426 = vpack.c.b16 %v12361, %v12360
      %v12427 = vpack.c.b16 %v12363, %v12362
      %12492 = vmatpush.bf16.msra.mxu0 %v12371
      %12493 = vmatpush.bf16.msra.mxu0 %v12370
      %12494 = vmatpush.bf16.msra.mxu0 %v12369
      %12495 = vmatpush.bf16.msra.mxu0 %v12368
      %12496 = vmatpush.bf16.msra.mxu0 %v12367
      %12497 = vmatpush.bf16.msra.mxu0 %v12366
      %12498 = vmatpush.bf16.msra.mxu0 %v12365
      %12499 = vmatpush.bf16.msra.mxu0 %v12364
      %12500 = vmatmul.bf16.gmra.mxu0 %v11968
      %v12501 = vpop.f32.mrf.mxu0
      %v12502 = vadd.f32 %v12106, %v12501
      %v12503 = vpop.f32.mrf.mxu0
      %12504 = vdwg.mxu0
      %12505 = vmatpush.bf16.msra.mxu0 %v12379
      %12506 = vmatpush.bf16.msra.mxu0 %v12378
      %12507 = vmatpush.bf16.msra.mxu0 %v12377
      %12508 = vmatpush.bf16.msra.mxu0 %v12376
      %12509 = vmatpush.bf16.msra.mxu0 %v12375
      %12510 = vmatpush.bf16.msra.mxu0 %v12374
      %12511 = vmatpush.bf16.msra.mxu0 %v12373
      %12512 = vmatpush.bf16.msra.mxu0 %v12372
      %12513 = vmatmul.bf16.gmra.mxu0 %v11969
      %v12514 = vpop.f32.mrf.mxu0
      %v12515 = vadd.f32 %v12502, %v12514
      %v12516 = vpop.f32.mrf.mxu0
      %12517 = vdwg.mxu0
      %12518 = vmatpush.bf16.msra.mxu0 %v12387
      %12519 = vmatpush.bf16.msra.mxu0 %v12386
      %12520 = vmatpush.bf16.msra.mxu0 %v12385
      %12521 = vmatpush.bf16.msra.mxu0 %v12384
      %12522 = vmatpush.bf16.msra.mxu0 %v12383
      %12523 = vmatpush.bf16.msra.mxu0 %v12382
      %12524 = vmatpush.bf16.msra.mxu0 %v12381
      %12525 = vmatpush.bf16.msra.mxu0 %v12380
      %12526 = vmatmul.bf16.gmra.mxu0 %v11970
      %v12527 = vpop.f32.mrf.mxu0
      %v12528 = vadd.f32 %v12515, %v12527
      %v12529 = vpop.f32.mrf.mxu0
      %12530 = vdwg.mxu0
      %12531 = vmatpush.bf16.msra.mxu0 %v12395
      %12532 = vmatpush.bf16.msra.mxu0 %v12394
      %12533 = vmatpush.bf16.msra.mxu0 %v12393
      %12534 = vmatpush.bf16.msra.mxu0 %v12392
      %12535 = vmatpush.bf16.msra.mxu0 %v12391
      %12536 = vmatpush.bf16.msra.mxu0 %v12390
      %12537 = vmatpush.bf16.msra.mxu0 %v12389
      %12538 = vmatpush.bf16.msra.mxu0 %v12388
      %12539 = vmatmul.bf16.gmra.mxu0 %v11971
      %v12540 = vpop.f32.mrf.mxu0
      %v12541 = vadd.f32 %v12528, %v12540
      %v12542 = vpop.f32.mrf.mxu0
      %12543 = vdwg.mxu0
      %12544 = vmatpush.bf16.msra.mxu0 %v12403
      %12545 = vmatpush.bf16.msra.mxu0 %v12402
      %12546 = vmatpush.bf16.msra.mxu0 %v12401
      %12547 = vmatpush.bf16.msra.mxu0 %v12400
      %12548 = vmatpush.bf16.msra.mxu0 %v12399
      %12549 = vmatpush.bf16.msra.mxu0 %v12398
      %12550 = vmatpush.bf16.msra.mxu0 %v12397
      %12551 = vmatpush.bf16.msra.mxu0 %v12396
      %12552 = vmatmul.bf16.gmra.mxu0 %v11972
      %v12553 = vpop.f32.mrf.mxu0
      %v12554 = vadd.f32 %v12541, %v12553
      %v12555 = vpop.f32.mrf.mxu0
      %12556 = vdwg.mxu0
      %12557 = vmatpush.bf16.msra.mxu0 %v12411
      %12558 = vmatpush.bf16.msra.mxu0 %v12410
      %12559 = vmatpush.bf16.msra.mxu0 %v12409
      %12560 = vmatpush.bf16.msra.mxu0 %v12408
      %12561 = vmatpush.bf16.msra.mxu0 %v12407
      %12562 = vmatpush.bf16.msra.mxu0 %v12406
      %12563 = vmatpush.bf16.msra.mxu0 %v12405
      %12564 = vmatpush.bf16.msra.mxu0 %v12404
      %12565 = vmatmul.bf16.gmra.mxu0 %v11973
      %v12566 = vpop.f32.mrf.mxu0
      %v12567 = vadd.f32 %v12554, %v12566
      %v12568 = vpop.f32.mrf.mxu0
      %12569 = vdwg.mxu0
      %12570 = vmatpush.bf16.msra.mxu0 %v12419
      %12571 = vmatpush.bf16.msra.mxu0 %v12418
      %12572 = vmatpush.bf16.msra.mxu0 %v12417
      %12573 = vmatpush.bf16.msra.mxu0 %v12416
      %12574 = vmatpush.bf16.msra.mxu0 %v12415
      %12575 = vmatpush.bf16.msra.mxu0 %v12414
      %12576 = vmatpush.bf16.msra.mxu0 %v12413
      %12577 = vmatpush.bf16.msra.mxu0 %v12412
      %12578 = vmatmul.bf16.gmra.mxu0 %v11974
      %v12579 = vpop.f32.mrf.mxu0
      %v12580 = vadd.f32 %v12567, %v12579
      %v12581 = vpop.f32.mrf.mxu0
      %12582 = vdwg.mxu0
      %12583 = vmatpush.bf16.msra.mxu0 %v12427
      %12584 = vmatpush.bf16.msra.mxu0 %v12426
      %12585 = vmatpush.bf16.msra.mxu0 %v12425
      %12586 = vmatpush.bf16.msra.mxu0 %v12424
      %12587 = vmatpush.bf16.msra.mxu0 %v12423
      %12588 = vmatpush.bf16.msra.mxu0 %v12422
      %12589 = vmatpush.bf16.msra.mxu0 %v12421
      %12590 = vmatpush.bf16.msra.mxu0 %v12420
      %12591 = vmatmul.bf16.gmra.mxu0 %v11975
      %v12592 = vpop.f32.mrf.mxu0
      %v12593 = vadd.f32 %v12580, %v12592
      %v12594 = vpop.f32.mrf.mxu0
      %12595 = vdwg.mxu0
      %12596 = vst [vmem:[%s5] sm:$0xff] %v12593
    $region45: #{network_forward.1} parent=1 // pred_fallthru
      _
    // Predicated region
    $region46: #{network_forward.1} parent=1 // pred_check
      _
    $region47: #{network_forward.1} parent=1 // pred_check_branch
      %12598 = sbr.rel (0) target = $region49
    $region48: #{network_forward.1} parent=1 // pred_region
      _
    $region49: #{network_forward.1} parent=1 // pred_fallthru
      _
    // Predicated region
    $region50: #{network_forward.1} parent=1 // pred_check
      _
    $region51: #{network_forward.1} parent=1 // pred_check_branch
      %12600 = sbr.rel (0) target = $region53
    $region52: #{network_forward.1} parent=1 // pred_region
      _
    $region53: #{network_forward.1} parent=1 // pred_fallthru
      _
    %12601 = vsyncpa [#allocation4], 1
    %12602 = vsyncpa [#allocation6], 1
    %12603 = vsyncpa [#allocation9], 1

</llo_original>
